<compile_context>
chip_gen: v7x
topology: tpu7x:2x2x1
jax: 0.10.0
libtpu: 0.0.40
codegen_flags: <defaults>
</compile_context>

<pallas_src>
import functools
import math

import jax
import jax.numpy as jnp
from jax.experimental import pallas as pl
from jax.experimental.pallas import tpu as pltpu


# ----------------------------------------------------------------------------
# In-kernel helpers (trace-time functions used inside Pallas kernel bodies)
# ----------------------------------------------------------------------------
def _dense(x, w, b, activation=None):
    """x: (M, K) f32; w: (K, N) bf16; b: (1, N) f32 -> (M, N) f32."""
    y = jnp.dot(x.astype(w.dtype), w, preferred_element_type=jnp.float32) + b
    if activation == "relu":
        y = jnp.maximum(y, 0.0)
    return y


def _layer_norm(x, g, b, eps):
    """x: (M, D) f32; g, b: (1, D) f32."""
    mean = jnp.mean(x, axis=-1, keepdims=True)
    var = jnp.mean(jnp.square(x - mean), axis=-1, keepdims=True)
    return (x - mean) * jax.lax.rsqrt(var + eps) * g + b


def _mha(x_q, x_kv, w, b, *, batch, num_heads, causal):
    """Multi-head attention for the whole batch in one call.

    x_q: (B*Sq, D), x_kv: (B*Skv, D) f32.
    w: (4, D, D) bf16 [q, k, v, out]; b: (4, 1, D) f32.
    Returns (B*Sq, D) f32 (after the output projection, before residual).
    """
    Nq, D = x_q.shape
    Nkv = x_kv.shape[0]
    B = batch
    Sq, Skv = Nq // B, Nkv // B
    H = num_heads
    dh = D // H
    scale = 1.0 / math.sqrt(dh)

    xq = x_q.astype(jnp.bfloat16)
    xkv = x_kv.astype(jnp.bfloat16)

    # Three separate lane-aligned projections (no (S, 3D) slab to lane-slice).
    q = jnp.dot(xq, w[0], preferred_element_type=jnp.float32) + b[0]
    k = jnp.dot(xkv, w[1], preferred_element_type=jnp.float32) + b[1]
    v = jnp.dot(xkv, w[2], preferred_element_type=jnp.float32) + b[2]

    allow = None
    if causal:
        row = jax.lax.broadcasted_iota(jnp.int32, (Sq, Skv), 0)
        col = jax.lax.broadcasted_iota(jnp.int32, (Sq, Skv), 1)
        allow = (row >= col)[None, :, :]

    # Per-head scores/softmax/context with batched (single batch dim) einsums.
    # TODO(synk): a fully head-batched (B*H, S, dh) dot_general would cut MXU
    #             pushes further but needs a 4-D transpose; kept per-head (H is
    #             small and static) on known-good 3-D einsum lowering paths.
    ctx_heads = []
    for h in range(H):
        sl = slice(h * dh, (h + 1) * dh)
        qh = q[:, sl].reshape(B, Sq, dh).astype(jnp.bfloat16)
        kh = k[:, sl].reshape(B, Skv, dh).astype(jnp.bfloat16)
        vh = v[:, sl].reshape(B, Skv, dh).astype(jnp.bfloat16)

        s = jnp.einsum("bqd,bkd->bqk", qh, kh,
                       preferred_element_type=jnp.float32) * scale
        if allow is not None:
            s = jnp.where(allow, s, -1e9)
        s = s - jnp.max(s, axis=-1, keepdims=True)
        p = jnp.exp(s)
        p = p * pl.reciprocal(jnp.sum(p, axis=-1, keepdims=True), approx=True)

        ctx_heads.append(jnp.einsum("bqk,bkd->bqd", p.astype(jnp.bfloat16), vh,
                                    preferred_element_type=jnp.float32))

    ctx = jnp.concatenate(ctx_heads, axis=-1).reshape(Nq, D)
    # Single output projection on the concatenated context.
    return (jnp.dot(ctx.astype(jnp.bfloat16), w[3],
                    preferred_element_type=jnp.float32) + b[3])


# ----------------------------------------------------------------------------
# Fused whole-stack kernels: grid over layers, activations resident in VMEM
# ----------------------------------------------------------------------------
def _encoder_stack_kernel(x_ref,
                          attn_w_ref, attn_b_ref, ln_g_ref, ln_b_ref,
                          w1_ref, b1_ref, w2_ref, b2_ref,
                          o_ref, act_ref, *, num_heads, eps):
    l = pl.program_id(0)
    B, S, D = x_ref.shape
    N = B * S

    @pl.when(l == 0)
    def _():
        act_ref[...] = x_ref[...].reshape(N, D)

    x = act_ref[...]
    ln_g = ln_g_ref[0]          # (2, 1, D)
    ln_b = ln_b_ref[0]

    # --- self-attention sublayer ------------------------------------------
    attn = _mha(x, x, attn_w_ref[0], attn_b_ref[0],
                batch=B, num_heads=num_heads, causal=False)
    x = _layer_norm(attn + x, ln_g[0], ln_b[0], eps)

    # --- feed-forward sublayer ----------------------------------------------
    h = _dense(x, w1_ref[0], b1_ref[0], activation="relu")
    ff = _dense(h, w2_ref[0], b2_ref[0])
    x = _layer_norm(ff + x, ln_g[1], ln_b[1], eps)

    act_ref[...] = x

    @pl.when(l == pl.num_programs(0) - 1)
    def _():
        o_ref[...] = x.reshape(B, S, D)


def _decoder_stack_kernel(y_ref, xenc_ref,
                          sa_w_ref, sa_b_ref, ca_w_ref, ca_b_ref,
                          ln_g_ref, ln_b_ref,
                          w1_ref, b1_ref, w2_ref, b2_ref,
                          o_ref, act_ref, *, num_heads, eps):
    l = pl.program_id(0)
    B, S, D = y_ref.shape
    N = B * S

    @pl.when(l == 0)
    def _():
        act_ref[...] = y_ref[...].reshape(N, D)

    y = act_ref[...]
    xe = xenc_ref[...].reshape(N, D)        # encoder output, VMEM-resident
    ln_g = ln_g_ref[0]          # (3, 1, D)
    ln_b = ln_b_ref[0]

    # --- masked (causal) self-attention sublayer ----------------------------
    attn = _mha(y, y, sa_w_ref[0], sa_b_ref[0],
                batch=B, num_heads=num_heads, causal=True)
    y = _layer_norm(attn + y, ln_g[0], ln_b[0], eps)

    # --- cross-attention sublayer (Q from decoder, K/V from encoder) --------
    attn = _mha(y, xe, ca_w_ref[0], ca_b_ref[0],
                batch=B, num_heads=num_heads, causal=False)
    y = _layer_norm(attn + y, ln_g[1], ln_b[1], eps)

    # --- feed-forward sublayer ----------------------------------------------
    h = _dense(y, w1_ref[0], b1_ref[0], activation="relu")
    ff = _dense(h, w2_ref[0], b2_ref[0])
    y = _layer_norm(ff + y, ln_g[2], ln_b[2], eps)

    act_ref[...] = y

    @pl.when(l == pl.num_programs(0) - 1)
    def _():
        o_ref[...] = y.reshape(B, S, D)


# ----------------------------------------------------------------------------
# Tiled final projection kernel (M, N, K grid; K-axis accumulator)
# ----------------------------------------------------------------------------
def _matmul_bias_kernel(x_ref, w_ref, b_ref, o_ref, acc_ref):
    @pl.when(pl.program_id(2) == 0)
    def _():
        acc_ref[...] = jnp.zeros_like(acc_ref)

    w = w_ref[...]
    acc_ref[...] += jnp.dot(x_ref[...].astype(w.dtype), w,
                            preferred_element_type=jnp.float32)

    @pl.when(pl.program_id(2) == pl.num_programs(2) - 1)
    def _():
        o_ref[...] = acc_ref[...] + b_ref[...]


# ----------------------------------------------------------------------------
# Wrappers
# ----------------------------------------------------------------------------
def _row(v):
    return v.reshape(1, -1)


def _layer_spec(arr):
    """BlockSpec selecting one layer's slab of an (L, ...) stacked array."""
    zeros = (0,) * (arr.ndim - 1)

    def idx(l):
        return (l,) + zeros

    return pl.BlockSpec((1,) + arr.shape[1:], idx)


def encoder_stack(x, p, num_heads):
    B, S, D = x.shape
    L = p["attn_w"].shape[0]
    F = p["ffn_w1"].shape[-1]
    N = B * S

    weights = [p["attn_w"], p["attn_b"], p["ln_g"], p["ln_b"],
               p["ffn_w1"], p["ffn_b1"], p["ffn_w2"], p["ffn_b2"]]
    act_spec = pl.BlockSpec((B, S, D), lambda l: (0, 0, 0))

    flops_layer = (2 * N * D * D * 4          # q/k/v/out projections
                   + 4 * B * S * S * D        # scores + context
                   + 2 * N * D * F * 2)       # ffn
    cost = pl.CostEstimate(
        flops=L * flops_layer,
        transcendentals=L * num_heads * B * S * S,
        bytes_accessed=(2 * x.size * 4
                        + sum(int(w.size) * w.dtype.itemsize for w in weights)))

    return pl.pallas_call(
        functools.partial(_encoder_stack_kernel, num_heads=num_heads, eps=1e-5),
        out_shape=jax.ShapeDtypeStruct((B, S, D), jnp.float32),
        grid=(L,),
        in_specs=[act_spec] + [_layer_spec(w) for w in weights],
        out_specs=act_spec,
        scratch_shapes=[pltpu.VMEM((N, D), jnp.float32)],
        compiler_params=pltpu.CompilerParams(dimension_semantics=("arbitrary",)),
        cost_estimate=cost,
    )(x, *weights)


def decoder_stack(x_enc, y, p, num_heads):
    B, S, D = y.shape
    L = p["sa_w"].shape[0]
    F = p["ffn_w1"].shape[-1]
    N = B * S

    weights = [p["sa_w"], p["sa_b"], p["ca_w"], p["ca_b"],
               p["ln_g"], p["ln_b"],
               p["ffn_w1"], p["ffn_b1"], p["ffn_w2"], p["ffn_b2"]]
    act_spec = pl.BlockSpec((B, S, D), lambda l: (0, 0, 0))

    flops_layer = (2 * N * D * D * 8          # self + cross q/k/v/out projections
                   + 2 * 4 * B * S * S * D    # two attention score/context passes
                   + 2 * N * D * F * 2)       # ffn
    cost = pl.CostEstimate(
        flops=L * flops_layer,
        transcendentals=L * 2 * num_heads * B * S * S,
        bytes_accessed=(3 * y.size * 4
                        + sum(int(w.size) * w.dtype.itemsize for w in weights)))

    return pl.pallas_call(
        functools.partial(_decoder_stack_kernel, num_heads=num_heads, eps=1e-5),
        out_shape=jax.ShapeDtypeStruct((B, S, D), jnp.float32),
        grid=(L,),
        in_specs=[act_spec, act_spec] + [_layer_spec(w) for w in weights],
        out_specs=act_spec,
        scratch_shapes=[pltpu.VMEM((N, D), jnp.float32)],
        compiler_params=pltpu.CompilerParams(dimension_semantics=("arbitrary",)),
        cost_estimate=cost,
    )(y, x_enc, *weights)


def linear_padded(x, w, b, *, tm=256, tn=256, tk=512):
    """Tiled GEMM + bias.  x: (M, K) f32, w: (K, N) bf16, b: (N,) f32.

    N is padded up to a multiple of 128 (lane-dense unmasked stores); the
    padding is sliced off before returning.
    """
    M, K = x.shape
    N = w.shape[1]
    n_pad = (-N) % 128
    if n_pad:
        w = jnp.pad(w, ((0, 0), (0, n_pad)))
        b = jnp.pad(b, (0, n_pad))
    Np = N + n_pad

    tm = min(tm, M)
    tn = min(tn, Np)
    tk = min(tk, K)
    assert M % tm == 0 and Np % tn == 0 and K % tk == 0

    flops = 2 * M * Np * K
    bytes_accessed = (x.size * x.dtype.itemsize + w.size * w.dtype.itemsize
                      + 4 * (M * Np + Np))

    out = pl.pallas_call(
        _matmul_bias_kernel,
        out_shape=jax.ShapeDtypeStruct((M, Np), jnp.float32),
        grid=(M // tm, Np // tn, K // tk),
        in_specs=[pl.BlockSpec((tm, tk), lambda i, j, k: (i, k)),
                  pl.BlockSpec((tk, tn), lambda i, j, k: (k, j)),
                  pl.BlockSpec((1, tn), lambda i, j, k: (0, j))],
        out_specs=pl.BlockSpec((tm, tn), lambda i, j, k: (i, j)),
        scratch_shapes=[pltpu.VMEM((tm, tn), jnp.float32)],
        compiler_params=pltpu.CompilerParams(
            dimension_semantics=("parallel", "parallel", "arbitrary")),
        cost_estimate=pl.CostEstimate(flops=flops, transcendentals=0,
                                      bytes_accessed=bytes_accessed),
    )(x, w, _row(b))
    return out[:, :N]


# ----------------------------------------------------------------------------
# Transformer forward (glue = embedding gather / positional encoding)
# ----------------------------------------------------------------------------
def positional_encoding(max_len, d_model):
    even_i = jnp.arange(0, d_model, 2, dtype=jnp.float32)
    denom = jnp.power(10000.0, even_i / d_model)
    pos = jnp.arange(max_len, dtype=jnp.float32)[:, None]
    even_pe = jnp.sin(pos / denom)
    odd_pe = jnp.cos(pos / denom)
    return jnp.stack([even_pe, odd_pe], axis=2).reshape(max_len, d_model)


@functools.partial(jax.jit, static_argnames=("num_heads",))
def transformer_forward(params, x_tokens, y_tokens, *, num_heads):
    B, S = x_tokens.shape
    D = params["enc_emb"].shape[1]
    pe = positional_encoding(S, D)

    # Encoder stack (one fused pallas_call over all layers)
    x = jnp.take(params["enc_emb"], x_tokens, axis=0) + pe[None, :, :]
    x = encoder_stack(x, params["encoder"], num_heads)

    # Decoder stack (causal self-attention mask generated inside the kernel)
    y = jnp.take(params["dec_emb"], y_tokens, axis=0) + pe[None, :, :]
    y = decoder_stack(x, y, params["decoder"], num_heads)

    # Final projection to kor vocab (N padded to 128 lanes inside the wrapper)
    out = linear_padded(y.reshape(B * S, D), params["final_w"], params["final_b"])
    V = params["final_b"].shape[0]
    return out.reshape(B, S, V)


# ----------------------------------------------------------------------------
# Deterministic parameter init (matmul weights bf16, stacked over layers)
# ----------------------------------------------------------------------------
def init_params(key, d_model, ffn_hidden, num_layers, eng_vocab, kor_vocab):
    keys = iter(jax.random.split(key, 64))
    D, F, L = d_model, ffn_hidden, num_layers

    def w32(shape, scale=0.05):
        return scale * jax.random.normal(next(keys), shape, dtype=jnp.float32)

    def wbf(shape):
        return w32(shape).astype(jnp.bfloat16)

    def zeros(shape):
        return jnp.zeros(shape, dtype=jnp.float32)

    def ones(shape):
        return jnp.ones(shape, dtype=jnp.float32)

    encoder = {
        "attn_w": wbf((L, 4, D, D)),      # [q, k, v, out]
        "attn_b": zeros((L, 4, 1, D)),
        "ln_g": ones((L, 2, 1, D)),       # [norm1, norm2]
        "ln_b": zeros((L, 2, 1, D)),
        "ffn_w1": wbf((L, D, F)),
        "ffn_b1": zeros((L, 1, F)),
        "ffn_w2": wbf((L, F, D)),
        "ffn_b2": zeros((L, 1, D)),
    }
    decoder = {
        "sa_w": wbf((L, 4, D, D)),        # masked self-attn [q, k, v, out]
        "sa_b": zeros((L, 4, 1, D)),
        "ca_w": wbf((L, 4, D, D)),        # cross-attn [q, k, v, out]
        "ca_b": zeros((L, 4, 1, D)),
        "ln_g": ones((L, 3, 1, D)),       # [norm1, norm2, norm3]
        "ln_b": zeros((L, 3, 1, D)),
        "ffn_w1": wbf((L, D, F)),
        "ffn_b1": zeros((L, 1, F)),
        "ffn_w2": wbf((L, F, D)),
        "ffn_b2": zeros((L, 1, D)),
    }

    return {
        "enc_emb": w32((eng_vocab, d_model)),
        "dec_emb": w32((kor_vocab, d_model)),
        "encoder": encoder,
        "decoder": decoder,
        "final_w": wbf((d_model, kor_vocab)),
        "final_b": zeros((kor_vocab,)),
    }


# ----------------------------------------------------------------------------
# Main
# ----------------------------------------------------------------------------
if __name__ == "__main__":
    d_model = 32
    ffn_hidden = 64
    num_heads = 4
    num_layers = 2
    max_seq = 8
    eng_vocab = 40
    kor_vocab = 48
    batch = 2

    key = jax.random.PRNGKey(0)
    k_par, k_x, k_y = jax.random.split(key, 3)

    params = init_params(k_par, d_model, ffn_hidden, num_layers,
                         eng_vocab, kor_vocab)

    x_tokens = jax.random.randint(k_x, (batch, max_seq), 0, eng_vocab, dtype=jnp.int32)
    y_tokens = jax.random.randint(k_y, (batch, max_seq), 0, kor_vocab, dtype=jnp.int32)

    out = transformer_forward(params, x_tokens, y_tokens, num_heads=num_heads)
    out = jax.block_until_ready(out)

    assert out.shape == (batch, max_seq, kor_vocab), out.shape
    assert bool(jnp.all(jnp.isfinite(out)))
    print("KERNEL_OK")
</pallas_src>

<mosaic_0001>
module attributes {stable_mosaic.version = 11 : i64} {
  func.func @_encoder_stack_kernel(%arg0: i32, %arg1: memref<2x8x32xf32, #tpu.memory_space<vmem>>, %arg2: memref<1x4x32x32xbf16, #tpu.memory_space<vmem>>, %arg3: memref<1x4x1x32xf32, #tpu.memory_space<vmem>>, %arg4: memref<1x2x1x32xf32, #tpu.memory_space<vmem>>, %arg5: memref<1x2x1x32xf32, #tpu.memory_space<vmem>>, %arg6: memref<1x32x64xbf16, #tpu.memory_space<vmem>>, %arg7: memref<1x1x64xf32, #tpu.memory_space<vmem>>, %arg8: memref<1x64x32xbf16, #tpu.memory_space<vmem>>, %arg9: memref<1x1x32xf32, #tpu.memory_space<vmem>>, %arg10: memref<2x8x32xf32, #tpu.memory_space<vmem>>, %arg11: memref<16x32xf32, #tpu.memory_space<vmem>>) attributes {dimension_semantics = [#tpu.dimension_semantics<arbitrary>], iteration_bounds = array<i64: 2>, scalar_prefetch = 0 : i64, scratch_operands = 1 : i64, tpu.core_type = #tpu.core_type<tc>, window_params = [{pipeline_mode = #tpu.pipeline_mode<synchronous>, transform_indices = @transform_0, window_bounds = array<i64: 2, 8, 32>}, {transform_indices = @transform_1, window_bounds = array<i64: 1, 4, 32, 32>}, {transform_indices = @transform_2, window_bounds = array<i64: 1, 4, 1, 32>}, {transform_indices = @transform_3, window_bounds = array<i64: 1, 2, 1, 32>}, {transform_indices = @transform_4, window_bounds = array<i64: 1, 2, 1, 32>}, {transform_indices = @transform_5, window_bounds = array<i64: 1, 32, 64>}, {transform_indices = @transform_6, window_bounds = array<i64: 1, 1, 64>}, {transform_indices = @transform_7, window_bounds = array<i64: 1, 64, 32>}, {transform_indices = @transform_8, window_bounds = array<i64: 1, 1, 32>}, {pipeline_mode = #tpu.pipeline_mode<synchronous>, transform_indices = @transform_9, window_bounds = array<i64: 2, 8, 32>}]} {
    %c0_i32 = arith.constant 0 : i32
    %0 = arith.cmpi eq, %arg0, %c0_i32 : i32
    %1 = arith.extui %0 : i1 to i32
    %c0_i32_0 = arith.constant 0 : i32
    %2 = arith.cmpi ne, %1, %c0_i32_0 : i32
    scf.if %2 {
      %c0_69 = arith.constant 0 : index
      %c0_70 = arith.constant 0 : index
      %c0_71 = arith.constant 0 : index
      %217 = vector.load %arg1[%c0_69, %c0_70, %c0_71] : memref<2x8x32xf32, #tpu.memory_space<vmem>>, vector<2x8x32xf32>
      %218 = vector.shape_cast %217 : vector<2x8x32xf32> to vector<16x32xf32>
      %c0_72 = arith.constant 0 : index
      %c0_73 = arith.constant 0 : index
      %219 = vector.load %arg11[%c0_72, %c0_73] : memref<16x32xf32, #tpu.memory_space<vmem>>, vector<16x32xf32>
      tpu.vector_store %arg11[%c0_72, %c0_73], %218 {strides = array<i32>} : memref<16x32xf32, #tpu.memory_space<vmem>>, vector<16x32xf32>,
    } else {
    }
    %c0 = arith.constant 0 : index
    %c0_1 = arith.constant 0 : index
    %3 = vector.load %arg11[%c0, %c0_1] : memref<16x32xf32, #tpu.memory_space<vmem>>, vector<16x32xf32>
    %c0_2 = arith.constant 0 : index
    %c0_3 = arith.constant 0 : index
    %c0_4 = arith.constant 0 : index
    %c0_5 = arith.constant 0 : index
    %4 = vector.load %arg4[%c0_2, %c0_3, %c0_4, %c0_5] : memref<1x2x1x32xf32, #tpu.memory_space<vmem>>, vector<1x2x1x32xf32>
    %5 = vector.shape_cast %4 : vector<1x2x1x32xf32> to vector<2x1x32xf32>
    %c0_6 = arith.constant 0 : index
    %c0_7 = arith.constant 0 : index
    %c0_8 = arith.constant 0 : index
    %c0_9 = arith.constant 0 : index
    %6 = vector.load %arg5[%c0_6, %c0_7, %c0_8, %c0_9] : memref<1x2x1x32xf32, #tpu.memory_space<vmem>>, vector<1x2x1x32xf32>
    %7 = vector.shape_cast %6 : vector<1x2x1x32xf32> to vector<2x1x32xf32>
    %c0_10 = arith.constant 0 : index
    %c0_11 = arith.constant 0 : index
    %c0_12 = arith.constant 0 : index
    %c0_13 = arith.constant 0 : index
    %8 = vector.load %arg2[%c0_10, %c0_11, %c0_12, %c0_13] : memref<1x4x32x32xbf16, #tpu.memory_space<vmem>>, vector<1x4x32x32xbf16>
    %9 = vector.shape_cast %8 : vector<1x4x32x32xbf16> to vector<4x32x32xbf16>
    %c0_14 = arith.constant 0 : index
    %c0_15 = arith.constant 0 : index
    %c0_16 = arith.constant 0 : index
    %c0_17 = arith.constant 0 : index
    %10 = vector.load %arg3[%c0_14, %c0_15, %c0_16, %c0_17] : memref<1x4x1x32xf32, #tpu.memory_space<vmem>>, vector<1x4x1x32xf32>
    %11 = vector.shape_cast %10 : vector<1x4x1x32xf32> to vector<4x1x32xf32>
    %12 = arith.truncf %3 : vector<16x32xf32> to vector<16x32xbf16>
    %13 = arith.truncf %3 : vector<16x32xf32> to vector<16x32xbf16>
    %14 = vector.extract_strided_slice %9 {offsets = [0, 0, 0], sizes = [1, 32, 32], strides = [1, 1, 1]} : vector<4x32x32xbf16> to vector<1x32x32xbf16>
    %15 = vector.shape_cast %14 : vector<1x32x32xbf16> to vector<32x32xbf16>
    %cst = arith.constant dense<0.000000e+00> : vector<16x32xf32>
    %16 = tpu.matmul %12, %15, %cst {dimension_numbers = #tpu.dot_dimension_numbers<[1], [0], [0], [1], [0, 0, 1, 1], [], []>} : vector<16x32xbf16>, vector<32x32xbf16>, vector<16x32xf32> -> vector<16x32xf32>
    %17 = vector.extract_strided_slice %11 {offsets = [0, 0, 0], sizes = [1, 1, 32], strides = [1, 1, 1]} : vector<4x1x32xf32> to vector<1x1x32xf32>
    %18 = vector.shape_cast %17 : vector<1x1x32xf32> to vector<1x32xf32>
    %19 = vector.broadcast %18 : vector<1x32xf32> to vector<16x32xf32>
    %20 = arith.addf %16, %19 : vector<16x32xf32>
    %21 = vector.extract_strided_slice %9 {offsets = [1, 0, 0], sizes = [1, 32, 32], strides = [1, 1, 1]} : vector<4x32x32xbf16> to vector<1x32x32xbf16>
    %22 = vector.shape_cast %21 : vector<1x32x32xbf16> to vector<32x32xbf16>
    %cst_18 = arith.constant dense<0.000000e+00> : vector<16x32xf32>
    %23 = tpu.matmul %13, %22, %cst_18 {dimension_numbers = #tpu.dot_dimension_numbers<[1], [0], [0], [1], [0, 0, 1, 1], [], []>} : vector<16x32xbf16>, vector<32x32xbf16>, vector<16x32xf32> -> vector<16x32xf32>
    %24 = vector.extract_strided_slice %11 {offsets = [1, 0, 0], sizes = [1, 1, 32], strides = [1, 1, 1]} : vector<4x1x32xf32> to vector<1x1x32xf32>
    %25 = vector.shape_cast %24 : vector<1x1x32xf32> to vector<1x32xf32>
    %26 = vector.broadcast %25 : vector<1x32xf32> to vector<16x32xf32>
    %27 = arith.addf %23, %26 : vector<16x32xf32>
    %28 = vector.extract_strided_slice %9 {offsets = [2, 0, 0], sizes = [1, 32, 32], strides = [1, 1, 1]} : vector<4x32x32xbf16> to vector<1x32x32xbf16>
    %29 = vector.shape_cast %28 : vector<1x32x32xbf16> to vector<32x32xbf16>
    %cst_19 = arith.constant dense<0.000000e+00> : vector<16x32xf32>
    %30 = tpu.matmul %13, %29, %cst_19 {dimension_numbers = #tpu.dot_dimension_numbers<[1], [0], [0], [1], [0, 0, 1, 1], [], []>} : vector<16x32xbf16>, vector<32x32xbf16>, vector<16x32xf32> -> vector<16x32xf32>
    %31 = vector.extract_strided_slice %11 {offsets = [2, 0, 0], sizes = [1, 1, 32], strides = [1, 1, 1]} : vector<4x1x32xf32> to vector<1x1x32xf32>
    %32 = vector.shape_cast %31 : vector<1x1x32xf32> to vector<1x32xf32>
    %33 = vector.broadcast %32 : vector<1x32xf32> to vector<16x32xf32>
    %34 = arith.addf %30, %33 : vector<16x32xf32>
    %35 = vector.extract_strided_slice %20 {offsets = [0, 0], sizes = [16, 8], strides = [1, 1]} : vector<16x32xf32> to vector<16x8xf32>
    %36 = vector.shape_cast %35 : vector<16x8xf32> to vector<2x8x8xf32>
    %37 = arith.truncf %36 : vector<2x8x8xf32> to vector<2x8x8xbf16>
    %38 = vector.extract_strided_slice %27 {offsets = [0, 0], sizes = [16, 8], strides = [1, 1]} : vector<16x32xf32> to vector<16x8xf32>
    %39 = vector.shape_cast %38 : vector<16x8xf32> to vector<2x8x8xf32>
    %40 = arith.truncf %39 : vector<2x8x8xf32> to vector<2x8x8xbf16>
    %41 = vector.extract_strided_slice %34 {offsets = [0, 0], sizes = [16, 8], strides = [1, 1]} : vector<16x32xf32> to vector<16x8xf32>
    %42 = vector.shape_cast %41 : vector<16x8xf32> to vector<2x8x8xf32>
    %43 = arith.truncf %42 : vector<2x8x8xf32> to vector<2x8x8xbf16>
    "tpu.trace_start"() <{level = 10 : i32, message = "bqd,bkd->bqk"}> : () -> ()
    %cst_20 = arith.constant dense<0.000000e+00> : vector<2x8x8xf32>
    %44 = tpu.matmul %37, %40, %cst_20 {dimension_numbers = #tpu.dot_dimension_numbers<[2], [2], [1], [1], [0, 0, 0, 1, 1, 1], [0], [0]>} : vector<2x8x8xbf16>, vector<2x8x8xbf16>, vector<2x8x8xf32> -> vector<2x8x8xf32>
    "tpu.trace_stop"() : () -> ()
    %cst_21 = arith.constant 0.353553385 : f32
    %45 = vector.broadcast %cst_21 : f32 to vector<2x8x8xf32>
    %46 = arith.mulf %44, %45 : vector<2x8x8xf32>
    %cst_22 = arith.constant dense<0xFF800000> : vector<2x8xf32>
    %47 = vector.multi_reduction <maximumf>, %46, %cst_22 [2] : vector<2x8x8xf32> to vector<2x8xf32>
    %48 = vector.shape_cast %47 : vector<2x8xf32> to vector<2x8x1xf32>
    %49 = vector.broadcast %48 : vector<2x8x1xf32> to vector<2x8x8xf32>
    %50 = arith.subf %46, %49 : vector<2x8x8xf32>
    %51 = math.exp %50 : vector<2x8x8xf32>
    %cst_23 = arith.constant dense<0.000000e+00> : vector<2x8xf32>
    %52 = vector.multi_reduction <add>, %51, %cst_23 [2] : vector<2x8x8xf32> to vector<2x8xf32>
    %53 = vector.shape_cast %52 : vector<2x8xf32> to vector<2x8x1xf32>
    %54 = tpu.reciprocal %53 {approx = true} : vector<2x8x1xf32> -> vector<2x8x1xf32>
    %55 = vector.broadcast %54 : vector<2x8x1xf32> to vector<2x8x8xf32>
    %56 = arith.mulf %51, %55 : vector<2x8x8xf32>
    %57 = arith.truncf %56 : vector<2x8x8xf32> to vector<2x8x8xbf16>
    "tpu.trace_start"() <{level = 10 : i32, message = "bqk,bkd->bqd"}> : () -> ()
    %cst_24 = arith.constant dense<0.000000e+00> : vector<2x8x8xf32>
    %58 = tpu.matmul %57, %43, %cst_24 {dimension_numbers = #tpu.dot_dimension_numbers<[2], [1], [1], [2], [0, 0, 0, 1, 1, 2], [0], [0]>} : vector<2x8x8xbf16>, vector<2x8x8xbf16>, vector<2x8x8xf32> -> vector<2x8x8xf32>
    "tpu.trace_stop"() : () -> ()
    %59 = vector.extract_strided_slice %20 {offsets = [0, 8], sizes = [16, 8], strides = [1, 1]} : vector<16x32xf32> to vector<16x8xf32>
    %60 = vector.shape_cast %59 : vector<16x8xf32> to vector<2x8x8xf32>
    %61 = arith.truncf %60 : vector<2x8x8xf32> to vector<2x8x8xbf16>
    %62 = vector.extract_strided_slice %27 {offsets = [0, 8], sizes = [16, 8], strides = [1, 1]} : vector<16x32xf32> to vector<16x8xf32>
    %63 = vector.shape_cast %62 : vector<16x8xf32> to vector<2x8x8xf32>
    %64 = arith.truncf %63 : vector<2x8x8xf32> to vector<2x8x8xbf16>
    %65 = vector.extract_strided_slice %34 {offsets = [0, 8], sizes = [16, 8], strides = [1, 1]} : vector<16x32xf32> to vector<16x8xf32>
    %66 = vector.shape_cast %65 : vector<16x8xf32> to vector<2x8x8xf32>
    %67 = arith.truncf %66 : vector<2x8x8xf32> to vector<2x8x8xbf16>
    "tpu.trace_start"() <{level = 10 : i32, message = "bqd,bkd->bqk"}> : () -> ()
    %cst_25 = arith.constant dense<0.000000e+00> : vector<2x8x8xf32>
    %68 = tpu.matmul %61, %64, %cst_25 {dimension_numbers = #tpu.dot_dimension_numbers<[2], [2], [1], [1], [0, 0, 0, 1, 1, 1], [0], [0]>} : vector<2x8x8xbf16>, vector<2x8x8xbf16>, vector<2x8x8xf32> -> vector<2x8x8xf32>
    "tpu.trace_stop"() : () -> ()
    %cst_26 = arith.constant 0.353553385 : f32
    %69 = vector.broadcast %cst_26 : f32 to vector<2x8x8xf32>
    %70 = arith.mulf %68, %69 : vector<2x8x8xf32>
    %cst_27 = arith.constant dense<0xFF800000> : vector<2x8xf32>
    %71 = vector.multi_reduction <maximumf>, %70, %cst_27 [2] : vector<2x8x8xf32> to vector<2x8xf32>
    %72 = vector.shape_cast %71 : vector<2x8xf32> to vector<2x8x1xf32>
    %73 = vector.broadcast %72 : vector<2x8x1xf32> to vector<2x8x8xf32>
    %74 = arith.subf %70, %73 : vector<2x8x8xf32>
    %75 = math.exp %74 : vector<2x8x8xf32>
    %cst_28 = arith.constant dense<0.000000e+00> : vector<2x8xf32>
    %76 = vector.multi_reduction <add>, %75, %cst_28 [2] : vector<2x8x8xf32> to vector<2x8xf32>
    %77 = vector.shape_cast %76 : vector<2x8xf32> to vector<2x8x1xf32>
    %78 = tpu.reciprocal %77 {approx = true} : vector<2x8x1xf32> -> vector<2x8x1xf32>
    %79 = vector.broadcast %78 : vector<2x8x1xf32> to vector<2x8x8xf32>
    %80 = arith.mulf %75, %79 : vector<2x8x8xf32>
    %81 = arith.truncf %80 : vector<2x8x8xf32> to vector<2x8x8xbf16>
    "tpu.trace_start"() <{level = 10 : i32, message = "bqk,bkd->bqd"}> : () -> ()
    %cst_29 = arith.constant dense<0.000000e+00> : vector<2x8x8xf32>
    %82 = tpu.matmul %81, %67, %cst_29 {dimension_numbers = #tpu.dot_dimension_numbers<[2], [1], [1], [2], [0, 0, 0, 1, 1, 2], [0], [0]>} : vector<2x8x8xbf16>, vector<2x8x8xbf16>, vector<2x8x8xf32> -> vector<2x8x8xf32>
    "tpu.trace_stop"() : () -> ()
    %83 = vector.extract_strided_slice %20 {offsets = [0, 16], sizes = [16, 8], strides = [1, 1]} : vector<16x32xf32> to vector<16x8xf32>
    %84 = vector.shape_cast %83 : vector<16x8xf32> to vector<2x8x8xf32>
    %85 = arith.truncf %84 : vector<2x8x8xf32> to vector<2x8x8xbf16>
    %86 = vector.extract_strided_slice %27 {offsets = [0, 16], sizes = [16, 8], strides = [1, 1]} : vector<16x32xf32> to vector<16x8xf32>
    %87 = vector.shape_cast %86 : vector<16x8xf32> to vector<2x8x8xf32>
    %88 = arith.truncf %87 : vector<2x8x8xf32> to vector<2x8x8xbf16>
    %89 = vector.extract_strided_slice %34 {offsets = [0, 16], sizes = [16, 8], strides = [1, 1]} : vector<16x32xf32> to vector<16x8xf32>
    %90 = vector.shape_cast %89 : vector<16x8xf32> to vector<2x8x8xf32>
    %91 = arith.truncf %90 : vector<2x8x8xf32> to vector<2x8x8xbf16>
    "tpu.trace_start"() <{level = 10 : i32, message = "bqd,bkd->bqk"}> : () -> ()
    %cst_30 = arith.constant dense<0.000000e+00> : vector<2x8x8xf32>
    %92 = tpu.matmul %85, %88, %cst_30 {dimension_numbers = #tpu.dot_dimension_numbers<[2], [2], [1], [1], [0, 0, 0, 1, 1, 1], [0], [0]>} : vector<2x8x8xbf16>, vector<2x8x8xbf16>, vector<2x8x8xf32> -> vector<2x8x8xf32>
    "tpu.trace_stop"() : () -> ()
    %cst_31 = arith.constant 0.353553385 : f32
    %93 = vector.broadcast %cst_31 : f32 to vector<2x8x8xf32>
    %94 = arith.mulf %92, %93 : vector<2x8x8xf32>
    %cst_32 = arith.constant dense<0xFF800000> : vector<2x8xf32>
    %95 = vector.multi_reduction <maximumf>, %94, %cst_32 [2] : vector<2x8x8xf32> to vector<2x8xf32>
    %96 = vector.shape_cast %95 : vector<2x8xf32> to vector<2x8x1xf32>
    %97 = vector.broadcast %96 : vector<2x8x1xf32> to vector<2x8x8xf32>
    %98 = arith.subf %94, %97 : vector<2x8x8xf32>
    %99 = math.exp %98 : vector<2x8x8xf32>
    %cst_33 = arith.constant dense<0.000000e+00> : vector<2x8xf32>
    %100 = vector.multi_reduction <add>, %99, %cst_33 [2] : vector<2x8x8xf32> to vector<2x8xf32>
    %101 = vector.shape_cast %100 : vector<2x8xf32> to vector<2x8x1xf32>
    %102 = tpu.reciprocal %101 {approx = true} : vector<2x8x1xf32> -> vector<2x8x1xf32>
    %103 = vector.broadcast %102 : vector<2x8x1xf32> to vector<2x8x8xf32>
    %104 = arith.mulf %99, %103 : vector<2x8x8xf32>
    %105 = arith.truncf %104 : vector<2x8x8xf32> to vector<2x8x8xbf16>
    "tpu.trace_start"() <{level = 10 : i32, message = "bqk,bkd->bqd"}> : () -> ()
    %cst_34 = arith.constant dense<0.000000e+00> : vector<2x8x8xf32>
    %106 = tpu.matmul %105, %91, %cst_34 {dimension_numbers = #tpu.dot_dimension_numbers<[2], [1], [1], [2], [0, 0, 0, 1, 1, 2], [0], [0]>} : vector<2x8x8xbf16>, vector<2x8x8xbf16>, vector<2x8x8xf32> -> vector<2x8x8xf32>
    "tpu.trace_stop"() : () -> ()
    %107 = vector.extract_strided_slice %20 {offsets = [0, 24], sizes = [16, 8], strides = [1, 1]} : vector<16x32xf32> to vector<16x8xf32>
    %108 = vector.shape_cast %107 : vector<16x8xf32> to vector<2x8x8xf32>
    %109 = arith.truncf %108 : vector<2x8x8xf32> to vector<2x8x8xbf16>
    %110 = vector.extract_strided_slice %27 {offsets = [0, 24], sizes = [16, 8], strides = [1, 1]} : vector<16x32xf32> to vector<16x8xf32>
    %111 = vector.shape_cast %110 : vector<16x8xf32> to vector<2x8x8xf32>
    %112 = arith.truncf %111 : vector<2x8x8xf32> to vector<2x8x8xbf16>
    %113 = vector.extract_strided_slice %34 {offsets = [0, 24], sizes = [16, 8], strides = [1, 1]} : vector<16x32xf32> to vector<16x8xf32>
    %114 = vector.shape_cast %113 : vector<16x8xf32> to vector<2x8x8xf32>
    %115 = arith.truncf %114 : vector<2x8x8xf32> to vector<2x8x8xbf16>
    "tpu.trace_start"() <{level = 10 : i32, message = "bqd,bkd->bqk"}> : () -> ()
    %cst_35 = arith.constant dense<0.000000e+00> : vector<2x8x8xf32>
    %116 = tpu.matmul %109, %112, %cst_35 {dimension_numbers = #tpu.dot_dimension_numbers<[2], [2], [1], [1], [0, 0, 0, 1, 1, 1], [0], [0]>} : vector<2x8x8xbf16>, vector<2x8x8xbf16>, vector<2x8x8xf32> -> vector<2x8x8xf32>
    "tpu.trace_stop"() : () -> ()
    %cst_36 = arith.constant 0.353553385 : f32
    %117 = vector.broadcast %cst_36 : f32 to vector<2x8x8xf32>
    %118 = arith.mulf %116, %117 : vector<2x8x8xf32>
    %cst_37 = arith.constant dense<0xFF800000> : vector<2x8xf32>
    %119 = vector.multi_reduction <maximumf>, %118, %cst_37 [2] : vector<2x8x8xf32> to vector<2x8xf32>
    %120 = vector.shape_cast %119 : vector<2x8xf32> to vector<2x8x1xf32>
    %121 = vector.broadcast %120 : vector<2x8x1xf32> to vector<2x8x8xf32>
    %122 = arith.subf %118, %121 : vector<2x8x8xf32>
    %123 = math.exp %122 : vector<2x8x8xf32>
    %cst_38 = arith.constant dense<0.000000e+00> : vector<2x8xf32>
    %124 = vector.multi_reduction <add>, %123, %cst_38 [2] : vector<2x8x8xf32> to vector<2x8xf32>
    %125 = vector.shape_cast %124 : vector<2x8xf32> to vector<2x8x1xf32>
    %126 = tpu.reciprocal %125 {approx = true} : vector<2x8x1xf32> -> vector<2x8x1xf32>
    %127 = vector.broadcast %126 : vector<2x8x1xf32> to vector<2x8x8xf32>
    %128 = arith.mulf %123, %127 : vector<2x8x8xf32>
    %129 = arith.truncf %128 : vector<2x8x8xf32> to vector<2x8x8xbf16>
    "tpu.trace_start"() <{level = 10 : i32, message = "bqk,bkd->bqd"}> : () -> ()
    %cst_39 = arith.constant dense<0.000000e+00> : vector<2x8x8xf32>
    %130 = tpu.matmul %129, %115, %cst_39 {dimension_numbers = #tpu.dot_dimension_numbers<[2], [1], [1], [2], [0, 0, 0, 1, 1, 2], [0], [0]>} : vector<2x8x8xbf16>, vector<2x8x8xbf16>, vector<2x8x8xf32> -> vector<2x8x8xf32>
    "tpu.trace_stop"() : () -> ()
    %131 = tpu.concatenate %58, %82, %106, %130 in 2 : vector<2x8x8xf32>, vector<2x8x8xf32>, vector<2x8x8xf32>, vector<2x8x8xf32> -> vector<2x8x32xf32>
    %132 = vector.shape_cast %131 : vector<2x8x32xf32> to vector<16x32xf32>
    %133 = arith.truncf %132 : vector<16x32xf32> to vector<16x32xbf16>
    %134 = vector.extract_strided_slice %9 {offsets = [3, 0, 0], sizes = [1, 32, 32], strides = [1, 1, 1]} : vector<4x32x32xbf16> to vector<1x32x32xbf16>
    %135 = vector.shape_cast %134 : vector<1x32x32xbf16> to vector<32x32xbf16>
    %cst_40 = arith.constant dense<0.000000e+00> : vector<16x32xf32>
    %136 = tpu.matmul %133, %135, %cst_40 {dimension_numbers = #tpu.dot_dimension_numbers<[1], [0], [0], [1], [0, 0, 1, 1], [], []>} : vector<16x32xbf16>, vector<32x32xbf16>, vector<16x32xf32> -> vector<16x32xf32>
    %137 = vector.extract_strided_slice %11 {offsets = [3, 0, 0], sizes = [1, 1, 32], strides = [1, 1, 1]} : vector<4x1x32xf32> to vector<1x1x32xf32>
    %138 = vector.shape_cast %137 : vector<1x1x32xf32> to vector<1x32xf32>
    %139 = vector.broadcast %138 : vector<1x32xf32> to vector<16x32xf32>
    %140 = arith.addf %136, %139 : vector<16x32xf32>
    %141 = arith.addf %140, %3 : vector<16x32xf32>
    %142 = vector.extract_strided_slice %5 {offsets = [0, 0, 0], sizes = [1, 1, 32], strides = [1, 1, 1]} : vector<2x1x32xf32> to vector<1x1x32xf32>
    %143 = vector.shape_cast %142 : vector<1x1x32xf32> to vector<1x32xf32>
    %144 = vector.extract_strided_slice %7 {offsets = [0, 0, 0], sizes = [1, 1, 32], strides = [1, 1, 1]} : vector<2x1x32xf32> to vector<1x1x32xf32>
    %145 = vector.shape_cast %144 : vector<1x1x32xf32> to vector<1x32xf32>
    %cst_41 = arith.constant dense<0.000000e+00> : vector<16xf32>
    %146 = vector.multi_reduction <add>, %141, %cst_41 [1] : vector<16x32xf32> to vector<16xf32>
    %147 = vector.shape_cast %146 : vector<16xf32> to vector<16x1xf32>
    %cst_42 = arith.constant 3.200000e+01 : f32
    %148 = vector.broadcast %cst_42 : f32 to vector<16x1xf32>
    %149 = arith.divf %147, %148 : vector<16x1xf32>
    %150 = vector.broadcast %149 : vector<16x1xf32> to vector<16x32xf32>
    %151 = arith.subf %141, %150 : vector<16x32xf32>
    %152 = arith.mulf %151, %151 : vector<16x32xf32>
    %cst_43 = arith.constant dense<0.000000e+00> : vector<16xf32>
    %153 = vector.multi_reduction <add>, %152, %cst_43 [1] : vector<16x32xf32> to vector<16xf32>
    %154 = vector.shape_cast %153 : vector<16xf32> to vector<16x1xf32>
    %cst_44 = arith.constant 3.200000e+01 : f32
    %155 = vector.broadcast %cst_44 : f32 to vector<16x1xf32>
    %156 = arith.divf %154, %155 : vector<16x1xf32>
    %157 = vector.broadcast %149 : vector<16x1xf32> to vector<16x32xf32>
    %158 = arith.subf %141, %157 : vector<16x32xf32>
    %cst_45 = arith.constant 9.99999974E-6 : f32
    %159 = vector.broadcast %cst_45 : f32 to vector<16x1xf32>
    %160 = arith.addf %156, %159 : vector<16x1xf32>
    %161 = math.rsqrt %160 : vector<16x1xf32>
    %162 = vector.broadcast %161 : vector<16x1xf32> to vector<16x32xf32>
    %163 = arith.mulf %158, %162 : vector<16x32xf32>
    %164 = vector.broadcast %143 : vector<1x32xf32> to vector<16x32xf32>
    %165 = arith.mulf %163, %164 : vector<16x32xf32>
    %166 = vector.broadcast %145 : vector<1x32xf32> to vector<16x32xf32>
    %167 = arith.addf %165, %166 : vector<16x32xf32>
    %c0_46 = arith.constant 0 : index
    %c0_47 = arith.constant 0 : index
    %c0_48 = arith.constant 0 : index
    %168 = vector.load %arg6[%c0_46, %c0_47, %c0_48] : memref<1x32x64xbf16, #tpu.memory_space<vmem>>, vector<1x32x64xbf16>
    %169 = vector.shape_cast %168 : vector<1x32x64xbf16> to vector<32x64xbf16>
    %c0_49 = arith.constant 0 : index
    %c0_50 = arith.constant 0 : index
    %c0_51 = arith.constant 0 : index
    %170 = vector.load %arg7[%c0_49, %c0_50, %c0_51] : memref<1x1x64xf32, #tpu.memory_space<vmem>>, vector<1x1x64xf32>
    %171 = vector.shape_cast %170 : vector<1x1x64xf32> to vector<1x64xf32>
    %172 = arith.truncf %167 : vector<16x32xf32> to vector<16x32xbf16>
    %cst_52 = arith.constant dense<0.000000e+00> : vector<16x64xf32>
    %173 = tpu.matmul %172, %169, %cst_52 {dimension_numbers = #tpu.dot_dimension_numbers<[1], [0], [0], [1], [0, 0, 1, 1], [], []>} : vector<16x32xbf16>, vector<32x64xbf16>, vector<16x64xf32> -> vector<16x64xf32>
    %174 = vector.broadcast %171 : vector<1x64xf32> to vector<16x64xf32>
    %175 = arith.addf %173, %174 : vector<16x64xf32>
    %cst_53 = arith.constant 0.000000e+00 : f32
    %176 = vector.broadcast %cst_53 : f32 to vector<16x64xf32>
    %177 = arith.maximumf %175, %176 : vector<16x64xf32>
    %c0_54 = arith.constant 0 : index
    %c0_55 = arith.constant 0 : index
    %c0_56 = arith.constant 0 : index
    %178 = vector.load %arg8[%c0_54, %c0_55, %c0_56] : memref<1x64x32xbf16, #tpu.memory_space<vmem>>, vector<1x64x32xbf16>
    %179 = vector.shape_cast %178 : vector<1x64x32xbf16> to vector<64x32xbf16>
    %c0_57 = arith.constant 0 : index
    %c0_58 = arith.constant 0 : index
    %c0_59 = arith.constant 0 : index
    %180 = vector.load %arg9[%c0_57, %c0_58, %c0_59] : memref<1x1x32xf32, #tpu.memory_space<vmem>>, vector<1x1x32xf32>
    %181 = vector.shape_cast %180 : vector<1x1x32xf32> to vector<1x32xf32>
    %182 = arith.truncf %177 : vector<16x64xf32> to vector<16x64xbf16>
    %cst_60 = arith.constant dense<0.000000e+00> : vector<16x32xf32>
    %183 = tpu.matmul %182, %179, %cst_60 {dimension_numbers = #tpu.dot_dimension_numbers<[1], [0], [0], [1], [0, 0, 1, 1], [], []>} : vector<16x64xbf16>, vector<64x32xbf16>, vector<16x32xf32> -> vector<16x32xf32>
    %184 = vector.broadcast %181 : vector<1x32xf32> to vector<16x32xf32>
    %185 = arith.addf %183, %184 : vector<16x32xf32>
    %186 = arith.addf %185, %167 : vector<16x32xf32>
    %187 = vector.extract_strided_slice %5 {offsets = [1, 0, 0], sizes = [1, 1, 32], strides = [1, 1, 1]} : vector<2x1x32xf32> to vector<1x1x32xf32>
    %188 = vector.shape_cast %187 : vector<1x1x32xf32> to vector<1x32xf32>
    %189 = vector.extract_strided_slice %7 {offsets = [1, 0, 0], sizes = [1, 1, 32], strides = [1, 1, 1]} : vector<2x1x32xf32> to vector<1x1x32xf32>
    %190 = vector.shape_cast %189 : vector<1x1x32xf32> to vector<1x32xf32>
    %cst_61 = arith.constant dense<0.000000e+00> : vector<16xf32>
    %191 = vector.multi_reduction <add>, %186, %cst_61 [1] : vector<16x32xf32> to vector<16xf32>
    %192 = vector.shape_cast %191 : vector<16xf32> to vector<16x1xf32>
    %cst_62 = arith.constant 3.200000e+01 : f32
    %193 = vector.broadcast %cst_62 : f32 to vector<16x1xf32>
    %194 = arith.divf %192, %193 : vector<16x1xf32>
    %195 = vector.broadcast %194 : vector<16x1xf32> to vector<16x32xf32>
    %196 = arith.subf %186, %195 : vector<16x32xf32>
    %197 = arith.mulf %196, %196 : vector<16x32xf32>
    %cst_63 = arith.constant dense<0.000000e+00> : vector<16xf32>
    %198 = vector.multi_reduction <add>, %197, %cst_63 [1] : vector<16x32xf32> to vector<16xf32>
    %199 = vector.shape_cast %198 : vector<16xf32> to vector<16x1xf32>
    %cst_64 = arith.constant 3.200000e+01 : f32
    %200 = vector.broadcast %cst_64 : f32 to vector<16x1xf32>
    %201 = arith.divf %199, %200 : vector<16x1xf32>
    %202 = vector.broadcast %194 : vector<16x1xf32> to vector<16x32xf32>
    %203 = arith.subf %186, %202 : vector<16x32xf32>
    %cst_65 = arith.constant 9.99999974E-6 : f32
    %204 = vector.broadcast %cst_65 : f32 to vector<16x1xf32>
    %205 = arith.addf %201, %204 : vector<16x1xf32>
    %206 = math.rsqrt %205 : vector<16x1xf32>
    %207 = vector.broadcast %206 : vector<16x1xf32> to vector<16x32xf32>
    %208 = arith.mulf %203, %207 : vector<16x32xf32>
    %209 = vector.broadcast %188 : vector<1x32xf32> to vector<16x32xf32>
    %210 = arith.mulf %208, %209 : vector<16x32xf32>
    %211 = vector.broadcast %190 : vector<1x32xf32> to vector<16x32xf32>
    %212 = arith.addf %210, %211 : vector<16x32xf32>
    %c0_66 = arith.constant 0 : index
    %c0_67 = arith.constant 0 : index
    %213 = vector.load %arg11[%c0_66, %c0_67] : memref<16x32xf32, #tpu.memory_space<vmem>>, vector<16x32xf32>
    tpu.vector_store %arg11[%c0_66, %c0_67], %212 {strides = array<i32>} : memref<16x32xf32, #tpu.memory_space<vmem>>, vector<16x32xf32>,
    %c1_i32 = arith.constant 1 : i32
    %214 = arith.cmpi eq, %arg0, %c1_i32 : i32
    %215 = arith.extui %214 : i1 to i32
    %c0_i32_68 = arith.constant 0 : i32
    %216 = arith.cmpi ne, %215, %c0_i32_68 : i32
    scf.if %216 {
      %217 = vector.shape_cast %212 : vector<16x32xf32> to vector<2x8x32xf32>
      %c0_69 = arith.constant 0 : index
      %c0_70 = arith.constant 0 : index
      %c0_71 = arith.constant 0 : index
      %218 = vector.load %arg10[%c0_69, %c0_70, %c0_71] : memref<2x8x32xf32, #tpu.memory_space<vmem>>, vector<2x8x32xf32>
      tpu.vector_store %arg10[%c0_69, %c0_70, %c0_71], %217 {strides = array<i32>} : memref<2x8x32xf32, #tpu.memory_space<vmem>>, vector<2x8x32xf32>,
    } else {
    }
    return
  }
  func.func @transform_0(%arg0: i32) -> (i32, i32, i32) {
    %c0_i32 = arith.constant 0 : i32
    %c0_i32_0 = arith.constant 0 : i32
    %c0_i32_1 = arith.constant 0 : i32
    %c0_i32_2 = arith.constant 0 : i32
    return %c0_i32, %c0_i32_0, %c0_i32_1 : i32, i32, i32
  }
  func.func @transform_1(%arg0: i32) -> (i32, i32, i32, i32) {
    %c0_i32 = arith.constant 0 : i32
    %c0_i32_0 = arith.constant 0 : i32
    %c0_i32_1 = arith.constant 0 : i32
    %c0_i32_2 = arith.constant 0 : i32
    return %arg0, %c0_i32, %c0_i32_0, %c0_i32_1 : i32, i32, i32, i32
  }
  func.func @transform_2(%arg0: i32) -> (i32, i32, i32, i32) {
    %c0_i32 = arith.constant 0 : i32
    %c0_i32_0 = arith.constant 0 : i32
    %c0_i32_1 = arith.constant 0 : i32
    %c0_i32_2 = arith.constant 0 : i32
    return %arg0, %c0_i32, %c0_i32_0, %c0_i32_1 : i32, i32, i32, i32
  }
  func.func @transform_3(%arg0: i32) -> (i32, i32, i32, i32) {
    %c0_i32 = arith.constant 0 : i32
    %c0_i32_0 = arith.constant 0 : i32
    %c0_i32_1 = arith.constant 0 : i32
    %c0_i32_2 = arith.constant 0 : i32
    return %arg0, %c0_i32, %c0_i32_0, %c0_i32_1 : i32, i32, i32, i32
  }
  func.func @transform_4(%arg0: i32) -> (i32, i32, i32, i32) {
    %c0_i32 = arith.constant 0 : i32
    %c0_i32_0 = arith.constant 0 : i32
    %c0_i32_1 = arith.constant 0 : i32
    %c0_i32_2 = arith.constant 0 : i32
    return %arg0, %c0_i32, %c0_i32_0, %c0_i32_1 : i32, i32, i32, i32
  }
  func.func @transform_5(%arg0: i32) -> (i32, i32, i32) {
    %c0_i32 = arith.constant 0 : i32
    %c0_i32_0 = arith.constant 0 : i32
    %c0_i32_1 = arith.constant 0 : i32
    return %arg0, %c0_i32, %c0_i32_0 : i32, i32, i32
  }
  func.func @transform_6(%arg0: i32) -> (i32, i32, i32) {
    %c0_i32 = arith.constant 0 : i32
    %c0_i32_0 = arith.constant 0 : i32
    %c0_i32_1 = arith.constant 0 : i32
    return %arg0, %c0_i32, %c0_i32_0 : i32, i32, i32
  }
  func.func @transform_7(%arg0: i32) -> (i32, i32, i32) {
    %c0_i32 = arith.constant 0 : i32
    %c0_i32_0 = arith.constant 0 : i32
    %c0_i32_1 = arith.constant 0 : i32
    return %arg0, %c0_i32, %c0_i32_0 : i32, i32, i32
  }
  func.func @transform_8(%arg0: i32) -> (i32, i32, i32) {
    %c0_i32 = arith.constant 0 : i32
    %c0_i32_0 = arith.constant 0 : i32
    %c0_i32_1 = arith.constant 0 : i32
    return %arg0, %c0_i32, %c0_i32_0 : i32, i32, i32
  }
  func.func @transform_9(%arg0: i32) -> (i32, i32, i32) {
    %c0_i32 = arith.constant 0 : i32
    %c0_i32_0 = arith.constant 0 : i32
    %c0_i32_1 = arith.constant 0 : i32
    %c0_i32_2 = arith.constant 0 : i32
    return %c0_i32, %c0_i32_0, %c0_i32_1 : i32, i32, i32
  }
}

module attributes {stable_mosaic.version = 11 : i64} {
  func.func @_decoder_stack_kernel(%arg0: i32, %arg1: memref<2x8x32xf32, #tpu.memory_space<vmem>>, %arg2: memref<2x8x32xf32, #tpu.memory_space<vmem>>, %arg3: memref<1x4x32x32xbf16, #tpu.memory_space<vmem>>, %arg4: memref<1x4x1x32xf32, #tpu.memory_space<vmem>>, %arg5: memref<1x4x32x32xbf16, #tpu.memory_space<vmem>>, %arg6: memref<1x4x1x32xf32, #tpu.memory_space<vmem>>, %arg7: memref<1x3x1x32xf32, #tpu.memory_space<vmem>>, %arg8: memref<1x3x1x32xf32, #tpu.memory_space<vmem>>, %arg9: memref<1x32x64xbf16, #tpu.memory_space<vmem>>, %arg10: memref<1x1x64xf32, #tpu.memory_space<vmem>>, %arg11: memref<1x64x32xbf16, #tpu.memory_space<vmem>>, %arg12: memref<1x1x32xf32, #tpu.memory_space<vmem>>, %arg13: memref<2x8x32xf32, #tpu.memory_space<vmem>>, %arg14: memref<16x32xf32, #tpu.memory_space<vmem>>) attributes {dimension_semantics = [#tpu.dimension_semantics<arbitrary>], iteration_bounds = array<i64: 2>, scalar_prefetch = 0 : i64, scratch_operands = 1 : i64, tpu.core_type = #tpu.core_type<tc>, window_params = [{pipeline_mode = #tpu.pipeline_mode<synchronous>, transform_indices = @transform_0, window_bounds = array<i64: 2, 8, 32>}, {pipeline_mode = #tpu.pipeline_mode<synchronous>, transform_indices = @transform_1, window_bounds = array<i64: 2, 8, 32>}, {transform_indices = @transform_2, window_bounds = array<i64: 1, 4, 32, 32>}, {transform_indices = @transform_3, window_bounds = array<i64: 1, 4, 1, 32>}, {transform_indices = @transform_4, window_bounds = array<i64: 1, 4, 32, 32>}, {transform_indices = @transform_5, window_bounds = array<i64: 1, 4, 1, 32>}, {transform_indices = @transform_6, window_bounds = array<i64: 1, 3, 1, 32>}, {transform_indices = @transform_7, window_bounds = array<i64: 1, 3, 1, 32>}, {transform_indices = @transform_8, window_bounds = array<i64: 1, 32, 64>}, {transform_indices = @transform_9, window_bounds = array<i64: 1, 1, 64>}, {transform_indices = @transform_10, window_bounds = array<i64: 1, 64, 32>}, {transform_indices = @transform_11, window_bounds = array<i64: 1, 1, 32>}, {pipeline_mode = #tpu.pipeline_mode<synchronous>, transform_indices = @transform_12, window_bounds = array<i64: 2, 8, 32>}]} {
    %c0_i32 = arith.constant 0 : i32
    %0 = arith.cmpi eq, %arg0, %c0_i32 : i32
    %1 = arith.extui %0 : i1 to i32
    %c0_i32_0 = arith.constant 0 : i32
    %2 = arith.cmpi ne, %1, %c0_i32_0 : i32
    scf.if %2 {
      %c0_113 = arith.constant 0 : index
      %c0_114 = arith.constant 0 : index
      %c0_115 = arith.constant 0 : index
      %399 = vector.load %arg1[%c0_113, %c0_114, %c0_115] : memref<2x8x32xf32, #tpu.memory_space<vmem>>, vector<2x8x32xf32>
      %400 = vector.shape_cast %399 : vector<2x8x32xf32> to vector<16x32xf32>
      %c0_116 = arith.constant 0 : index
      %c0_117 = arith.constant 0 : index
      %401 = vector.load %arg14[%c0_116, %c0_117] : memref<16x32xf32, #tpu.memory_space<vmem>>, vector<16x32xf32>
      tpu.vector_store %arg14[%c0_116, %c0_117], %400 {strides = array<i32>} : memref<16x32xf32, #tpu.memory_space<vmem>>, vector<16x32xf32>,
    } else {
    }
    %c0 = arith.constant 0 : index
    %c0_1 = arith.constant 0 : index
    %3 = vector.load %arg14[%c0, %c0_1] : memref<16x32xf32, #tpu.memory_space<vmem>>, vector<16x32xf32>
    %c0_2 = arith.constant 0 : index
    %c0_3 = arith.constant 0 : index
    %c0_4 = arith.constant 0 : index
    %4 = vector.load %arg2[%c0_2, %c0_3, %c0_4] : memref<2x8x32xf32, #tpu.memory_space<vmem>>, vector<2x8x32xf32>
    %5 = vector.shape_cast %4 : vector<2x8x32xf32> to vector<16x32xf32>
    %c0_5 = arith.constant 0 : index
    %c0_6 = arith.constant 0 : index
    %c0_7 = arith.constant 0 : index
    %c0_8 = arith.constant 0 : index
    %6 = vector.load %arg7[%c0_5, %c0_6, %c0_7, %c0_8] : memref<1x3x1x32xf32, #tpu.memory_space<vmem>>, vector<1x3x1x32xf32>
    %7 = vector.shape_cast %6 : vector<1x3x1x32xf32> to vector<3x1x32xf32>
    %c0_9 = arith.constant 0 : index
    %c0_10 = arith.constant 0 : index
    %c0_11 = arith.constant 0 : index
    %c0_12 = arith.constant 0 : index
    %8 = vector.load %arg8[%c0_9, %c0_10, %c0_11, %c0_12] : memref<1x3x1x32xf32, #tpu.memory_space<vmem>>, vector<1x3x1x32xf32>
    %9 = vector.shape_cast %8 : vector<1x3x1x32xf32> to vector<3x1x32xf32>
    %c0_13 = arith.constant 0 : index
    %c0_14 = arith.constant 0 : index
    %c0_15 = arith.constant 0 : index
    %c0_16 = arith.constant 0 : index
    %10 = vector.load %arg3[%c0_13, %c0_14, %c0_15, %c0_16] : memref<1x4x32x32xbf16, #tpu.memory_space<vmem>>, vector<1x4x32x32xbf16>
    %11 = vector.shape_cast %10 : vector<1x4x32x32xbf16> to vector<4x32x32xbf16>
    %c0_17 = arith.constant 0 : index
    %c0_18 = arith.constant 0 : index
    %c0_19 = arith.constant 0 : index
    %c0_20 = arith.constant 0 : index
    %12 = vector.load %arg4[%c0_17, %c0_18, %c0_19, %c0_20] : memref<1x4x1x32xf32, #tpu.memory_space<vmem>>, vector<1x4x1x32xf32>
    %13 = vector.shape_cast %12 : vector<1x4x1x32xf32> to vector<4x1x32xf32>
    %14 = arith.truncf %3 : vector<16x32xf32> to vector<16x32xbf16>
    %15 = arith.truncf %3 : vector<16x32xf32> to vector<16x32xbf16>
    %16 = vector.extract_strided_slice %11 {offsets = [0, 0, 0], sizes = [1, 32, 32], strides = [1, 1, 1]} : vector<4x32x32xbf16> to vector<1x32x32xbf16>
    %17 = vector.shape_cast %16 : vector<1x32x32xbf16> to vector<32x32xbf16>
    %cst = arith.constant dense<0.000000e+00> : vector<16x32xf32>
    %18 = tpu.matmul %14, %17, %cst {dimension_numbers = #tpu.dot_dimension_numbers<[1], [0], [0], [1], [0, 0, 1, 1], [], []>} : vector<16x32xbf16>, vector<32x32xbf16>, vector<16x32xf32> -> vector<16x32xf32>
    %19 = vector.extract_strided_slice %13 {offsets = [0, 0, 0], sizes = [1, 1, 32], strides = [1, 1, 1]} : vector<4x1x32xf32> to vector<1x1x32xf32>
    %20 = vector.shape_cast %19 : vector<1x1x32xf32> to vector<1x32xf32>
    %21 = vector.broadcast %20 : vector<1x32xf32> to vector<16x32xf32>
    %22 = arith.addf %18, %21 : vector<16x32xf32>
    %23 = vector.extract_strided_slice %11 {offsets = [1, 0, 0], sizes = [1, 32, 32], strides = [1, 1, 1]} : vector<4x32x32xbf16> to vector<1x32x32xbf16>
    %24 = vector.shape_cast %23 : vector<1x32x32xbf16> to vector<32x32xbf16>
    %cst_21 = arith.constant dense<0.000000e+00> : vector<16x32xf32>
    %25 = tpu.matmul %15, %24, %cst_21 {dimension_numbers = #tpu.dot_dimension_numbers<[1], [0], [0], [1], [0, 0, 1, 1], [], []>} : vector<16x32xbf16>, vector<32x32xbf16>, vector<16x32xf32> -> vector<16x32xf32>
    %26 = vector.extract_strided_slice %13 {offsets = [1, 0, 0], sizes = [1, 1, 32], strides = [1, 1, 1]} : vector<4x1x32xf32> to vector<1x1x32xf32>
    %27 = vector.shape_cast %26 : vector<1x1x32xf32> to vector<1x32xf32>
    %28 = vector.broadcast %27 : vector<1x32xf32> to vector<16x32xf32>
    %29 = arith.addf %25, %28 : vector<16x32xf32>
    %30 = vector.extract_strided_slice %11 {offsets = [2, 0, 0], sizes = [1, 32, 32], strides = [1, 1, 1]} : vector<4x32x32xbf16> to vector<1x32x32xbf16>
    %31 = vector.shape_cast %30 : vector<1x32x32xbf16> to vector<32x32xbf16>
    %cst_22 = arith.constant dense<0.000000e+00> : vector<16x32xf32>
    %32 = tpu.matmul %15, %31, %cst_22 {dimension_numbers = #tpu.dot_dimension_numbers<[1], [0], [0], [1], [0, 0, 1, 1], [], []>} : vector<16x32xbf16>, vector<32x32xbf16>, vector<16x32xf32> -> vector<16x32xf32>
    %33 = vector.extract_strided_slice %13 {offsets = [2, 0, 0], sizes = [1, 1, 32], strides = [1, 1, 1]} : vector<4x1x32xf32> to vector<1x1x32xf32>
    %34 = vector.shape_cast %33 : vector<1x1x32xf32> to vector<1x32xf32>
    %35 = vector.broadcast %34 : vector<1x32xf32> to vector<16x32xf32>
    %36 = arith.addf %32, %35 : vector<16x32xf32>
    %37 = tpu.iota {dimensions = array<i32: 0>} : vector<8x8xi32>
    %38 = tpu.iota {dimensions = array<i32: 1>} : vector<8x8xi32>
    %39 = arith.cmpi sge, %37, %38 : vector<8x8xi32>
    %40 = vector.shape_cast %39 : vector<8x8xi1> to vector<1x8x8xi1>
    %41 = vector.extract_strided_slice %22 {offsets = [0, 0], sizes = [16, 8], strides = [1, 1]} : vector<16x32xf32> to vector<16x8xf32>
    %42 = vector.shape_cast %41 : vector<16x8xf32> to vector<2x8x8xf32>
    %43 = arith.truncf %42 : vector<2x8x8xf32> to vector<2x8x8xbf16>
    %44 = vector.extract_strided_slice %29 {offsets = [0, 0], sizes = [16, 8], strides = [1, 1]} : vector<16x32xf32> to vector<16x8xf32>
    %45 = vector.shape_cast %44 : vector<16x8xf32> to vector<2x8x8xf32>
    %46 = arith.truncf %45 : vector<2x8x8xf32> to vector<2x8x8xbf16>
    %47 = vector.extract_strided_slice %36 {offsets = [0, 0], sizes = [16, 8], strides = [1, 1]} : vector<16x32xf32> to vector<16x8xf32>
    %48 = vector.shape_cast %47 : vector<16x8xf32> to vector<2x8x8xf32>
    %49 = arith.truncf %48 : vector<2x8x8xf32> to vector<2x8x8xbf16>
    "tpu.trace_start"() <{level = 10 : i32, message = "bqd,bkd->bqk"}> : () -> ()
    %cst_23 = arith.constant dense<0.000000e+00> : vector<2x8x8xf32>
    %50 = tpu.matmul %43, %46, %cst_23 {dimension_numbers = #tpu.dot_dimension_numbers<[2], [2], [1], [1], [0, 0, 0, 1, 1, 1], [0], [0]>} : vector<2x8x8xbf16>, vector<2x8x8xbf16>, vector<2x8x8xf32> -> vector<2x8x8xf32>
    "tpu.trace_stop"() : () -> ()
    %cst_24 = arith.constant 0.353553385 : f32
    %51 = vector.broadcast %cst_24 : f32 to vector<2x8x8xf32>
    %52 = arith.mulf %50, %51 : vector<2x8x8xf32>
    %cst_25 = arith.constant -1.000000e+09 : f32
    %53 = vector.shape_cast %40 : vector<1x8x8xi1> to vector<1x8x8xi1>
    %54 = vector.broadcast %53 : vector<1x8x8xi1> to vector<2x8x8xi1>
    %55 = vector.broadcast %cst_25 : f32 to vector<2x8x8xf32>
    %56 = arith.select %54, %52, %55 : vector<2x8x8xi1>, vector<2x8x8xf32>
    %cst_26 = arith.constant dense<0xFF800000> : vector<2x8xf32>
    %57 = vector.multi_reduction <maximumf>, %56, %cst_26 [2] : vector<2x8x8xf32> to vector<2x8xf32>
    %58 = vector.shape_cast %57 : vector<2x8xf32> to vector<2x8x1xf32>
    %59 = vector.broadcast %58 : vector<2x8x1xf32> to vector<2x8x8xf32>
    %60 = arith.subf %56, %59 : vector<2x8x8xf32>
    %61 = math.exp %60 : vector<2x8x8xf32>
    %cst_27 = arith.constant dense<0.000000e+00> : vector<2x8xf32>
    %62 = vector.multi_reduction <add>, %61, %cst_27 [2] : vector<2x8x8xf32> to vector<2x8xf32>
    %63 = vector.shape_cast %62 : vector<2x8xf32> to vector<2x8x1xf32>
    %64 = tpu.reciprocal %63 {approx = true} : vector<2x8x1xf32> -> vector<2x8x1xf32>
    %65 = vector.broadcast %64 : vector<2x8x1xf32> to vector<2x8x8xf32>
    %66 = arith.mulf %61, %65 : vector<2x8x8xf32>
    %67 = arith.truncf %66 : vector<2x8x8xf32> to vector<2x8x8xbf16>
    "tpu.trace_start"() <{level = 10 : i32, message = "bqk,bkd->bqd"}> : () -> ()
    %cst_28 = arith.constant dense<0.000000e+00> : vector<2x8x8xf32>
    %68 = tpu.matmul %67, %49, %cst_28 {dimension_numbers = #tpu.dot_dimension_numbers<[2], [1], [1], [2], [0, 0, 0, 1, 1, 2], [0], [0]>} : vector<2x8x8xbf16>, vector<2x8x8xbf16>, vector<2x8x8xf32> -> vector<2x8x8xf32>
    "tpu.trace_stop"() : () -> ()
    %69 = vector.extract_strided_slice %22 {offsets = [0, 8], sizes = [16, 8], strides = [1, 1]} : vector<16x32xf32> to vector<16x8xf32>
    %70 = vector.shape_cast %69 : vector<16x8xf32> to vector<2x8x8xf32>
    %71 = arith.truncf %70 : vector<2x8x8xf32> to vector<2x8x8xbf16>
    %72 = vector.extract_strided_slice %29 {offsets = [0, 8], sizes = [16, 8], strides = [1, 1]} : vector<16x32xf32> to vector<16x8xf32>
    %73 = vector.shape_cast %72 : vector<16x8xf32> to vector<2x8x8xf32>
    %74 = arith.truncf %73 : vector<2x8x8xf32> to vector<2x8x8xbf16>
    %75 = vector.extract_strided_slice %36 {offsets = [0, 8], sizes = [16, 8], strides = [1, 1]} : vector<16x32xf32> to vector<16x8xf32>
    %76 = vector.shape_cast %75 : vector<16x8xf32> to vector<2x8x8xf32>
    %77 = arith.truncf %76 : vector<2x8x8xf32> to vector<2x8x8xbf16>
    "tpu.trace_start"() <{level = 10 : i32, message = "bqd,bkd->bqk"}> : () -> ()
    %cst_29 = arith.constant dense<0.000000e+00> : vector<2x8x8xf32>
    %78 = tpu.matmul %71, %74, %cst_29 {dimension_numbers = #tpu.dot_dimension_numbers<[2], [2], [1], [1], [0, 0, 0, 1, 1, 1], [0], [0]>} : vector<2x8x8xbf16>, vector<2x8x8xbf16>, vector<2x8x8xf32> -> vector<2x8x8xf32>
    "tpu.trace_stop"() : () -> ()
    %cst_30 = arith.constant 0.353553385 : f32
    %79 = vector.broadcast %cst_30 : f32 to vector<2x8x8xf32>
    %80 = arith.mulf %78, %79 : vector<2x8x8xf32>
    %cst_31 = arith.constant -1.000000e+09 : f32
    %81 = vector.shape_cast %40 : vector<1x8x8xi1> to vector<1x8x8xi1>
    %82 = vector.broadcast %81 : vector<1x8x8xi1> to vector<2x8x8xi1>
    %83 = vector.broadcast %cst_31 : f32 to vector<2x8x8xf32>
    %84 = arith.select %82, %80, %83 : vector<2x8x8xi1>, vector<2x8x8xf32>
    %cst_32 = arith.constant dense<0xFF800000> : vector<2x8xf32>
    %85 = vector.multi_reduction <maximumf>, %84, %cst_32 [2] : vector<2x8x8xf32> to vector<2x8xf32>
    %86 = vector.shape_cast %85 : vector<2x8xf32> to vector<2x8x1xf32>
    %87 = vector.broadcast %86 : vector<2x8x1xf32> to vector<2x8x8xf32>
    %88 = arith.subf %84, %87 : vector<2x8x8xf32>
    %89 = math.exp %88 : vector<2x8x8xf32>
    %cst_33 = arith.constant dense<0.000000e+00> : vector<2x8xf32>
    %90 = vector.multi_reduction <add>, %89, %cst_33 [2] : vector<2x8x8xf32> to vector<2x8xf32>
    %91 = vector.shape_cast %90 : vector<2x8xf32> to vector<2x8x1xf32>
    %92 = tpu.reciprocal %91 {approx = true} : vector<2x8x1xf32> -> vector<2x8x1xf32>
    %93 = vector.broadcast %92 : vector<2x8x1xf32> to vector<2x8x8xf32>
    %94 = arith.mulf %89, %93 : vector<2x8x8xf32>
    %95 = arith.truncf %94 : vector<2x8x8xf32> to vector<2x8x8xbf16>
    "tpu.trace_start"() <{level = 10 : i32, message = "bqk,bkd->bqd"}> : () -> ()
    %cst_34 = arith.constant dense<0.000000e+00> : vector<2x8x8xf32>
    %96 = tpu.matmul %95, %77, %cst_34 {dimension_numbers = #tpu.dot_dimension_numbers<[2], [1], [1], [2], [0, 0, 0, 1, 1, 2], [0], [0]>} : vector<2x8x8xbf16>, vector<2x8x8xbf16>, vector<2x8x8xf32> -> vector<2x8x8xf32>
    "tpu.trace_stop"() : () -> ()
    %97 = vector.extract_strided_slice %22 {offsets = [0, 16], sizes = [16, 8], strides = [1, 1]} : vector<16x32xf32> to vector<16x8xf32>
    %98 = vector.shape_cast %97 : vector<16x8xf32> to vector<2x8x8xf32>
    %99 = arith.truncf %98 : vector<2x8x8xf32> to vector<2x8x8xbf16>
    %100 = vector.extract_strided_slice %29 {offsets = [0, 16], sizes = [16, 8], strides = [1, 1]} : vector<16x32xf32> to vector<16x8xf32>
    %101 = vector.shape_cast %100 : vector<16x8xf32> to vector<2x8x8xf32>
    %102 = arith.truncf %101 : vector<2x8x8xf32> to vector<2x8x8xbf16>
    %103 = vector.extract_strided_slice %36 {offsets = [0, 16], sizes = [16, 8], strides = [1, 1]} : vector<16x32xf32> to vector<16x8xf32>
    %104 = vector.shape_cast %103 : vector<16x8xf32> to vector<2x8x8xf32>
    %105 = arith.truncf %104 : vector<2x8x8xf32> to vector<2x8x8xbf16>
    "tpu.trace_start"() <{level = 10 : i32, message = "bqd,bkd->bqk"}> : () -> ()
    %cst_35 = arith.constant dense<0.000000e+00> : vector<2x8x8xf32>
    %106 = tpu.matmul %99, %102, %cst_35 {dimension_numbers = #tpu.dot_dimension_numbers<[2], [2], [1], [1], [0, 0, 0, 1, 1, 1], [0], [0]>} : vector<2x8x8xbf16>, vector<2x8x8xbf16>, vector<2x8x8xf32> -> vector<2x8x8xf32>
    "tpu.trace_stop"() : () -> ()
    %cst_36 = arith.constant 0.353553385 : f32
    %107 = vector.broadcast %cst_36 : f32 to vector<2x8x8xf32>
    %108 = arith.mulf %106, %107 : vector<2x8x8xf32>
    %cst_37 = arith.constant -1.000000e+09 : f32
    %109 = vector.shape_cast %40 : vector<1x8x8xi1> to vector<1x8x8xi1>
    %110 = vector.broadcast %109 : vector<1x8x8xi1> to vector<2x8x8xi1>
    %111 = vector.broadcast %cst_37 : f32 to vector<2x8x8xf32>
    %112 = arith.select %110, %108, %111 : vector<2x8x8xi1>, vector<2x8x8xf32>
    %cst_38 = arith.constant dense<0xFF800000> : vector<2x8xf32>
    %113 = vector.multi_reduction <maximumf>, %112, %cst_38 [2] : vector<2x8x8xf32> to vector<2x8xf32>
    %114 = vector.shape_cast %113 : vector<2x8xf32> to vector<2x8x1xf32>
    %115 = vector.broadcast %114 : vector<2x8x1xf32> to vector<2x8x8xf32>
    %116 = arith.subf %112, %115 : vector<2x8x8xf32>
    %117 = math.exp %116 : vector<2x8x8xf32>
    %cst_39 = arith.constant dense<0.000000e+00> : vector<2x8xf32>
    %118 = vector.multi_reduction <add>, %117, %cst_39 [2] : vector<2x8x8xf32> to vector<2x8xf32>
    %119 = vector.shape_cast %118 : vector<2x8xf32> to vector<2x8x1xf32>
    %120 = tpu.reciprocal %119 {approx = true} : vector<2x8x1xf32> -> vector<2x8x1xf32>
    %121 = vector.broadcast %120 : vector<2x8x1xf32> to vector<2x8x8xf32>
    %122 = arith.mulf %117, %121 : vector<2x8x8xf32>
    %123 = arith.truncf %122 : vector<2x8x8xf32> to vector<2x8x8xbf16>
    "tpu.trace_start"() <{level = 10 : i32, message = "bqk,bkd->bqd"}> : () -> ()
    %cst_40 = arith.constant dense<0.000000e+00> : vector<2x8x8xf32>
    %124 = tpu.matmul %123, %105, %cst_40 {dimension_numbers = #tpu.dot_dimension_numbers<[2], [1], [1], [2], [0, 0, 0, 1, 1, 2], [0], [0]>} : vector<2x8x8xbf16>, vector<2x8x8xbf16>, vector<2x8x8xf32> -> vector<2x8x8xf32>
    "tpu.trace_stop"() : () -> ()
    %125 = vector.extract_strided_slice %22 {offsets = [0, 24], sizes = [16, 8], strides = [1, 1]} : vector<16x32xf32> to vector<16x8xf32>
    %126 = vector.shape_cast %125 : vector<16x8xf32> to vector<2x8x8xf32>
    %127 = arith.truncf %126 : vector<2x8x8xf32> to vector<2x8x8xbf16>
    %128 = vector.extract_strided_slice %29 {offsets = [0, 24], sizes = [16, 8], strides = [1, 1]} : vector<16x32xf32> to vector<16x8xf32>
    %129 = vector.shape_cast %128 : vector<16x8xf32> to vector<2x8x8xf32>
    %130 = arith.truncf %129 : vector<2x8x8xf32> to vector<2x8x8xbf16>
    %131 = vector.extract_strided_slice %36 {offsets = [0, 24], sizes = [16, 8], strides = [1, 1]} : vector<16x32xf32> to vector<16x8xf32>
    %132 = vector.shape_cast %131 : vector<16x8xf32> to vector<2x8x8xf32>
    %133 = arith.truncf %132 : vector<2x8x8xf32> to vector<2x8x8xbf16>
    "tpu.trace_start"() <{level = 10 : i32, message = "bqd,bkd->bqk"}> : () -> ()
    %cst_41 = arith.constant dense<0.000000e+00> : vector<2x8x8xf32>
    %134 = tpu.matmul %127, %130, %cst_41 {dimension_numbers = #tpu.dot_dimension_numbers<[2], [2], [1], [1], [0, 0, 0, 1, 1, 1], [0], [0]>} : vector<2x8x8xbf16>, vector<2x8x8xbf16>, vector<2x8x8xf32> -> vector<2x8x8xf32>
    "tpu.trace_stop"() : () -> ()
    %cst_42 = arith.constant 0.353553385 : f32
    %135 = vector.broadcast %cst_42 : f32 to vector<2x8x8xf32>
    %136 = arith.mulf %134, %135 : vector<2x8x8xf32>
    %cst_43 = arith.constant -1.000000e+09 : f32
    %137 = vector.shape_cast %40 : vector<1x8x8xi1> to vector<1x8x8xi1>
    %138 = vector.broadcast %137 : vector<1x8x8xi1> to vector<2x8x8xi1>
    %139 = vector.broadcast %cst_43 : f32 to vector<2x8x8xf32>
    %140 = arith.select %138, %136, %139 : vector<2x8x8xi1>, vector<2x8x8xf32>
    %cst_44 = arith.constant dense<0xFF800000> : vector<2x8xf32>
    %141 = vector.multi_reduction <maximumf>, %140, %cst_44 [2] : vector<2x8x8xf32> to vector<2x8xf32>
    %142 = vector.shape_cast %141 : vector<2x8xf32> to vector<2x8x1xf32>
    %143 = vector.broadcast %142 : vector<2x8x1xf32> to vector<2x8x8xf32>
    %144 = arith.subf %140, %143 : vector<2x8x8xf32>
    %145 = math.exp %144 : vector<2x8x8xf32>
    %cst_45 = arith.constant dense<0.000000e+00> : vector<2x8xf32>
    %146 = vector.multi_reduction <add>, %145, %cst_45 [2] : vector<2x8x8xf32> to vector<2x8xf32>
    %147 = vector.shape_cast %146 : vector<2x8xf32> to vector<2x8x1xf32>
    %148 = tpu.reciprocal %147 {approx = true} : vector<2x8x1xf32> -> vector<2x8x1xf32>
    %149 = vector.broadcast %148 : vector<2x8x1xf32> to vector<2x8x8xf32>
    %150 = arith.mulf %145, %149 : vector<2x8x8xf32>
    %151 = arith.truncf %150 : vector<2x8x8xf32> to vector<2x8x8xbf16>
    "tpu.trace_start"() <{level = 10 : i32, message = "bqk,bkd->bqd"}> : () -> ()
    %cst_46 = arith.constant dense<0.000000e+00> : vector<2x8x8xf32>
    %152 = tpu.matmul %151, %133, %cst_46 {dimension_numbers = #tpu.dot_dimension_numbers<[2], [1], [1], [2], [0, 0, 0, 1, 1, 2], [0], [0]>} : vector<2x8x8xbf16>, vector<2x8x8xbf16>, vector<2x8x8xf32> -> vector<2x8x8xf32>
    "tpu.trace_stop"() : () -> ()
    %153 = tpu.concatenate %68, %96, %124, %152 in 2 : vector<2x8x8xf32>, vector<2x8x8xf32>, vector<2x8x8xf32>, vector<2x8x8xf32> -> vector<2x8x32xf32>
    %154 = vector.shape_cast %153 : vector<2x8x32xf32> to vector<16x32xf32>
    %155 = arith.truncf %154 : vector<16x32xf32> to vector<16x32xbf16>
    %156 = vector.extract_strided_slice %11 {offsets = [3, 0, 0], sizes = [1, 32, 32], strides = [1, 1, 1]} : vector<4x32x32xbf16> to vector<1x32x32xbf16>
    %157 = vector.shape_cast %156 : vector<1x32x32xbf16> to vector<32x32xbf16>
    %cst_47 = arith.constant dense<0.000000e+00> : vector<16x32xf32>
    %158 = tpu.matmul %155, %157, %cst_47 {dimension_numbers = #tpu.dot_dimension_numbers<[1], [0], [0], [1], [0, 0, 1, 1], [], []>} : vector<16x32xbf16>, vector<32x32xbf16>, vector<16x32xf32> -> vector<16x32xf32>
    %159 = vector.extract_strided_slice %13 {offsets = [3, 0, 0], sizes = [1, 1, 32], strides = [1, 1, 1]} : vector<4x1x32xf32> to vector<1x1x32xf32>
    %160 = vector.shape_cast %159 : vector<1x1x32xf32> to vector<1x32xf32>
    %161 = vector.broadcast %160 : vector<1x32xf32> to vector<16x32xf32>
    %162 = arith.addf %158, %161 : vector<16x32xf32>
    %163 = arith.addf %162, %3 : vector<16x32xf32>
    %164 = vector.extract_strided_slice %7 {offsets = [0, 0, 0], sizes = [1, 1, 32], strides = [1, 1, 1]} : vector<3x1x32xf32> to vector<1x1x32xf32>
    %165 = vector.shape_cast %164 : vector<1x1x32xf32> to vector<1x32xf32>
    %166 = vector.extract_strided_slice %9 {offsets = [0, 0, 0], sizes = [1, 1, 32], strides = [1, 1, 1]} : vector<3x1x32xf32> to vector<1x1x32xf32>
    %167 = vector.shape_cast %166 : vector<1x1x32xf32> to vector<1x32xf32>
    %cst_48 = arith.constant dense<0.000000e+00> : vector<16xf32>
    %168 = vector.multi_reduction <add>, %163, %cst_48 [1] : vector<16x32xf32> to vector<16xf32>
    %169 = vector.shape_cast %168 : vector<16xf32> to vector<16x1xf32>
    %cst_49 = arith.constant 3.200000e+01 : f32
    %170 = vector.broadcast %cst_49 : f32 to vector<16x1xf32>
    %171 = arith.divf %169, %170 : vector<16x1xf32>
    %172 = vector.broadcast %171 : vector<16x1xf32> to vector<16x32xf32>
    %173 = arith.subf %163, %172 : vector<16x32xf32>
    %174 = arith.mulf %173, %173 : vector<16x32xf32>
    %cst_50 = arith.constant dense<0.000000e+00> : vector<16xf32>
    %175 = vector.multi_reduction <add>, %174, %cst_50 [1] : vector<16x32xf32> to vector<16xf32>
    %176 = vector.shape_cast %175 : vector<16xf32> to vector<16x1xf32>
    %cst_51 = arith.constant 3.200000e+01 : f32
    %177 = vector.broadcast %cst_51 : f32 to vector<16x1xf32>
    %178 = arith.divf %176, %177 : vector<16x1xf32>
    %179 = vector.broadcast %171 : vector<16x1xf32> to vector<16x32xf32>
    %180 = arith.subf %163, %179 : vector<16x32xf32>
    %cst_52 = arith.constant 9.99999974E-6 : f32
    %181 = vector.broadcast %cst_52 : f32 to vector<16x1xf32>
    %182 = arith.addf %178, %181 : vector<16x1xf32>
    %183 = math.rsqrt %182 : vector<16x1xf32>
    %184 = vector.broadcast %183 : vector<16x1xf32> to vector<16x32xf32>
    %185 = arith.mulf %180, %184 : vector<16x32xf32>
    %186 = vector.broadcast %165 : vector<1x32xf32> to vector<16x32xf32>
    %187 = arith.mulf %185, %186 : vector<16x32xf32>
    %188 = vector.broadcast %167 : vector<1x32xf32> to vector<16x32xf32>
    %189 = arith.addf %187, %188 : vector<16x32xf32>
    %c0_53 = arith.constant 0 : index
    %c0_54 = arith.constant 0 : index
    %c0_55 = arith.constant 0 : index
    %c0_56 = arith.constant 0 : index
    %190 = vector.load %arg5[%c0_53, %c0_54, %c0_55, %c0_56] : memref<1x4x32x32xbf16, #tpu.memory_space<vmem>>, vector<1x4x32x32xbf16>
    %191 = vector.shape_cast %190 : vector<1x4x32x32xbf16> to vector<4x32x32xbf16>
    %c0_57 = arith.constant 0 : index
    %c0_58 = arith.constant 0 : index
    %c0_59 = arith.constant 0 : index
    %c0_60 = arith.constant 0 : index
    %192 = vector.load %arg6[%c0_57, %c0_58, %c0_59, %c0_60] : memref<1x4x1x32xf32, #tpu.memory_space<vmem>>, vector<1x4x1x32xf32>
    %193 = vector.shape_cast %192 : vector<1x4x1x32xf32> to vector<4x1x32xf32>
    %194 = arith.truncf %189 : vector<16x32xf32> to vector<16x32xbf16>
    %195 = arith.truncf %5 : vector<16x32xf32> to vector<16x32xbf16>
    %196 = vector.extract_strided_slice %191 {offsets = [0, 0, 0], sizes = [1, 32, 32], strides = [1, 1, 1]} : vector<4x32x32xbf16> to vector<1x32x32xbf16>
    %197 = vector.shape_cast %196 : vector<1x32x32xbf16> to vector<32x32xbf16>
    %cst_61 = arith.constant dense<0.000000e+00> : vector<16x32xf32>
    %198 = tpu.matmul %194, %197, %cst_61 {dimension_numbers = #tpu.dot_dimension_numbers<[1], [0], [0], [1], [0, 0, 1, 1], [], []>} : vector<16x32xbf16>, vector<32x32xbf16>, vector<16x32xf32> -> vector<16x32xf32>
    %199 = vector.extract_strided_slice %193 {offsets = [0, 0, 0], sizes = [1, 1, 32], strides = [1, 1, 1]} : vector<4x1x32xf32> to vector<1x1x32xf32>
    %200 = vector.shape_cast %199 : vector<1x1x32xf32> to vector<1x32xf32>
    %201 = vector.broadcast %200 : vector<1x32xf32> to vector<16x32xf32>
    %202 = arith.addf %198, %201 : vector<16x32xf32>
    %203 = vector.extract_strided_slice %191 {offsets = [1, 0, 0], sizes = [1, 32, 32], strides = [1, 1, 1]} : vector<4x32x32xbf16> to vector<1x32x32xbf16>
    %204 = vector.shape_cast %203 : vector<1x32x32xbf16> to vector<32x32xbf16>
    %cst_62 = arith.constant dense<0.000000e+00> : vector<16x32xf32>
    %205 = tpu.matmul %195, %204, %cst_62 {dimension_numbers = #tpu.dot_dimension_numbers<[1], [0], [0], [1], [0, 0, 1, 1], [], []>} : vector<16x32xbf16>, vector<32x32xbf16>, vector<16x32xf32> -> vector<16x32xf32>
    %206 = vector.extract_strided_slice %193 {offsets = [1, 0, 0], sizes = [1, 1, 32], strides = [1, 1, 1]} : vector<4x1x32xf32> to vector<1x1x32xf32>
    %207 = vector.shape_cast %206 : vector<1x1x32xf32> to vector<1x32xf32>
    %208 = vector.broadcast %207 : vector<1x32xf32> to vector<16x32xf32>
    %209 = arith.addf %205, %208 : vector<16x32xf32>
    %210 = vector.extract_strided_slice %191 {offsets = [2, 0, 0], sizes = [1, 32, 32], strides = [1, 1, 1]} : vector<4x32x32xbf16> to vector<1x32x32xbf16>
    %211 = vector.shape_cast %210 : vector<1x32x32xbf16> to vector<32x32xbf16>
    %cst_63 = arith.constant dense<0.000000e+00> : vector<16x32xf32>
    %212 = tpu.matmul %195, %211, %cst_63 {dimension_numbers = #tpu.dot_dimension_numbers<[1], [0], [0], [1], [0, 0, 1, 1], [], []>} : vector<16x32xbf16>, vector<32x32xbf16>, vector<16x32xf32> -> vector<16x32xf32>
    %213 = vector.extract_strided_slice %193 {offsets = [2, 0, 0], sizes = [1, 1, 32], strides = [1, 1, 1]} : vector<4x1x32xf32> to vector<1x1x32xf32>
    %214 = vector.shape_cast %213 : vector<1x1x32xf32> to vector<1x32xf32>
    %215 = vector.broadcast %214 : vector<1x32xf32> to vector<16x32xf32>
    %216 = arith.addf %212, %215 : vector<16x32xf32>
    %217 = vector.extract_strided_slice %202 {offsets = [0, 0], sizes = [16, 8], strides = [1, 1]} : vector<16x32xf32> to vector<16x8xf32>
    %218 = vector.shape_cast %217 : vector<16x8xf32> to vector<2x8x8xf32>
    %219 = arith.truncf %218 : vector<2x8x8xf32> to vector<2x8x8xbf16>
    %220 = vector.extract_strided_slice %209 {offsets = [0, 0], sizes = [16, 8], strides = [1, 1]} : vector<16x32xf32> to vector<16x8xf32>
    %221 = vector.shape_cast %220 : vector<16x8xf32> to vector<2x8x8xf32>
    %222 = arith.truncf %221 : vector<2x8x8xf32> to vector<2x8x8xbf16>
    %223 = vector.extract_strided_slice %216 {offsets = [0, 0], sizes = [16, 8], strides = [1, 1]} : vector<16x32xf32> to vector<16x8xf32>
    %224 = vector.shape_cast %223 : vector<16x8xf32> to vector<2x8x8xf32>
    %225 = arith.truncf %224 : vector<2x8x8xf32> to vector<2x8x8xbf16>
    "tpu.trace_start"() <{level = 10 : i32, message = "bqd,bkd->bqk"}> : () -> ()
    %cst_64 = arith.constant dense<0.000000e+00> : vector<2x8x8xf32>
    %226 = tpu.matmul %219, %222, %cst_64 {dimension_numbers = #tpu.dot_dimension_numbers<[2], [2], [1], [1], [0, 0, 0, 1, 1, 1], [0], [0]>} : vector<2x8x8xbf16>, vector<2x8x8xbf16>, vector<2x8x8xf32> -> vector<2x8x8xf32>
    "tpu.trace_stop"() : () -> ()
    %cst_65 = arith.constant 0.353553385 : f32
    %227 = vector.broadcast %cst_65 : f32 to vector<2x8x8xf32>
    %228 = arith.mulf %226, %227 : vector<2x8x8xf32>
    %cst_66 = arith.constant dense<0xFF800000> : vector<2x8xf32>
    %229 = vector.multi_reduction <maximumf>, %228, %cst_66 [2] : vector<2x8x8xf32> to vector<2x8xf32>
    %230 = vector.shape_cast %229 : vector<2x8xf32> to vector<2x8x1xf32>
    %231 = vector.broadcast %230 : vector<2x8x1xf32> to vector<2x8x8xf32>
    %232 = arith.subf %228, %231 : vector<2x8x8xf32>
    %233 = math.exp %232 : vector<2x8x8xf32>
    %cst_67 = arith.constant dense<0.000000e+00> : vector<2x8xf32>
    %234 = vector.multi_reduction <add>, %233, %cst_67 [2] : vector<2x8x8xf32> to vector<2x8xf32>
    %235 = vector.shape_cast %234 : vector<2x8xf32> to vector<2x8x1xf32>
    %236 = tpu.reciprocal %235 {approx = true} : vector<2x8x1xf32> -> vector<2x8x1xf32>
    %237 = vector.broadcast %236 : vector<2x8x1xf32> to vector<2x8x8xf32>
    %238 = arith.mulf %233, %237 : vector<2x8x8xf32>
    %239 = arith.truncf %238 : vector<2x8x8xf32> to vector<2x8x8xbf16>
    "tpu.trace_start"() <{level = 10 : i32, message = "bqk,bkd->bqd"}> : () -> ()
    %cst_68 = arith.constant dense<0.000000e+00> : vector<2x8x8xf32>
    %240 = tpu.matmul %239, %225, %cst_68 {dimension_numbers = #tpu.dot_dimension_numbers<[2], [1], [1], [2], [0, 0, 0, 1, 1, 2], [0], [0]>} : vector<2x8x8xbf16>, vector<2x8x8xbf16>, vector<2x8x8xf32> -> vector<2x8x8xf32>
    "tpu.trace_stop"() : () -> ()
    %241 = vector.extract_strided_slice %202 {offsets = [0, 8], sizes = [16, 8], strides = [1, 1]} : vector<16x32xf32> to vector<16x8xf32>
    %242 = vector.shape_cast %241 : vector<16x8xf32> to vector<2x8x8xf32>
    %243 = arith.truncf %242 : vector<2x8x8xf32> to vector<2x8x8xbf16>
    %244 = vector.extract_strided_slice %209 {offsets = [0, 8], sizes = [16, 8], strides = [1, 1]} : vector<16x32xf32> to vector<16x8xf32>
    %245 = vector.shape_cast %244 : vector<16x8xf32> to vector<2x8x8xf32>
    %246 = arith.truncf %245 : vector<2x8x8xf32> to vector<2x8x8xbf16>
    %247 = vector.extract_strided_slice %216 {offsets = [0, 8], sizes = [16, 8], strides = [1, 1]} : vector<16x32xf32> to vector<16x8xf32>
    %248 = vector.shape_cast %247 : vector<16x8xf32> to vector<2x8x8xf32>
    %249 = arith.truncf %248 : vector<2x8x8xf32> to vector<2x8x8xbf16>
    "tpu.trace_start"() <{level = 10 : i32, message = "bqd,bkd->bqk"}> : () -> ()
    %cst_69 = arith.constant dense<0.000000e+00> : vector<2x8x8xf32>
    %250 = tpu.matmul %243, %246, %cst_69 {dimension_numbers = #tpu.dot_dimension_numbers<[2], [2], [1], [1], [0, 0, 0, 1, 1, 1], [0], [0]>} : vector<2x8x8xbf16>, vector<2x8x8xbf16>, vector<2x8x8xf32> -> vector<2x8x8xf32>
    "tpu.trace_stop"() : () -> ()
    %cst_70 = arith.constant 0.353553385 : f32
    %251 = vector.broadcast %cst_70 : f32 to vector<2x8x8xf32>
    %252 = arith.mulf %250, %251 : vector<2x8x8xf32>
    %cst_71 = arith.constant dense<0xFF800000> : vector<2x8xf32>
    %253 = vector.multi_reduction <maximumf>, %252, %cst_71 [2] : vector<2x8x8xf32> to vector<2x8xf32>
    %254 = vector.shape_cast %253 : vector<2x8xf32> to vector<2x8x1xf32>
    %255 = vector.broadcast %254 : vector<2x8x1xf32> to vector<2x8x8xf32>
    %256 = arith.subf %252, %255 : vector<2x8x8xf32>
    %257 = math.exp %256 : vector<2x8x8xf32>
    %cst_72 = arith.constant dense<0.000000e+00> : vector<2x8xf32>
    %258 = vector.multi_reduction <add>, %257, %cst_72 [2] : vector<2x8x8xf32> to vector<2x8xf32>
    %259 = vector.shape_cast %258 : vector<2x8xf32> to vector<2x8x1xf32>
    %260 = tpu.reciprocal %259 {approx = true} : vector<2x8x1xf32> -> vector<2x8x1xf32>
    %261 = vector.broadcast %260 : vector<2x8x1xf32> to vector<2x8x8xf32>
    %262 = arith.mulf %257, %261 : vector<2x8x8xf32>
    %263 = arith.truncf %262 : vector<2x8x8xf32> to vector<2x8x8xbf16>
    "tpu.trace_start"() <{level = 10 : i32, message = "bqk,bkd->bqd"}> : () -> ()
    %cst_73 = arith.constant dense<0.000000e+00> : vector<2x8x8xf32>
    %264 = tpu.matmul %263, %249, %cst_73 {dimension_numbers = #tpu.dot_dimension_numbers<[2], [1], [1], [2], [0, 0, 0, 1, 1, 2], [0], [0]>} : vector<2x8x8xbf16>, vector<2x8x8xbf16>, vector<2x8x8xf32> -> vector<2x8x8xf32>
    "tpu.trace_stop"() : () -> ()
    %265 = vector.extract_strided_slice %202 {offsets = [0, 16], sizes = [16, 8], strides = [1, 1]} : vector<16x32xf32> to vector<16x8xf32>
    %266 = vector.shape_cast %265 : vector<16x8xf32> to vector<2x8x8xf32>
    %267 = arith.truncf %266 : vector<2x8x8xf32> to vector<2x8x8xbf16>
    %268 = vector.extract_strided_slice %209 {offsets = [0, 16], sizes = [16, 8], strides = [1, 1]} : vector<16x32xf32> to vector<16x8xf32>
    %269 = vector.shape_cast %268 : vector<16x8xf32> to vector<2x8x8xf32>
    %270 = arith.truncf %269 : vector<2x8x8xf32> to vector<2x8x8xbf16>
    %271 = vector.extract_strided_slice %216 {offsets = [0, 16], sizes = [16, 8], strides = [1, 1]} : vector<16x32xf32> to vector<16x8xf32>
    %272 = vector.shape_cast %271 : vector<16x8xf32> to vector<2x8x8xf32>
    %273 = arith.truncf %272 : vector<2x8x8xf32> to vector<2x8x8xbf16>
    "tpu.trace_start"() <{level = 10 : i32, message = "bqd,bkd->bqk"}> : () -> ()
    %cst_74 = arith.constant dense<0.000000e+00> : vector<2x8x8xf32>
    %274 = tpu.matmul %267, %270, %cst_74 {dimension_numbers = #tpu.dot_dimension_numbers<[2], [2], [1], [1], [0, 0, 0, 1, 1, 1], [0], [0]>} : vector<2x8x8xbf16>, vector<2x8x8xbf16>, vector<2x8x8xf32> -> vector<2x8x8xf32>
    "tpu.trace_stop"() : () -> ()
    %cst_75 = arith.constant 0.353553385 : f32
    %275 = vector.broadcast %cst_75 : f32 to vector<2x8x8xf32>
    %276 = arith.mulf %274, %275 : vector<2x8x8xf32>
    %cst_76 = arith.constant dense<0xFF800000> : vector<2x8xf32>
    %277 = vector.multi_reduction <maximumf>, %276, %cst_76 [2] : vector<2x8x8xf32> to vector<2x8xf32>
    %278 = vector.shape_cast %277 : vector<2x8xf32> to vector<2x8x1xf32>
    %279 = vector.broadcast %278 : vector<2x8x1xf32> to vector<2x8x8xf32>
    %280 = arith.subf %276, %279 : vector<2x8x8xf32>
    %281 = math.exp %280 : vector<2x8x8xf32>
    %cst_77 = arith.constant dense<0.000000e+00> : vector<2x8xf32>
    %282 = vector.multi_reduction <add>, %281, %cst_77 [2] : vector<2x8x8xf32> to vector<2x8xf32>
    %283 = vector.shape_cast %282 : vector<2x8xf32> to vector<2x8x1xf32>
    %284 = tpu.reciprocal %283 {approx = true} : vector<2x8x1xf32> -> vector<2x8x1xf32>
    %285 = vector.broadcast %284 : vector<2x8x1xf32> to vector<2x8x8xf32>
    %286 = arith.mulf %281, %285 : vector<2x8x8xf32>
    %287 = arith.truncf %286 : vector<2x8x8xf32> to vector<2x8x8xbf16>
    "tpu.trace_start"() <{level = 10 : i32, message = "bqk,bkd->bqd"}> : () -> ()
    %cst_78 = arith.constant dense<0.000000e+00> : vector<2x8x8xf32>
    %288 = tpu.matmul %287, %273, %cst_78 {dimension_numbers = #tpu.dot_dimension_numbers<[2], [1], [1], [2], [0, 0, 0, 1, 1, 2], [0], [0]>} : vector<2x8x8xbf16>, vector<2x8x8xbf16>, vector<2x8x8xf32> -> vector<2x8x8xf32>
    "tpu.trace_stop"() : () -> ()
    %289 = vector.extract_strided_slice %202 {offsets = [0, 24], sizes = [16, 8], strides = [1, 1]} : vector<16x32xf32> to vector<16x8xf32>
    %290 = vector.shape_cast %289 : vector<16x8xf32> to vector<2x8x8xf32>
    %291 = arith.truncf %290 : vector<2x8x8xf32> to vector<2x8x8xbf16>
    %292 = vector.extract_strided_slice %209 {offsets = [0, 24], sizes = [16, 8], strides = [1, 1]} : vector<16x32xf32> to vector<16x8xf32>
    %293 = vector.shape_cast %292 : vector<16x8xf32> to vector<2x8x8xf32>
    %294 = arith.truncf %293 : vector<2x8x8xf32> to vector<2x8x8xbf16>
    %295 = vector.extract_strided_slice %216 {offsets = [0, 24], sizes = [16, 8], strides = [1, 1]} : vector<16x32xf32> to vector<16x8xf32>
    %296 = vector.shape_cast %295 : vector<16x8xf32> to vector<2x8x8xf32>
    %297 = arith.truncf %296 : vector<2x8x8xf32> to vector<2x8x8xbf16>
    "tpu.trace_start"() <{level = 10 : i32, message = "bqd,bkd->bqk"}> : () -> ()
    %cst_79 = arith.constant dense<0.000000e+00> : vector<2x8x8xf32>
    %298 = tpu.matmul %291, %294, %cst_79 {dimension_numbers = #tpu.dot_dimension_numbers<[2], [2], [1], [1], [0, 0, 0, 1, 1, 1], [0], [0]>} : vector<2x8x8xbf16>, vector<2x8x8xbf16>, vector<2x8x8xf32> -> vector<2x8x8xf32>
    "tpu.trace_stop"() : () -> ()
    %cst_80 = arith.constant 0.353553385 : f32
    %299 = vector.broadcast %cst_80 : f32 to vector<2x8x8xf32>
    %300 = arith.mulf %298, %299 : vector<2x8x8xf32>
    %cst_81 = arith.constant dense<0xFF800000> : vector<2x8xf32>
    %301 = vector.multi_reduction <maximumf>, %300, %cst_81 [2] : vector<2x8x8xf32> to vector<2x8xf32>
    %302 = vector.shape_cast %301 : vector<2x8xf32> to vector<2x8x1xf32>
    %303 = vector.broadcast %302 : vector<2x8x1xf32> to vector<2x8x8xf32>
    %304 = arith.subf %300, %303 : vector<2x8x8xf32>
    %305 = math.exp %304 : vector<2x8x8xf32>
    %cst_82 = arith.constant dense<0.000000e+00> : vector<2x8xf32>
    %306 = vector.multi_reduction <add>, %305, %cst_82 [2] : vector<2x8x8xf32> to vector<2x8xf32>
    %307 = vector.shape_cast %306 : vector<2x8xf32> to vector<2x8x1xf32>
    %308 = tpu.reciprocal %307 {approx = true} : vector<2x8x1xf32> -> vector<2x8x1xf32>
    %309 = vector.broadcast %308 : vector<2x8x1xf32> to vector<2x8x8xf32>
    %310 = arith.mulf %305, %309 : vector<2x8x8xf32>
    %311 = arith.truncf %310 : vector<2x8x8xf32> to vector<2x8x8xbf16>
    "tpu.trace_start"() <{level = 10 : i32, message = "bqk,bkd->bqd"}> : () -> ()
    %cst_83 = arith.constant dense<0.000000e+00> : vector<2x8x8xf32>
    %312 = tpu.matmul %311, %297, %cst_83 {dimension_numbers = #tpu.dot_dimension_numbers<[2], [1], [1], [2], [0, 0, 0, 1, 1, 2], [0], [0]>} : vector<2x8x8xbf16>, vector<2x8x8xbf16>, vector<2x8x8xf32> -> vector<2x8x8xf32>
    "tpu.trace_stop"() : () -> ()
    %313 = tpu.concatenate %240, %264, %288, %312 in 2 : vector<2x8x8xf32>, vector<2x8x8xf32>, vector<2x8x8xf32>, vector<2x8x8xf32> -> vector<2x8x32xf32>
    %314 = vector.shape_cast %313 : vector<2x8x32xf32> to vector<16x32xf32>
    %315 = arith.truncf %314 : vector<16x32xf32> to vector<16x32xbf16>
    %316 = vector.extract_strided_slice %191 {offsets = [3, 0, 0], sizes = [1, 32, 32], strides = [1, 1, 1]} : vector<4x32x32xbf16> to vector<1x32x32xbf16>
    %317 = vector.shape_cast %316 : vector<1x32x32xbf16> to vector<32x32xbf16>
    %cst_84 = arith.constant dense<0.000000e+00> : vector<16x32xf32>
    %318 = tpu.matmul %315, %317, %cst_84 {dimension_numbers = #tpu.dot_dimension_numbers<[1], [0], [0], [1], [0, 0, 1, 1], [], []>} : vector<16x32xbf16>, vector<32x32xbf16>, vector<16x32xf32> -> vector<16x32xf32>
    %319 = vector.extract_strided_slice %193 {offsets = [3, 0, 0], sizes = [1, 1, 32], strides = [1, 1, 1]} : vector<4x1x32xf32> to vector<1x1x32xf32>
    %320 = vector.shape_cast %319 : vector<1x1x32xf32> to vector<1x32xf32>
    %321 = vector.broadcast %320 : vector<1x32xf32> to vector<16x32xf32>
    %322 = arith.addf %318, %321 : vector<16x32xf32>
    %323 = arith.addf %322, %189 : vector<16x32xf32>
    %324 = vector.extract_strided_slice %7 {offsets = [1, 0, 0], sizes = [1, 1, 32], strides = [1, 1, 1]} : vector<3x1x32xf32> to vector<1x1x32xf32>
    %325 = vector.shape_cast %324 : vector<1x1x32xf32> to vector<1x32xf32>
    %326 = vector.extract_strided_slice %9 {offsets = [1, 0, 0], sizes = [1, 1, 32], strides = [1, 1, 1]} : vector<3x1x32xf32> to vector<1x1x32xf32>
    %327 = vector.shape_cast %326 : vector<1x1x32xf32> to vector<1x32xf32>
    %cst_85 = arith.constant dense<0.000000e+00> : vector<16xf32>
    %328 = vector.multi_reduction <add>, %323, %cst_85 [1] : vector<16x32xf32> to vector<16xf32>
    %329 = vector.shape_cast %328 : vector<16xf32> to vector<16x1xf32>
    %cst_86 = arith.constant 3.200000e+01 : f32
    %330 = vector.broadcast %cst_86 : f32 to vector<16x1xf32>
    %331 = arith.divf %329, %330 : vector<16x1xf32>
    %332 = vector.broadcast %331 : vector<16x1xf32> to vector<16x32xf32>
    %333 = arith.subf %323, %332 : vector<16x32xf32>
    %334 = arith.mulf %333, %333 : vector<16x32xf32>
    %cst_87 = arith.constant dense<0.000000e+00> : vector<16xf32>
    %335 = vector.multi_reduction <add>, %334, %cst_87 [1] : vector<16x32xf32> to vector<16xf32>
    %336 = vector.shape_cast %335 : vector<16xf32> to vector<16x1xf32>
    %cst_88 = arith.constant 3.200000e+01 : f32
    %337 = vector.broadcast %cst_88 : f32 to vector<16x1xf32>
    %338 = arith.divf %336, %337 : vector<16x1xf32>
    %339 = vector.broadcast %331 : vector<16x1xf32> to vector<16x32xf32>
    %340 = arith.subf %323, %339 : vector<16x32xf32>
    %cst_89 = arith.constant 9.99999974E-6 : f32
    %341 = vector.broadcast %cst_89 : f32 to vector<16x1xf32>
    %342 = arith.addf %338, %341 : vector<16x1xf32>
    %343 = math.rsqrt %342 : vector<16x1xf32>
    %344 = vector.broadcast %343 : vector<16x1xf32> to vector<16x32xf32>
    %345 = arith.mulf %340, %344 : vector<16x32xf32>
    %346 = vector.broadcast %325 : vector<1x32xf32> to vector<16x32xf32>
    %347 = arith.mulf %345, %346 : vector<16x32xf32>
    %348 = vector.broadcast %327 : vector<1x32xf32> to vector<16x32xf32>
    %349 = arith.addf %347, %348 : vector<16x32xf32>
    %c0_90 = arith.constant 0 : index
    %c0_91 = arith.constant 0 : index
    %c0_92 = arith.constant 0 : index
    %350 = vector.load %arg9[%c0_90, %c0_91, %c0_92] : memref<1x32x64xbf16, #tpu.memory_space<vmem>>, vector<1x32x64xbf16>
    %351 = vector.shape_cast %350 : vector<1x32x64xbf16> to vector<32x64xbf16>
    %c0_93 = arith.constant 0 : index
    %c0_94 = arith.constant 0 : index
    %c0_95 = arith.constant 0 : index
    %352 = vector.load %arg10[%c0_93, %c0_94, %c0_95] : memref<1x1x64xf32, #tpu.memory_space<vmem>>, vector<1x1x64xf32>
    %353 = vector.shape_cast %352 : vector<1x1x64xf32> to vector<1x64xf32>
    %354 = arith.truncf %349 : vector<16x32xf32> to vector<16x32xbf16>
    %cst_96 = arith.constant dense<0.000000e+00> : vector<16x64xf32>
    %355 = tpu.matmul %354, %351, %cst_96 {dimension_numbers = #tpu.dot_dimension_numbers<[1], [0], [0], [1], [0, 0, 1, 1], [], []>} : vector<16x32xbf16>, vector<32x64xbf16>, vector<16x64xf32> -> vector<16x64xf32>
    %356 = vector.broadcast %353 : vector<1x64xf32> to vector<16x64xf32>
    %357 = arith.addf %355, %356 : vector<16x64xf32>
    %cst_97 = arith.constant 0.000000e+00 : f32
    %358 = vector.broadcast %cst_97 : f32 to vector<16x64xf32>
    %359 = arith.maximumf %357, %358 : vector<16x64xf32>
    %c0_98 = arith.constant 0 : index
    %c0_99 = arith.constant 0 : index
    %c0_100 = arith.constant 0 : index
    %360 = vector.load %arg11[%c0_98, %c0_99, %c0_100] : memref<1x64x32xbf16, #tpu.memory_space<vmem>>, vector<1x64x32xbf16>
    %361 = vector.shape_cast %360 : vector<1x64x32xbf16> to vector<64x32xbf16>
    %c0_101 = arith.constant 0 : index
    %c0_102 = arith.constant 0 : index
    %c0_103 = arith.constant 0 : index
    %362 = vector.load %arg12[%c0_101, %c0_102, %c0_103] : memref<1x1x32xf32, #tpu.memory_space<vmem>>, vector<1x1x32xf32>
    %363 = vector.shape_cast %362 : vector<1x1x32xf32> to vector<1x32xf32>
    %364 = arith.truncf %359 : vector<16x64xf32> to vector<16x64xbf16>
    %cst_104 = arith.constant dense<0.000000e+00> : vector<16x32xf32>
    %365 = tpu.matmul %364, %361, %cst_104 {dimension_numbers = #tpu.dot_dimension_numbers<[1], [0], [0], [1], [0, 0, 1, 1], [], []>} : vector<16x64xbf16>, vector<64x32xbf16>, vector<16x32xf32> -> vector<16x32xf32>
    %366 = vector.broadcast %363 : vector<1x32xf32> to vector<16x32xf32>
    %367 = arith.addf %365, %366 : vector<16x32xf32>
    %368 = arith.addf %367, %349 : vector<16x32xf32>
    %369 = vector.extract_strided_slice %7 {offsets = [2, 0, 0], sizes = [1, 1, 32], strides = [1, 1, 1]} : vector<3x1x32xf32> to vector<1x1x32xf32>
    %370 = vector.shape_cast %369 : vector<1x1x32xf32> to vector<1x32xf32>
    %371 = vector.extract_strided_slice %9 {offsets = [2, 0, 0], sizes = [1, 1, 32], strides = [1, 1, 1]} : vector<3x1x32xf32> to vector<1x1x32xf32>
    %372 = vector.shape_cast %371 : vector<1x1x32xf32> to vector<1x32xf32>
    %cst_105 = arith.constant dense<0.000000e+00> : vector<16xf32>
    %373 = vector.multi_reduction <add>, %368, %cst_105 [1] : vector<16x32xf32> to vector<16xf32>
    %374 = vector.shape_cast %373 : vector<16xf32> to vector<16x1xf32>
    %cst_106 = arith.constant 3.200000e+01 : f32
    %375 = vector.broadcast %cst_106 : f32 to vector<16x1xf32>
    %376 = arith.divf %374, %375 : vector<16x1xf32>
    %377 = vector.broadcast %376 : vector<16x1xf32> to vector<16x32xf32>
    %378 = arith.subf %368, %377 : vector<16x32xf32>
    %379 = arith.mulf %378, %378 : vector<16x32xf32>
    %cst_107 = arith.constant dense<0.000000e+00> : vector<16xf32>
    %380 = vector.multi_reduction <add>, %379, %cst_107 [1] : vector<16x32xf32> to vector<16xf32>
    %381 = vector.shape_cast %380 : vector<16xf32> to vector<16x1xf32>
    %cst_108 = arith.constant 3.200000e+01 : f32
    %382 = vector.broadcast %cst_108 : f32 to vector<16x1xf32>
    %383 = arith.divf %381, %382 : vector<16x1xf32>
    %384 = vector.broadcast %376 : vector<16x1xf32> to vector<16x32xf32>
    %385 = arith.subf %368, %384 : vector<16x32xf32>
    %cst_109 = arith.constant 9.99999974E-6 : f32
    %386 = vector.broadcast %cst_109 : f32 to vector<16x1xf32>
    %387 = arith.addf %383, %386 : vector<16x1xf32>
    %388 = math.rsqrt %387 : vector<16x1xf32>
    %389 = vector.broadcast %388 : vector<16x1xf32> to vector<16x32xf32>
    %390 = arith.mulf %385, %389 : vector<16x32xf32>
    %391 = vector.broadcast %370 : vector<1x32xf32> to vector<16x32xf32>
    %392 = arith.mulf %390, %391 : vector<16x32xf32>
    %393 = vector.broadcast %372 : vector<1x32xf32> to vector<16x32xf32>
    %394 = arith.addf %392, %393 : vector<16x32xf32>
    %c0_110 = arith.constant 0 : index
    %c0_111 = arith.constant 0 : index
    %395 = vector.load %arg14[%c0_110, %c0_111] : memref<16x32xf32, #tpu.memory_space<vmem>>, vector<16x32xf32>
    tpu.vector_store %arg14[%c0_110, %c0_111], %394 {strides = array<i32>} : memref<16x32xf32, #tpu.memory_space<vmem>>, vector<16x32xf32>,
    %c1_i32 = arith.constant 1 : i32
    %396 = arith.cmpi eq, %arg0, %c1_i32 : i32
    %397 = arith.extui %396 : i1 to i32
    %c0_i32_112 = arith.constant 0 : i32
    %398 = arith.cmpi ne, %397, %c0_i32_112 : i32
    scf.if %398 {
      %399 = vector.shape_cast %394 : vector<16x32xf32> to vector<2x8x32xf32>
      %c0_113 = arith.constant 0 : index
      %c0_114 = arith.constant 0 : index
      %c0_115 = arith.constant 0 : index
      %400 = vector.load %arg13[%c0_113, %c0_114, %c0_115] : memref<2x8x32xf32, #tpu.memory_space<vmem>>, vector<2x8x32xf32>
      tpu.vector_store %arg13[%c0_113, %c0_114, %c0_115], %399 {strides = array<i32>} : memref<2x8x32xf32, #tpu.memory_space<vmem>>, vector<2x8x32xf32>,
    } else {
    }
    return
  }
  func.func @transform_0(%arg0: i32) -> (i32, i32, i32) {
    %c0_i32 = arith.constant 0 : i32
    %c0_i32_0 = arith.constant 0 : i32
    %c0_i32_1 = arith.constant 0 : i32
    %c0_i32_2 = arith.constant 0 : i32
    return %c0_i32, %c0_i32_0, %c0_i32_1 : i32, i32, i32
  }
  func.func @transform_1(%arg0: i32) -> (i32, i32, i32) {
    %c0_i32 = arith.constant 0 : i32
    %c0_i32_0 = arith.constant 0 : i32
    %c0_i32_1 = arith.constant 0 : i32
    %c0_i32_2 = arith.constant 0 : i32
    return %c0_i32, %c0_i32_0, %c0_i32_1 : i32, i32, i32
  }
  func.func @transform_2(%arg0: i32) -> (i32, i32, i32, i32) {
    %c0_i32 = arith.constant 0 : i32
    %c0_i32_0 = arith.constant 0 : i32
    %c0_i32_1 = arith.constant 0 : i32
    %c0_i32_2 = arith.constant 0 : i32
    return %arg0, %c0_i32, %c0_i32_0, %c0_i32_1 : i32, i32, i32, i32
  }
  func.func @transform_3(%arg0: i32) -> (i32, i32, i32, i32) {
    %c0_i32 = arith.constant 0 : i32
    %c0_i32_0 = arith.constant 0 : i32
    %c0_i32_1 = arith.constant 0 : i32
    %c0_i32_2 = arith.constant 0 : i32
    return %arg0, %c0_i32, %c0_i32_0, %c0_i32_1 : i32, i32, i32, i32
  }
  func.func @transform_4(%arg0: i32) -> (i32, i32, i32, i32) {
    %c0_i32 = arith.constant 0 : i32
    %c0_i32_0 = arith.constant 0 : i32
    %c0_i32_1 = arith.constant 0 : i32
    %c0_i32_2 = arith.constant 0 : i32
    return %arg0, %c0_i32, %c0_i32_0, %c0_i32_1 : i32, i32, i32, i32
  }
  func.func @transform_5(%arg0: i32) -> (i32, i32, i32, i32) {
    %c0_i32 = arith.constant 0 : i32
    %c0_i32_0 = arith.constant 0 : i32
    %c0_i32_1 = arith.constant 0 : i32
    %c0_i32_2 = arith.constant 0 : i32
    return %arg0, %c0_i32, %c0_i32_0, %c0_i32_1 : i32, i32, i32, i32
  }
  func.func @transform_6(%arg0: i32) -> (i32, i32, i32, i32) {
    %c0_i32 = arith.constant 0 : i32
    %c0_i32_0 = arith.constant 0 : i32
    %c0_i32_1 = arith.constant 0 : i32
    %c0_i32_2 = arith.constant 0 : i32
    return %arg0, %c0_i32, %c0_i32_0, %c0_i32_1 : i32, i32, i32, i32
  }
  func.func @transform_7(%arg0: i32) -> (i32, i32, i32, i32) {
    %c0_i32 = arith.constant 0 : i32
    %c0_i32_0 = arith.constant 0 : i32
    %c0_i32_1 = arith.constant 0 : i32
    %c0_i32_2 = arith.constant 0 : i32
    return %arg0, %c0_i32, %c0_i32_0, %c0_i32_1 : i32, i32, i32, i32
  }
  func.func @transform_8(%arg0: i32) -> (i32, i32, i32) {
    %c0_i32 = arith.constant 0 : i32
    %c0_i32_0 = arith.constant 0 : i32
    %c0_i32_1 = arith.constant 0 : i32
    return %arg0, %c0_i32, %c0_i32_0 : i32, i32, i32
  }
  func.func @transform_9(%arg0: i32) -> (i32, i32, i32) {
    %c0_i32 = arith.constant 0 : i32
    %c0_i32_0 = arith.constant 0 : i32
    %c0_i32_1 = arith.constant 0 : i32
    return %arg0, %c0_i32, %c0_i32_0 : i32, i32, i32
  }
  func.func @transform_10(%arg0: i32) -> (i32, i32, i32) {
    %c0_i32 = arith.constant 0 : i32
    %c0_i32_0 = arith.constant 0 : i32
    %c0_i32_1 = arith.constant 0 : i32
    return %arg0, %c0_i32, %c0_i32_0 : i32, i32, i32
  }
  func.func @transform_11(%arg0: i32) -> (i32, i32, i32) {
    %c0_i32 = arith.constant 0 : i32
    %c0_i32_0 = arith.constant 0 : i32
    %c0_i32_1 = arith.constant 0 : i32
    return %arg0, %c0_i32, %c0_i32_0 : i32, i32, i32
  }
  func.func @transform_12(%arg0: i32) -> (i32, i32, i32) {
    %c0_i32 = arith.constant 0 : i32
    %c0_i32_0 = arith.constant 0 : i32
    %c0_i32_1 = arith.constant 0 : i32
    %c0_i32_2 = arith.constant 0 : i32
    return %c0_i32, %c0_i32_0, %c0_i32_1 : i32, i32, i32
  }
}

module attributes {stable_mosaic.version = 11 : i64} {
  func.func @_matmul_bias_kernel(%arg0: i32, %arg1: i32, %arg2: i32, %arg3: memref<16x32xf32, #tpu.memory_space<vmem>>, %arg4: memref<32x128xbf16, #tpu.memory_space<vmem>>, %arg5: memref<1x128xf32, #tpu.memory_space<vmem>>, %arg6: memref<16x128xf32, #tpu.memory_space<vmem>>, %arg7: memref<16x128xf32, #tpu.memory_space<vmem>>) attributes {dimension_semantics = [#tpu.dimension_semantics<parallel>, #tpu.dimension_semantics<parallel>, #tpu.dimension_semantics<arbitrary>], iteration_bounds = array<i64: 1, 1, 1>, scalar_prefetch = 0 : i64, scratch_operands = 1 : i64, tpu.core_type = #tpu.core_type<tc>, window_params = [{transform_indices = @transform_0, window_bounds = array<i64: 16, 32>}, {transform_indices = @transform_1, window_bounds = array<i64: 32, 128>}, {transform_indices = @transform_2, window_bounds = array<i64: 1, 128>}, {transform_indices = @transform_3, window_bounds = array<i64: 16, 128>}]} {
    %c0_i32 = arith.constant 0 : i32
    %0 = arith.cmpi eq, %arg2, %c0_i32 : i32
    %1 = arith.extui %0 : i1 to i32
    %c0_i32_0 = arith.constant 0 : i32
    %2 = arith.cmpi ne, %1, %c0_i32_0 : i32
    scf.if %2 {
      %cst_10 = arith.constant 0.000000e+00 : f32
      %13 = vector.broadcast %cst_10 : f32 to vector<16x128xf32>
      %c0_11 = arith.constant 0 : index
      %c0_12 = arith.constant 0 : index
      %14 = vector.load %arg7[%c0_11, %c0_12] : memref<16x128xf32, #tpu.memory_space<vmem>>, vector<16x128xf32>
      tpu.vector_store %arg7[%c0_11, %c0_12], %13 {strides = array<i32>} : memref<16x128xf32, #tpu.memory_space<vmem>>, vector<16x128xf32>,
    } else {
    }
    %c0 = arith.constant 0 : index
    %c0_1 = arith.constant 0 : index
    %3 = vector.load %arg4[%c0, %c0_1] : memref<32x128xbf16, #tpu.memory_space<vmem>>, vector<32x128xbf16>
    %c0_2 = arith.constant 0 : index
    %c0_3 = arith.constant 0 : index
    %4 = vector.load %arg7[%c0_2, %c0_3] : memref<16x128xf32, #tpu.memory_space<vmem>>, vector<16x128xf32>
    %c0_4 = arith.constant 0 : index
    %c0_5 = arith.constant 0 : index
    %5 = vector.load %arg3[%c0_4, %c0_5] : memref<16x32xf32, #tpu.memory_space<vmem>>, vector<16x32xf32>
    %6 = arith.truncf %5 : vector<16x32xf32> to vector<16x32xbf16>
    %cst = arith.constant dense<0.000000e+00> : vector<16x128xf32>
    %7 = tpu.matmul %6, %3, %cst {dimension_numbers = #tpu.dot_dimension_numbers<[1], [0], [0], [1], [0, 0, 1, 1], [], []>} : vector<16x32xbf16>, vector<32x128xbf16>, vector<16x128xf32> -> vector<16x128xf32>
    %8 = arith.addf %4, %7 : vector<16x128xf32>
    %c0_6 = arith.constant 0 : index
    %c0_7 = arith.constant 0 : index
    %9 = vector.load %arg7[%c0_6, %c0_7] : memref<16x128xf32, #tpu.memory_space<vmem>>, vector<16x128xf32>
    tpu.vector_store %arg7[%c0_6, %c0_7], %8 {strides = array<i32>} : memref<16x128xf32, #tpu.memory_space<vmem>>, vector<16x128xf32>,
    %c0_i32_8 = arith.constant 0 : i32
    %10 = arith.cmpi eq, %arg2, %c0_i32_8 : i32
    %11 = arith.extui %10 : i1 to i32
    %c0_i32_9 = arith.constant 0 : i32
    %12 = arith.cmpi ne, %11, %c0_i32_9 : i32
    scf.if %12 {
      %c0_10 = arith.constant 0 : index
      %c0_11 = arith.constant 0 : index
      %13 = vector.load %arg7[%c0_10, %c0_11] : memref<16x128xf32, #tpu.memory_space<vmem>>, vector<16x128xf32>
      %c0_12 = arith.constant 0 : index
      %c0_13 = arith.constant 0 : index
      %14 = vector.load %arg5[%c0_12, %c0_13] : memref<1x128xf32, #tpu.memory_space<vmem>>, vector<1x128xf32>
      %15 = vector.broadcast %14 : vector<1x128xf32> to vector<16x128xf32>
      %16 = arith.addf %13, %15 : vector<16x128xf32>
      %c0_14 = arith.constant 0 : index
      %c0_15 = arith.constant 0 : index
      %17 = vector.load %arg6[%c0_14, %c0_15] : memref<16x128xf32, #tpu.memory_space<vmem>>, vector<16x128xf32>
      tpu.vector_store %arg6[%c0_14, %c0_15], %16 {strides = array<i32>} : memref<16x128xf32, #tpu.memory_space<vmem>>, vector<16x128xf32>,
    } else {
    }
    return
  }
  func.func @transform_0(%arg0: i32, %arg1: i32, %arg2: i32) -> (i32, i32) {
    %c0_i32 = arith.constant 0 : i32
    return %arg0, %arg2 : i32, i32
  }
  func.func @transform_1(%arg0: i32, %arg1: i32, %arg2: i32) -> (i32, i32) {
    %c0_i32 = arith.constant 0 : i32
    return %arg2, %arg1 : i32, i32
  }
  func.func @transform_2(%arg0: i32, %arg1: i32, %arg2: i32) -> (i32, i32) {
    %c0_i32 = arith.constant 0 : i32
    %c0_i32_0 = arith.constant 0 : i32
    return %c0_i32, %arg1 : i32, i32
  }
  func.func @transform_3(%arg0: i32, %arg1: i32, %arg2: i32) -> (i32, i32) {
    %c0_i32 = arith.constant 0 : i32
    return %arg0, %arg1 : i32, i32
  }
}

</mosaic_0001>

<llo_original>
// kernel: transformer_forward.5
$region0: #{transformer_forward.5}
  #allocation0 [shape = 'u32[]', space=smem, size = 0x4, offset = 0x4, fixed_abs, tag = 'smem constant byte address 0x4 - core index']
  #allocation1 [shape = 'u32[144,128]{1,0:T(1,128)}', space=vmem, size = 0x12000, scoped, tag = 'internal scratch']
  #allocation2 [shape = 'f32[16,128]{1,0:T(8,128)}', space=vmem, size = 0x2000, scoped, tag = 'scratch operand']
  %s0 = inlined_call_operand.vmem [shape: f32[16,32], index: 0, kind: input, shape index: {}]
  %s1 = inlined_call_operand.vmem [shape: bf16[32,128], index: 1, kind: input, shape index: {}]
  %s2 = inlined_call_operand.vmem [shape: f32[1,128], index: 2, kind: input, shape index: {}]
  %s3 = inlined_call_operand.vmem [shape: f32[16,128], index: 3, kind: output, shape index: {}]
  %s4 = sld [smem:[#allocation0]]
  $region30: #{transformer_forward.5} parent=0
    _
  %s6 = ssub.s32 1, %s4
  %s7 = scalar_select 0, %s6, %s4
  // Predicated region
  $region2: #{transformer_forward.5} parent=0 // pred_check
    _
  $region3: #{transformer_forward.5} parent=0 // pred_check_branch
    %9 = sbr.rel (0) target = $region5
  $region4: #{transformer_forward.5} parent=0 // pred_region
    _
  $region5: #{transformer_forward.5} parent=0 // pred_fallthru
    _
  // Predicated region
  $region6: #{transformer_forward.5} parent=0 // pred_check
    _
  $region7: #{transformer_forward.5} parent=0 // pred_check_branch
    %11 = sbr.rel (0) target = $region9
  $region8: #{transformer_forward.5} parent=0 // pred_region
    _
  $region9: #{transformer_forward.5} parent=0 // pred_fallthru
    _
  // Predicated region
  $region10: #{transformer_forward.5} parent=0 // pred_check
    _
  $region11: #{transformer_forward.5} parent=0 // pred_check_branch
    %13 = sbr.rel (0) target = $region13
  $region12: #{transformer_forward.5} parent=0 // pred_region
    _
  $region13: #{transformer_forward.5} parent=0 // pred_fallthru
    _
  %p15 = scmp.eq.s32.totalorder 0, 0
  // Predicated region
  $region14: #{transformer_forward.5} parent=0 // pred_check
    %p16 = pneg %p15
  $region15: #{transformer_forward.5} parent=0 // pred_check_branch
    %18 = sbr.rel (%p16) target = $region17
  $region16: #{transformer_forward.5} parent=0 // pred_region
    %19 = vst [vmem:[#allocation2] sm:$0xff] 0.0
    %20 = vst [vmem:[#allocation2 + $0x8] sm:$0xff] 0.0
  $region17: #{transformer_forward.5} parent=0 // pred_fallthru
    _
  %v21 = vld [vmem:[%s1] sm:$0xf]
  %v22 = vld [vmem:[%s1 + $0x4] sm:$0xf]
  %v23 = vld [vmem:[%s1 + $0x8] sm:$0xf]
  %v24 = vld [vmem:[%s1 + $0xc] sm:$0xf]
  %v25 = vld [vmem:[#allocation2] sm:$0xff]
  %v26 = vld [vmem:[#allocation2 + $0x8] sm:$0xff]
  %v27 = vld [vmem:[%s0] sm:$0xff]
  %v28 = vld [vmem:[%s0 + $0x8] sm:$0xff]
  %v29 = vpack.c.bf16 %v28, %v27
  %v34 = vunpack.c.l.b16 %v21
  %v35 = vunpack.c.l.b16 %v22
  %v36 = vunpack.c.l.b16 %v23
  %v37 = vunpack.c.l.b16 %v24
  %v38 = vpack.c.b16 %v35, %v34
  %v39 = vpack.c.b16 %v37, %v36
  %vm42 = vcmask 261120
  %v44 = vsel %vm42, %v29, 0
  %46 = vmatprep.subr.bf16.mxu0 0
  %47 = vmatpush1.bf16.msra.mxu0 %v38
  %48 = vmatprep.subr.bf16.mxu0 0
  %49 = vmatpush1.bf16.msra.mxu0 %v39
  %50 = vmatprep.subr.bf16.mxu0 0
  %51 = vmatpush1.bf16.msra.mxu0 0
  %52 = vmatprep.subr.bf16.mxu0 0
  %53 = vmatpush1.bf16.msra.mxu0 0
  %54 = vmatprep.subr.bf16.mxu0 0
  %55 = vmatpush1.bf16.msra.mxu0 0
  %56 = vmatprep.subr.bf16.mxu0 0
  %57 = vmatpush1.bf16.msra.mxu0 0
  %58 = vmatprep.subr.bf16.mxu0 0
  %59 = vmatpush1.bf16.msra.mxu0 0
  %60 = vmatprep.subr.bf16.mxu0 0
  %61 = vmatpush1.bf16.msra.mxu0 0
  %62 = vmatprep.subr.bf16.mxu0 0
  %63 = vmatpush1.bf16.msra.mxu0 0
  %64 = vmatprep.subr.bf16.mxu0 0
  %65 = vmatpush1.bf16.msra.mxu0 0
  %66 = vmatprep.subr.bf16.mxu0 0
  %67 = vmatpush1.bf16.msra.mxu0 0
  %68 = vmatprep.subr.bf16.mxu0 0
  %69 = vmatpush1.bf16.msra.mxu0 0
  %70 = vmatprep.subr.bf16.mxu0 0
  %71 = vmatpush1.bf16.msra.mxu0 0
  %72 = vmatprep.subr.bf16.mxu0 0
  %73 = vmatpush1.bf16.msra.mxu0 0
  %74 = vmatprep.subr.bf16.mxu0 0
  %75 = vmatpush1.bf16.msra.mxu0 0
  %76 = vmatprep.subr.bf16.mxu0 0
  %77 = vmatpush1.bf16.msra.mxu0 0
  %78 = vmatprep.mubr.bf16.mxu0 0
  %79 = vmatmul.mubr.bf16.gmra.mrb[0].mxu0 %v44
  %v80 = vpop.f32.mrb[0].mxu0
  %v81 = vadd.f32 0.0, %v80
  %v82 = vpop.f32.mrb[0].mxu0
  %v83 = vpop.f32.mrb[0].mxu0
  %v84 = vadd.f32 0.0, %v83
  %v85 = vpop.f32.mrb[0].mxu0
  %86 = vdwg.mxu0
  %v87 = vadd.f32 %v25, %v81
  %v88 = vadd.f32 %v26, %v84
  %89 = vst [vmem:[#allocation2] sm:$0xff] %v87
  %90 = vst [vmem:[#allocation2 + $0x8] sm:$0xff] %v88
  // Predicated region
  $region18: #{transformer_forward.5} parent=0 // pred_check
    %p91 = pneg %p15
  $region19: #{transformer_forward.5} parent=0 // pred_check_branch
    %93 = sbr.rel (%p91) target = $region21
  $region20: #{transformer_forward.5} parent=0 // pred_region
    %v94 = vld [vmem:[#allocation2] sm:$0xff]
    %v95 = vld [vmem:[#allocation2 + $0x8] sm:$0xff]
    %v96 = vld [vmem:[%s2] sm:$0x1]
    %v98 = vlaneseq
    %v99 = vshrl.u32 %v98, 7
    %v100 = vsub.s32 0, %v99
    %v101 = vrot.slane %v96, %v100
    %v103 = vadd.f32 %v94, %v101
    %v104 = vadd.f32 %v95, %v101
    %105 = vst [vmem:[%s3] sm:$0xff] %v103
    %106 = vst [vmem:[%s3 + $0x8] sm:$0xff] %v104
  $region21: #{transformer_forward.5} parent=0 // pred_fallthru
    _
  // Predicated region
  $region22: #{transformer_forward.5} parent=0 // pred_check
    _
  $region23: #{transformer_forward.5} parent=0 // pred_check_branch
    %108 = sbr.rel (0) target = $region25
  $region24: #{transformer_forward.5} parent=0 // pred_region
    _
  $region25: #{transformer_forward.5} parent=0 // pred_fallthru
    _
  // Predicated region
  $region26: #{transformer_forward.5} parent=0 // pred_check
    _
  $region27: #{transformer_forward.5} parent=0 // pred_check_branch
    %110 = sbr.rel (0) target = $region29
  $region28: #{transformer_forward.5} parent=0 // pred_region
    _
  $region29: #{transformer_forward.5} parent=0 // pred_fallthru
    _

// kernel: transformer_forward.3
$region0: #{transformer_forward.3}
  #allocation0 [shape = 'u32[]', space=smem, size = 0x4, offset = 0x4, fixed_abs, tag = 'smem constant byte address 0x4 - core index']
  #allocation1 [shape = 'u32[144,128]{1,0:T(1,128)}', space=vmem, size = 0x12000, scoped, tag = 'internal scratch']
  #allocation2 [shape = 'f32[16,32]{1,0:T(8,128)}', space=vmem, size = 0x2000, scoped, tag = 'scratch operand']
  %s0 = inlined_call_operand.vmem [shape: f32[2,8,32], index: 0, kind: input, shape index: {}]
  %s1 = inlined_call_operand.vmem [shape: bf16[2,4,32,32], index: 1, kind: input, shape index: {}]
  %s2 = inlined_call_operand.vmem [shape: f32[2,4,1,32], index: 2, kind: input, shape index: {}]
  %s3 = inlined_call_operand.vmem [shape: f32[2,2,1,32], index: 3, kind: input, shape index: {}]
  %s4 = inlined_call_operand.vmem [shape: f32[2,2,1,32], index: 4, kind: input, shape index: {}]
  %s5 = inlined_call_operand.vmem [shape: bf16[2,32,64], index: 5, kind: input, shape index: {}]
  %s6 = inlined_call_operand.vmem [shape: f32[2,1,64], index: 6, kind: input, shape index: {}]
  %s7 = inlined_call_operand.vmem [shape: bf16[2,64,32], index: 7, kind: input, shape index: {}]
  %s8 = inlined_call_operand.vmem [shape: f32[2,1,32], index: 8, kind: input, shape index: {}]
  %s9 = inlined_call_operand.vmem [shape: f32[2,8,32], index: 9, kind: output, shape index: {}]
  %s10 = sld [smem:[#allocation0]]
  $region77: #{transformer_forward.3} parent=0
    _
  %s12 = ssub.s32 1, %s10
  %s13 = scalar_select 0, %s12, %s10
  loop: start=0, step=1, limit=4
  $region2: #{transformer_forward.3} parent=0 // loop_pre_header
    _
  $region3: #{transformer_forward.3} parent=0 // loop_header
    %s15 = sphi 0, %s19
    %p16 = scmp.ge.s32.totalorder %s15, 4
    %s23 = sphi 0, %s23
    %s25 = sphi 0, %s23
    %s26 = sphi 0, %s25
    %s40 = sphi 0, %s26
    %s46 = sphi 0, %s48
    %s49 = sphi 0, %s46
    %s50 = sphi 0, %s49
    %s66 = sphi 0, %s50
    %s72 = sphi 0, %s74
    %s75 = sphi 0, %s72
    %s76 = sphi 0, %s75
    %s92 = sphi 0, %s76
    %s98 = sphi 0, %s100
    %s101 = sphi 0, %s98
    %s102 = sphi 0, %s101
    %s118 = sphi 0, %s102
    %s124 = sphi 0, %s126
    %s127 = sphi 0, %s124
    %s128 = sphi 0, %s127
    %s144 = sphi 0, %s128
    %s150 = sphi 0, %s152
    %s153 = sphi 0, %s150
    %s154 = sphi 0, %s153
    %s170 = sphi 0, %s154
    %s176 = sphi 0, %s178
    %s179 = sphi 0, %s176
    %s180 = sphi 0, %s179
    %s196 = sphi 0, %s180
    %s202 = sphi 0, %s204
    %s205 = sphi 0, %s202
    %s206 = sphi 0, %s205
    %s222 = sphi 0, %s206
    %s228 = sphi 0, %s230
    %s231 = sphi 0, %s228
    %s232 = sphi 0, %s231
    %s248 = sphi 0, %s232
    %s252 = sphi 0, %s252
    %s254 = sphi 0, %s252
    %s255 = sphi 0, %s254
    %s269 = sphi 0, %s255
  $region4: #{transformer_forward.3} parent=0 // loop_header_branch
    %18 = sbr.rel (%p16) target = $region8
  $region5: #{transformer_forward.3} parent=0 // loop_body
    %s20 = ssub.s32 %s15, 1
    %s21 = ssub.s32 %s15, 2
    %s22 = sadd.s32 %s15, 1
    %s24 = sadd.s32 %s23, 1
    %p27 = scmp.eq.s32.totalorder %s15, 1
    %p28 = scmp.ne.s32.totalorder %s23, %s25
    %p29 = scmp.eq.s32.totalorder %s15, 0
    %p30 = por %p28, %p29
    %p31 = scmp.ne.s32.totalorder %s23, %s25
    %p32 = scmp.eq.s32.totalorder %s20, 1
    %p33 = por %p31, %p32
    %p34 = scmp.ne.s32.totalorder %s25, %s26
    %p35 = scmp.eq.s32.totalorder %s20, 0
    %p36 = por %p34, %p35
    %p37 = scmp.ne.s32.totalorder %s25, %s26
    %p38 = scmp.eq.s32.totalorder %s21, 1
    %p39 = por %p37, %p38
    %p41 = scmp.ne.s32.totalorder %s26, %s40
    %p42 = scmp.eq.s32.totalorder %s21, 0
    %p43 = por %p41, %p42
    %s44 = ssub.s32 %s15, %s22
    %p45 = scmp.eq.s32.totalorder %s44, 0
    %s47 = sadd.s32 %s46, 1
    %s48 = scalar_select %p45, %s46, %s47
    %p51 = pneg %p45
    %p52 = scmp.eq.s32.totalorder %s15, 1
    %p53 = por %p51, %p52
    %p54 = scmp.ne.s32.totalorder %s46, %s49
    %p55 = scmp.eq.s32.totalorder %s15, 0
    %p56 = por %p54, %p55
    %p57 = scmp.ne.s32.totalorder %s46, %s49
    %p58 = scmp.eq.s32.totalorder %s20, 1
    %p59 = por %p57, %p58
    %p60 = scmp.ne.s32.totalorder %s49, %s50
    %p61 = scmp.eq.s32.totalorder %s20, 0
    %p62 = por %p60, %p61
    %p63 = scmp.ne.s32.totalorder %s49, %s50
    %p64 = scmp.eq.s32.totalorder %s21, 1
    %p65 = por %p63, %p64
    %p67 = scmp.ne.s32.totalorder %s50, %s66
    %p68 = scmp.eq.s32.totalorder %s21, 0
    %p69 = por %p67, %p68
    %s70 = ssub.s32 %s15, %s22
    %p71 = scmp.eq.s32.totalorder %s70, 0
    %s73 = sadd.s32 %s72, 1
    %s74 = scalar_select %p71, %s72, %s73
    %p77 = pneg %p71
    %p78 = scmp.eq.s32.totalorder %s15, 1
    %p79 = por %p77, %p78
    %p80 = scmp.ne.s32.totalorder %s72, %s75
    %p81 = scmp.eq.s32.totalorder %s15, 0
    %p82 = por %p80, %p81
    %p83 = scmp.ne.s32.totalorder %s72, %s75
    %p84 = scmp.eq.s32.totalorder %s20, 1
    %p85 = por %p83, %p84
    %p86 = scmp.ne.s32.totalorder %s75, %s76
    %p87 = scmp.eq.s32.totalorder %s20, 0
    %p88 = por %p86, %p87
    %p89 = scmp.ne.s32.totalorder %s75, %s76
    %p90 = scmp.eq.s32.totalorder %s21, 1
    %p91 = por %p89, %p90
    %p93 = scmp.ne.s32.totalorder %s76, %s92
    %p94 = scmp.eq.s32.totalorder %s21, 0
    %p95 = por %p93, %p94
    %s96 = ssub.s32 %s15, %s22
    %p97 = scmp.eq.s32.totalorder %s96, 0
    %s99 = sadd.s32 %s98, 1
    %s100 = scalar_select %p97, %s98, %s99
    %p103 = pneg %p97
    %p104 = scmp.eq.s32.totalorder %s15, 1
    %p105 = por %p103, %p104
    %p106 = scmp.ne.s32.totalorder %s98, %s101
    %p107 = scmp.eq.s32.totalorder %s15, 0
    %p108 = por %p106, %p107
    %p109 = scmp.ne.s32.totalorder %s98, %s101
    %p110 = scmp.eq.s32.totalorder %s20, 1
    %p111 = por %p109, %p110
    %p112 = scmp.ne.s32.totalorder %s101, %s102
    %p113 = scmp.eq.s32.totalorder %s20, 0
    %p114 = por %p112, %p113
    %p115 = scmp.ne.s32.totalorder %s101, %s102
    %p116 = scmp.eq.s32.totalorder %s21, 1
    %p117 = por %p115, %p116
    %p119 = scmp.ne.s32.totalorder %s102, %s118
    %p120 = scmp.eq.s32.totalorder %s21, 0
    %p121 = por %p119, %p120
    %s122 = ssub.s32 %s15, %s22
    %p123 = scmp.eq.s32.totalorder %s122, 0
    %s125 = sadd.s32 %s124, 1
    %s126 = scalar_select %p123, %s124, %s125
    %p129 = pneg %p123
    %p130 = scmp.eq.s32.totalorder %s15, 1
    %p131 = por %p129, %p130
    %p132 = scmp.ne.s32.totalorder %s124, %s127
    %p133 = scmp.eq.s32.totalorder %s15, 0
    %p134 = por %p132, %p133
    %p135 = scmp.ne.s32.totalorder %s124, %s127
    %p136 = scmp.eq.s32.totalorder %s20, 1
    %p137 = por %p135, %p136
    %p138 = scmp.ne.s32.totalorder %s127, %s128
    %p139 = scmp.eq.s32.totalorder %s20, 0
    %p140 = por %p138, %p139
    %p141 = scmp.ne.s32.totalorder %s127, %s128
    %p142 = scmp.eq.s32.totalorder %s21, 1
    %p143 = por %p141, %p142
    %p145 = scmp.ne.s32.totalorder %s128, %s144
    %p146 = scmp.eq.s32.totalorder %s21, 0
    %p147 = por %p145, %p146
    %s148 = ssub.s32 %s15, %s22
    %p149 = scmp.eq.s32.totalorder %s148, 0
    %s151 = sadd.s32 %s150, 1
    %s152 = scalar_select %p149, %s150, %s151
    %p155 = pneg %p149
    %p156 = scmp.eq.s32.totalorder %s15, 1
    %p157 = por %p155, %p156
    %p158 = scmp.ne.s32.totalorder %s150, %s153
    %p159 = scmp.eq.s32.totalorder %s15, 0
    %p160 = por %p158, %p159
    %p161 = scmp.ne.s32.totalorder %s150, %s153
    %p162 = scmp.eq.s32.totalorder %s20, 1
    %p163 = por %p161, %p162
    %p164 = scmp.ne.s32.totalorder %s153, %s154
    %p165 = scmp.eq.s32.totalorder %s20, 0
    %p166 = por %p164, %p165
    %p167 = scmp.ne.s32.totalorder %s153, %s154
    %p168 = scmp.eq.s32.totalorder %s21, 1
    %p169 = por %p167, %p168
    %p171 = scmp.ne.s32.totalorder %s154, %s170
    %p172 = scmp.eq.s32.totalorder %s21, 0
    %p173 = por %p171, %p172
    %s174 = ssub.s32 %s15, %s22
    %p175 = scmp.eq.s32.totalorder %s174, 0
    %s177 = sadd.s32 %s176, 1
    %s178 = scalar_select %p175, %s176, %s177
    %p181 = pneg %p175
    %p182 = scmp.eq.s32.totalorder %s15, 1
    %p183 = por %p181, %p182
    %p184 = scmp.ne.s32.totalorder %s176, %s179
    %p185 = scmp.eq.s32.totalorder %s15, 0
    %p186 = por %p184, %p185
    %p187 = scmp.ne.s32.totalorder %s176, %s179
    %p188 = scmp.eq.s32.totalorder %s20, 1
    %p189 = por %p187, %p188
    %p190 = scmp.ne.s32.totalorder %s179, %s180
    %p191 = scmp.eq.s32.totalorder %s20, 0
    %p192 = por %p190, %p191
    %p193 = scmp.ne.s32.totalorder %s179, %s180
    %p194 = scmp.eq.s32.totalorder %s21, 1
    %p195 = por %p193, %p194
    %p197 = scmp.ne.s32.totalorder %s180, %s196
    %p198 = scmp.eq.s32.totalorder %s21, 0
    %p199 = por %p197, %p198
    %s200 = ssub.s32 %s15, %s22
    %p201 = scmp.eq.s32.totalorder %s200, 0
    %s203 = sadd.s32 %s202, 1
    %s204 = scalar_select %p201, %s202, %s203
    %p207 = pneg %p201
    %p208 = scmp.eq.s32.totalorder %s15, 1
    %p209 = por %p207, %p208
    %p210 = scmp.ne.s32.totalorder %s202, %s205
    %p211 = scmp.eq.s32.totalorder %s15, 0
    %p212 = por %p210, %p211
    %p213 = scmp.ne.s32.totalorder %s202, %s205
    %p214 = scmp.eq.s32.totalorder %s20, 1
    %p215 = por %p213, %p214
    %p216 = scmp.ne.s32.totalorder %s205, %s206
    %p217 = scmp.eq.s32.totalorder %s20, 0
    %p218 = por %p216, %p217
    %p219 = scmp.ne.s32.totalorder %s205, %s206
    %p220 = scmp.eq.s32.totalorder %s21, 1
    %p221 = por %p219, %p220
    %p223 = scmp.ne.s32.totalorder %s206, %s222
    %p224 = scmp.eq.s32.totalorder %s21, 0
    %p225 = por %p223, %p224
    %s226 = ssub.s32 %s15, %s22
    %p227 = scmp.eq.s32.totalorder %s226, 0
    %s229 = sadd.s32 %s228, 1
    %s230 = scalar_select %p227, %s228, %s229
    %p233 = pneg %p227
    %p234 = scmp.eq.s32.totalorder %s15, 1
    %p235 = por %p233, %p234
    %p236 = scmp.ne.s32.totalorder %s228, %s231
    %p237 = scmp.eq.s32.totalorder %s15, 0
    %p238 = por %p236, %p237
    %p239 = scmp.ne.s32.totalorder %s228, %s231
    %p240 = scmp.eq.s32.totalorder %s20, 1
    %p241 = por %p239, %p240
    %p242 = scmp.ne.s32.totalorder %s231, %s232
    %p243 = scmp.eq.s32.totalorder %s20, 0
    %p244 = por %p242, %p243
    %p245 = scmp.ne.s32.totalorder %s231, %s232
    %p246 = scmp.eq.s32.totalorder %s21, 1
    %p247 = por %p245, %p246
    %p249 = scmp.ne.s32.totalorder %s232, %s248
    %p250 = scmp.eq.s32.totalorder %s21, 0
    %p251 = por %p249, %p250
    %s253 = sadd.s32 %s252, 1
    %p256 = scmp.eq.s32.totalorder %s15, 1
    %p257 = scmp.ne.s32.totalorder %s252, %s254
    %p258 = scmp.eq.s32.totalorder %s15, 0
    %p259 = por %p257, %p258
    %p260 = scmp.ne.s32.totalorder %s252, %s254
    %p261 = scmp.eq.s32.totalorder %s20, 1
    %p262 = por %p260, %p261
    %p263 = scmp.ne.s32.totalorder %s254, %s255
    %p264 = scmp.eq.s32.totalorder %s20, 0
    %p265 = por %p263, %p264
    %p266 = scmp.ne.s32.totalorder %s254, %s255
    %p267 = scmp.eq.s32.totalorder %s21, 1
    %p268 = por %p266, %p267
    %p270 = scmp.ne.s32.totalorder %s255, %s269
    %p271 = scmp.eq.s32.totalorder %s21, 0
    %p272 = por %p270, %p271
    %p273 = scmp.le.s32.totalorder 1, %s15
    %p274 = scmp.lt.s32.totalorder %s15, 3
    %p275 = pnand %p273, %p274
    %p276 = pneg %p275
    // Predicated region
    $region9: #{transformer_forward.3} parent=5 // pred_check
      _
    $region10: #{transformer_forward.3} parent=5 // pred_check_branch
      %278 = sbr.rel (%p275) target = $region12
    $region11: #{transformer_forward.3} parent=5 // pred_region
      %s279 = ssub.s32 %s15, 1
      // Predicated region
      $region13: #{transformer_forward.3} parent=11 // pred_check
        %p280 = pneg %p36
      $region14: #{transformer_forward.3} parent=11 // pred_check_branch
        %282 = sbr.rel (%p280) target = $region16
      $region15: #{transformer_forward.3} parent=11 // pred_region
        _
      $region16: #{transformer_forward.3} parent=11 // pred_fallthru
        _
    $region12: #{transformer_forward.3} parent=5 // pred_fallthru
      _
    %p283 = scmp.lt.s32.totalorder %s15, 2
    // Predicated region
    $region17: #{transformer_forward.3} parent=5 // pred_check
      %p284 = pneg %p283
    $region18: #{transformer_forward.3} parent=5 // pred_check_branch
      %286 = sbr.rel (%p284) target = $region20
    $region19: #{transformer_forward.3} parent=5 // pred_region
      // Predicated region
      $region21: #{transformer_forward.3} parent=19 // pred_check
        %p287 = pneg %p56
      $region22: #{transformer_forward.3} parent=19 // pred_check_branch
        %289 = sbr.rel (%p287) target = $region24
      $region23: #{transformer_forward.3} parent=19 // pred_region
        %p290 = scmp.lt.s32.totalorder %s15, 1
        %s291 = scalar_select %p290, %s15, 1
        %s292 = smul.addr %s291, 16
        %s293 = smul.addr %s292, 4
        %s294 = scalar_lea.vmem %s1, %s293
      $region24: #{transformer_forward.3} parent=19 // pred_fallthru
        _
      // Predicated region
      $region25: #{transformer_forward.3} parent=19 // pred_check
        %p295 = pneg %p82
      $region26: #{transformer_forward.3} parent=19 // pred_check_branch
        %297 = sbr.rel (%p295) target = $region28
      $region27: #{transformer_forward.3} parent=19 // pred_region
        %p298 = scmp.lt.s32.totalorder %s15, 1
        %s299 = scalar_select %p298, %s15, 1
        %s300 = smul.addr %s299, 4
        %s301 = scalar_lea.vmem %s2, %s300
      $region28: #{transformer_forward.3} parent=19 // pred_fallthru
        _
      // Predicated region
      $region29: #{transformer_forward.3} parent=19 // pred_check
        %p302 = pneg %p108
      $region30: #{transformer_forward.3} parent=19 // pred_check_branch
        %304 = sbr.rel (%p302) target = $region32
      $region31: #{transformer_forward.3} parent=19 // pred_region
        %p305 = scmp.lt.s32.totalorder %s15, 1
        %s306 = scalar_select %p305, %s15, 1
        %s307 = smul.addr %s306, 2
        %s308 = scalar_lea.vmem %s3, %s307
      $region32: #{transformer_forward.3} parent=19 // pred_fallthru
        _
      // Predicated region
      $region33: #{transformer_forward.3} parent=19 // pred_check
        %p309 = pneg %p134
      $region34: #{transformer_forward.3} parent=19 // pred_check_branch
        %311 = sbr.rel (%p309) target = $region36
      $region35: #{transformer_forward.3} parent=19 // pred_region
        %p312 = scmp.lt.s32.totalorder %s15, 1
        %s313 = scalar_select %p312, %s15, 1
        %s314 = smul.addr %s313, 2
        %s315 = scalar_lea.vmem %s4, %s314
      $region36: #{transformer_forward.3} parent=19 // pred_fallthru
        _
      // Predicated region
      $region37: #{transformer_forward.3} parent=19 // pred_check
        %p316 = pneg %p160
      $region38: #{transformer_forward.3} parent=19 // pred_check_branch
        %318 = sbr.rel (%p316) target = $region40
      $region39: #{transformer_forward.3} parent=19 // pred_region
        %p319 = scmp.lt.s32.totalorder %s15, 1
        %s320 = scalar_select %p319, %s15, 1
        %s321 = smul.addr %s320, 4
        %s322 = smul.addr %s321, 4
        %s323 = scalar_lea.vmem %s5, %s322
      $region40: #{transformer_forward.3} parent=19 // pred_fallthru
        _
      // Predicated region
      $region41: #{transformer_forward.3} parent=19 // pred_check
        %p324 = pneg %p186
      $region42: #{transformer_forward.3} parent=19 // pred_check_branch
        %326 = sbr.rel (%p324) target = $region44
      $region43: #{transformer_forward.3} parent=19 // pred_region
        %p327 = scmp.lt.s32.totalorder %s15, 1
        %s328 = scalar_select %p327, %s15, 1
        %s329 = scalar_lea.vmem %s6, %s328
      $region44: #{transformer_forward.3} parent=19 // pred_fallthru
        _
      // Predicated region
      $region45: #{transformer_forward.3} parent=19 // pred_check
        %p330 = pneg %p212
      $region46: #{transformer_forward.3} parent=19 // pred_check_branch
        %332 = sbr.rel (%p330) target = $region48
      $region47: #{transformer_forward.3} parent=19 // pred_region
        %p333 = scmp.lt.s32.totalorder %s15, 1
        %s334 = scalar_select %p333, %s15, 1
        %s335 = smul.addr %s334, 8
        %s336 = smul.addr %s335, 4
        %s337 = scalar_lea.vmem %s7, %s336
      $region48: #{transformer_forward.3} parent=19 // pred_fallthru
        _
      // Predicated region
      $region49: #{transformer_forward.3} parent=19 // pred_check
        %p338 = pneg %p238
      $region50: #{transformer_forward.3} parent=19 // pred_check_branch
        %340 = sbr.rel (%p338) target = $region52
      $region51: #{transformer_forward.3} parent=19 // pred_region
        %p341 = scmp.lt.s32.totalorder %s15, 1
        %s342 = scalar_select %p341, %s15, 1
        %s343 = scalar_lea.vmem %s8, %s342
      $region52: #{transformer_forward.3} parent=19 // pred_fallthru
        _
    $region20: #{transformer_forward.3} parent=5 // pred_fallthru
      _
    %p344 = scmp.le.s32.totalorder 1, %s15
    %p345 = scmp.lt.s32.totalorder %s15, 3
    %p346 = pnand %p344, %p345
    %p347 = pneg %p346
    // Predicated region
    $region53: #{transformer_forward.3} parent=5 // pred_check
      _
    $region54: #{transformer_forward.3} parent=5 // pred_check_branch
      %349 = sbr.rel (%p346) target = $region56
    $region55: #{transformer_forward.3} parent=5 // pred_region
      %s350 = ssub.s32 %s15, 1
      %p351 = pneg %p36
      %p352 = pneg %p33
      %p353 = scmp.lt.s32.totalorder %s20, 1
      %s354 = scalar_select %p353, %s20, 1
      %s355 = smul.addr %s354, 16
      %s356 = smul.addr %s355, 4
      %s357 = scalar_lea.vmem %s1, %s356
      %p358 = pneg %p62
      %p359 = pneg %p59
      %p360 = scmp.lt.s32.totalorder %s20, 1
      %s361 = scalar_select %p360, %s20, 1
      %s362 = smul.addr %s361, 4
      %s363 = scalar_lea.vmem %s2, %s362
      %p364 = pneg %p88
      %p365 = pneg %p85
      %p366 = scmp.lt.s32.totalorder %s20, 1
      %s367 = scalar_select %p366, %s20, 1
      %s368 = smul.addr %s367, 2
      %s369 = scalar_lea.vmem %s3, %s368
      %p370 = pneg %p114
      %p371 = pneg %p111
      %p372 = scmp.lt.s32.totalorder %s20, 1
      %s373 = scalar_select %p372, %s20, 1
      %s374 = smul.addr %s373, 2
      %s375 = scalar_lea.vmem %s4, %s374
      %p376 = pneg %p140
      %p377 = pneg %p137
      %p378 = scmp.lt.s32.totalorder %s20, 1
      %s379 = scalar_select %p378, %s20, 1
      %s380 = smul.addr %s379, 4
      %s381 = smul.addr %s380, 4
      %s382 = scalar_lea.vmem %s5, %s381
      %p383 = pneg %p166
      %p384 = pneg %p163
      %p385 = scmp.lt.s32.totalorder %s20, 1
      %s386 = scalar_select %p385, %s20, 1
      %s387 = scalar_lea.vmem %s6, %s386
      %p388 = pneg %p192
      %p389 = pneg %p189
      %p390 = scmp.lt.s32.totalorder %s20, 1
      %s391 = scalar_select %p390, %s20, 1
      %s392 = smul.addr %s391, 8
      %s393 = smul.addr %s392, 4
      %s394 = scalar_lea.vmem %s7, %s393
      %p395 = pneg %p218
      %p396 = pneg %p215
      %p397 = scmp.lt.s32.totalorder %s20, 1
      %s398 = scalar_select %p397, %s20, 1
      %s399 = scalar_lea.vmem %s8, %s398
      %p400 = pneg %p244
      %p401 = pneg %p241
      %p402 = pneg %p265
      %p403 = pneg %p262
      %p404 = scmp.lt.s32.totalorder %s20, 1
      %s405 = scalar_select %p404, %s20, 1
      %s406 = smul.addr %s405, 16
      %s407 = smul.addr %s406, 4
      %s408 = scalar_lea.vmem %s1, %s407
      %p409 = scmp.lt.s32.totalorder %s20, 1
      %s410 = scalar_select %p409, %s20, 1
      %s411 = smul.addr %s410, 4
      %s412 = scalar_lea.vmem %s2, %s411
      %p413 = scmp.lt.s32.totalorder %s20, 1
      %s414 = scalar_select %p413, %s20, 1
      %s415 = smul.addr %s414, 2
      %s416 = scalar_lea.vmem %s3, %s415
      %p417 = scmp.lt.s32.totalorder %s20, 1
      %s418 = scalar_select %p417, %s20, 1
      %s419 = smul.addr %s418, 2
      %s420 = scalar_lea.vmem %s4, %s419
      %p421 = scmp.lt.s32.totalorder %s20, 1
      %s422 = scalar_select %p421, %s20, 1
      %s423 = smul.addr %s422, 4
      %s424 = smul.addr %s423, 4
      %s425 = scalar_lea.vmem %s5, %s424
      %p426 = scmp.lt.s32.totalorder %s20, 1
      %s427 = scalar_select %p426, %s20, 1
      %s428 = scalar_lea.vmem %s6, %s427
      %p429 = scmp.lt.s32.totalorder %s20, 1
      %s430 = scalar_select %p429, %s20, 1
      %s431 = smul.addr %s430, 8
      %s432 = smul.addr %s431, 4
      %s433 = scalar_lea.vmem %s7, %s432
      %p434 = scmp.lt.s32.totalorder %s20, 1
      %s435 = scalar_select %p434, %s20, 1
      %s436 = scalar_lea.vmem %s8, %s435
      %p438 = scmp.eq.s32.totalorder %s20, 0
      // Predicated region
      $region57: #{transformer_forward.3} parent=55 // pred_check
        %p439 = pneg %p438
      $region58: #{transformer_forward.3} parent=55 // pred_check_branch
        %441 = sbr.rel (%p439) target = $region60
      $region59: #{transformer_forward.3} parent=55 // pred_region
        %v442 = vld [vmem:[%s0] sm:$0xff]
        %v443 = vld [vmem:[%s0 + $0x8] sm:$0xff]
        %vm444 = vcmask 261120
        %445 = vst.msk [vmem:[#allocation2] sm:$0xff] %vm444, %v442
        %446 = vst.msk [vmem:[#allocation2 + $0x8] sm:$0xff] %vm444, %v443
      $region60: #{transformer_forward.3} parent=55 // pred_fallthru
        _
      %v447 = vld [vmem:[#allocation2] sm:$0xff]
      %v448 = vld [vmem:[#allocation2 + $0x8] sm:$0xff]
      %v449 = vld [vmem:[%s416] sm:$0x1]
      %v450 = vld [vmem:[%s416 + $0x1] sm:$0x1]
      %v451 = vld [vmem:[%s420] sm:$0x1]
      %v452 = vld [vmem:[%s420 + $0x1] sm:$0x1]
      %v453 = vld [vmem:[%s408] sm:$0xf]
      %v454 = vld [vmem:[%s408 + $0x4] sm:$0xf]
      %v455 = vld [vmem:[%s408 + $0x8] sm:$0xf]
      %v456 = vld [vmem:[%s408 + $0xc] sm:$0xf]
      %v457 = vld [vmem:[%s408 + $0x10] sm:$0xf]
      %v458 = vld [vmem:[%s408 + $0x14] sm:$0xf]
      %v459 = vld [vmem:[%s408 + $0x18] sm:$0xf]
      %v460 = vld [vmem:[%s408 + $0x1c] sm:$0xf]
      %v461 = vld [vmem:[%s408 + $0x20] sm:$0xf]
      %v462 = vld [vmem:[%s408 + $0x24] sm:$0xf]
      %v463 = vld [vmem:[%s408 + $0x28] sm:$0xf]
      %v464 = vld [vmem:[%s408 + $0x2c] sm:$0xf]
      %v465 = vld [vmem:[%s408 + $0x30] sm:$0xf]
      %v466 = vld [vmem:[%s408 + $0x34] sm:$0xf]
      %v467 = vld [vmem:[%s408 + $0x38] sm:$0xf]
      %v468 = vld [vmem:[%s408 + $0x3c] sm:$0xf]
      %v469 = vld [vmem:[%s412] sm:$0x1]
      %v470 = vld [vmem:[%s412 + $0x1] sm:$0x1]
      %v471 = vld [vmem:[%s412 + $0x2] sm:$0x1]
      %v472 = vld [vmem:[%s412 + $0x3] sm:$0x1]
      %v473 = vpack.c.bf16 %v448, %v447
      %v475 = vlaneseq
      %v476 = vshrl.u32 %v475, 7
      %v477 = vsub.s32 0, %v476
      %v478 = vrot.slane %v469, %v477
      %v484 = vunpack.c.l.b16 %v453
      %v485 = vunpack.c.l.b16 %v454
      %v486 = vunpack.c.l.b16 %v455
      %v487 = vunpack.c.l.b16 %v456
      %v488 = vpack.c.b16 %v485, %v484
      %v489 = vpack.c.b16 %v487, %v486
      %vm492 = vcmask 261120
      %v494 = vsel %vm492, %v473, 0
      %496 = vmatprep.subr.bf16.mxu0 0
      %497 = vmatpush1.bf16.msra.mxu0 %v488
      %498 = vmatprep.subr.bf16.mxu0 0
      %499 = vmatpush1.bf16.msra.mxu0 %v489
      %500 = vmatprep.subr.bf16.mxu0 0
      %501 = vmatpush1.bf16.msra.mxu0 0
      %502 = vmatprep.subr.bf16.mxu0 0
      %503 = vmatpush1.bf16.msra.mxu0 0
      %504 = vmatprep.subr.bf16.mxu0 0
      %505 = vmatpush1.bf16.msra.mxu0 0
      %506 = vmatprep.subr.bf16.mxu0 0
      %507 = vmatpush1.bf16.msra.mxu0 0
      %508 = vmatprep.subr.bf16.mxu0 0
      %509 = vmatpush1.bf16.msra.mxu0 0
      %510 = vmatprep.subr.bf16.mxu0 0
      %511 = vmatpush1.bf16.msra.mxu0 0
      %512 = vmatprep.subr.bf16.mxu0 0
      %513 = vmatpush1.bf16.msra.mxu0 0
      %514 = vmatprep.subr.bf16.mxu0 0
      %515 = vmatpush1.bf16.msra.mxu0 0
      %516 = vmatprep.subr.bf16.mxu0 0
      %517 = vmatpush1.bf16.msra.mxu0 0
      %518 = vmatprep.subr.bf16.mxu0 0
      %519 = vmatpush1.bf16.msra.mxu0 0
      %520 = vmatprep.subr.bf16.mxu0 0
      %521 = vmatpush1.bf16.msra.mxu0 0
      %522 = vmatprep.subr.bf16.mxu0 0
      %523 = vmatpush1.bf16.msra.mxu0 0
      %524 = vmatprep.subr.bf16.mxu0 0
      %525 = vmatpush1.bf16.msra.mxu0 0
      %526 = vmatprep.subr.bf16.mxu0 0
      %527 = vmatpush1.bf16.msra.mxu0 0
      %528 = vmatprep.mubr.bf16.mxu0 0
      %529 = vmatmul.mubr.bf16.gmra.mrb[0].mxu0 %v494
      %v530 = vpop.f32.mrb[0].mxu0
      %v531 = vadd.f32 %v478, %v530
      %v532 = vpop.f32.mrb[0].mxu0
      %v533 = vpop.f32.mrb[0].mxu0
      %v534 = vadd.f32 %v478, %v533
      %v535 = vpop.f32.mrb[0].mxu0
      %536 = vdwg.mxu0
      %v538 = vlaneseq
      %v539 = vshrl.u32 %v538, 7
      %v540 = vsub.s32 0, %v539
      %v541 = vrot.slane %v470, %v540
      %v547 = vunpack.c.l.b16 %v457
      %v548 = vunpack.c.l.b16 %v458
      %v549 = vunpack.c.l.b16 %v459
      %v550 = vunpack.c.l.b16 %v460
      %v551 = vpack.c.b16 %v548, %v547
      %v552 = vpack.c.b16 %v550, %v549
      %555 = vmatprep.subr.bf16.mxu0 0
      %556 = vmatpush1.bf16.msra.mxu0 %v551
      %557 = vmatprep.subr.bf16.mxu0 0
      %558 = vmatpush1.bf16.msra.mxu0 %v552
      %559 = vmatprep.subr.bf16.mxu0 0
      %560 = vmatpush1.bf16.msra.mxu0 0
      %561 = vmatprep.subr.bf16.mxu0 0
      %562 = vmatpush1.bf16.msra.mxu0 0
      %563 = vmatprep.subr.bf16.mxu0 0
      %564 = vmatpush1.bf16.msra.mxu0 0
      %565 = vmatprep.subr.bf16.mxu0 0
      %566 = vmatpush1.bf16.msra.mxu0 0
      %567 = vmatprep.subr.bf16.mxu0 0
      %568 = vmatpush1.bf16.msra.mxu0 0
      %569 = vmatprep.subr.bf16.mxu0 0
      %570 = vmatpush1.bf16.msra.mxu0 0
      %571 = vmatprep.subr.bf16.mxu0 0
      %572 = vmatpush1.bf16.msra.mxu0 0
      %573 = vmatprep.subr.bf16.mxu0 0
      %574 = vmatpush1.bf16.msra.mxu0 0
      %575 = vmatprep.subr.bf16.mxu0 0
      %576 = vmatpush1.bf16.msra.mxu0 0
      %577 = vmatprep.subr.bf16.mxu0 0
      %578 = vmatpush1.bf16.msra.mxu0 0
      %579 = vmatprep.subr.bf16.mxu0 0
      %580 = vmatpush1.bf16.msra.mxu0 0
      %581 = vmatprep.subr.bf16.mxu0 0
      %582 = vmatpush1.bf16.msra.mxu0 0
      %583 = vmatprep.subr.bf16.mxu0 0
      %584 = vmatpush1.bf16.msra.mxu0 0
      %585 = vmatprep.subr.bf16.mxu0 0
      %586 = vmatpush1.bf16.msra.mxu0 0
      %587 = vmatprep.mubr.bf16.mxu0 0
      %588 = vmatmul.mubr.bf16.gmra.mrb[0].mxu0 %v494
      %v589 = vpop.f32.mrb[0].mxu0
      %v590 = vadd.f32 %v541, %v589
      %v591 = vpop.f32.mrb[0].mxu0
      %v592 = vpop.f32.mrb[0].mxu0
      %v593 = vadd.f32 %v541, %v592
      %v594 = vpop.f32.mrb[0].mxu0
      %595 = vdwg.mxu0
      %v597 = vlaneseq
      %v598 = vshrl.u32 %v597, 7
      %v599 = vsub.s32 0, %v598
      %v600 = vrot.slane %v471, %v599
      %v606 = vunpack.c.l.b16 %v461
      %v607 = vunpack.c.l.b16 %v462
      %v608 = vunpack.c.l.b16 %v463
      %v609 = vunpack.c.l.b16 %v464
      %v610 = vpack.c.b16 %v607, %v606
      %v611 = vpack.c.b16 %v609, %v608
      %614 = vmatprep.subr.bf16.mxu0 0
      %615 = vmatpush1.bf16.msra.mxu0 %v610
      %616 = vmatprep.subr.bf16.mxu0 0
      %617 = vmatpush1.bf16.msra.mxu0 %v611
      %618 = vmatprep.subr.bf16.mxu0 0
      %619 = vmatpush1.bf16.msra.mxu0 0
      %620 = vmatprep.subr.bf16.mxu0 0
      %621 = vmatpush1.bf16.msra.mxu0 0
      %622 = vmatprep.subr.bf16.mxu0 0
      %623 = vmatpush1.bf16.msra.mxu0 0
      %624 = vmatprep.subr.bf16.mxu0 0
      %625 = vmatpush1.bf16.msra.mxu0 0
      %626 = vmatprep.subr.bf16.mxu0 0
      %627 = vmatpush1.bf16.msra.mxu0 0
      %628 = vmatprep.subr.bf16.mxu0 0
      %629 = vmatpush1.bf16.msra.mxu0 0
      %630 = vmatprep.subr.bf16.mxu0 0
      %631 = vmatpush1.bf16.msra.mxu0 0
      %632 = vmatprep.subr.bf16.mxu0 0
      %633 = vmatpush1.bf16.msra.mxu0 0
      %634 = vmatprep.subr.bf16.mxu0 0
      %635 = vmatpush1.bf16.msra.mxu0 0
      %636 = vmatprep.subr.bf16.mxu0 0
      %637 = vmatpush1.bf16.msra.mxu0 0
      %638 = vmatprep.subr.bf16.mxu0 0
      %639 = vmatpush1.bf16.msra.mxu0 0
      %640 = vmatprep.subr.bf16.mxu0 0
      %641 = vmatpush1.bf16.msra.mxu0 0
      %642 = vmatprep.subr.bf16.mxu0 0
      %643 = vmatpush1.bf16.msra.mxu0 0
      %644 = vmatprep.subr.bf16.mxu0 0
      %645 = vmatpush1.bf16.msra.mxu0 0
      %646 = vmatprep.mubr.bf16.mxu0 0
      %647 = vmatmul.mubr.bf16.gmra.mrb[0].mxu0 %v494
      %v648 = vpop.f32.mrb[0].mxu0
      %v649 = vadd.f32 %v600, %v648
      %v650 = vpop.f32.mrb[0].mxu0
      %v651 = vpop.f32.mrb[0].mxu0
      %v652 = vadd.f32 %v600, %v651
      %v653 = vpop.f32.mrb[0].mxu0
      %654 = vdwg.mxu0
      %v655 = vpack.c.bf16 %v531, %v531
      %v656 = vpack.c.bf16 %v534, %v534
      %v657 = vpack.c.bf16 %v590, %v590
      %v658 = vpack.c.bf16 %v593, %v593
      %v659 = vpack.c.bf16 %v649, %v649
      %v660 = vpack.c.bf16 %v652, %v652
      %vm661 = vcmask 64512
      %v663 = vsel %vm661, %v655, 0
      %v666 = vsel %vm661, %v657, 0
      %668 = vmatprep.subr.bf16.mxu0 0
      %669 = vmatpush1.bf16.xpose.msra.mxu0 %v666
      %670 = vmatprep.subr.bf16.mxu0 0
      %671 = vmatpush1.bf16.xpose.msra.mxu0 0
      %672 = vmatprep.subr.bf16.mxu0 0
      %673 = vmatpush1.bf16.xpose.msra.mxu0 0
      %674 = vmatprep.subr.bf16.mxu0 0
      %675 = vmatpush1.bf16.xpose.msra.mxu0 0
      %676 = vmatprep.subr.bf16.mxu0 0
      %677 = vmatpush1.bf16.xpose.msra.mxu0 0
      %678 = vmatprep.subr.bf16.mxu0 0
      %679 = vmatpush1.bf16.xpose.msra.mxu0 0
      %680 = vmatprep.subr.bf16.mxu0 0
      %681 = vmatpush1.bf16.xpose.msra.mxu0 0
      %682 = vmatprep.subr.bf16.mxu0 0
      %683 = vmatpush1.bf16.xpose.msra.mxu0 0
      %684 = vmatprep.subr.bf16.mxu0 0
      %685 = vmatpush1.bf16.xpose.msra.mxu0 0
      %686 = vmatprep.subr.bf16.mxu0 0
      %687 = vmatpush1.bf16.xpose.msra.mxu0 0
      %688 = vmatprep.subr.bf16.mxu0 0
      %689 = vmatpush1.bf16.xpose.msra.mxu0 0
      %690 = vmatprep.subr.bf16.mxu0 0
      %691 = vmatpush1.bf16.xpose.msra.mxu0 0
      %692 = vmatprep.subr.bf16.mxu0 0
      %693 = vmatpush1.bf16.xpose.msra.mxu0 0
      %694 = vmatprep.subr.bf16.mxu0 0
      %695 = vmatpush1.bf16.xpose.msra.mxu0 0
      %696 = vmatprep.subr.bf16.mxu0 0
      %697 = vmatpush1.bf16.xpose.msra.mxu0 0
      %698 = vmatprep.subr.bf16.mxu0 0
      %699 = vmatpush1.bf16.xpose.msra.mxu0 0
      %700 = vmatprep.mubr.bf16.mxu0 0
      %701 = vmatmul.mubr.bf16.gmra.mrb[0].mxu0 %v663
      %v702 = vpop.f32.mrb[0].mxu0
      %v703 = vadd.f32 0.0, %v702
      %v704 = vpop.f32.mrb[0].mxu0
      %v705 = vpop.f32.mrb[0].mxu0
      %v706 = vpop.f32.mrb[0].mxu0
      %707 = vdwg.mxu0
      %v709 = vsel %vm661, %v656, 0
      %v712 = vsel %vm661, %v658, 0
      %714 = vmatprep.subr.bf16.mxu0 0
      %715 = vmatpush1.bf16.xpose.msra.mxu0 %v712
      %716 = vmatprep.subr.bf16.mxu0 0
      %717 = vmatpush1.bf16.xpose.msra.mxu0 0
      %718 = vmatprep.subr.bf16.mxu0 0
      %719 = vmatpush1.bf16.xpose.msra.mxu0 0
      %720 = vmatprep.subr.bf16.mxu0 0
      %721 = vmatpush1.bf16.xpose.msra.mxu0 0
      %722 = vmatprep.subr.bf16.mxu0 0
      %723 = vmatpush1.bf16.xpose.msra.mxu0 0
      %724 = vmatprep.subr.bf16.mxu0 0
      %725 = vmatpush1.bf16.xpose.msra.mxu0 0
      %726 = vmatprep.subr.bf16.mxu0 0
      %727 = vmatpush1.bf16.xpose.msra.mxu0 0
      %728 = vmatprep.subr.bf16.mxu0 0
      %729 = vmatpush1.bf16.xpose.msra.mxu0 0
      %730 = vmatprep.subr.bf16.mxu0 0
      %731 = vmatpush1.bf16.xpose.msra.mxu0 0
      %732 = vmatprep.subr.bf16.mxu0 0
      %733 = vmatpush1.bf16.xpose.msra.mxu0 0
      %734 = vmatprep.subr.bf16.mxu0 0
      %735 = vmatpush1.bf16.xpose.msra.mxu0 0
      %736 = vmatprep.subr.bf16.mxu0 0
      %737 = vmatpush1.bf16.xpose.msra.mxu0 0
      %738 = vmatprep.subr.bf16.mxu0 0
      %739 = vmatpush1.bf16.xpose.msra.mxu0 0
      %740 = vmatprep.subr.bf16.mxu0 0
      %741 = vmatpush1.bf16.xpose.msra.mxu0 0
      %742 = vmatprep.subr.bf16.mxu0 0
      %743 = vmatpush1.bf16.xpose.msra.mxu0 0
      %744 = vmatprep.subr.bf16.mxu0 0
      %745 = vmatpush1.bf16.xpose.msra.mxu0 0
      %746 = vmatprep.mubr.bf16.mxu0 0
      %747 = vmatmul.mubr.bf16.gmra.mrb[0].mxu0 %v709
      %v748 = vpop.f32.mrb[0].mxu0
      %v749 = vadd.f32 0.0, %v748
      %v750 = vpop.f32.mrb[0].mxu0
      %v751 = vpop.f32.mrb[0].mxu0
      %v752 = vpop.f32.mrb[0].mxu0
      %753 = vdwg.mxu0
      %v754 = vmul.f32 %v703, 0.35355338
      %v755 = vmul.f32 %v749, 0.35355338
      %v756 = vsel %vm661, %v754, -inf
      %757 = vmax.xlane.f32.xlu0 %v756
      %v758 = vpop.xlane.xlu0 %757
      %v759 = vsel %vm661, %v755, -inf
      %760 = vmax.xlane.f32.xlu0 %v759
      %v761 = vpop.xlane.xlu0 %760
      %v762 = vsub.f32 %v754, %v758
      %v763 = vsub.f32 %v755, %v761
      %v764 = vmul.f32 %v762, 1.442695
      %v765 = vpow.pop %v764
      %v766 = vmul.f32 %v763, 1.442695
      %v767 = vpow.pop %v766
      %v768 = vsel %vm661, %v765, 0.0
      %769 = vadd.xlane.f32.xlu0 %v768
      %v770 = vpop.xlane.xlu0 %769
      %v771 = vsel %vm661, %v767, 0.0
      %772 = vadd.xlane.f32.xlu0 %v771
      %v773 = vpop.xlane.xlu0 %772
      %v774 = vrcp.pop %v770
      %v775 = vrcp.pop %v773
      %v776 = vmul.f32 %v765, %v774
      %v777 = vmul.f32 %v767, %v775
      %v778 = vpack.c.bf16 %v776, %v776
      %v779 = vpack.c.bf16 %v777, %v777
      %v781 = vsel %vm661, %v778, 0
      %vm783 = vcmask 1043456
      %v785 = vsel %vm783, %v659, 0
      %787 = vmatprep.subr.bf16.mxu0 0
      %788 = vmatpush1.bf16.msra.mxu0 %v785
      %789 = vmatprep.subr.bf16.mxu0 0
      %790 = vmatpush1.bf16.msra.mxu0 0
      %791 = vmatprep.subr.bf16.mxu0 0
      %792 = vmatpush1.bf16.msra.mxu0 0
      %793 = vmatprep.subr.bf16.mxu0 0
      %794 = vmatpush1.bf16.msra.mxu0 0
      %795 = vmatprep.subr.bf16.mxu0 0
      %796 = vmatpush1.bf16.msra.mxu0 0
      %797 = vmatprep.subr.bf16.mxu0 0
      %798 = vmatpush1.bf16.msra.mxu0 0
      %799 = vmatprep.subr.bf16.mxu0 0
      %800 = vmatpush1.bf16.msra.mxu0 0
      %801 = vmatprep.subr.bf16.mxu0 0
      %802 = vmatpush1.bf16.msra.mxu0 0
      %803 = vmatprep.subr.bf16.mxu0 0
      %804 = vmatpush1.bf16.msra.mxu0 0
      %805 = vmatprep.subr.bf16.mxu0 0
      %806 = vmatpush1.bf16.msra.mxu0 0
      %807 = vmatprep.subr.bf16.mxu0 0
      %808 = vmatpush1.bf16.msra.mxu0 0
      %809 = vmatprep.subr.bf16.mxu0 0
      %810 = vmatpush1.bf16.msra.mxu0 0
      %811 = vmatprep.subr.bf16.mxu0 0
      %812 = vmatpush1.bf16.msra.mxu0 0
      %813 = vmatprep.subr.bf16.mxu0 0
      %814 = vmatpush1.bf16.msra.mxu0 0
      %815 = vmatprep.subr.bf16.mxu0 0
      %816 = vmatpush1.bf16.msra.mxu0 0
      %817 = vmatprep.subr.bf16.mxu0 0
      %818 = vmatpush1.bf16.msra.mxu0 0
      %819 = vmatprep.mubr.bf16.mxu0 0
      %820 = vmatmul.mubr.bf16.gmra.mrb[0].mxu0 %v781
      %v821 = vpop.f32.mrb[0].mxu0
      %v822 = vadd.f32 0.0, %v821
      %v823 = vpop.f32.mrb[0].mxu0
      %v824 = vpop.f32.mrb[0].mxu0
      %v825 = vpop.f32.mrb[0].mxu0
      %826 = vdwg.mxu0
      %v828 = vsel %vm661, %v779, 0
      %v831 = vsel %vm783, %v660, 0
      %833 = vmatprep.subr.bf16.mxu0 0
      %834 = vmatpush1.bf16.msra.mxu0 %v831
      %835 = vmatprep.subr.bf16.mxu0 0
      %836 = vmatpush1.bf16.msra.mxu0 0
      %837 = vmatprep.subr.bf16.mxu0 0
      %838 = vmatpush1.bf16.msra.mxu0 0
      %839 = vmatprep.subr.bf16.mxu0 0
      %840 = vmatpush1.bf16.msra.mxu0 0
      %841 = vmatprep.subr.bf16.mxu0 0
      %842 = vmatpush1.bf16.msra.mxu0 0
      %843 = vmatprep.subr.bf16.mxu0 0
      %844 = vmatpush1.bf16.msra.mxu0 0
      %845 = vmatprep.subr.bf16.mxu0 0
      %846 = vmatpush1.bf16.msra.mxu0 0
      %847 = vmatprep.subr.bf16.mxu0 0
      %848 = vmatpush1.bf16.msra.mxu0 0
      %849 = vmatprep.subr.bf16.mxu0 0
      %850 = vmatpush1.bf16.msra.mxu0 0
      %851 = vmatprep.subr.bf16.mxu0 0
      %852 = vmatpush1.bf16.msra.mxu0 0
      %853 = vmatprep.subr.bf16.mxu0 0
      %854 = vmatpush1.bf16.msra.mxu0 0
      %855 = vmatprep.subr.bf16.mxu0 0
      %856 = vmatpush1.bf16.msra.mxu0 0
      %857 = vmatprep.subr.bf16.mxu0 0
      %858 = vmatpush1.bf16.msra.mxu0 0
      %859 = vmatprep.subr.bf16.mxu0 0
      %860 = vmatpush1.bf16.msra.mxu0 0
      %861 = vmatprep.subr.bf16.mxu0 0
      %862 = vmatpush1.bf16.msra.mxu0 0
      %863 = vmatprep.subr.bf16.mxu0 0
      %864 = vmatpush1.bf16.msra.mxu0 0
      %865 = vmatprep.mubr.bf16.mxu0 0
      %866 = vmatmul.mubr.bf16.gmra.mrb[0].mxu0 %v828
      %v867 = vpop.f32.mrb[0].mxu0
      %v868 = vadd.f32 0.0, %v867
      %v869 = vpop.f32.mrb[0].mxu0
      %v870 = vpop.f32.mrb[0].mxu0
      %v871 = vpop.f32.mrb[0].mxu0
      %872 = vdwg.mxu0
      %874 = vrot.lane.b32.xlu0 %v655, 120
      %v875 = vpop.permute.xlu0 %874
      %877 = vrot.lane.b32.xlu0 %v657, 120
      %v878 = vpop.permute.xlu0 %877
      %v880 = vsel %vm661, %v875, 0
      %v883 = vsel %vm661, %v878, 0
      %885 = vmatprep.subr.bf16.mxu0 0
      %886 = vmatpush1.bf16.xpose.msra.mxu0 %v883
      %887 = vmatprep.subr.bf16.mxu0 0
      %888 = vmatpush1.bf16.xpose.msra.mxu0 0
      %889 = vmatprep.subr.bf16.mxu0 0
      %890 = vmatpush1.bf16.xpose.msra.mxu0 0
      %891 = vmatprep.subr.bf16.mxu0 0
      %892 = vmatpush1.bf16.xpose.msra.mxu0 0
      %893 = vmatprep.subr.bf16.mxu0 0
      %894 = vmatpush1.bf16.xpose.msra.mxu0 0
      %895 = vmatprep.subr.bf16.mxu0 0
      %896 = vmatpush1.bf16.xpose.msra.mxu0 0
      %897 = vmatprep.subr.bf16.mxu0 0
      %898 = vmatpush1.bf16.xpose.msra.mxu0 0
      %899 = vmatprep.subr.bf16.mxu0 0
      %900 = vmatpush1.bf16.xpose.msra.mxu0 0
      %901 = vmatprep.subr.bf16.mxu0 0
      %902 = vmatpush1.bf16.xpose.msra.mxu0 0
      %903 = vmatprep.subr.bf16.mxu0 0
      %904 = vmatpush1.bf16.xpose.msra.mxu0 0
      %905 = vmatprep.subr.bf16.mxu0 0
      %906 = vmatpush1.bf16.xpose.msra.mxu0 0
      %907 = vmatprep.subr.bf16.mxu0 0
      %908 = vmatpush1.bf16.xpose.msra.mxu0 0
      %909 = vmatprep.subr.bf16.mxu0 0
      %910 = vmatpush1.bf16.xpose.msra.mxu0 0
      %911 = vmatprep.subr.bf16.mxu0 0
      %912 = vmatpush1.bf16.xpose.msra.mxu0 0
      %913 = vmatprep.subr.bf16.mxu0 0
      %914 = vmatpush1.bf16.xpose.msra.mxu0 0
      %915 = vmatprep.subr.bf16.mxu0 0
      %916 = vmatpush1.bf16.xpose.msra.mxu0 0
      %917 = vmatprep.mubr.bf16.mxu0 0
      %918 = vmatmul.mubr.bf16.gmra.mrb[0].mxu0 %v880
      %v919 = vpop.f32.mrb[0].mxu0
      %v920 = vadd.f32 0.0, %v919
      %v921 = vpop.f32.mrb[0].mxu0
      %v922 = vpop.f32.mrb[0].mxu0
      %v923 = vpop.f32.mrb[0].mxu0
      %924 = vdwg.mxu0
      %926 = vrot.lane.b32.xlu0 %v656, 120
      %v927 = vpop.permute.xlu0 %926
      %929 = vrot.lane.b32.xlu0 %v658, 120
      %v930 = vpop.permute.xlu0 %929
      %v932 = vsel %vm661, %v927, 0
      %v935 = vsel %vm661, %v930, 0
      %937 = vmatprep.subr.bf16.mxu0 0
      %938 = vmatpush1.bf16.xpose.msra.mxu0 %v935
      %939 = vmatprep.subr.bf16.mxu0 0
      %940 = vmatpush1.bf16.xpose.msra.mxu0 0
      %941 = vmatprep.subr.bf16.mxu0 0
      %942 = vmatpush1.bf16.xpose.msra.mxu0 0
      %943 = vmatprep.subr.bf16.mxu0 0
      %944 = vmatpush1.bf16.xpose.msra.mxu0 0
      %945 = vmatprep.subr.bf16.mxu0 0
      %946 = vmatpush1.bf16.xpose.msra.mxu0 0
      %947 = vmatprep.subr.bf16.mxu0 0
      %948 = vmatpush1.bf16.xpose.msra.mxu0 0
      %949 = vmatprep.subr.bf16.mxu0 0
      %950 = vmatpush1.bf16.xpose.msra.mxu0 0
      %951 = vmatprep.subr.bf16.mxu0 0
      %952 = vmatpush1.bf16.xpose.msra.mxu0 0
      %953 = vmatprep.subr.bf16.mxu0 0
      %954 = vmatpush1.bf16.xpose.msra.mxu0 0
      %955 = vmatprep.subr.bf16.mxu0 0
      %956 = vmatpush1.bf16.xpose.msra.mxu0 0
      %957 = vmatprep.subr.bf16.mxu0 0
      %958 = vmatpush1.bf16.xpose.msra.mxu0 0
      %959 = vmatprep.subr.bf16.mxu0 0
      %960 = vmatpush1.bf16.xpose.msra.mxu0 0
      %961 = vmatprep.subr.bf16.mxu0 0
      %962 = vmatpush1.bf16.xpose.msra.mxu0 0
      %963 = vmatprep.subr.bf16.mxu0 0
      %964 = vmatpush1.bf16.xpose.msra.mxu0 0
      %965 = vmatprep.subr.bf16.mxu0 0
      %966 = vmatpush1.bf16.xpose.msra.mxu0 0
      %967 = vmatprep.subr.bf16.mxu0 0
      %968 = vmatpush1.bf16.xpose.msra.mxu0 0
      %969 = vmatprep.mubr.bf16.mxu0 0
      %970 = vmatmul.mubr.bf16.gmra.mrb[0].mxu0 %v932
      %v971 = vpop.f32.mrb[0].mxu0
      %v972 = vadd.f32 0.0, %v971
      %v973 = vpop.f32.mrb[0].mxu0
      %v974 = vpop.f32.mrb[0].mxu0
      %v975 = vpop.f32.mrb[0].mxu0
      %976 = vdwg.mxu0
      %v977 = vmul.f32 %v920, 0.35355338
      %v978 = vmul.f32 %v972, 0.35355338
      %v979 = vsel %vm661, %v977, -inf
      %980 = vmax.xlane.f32.xlu0 %v979
      %v981 = vpop.xlane.xlu0 %980
      %v982 = vsel %vm661, %v978, -inf
      %983 = vmax.xlane.f32.xlu0 %v982
      %v984 = vpop.xlane.xlu0 %983
      %v985 = vsub.f32 %v977, %v981
      %v986 = vsub.f32 %v978, %v984
      %v987 = vmul.f32 %v985, 1.442695
      %v988 = vpow.pop %v987
      %v989 = vmul.f32 %v986, 1.442695
      %v990 = vpow.pop %v989
      %v991 = vsel %vm661, %v988, 0.0
      %992 = vadd.xlane.f32.xlu0 %v991
      %v993 = vpop.xlane.xlu0 %992
      %v994 = vsel %vm661, %v990, 0.0
      %995 = vadd.xlane.f32.xlu0 %v994
      %v996 = vpop.xlane.xlu0 %995
      %v997 = vrcp.pop %v993
      %v998 = vrcp.pop %v996
      %v999 = vmul.f32 %v988, %v997
      %v1000 = vmul.f32 %v990, %v998
      %v1001 = vpack.c.bf16 %v999, %v999
      %v1002 = vpack.c.bf16 %v1000, %v1000
      %1004 = vrot.lane.b32.xlu0 %v659, 120
      %v1005 = vpop.permute.xlu0 %1004
      %v1007 = vsel %vm661, %v1001, 0
      %v1010 = vsel %vm783, %v1005, 0
      %1012 = vmatprep.subr.bf16.mxu0 0
      %1013 = vmatpush1.bf16.msra.mxu0 %v1010
      %1014 = vmatprep.subr.bf16.mxu0 0
      %1015 = vmatpush1.bf16.msra.mxu0 0
      %1016 = vmatprep.subr.bf16.mxu0 0
      %1017 = vmatpush1.bf16.msra.mxu0 0
      %1018 = vmatprep.subr.bf16.mxu0 0
      %1019 = vmatpush1.bf16.msra.mxu0 0
      %1020 = vmatprep.subr.bf16.mxu0 0
      %1021 = vmatpush1.bf16.msra.mxu0 0
      %1022 = vmatprep.subr.bf16.mxu0 0
      %1023 = vmatpush1.bf16.msra.mxu0 0
      %1024 = vmatprep.subr.bf16.mxu0 0
      %1025 = vmatpush1.bf16.msra.mxu0 0
      %1026 = vmatprep.subr.bf16.mxu0 0
      %1027 = vmatpush1.bf16.msra.mxu0 0
      %1028 = vmatprep.subr.bf16.mxu0 0
      %1029 = vmatpush1.bf16.msra.mxu0 0
      %1030 = vmatprep.subr.bf16.mxu0 0
      %1031 = vmatpush1.bf16.msra.mxu0 0
      %1032 = vmatprep.subr.bf16.mxu0 0
      %1033 = vmatpush1.bf16.msra.mxu0 0
      %1034 = vmatprep.subr.bf16.mxu0 0
      %1035 = vmatpush1.bf16.msra.mxu0 0
      %1036 = vmatprep.subr.bf16.mxu0 0
      %1037 = vmatpush1.bf16.msra.mxu0 0
      %1038 = vmatprep.subr.bf16.mxu0 0
      %1039 = vmatpush1.bf16.msra.mxu0 0
      %1040 = vmatprep.subr.bf16.mxu0 0
      %1041 = vmatpush1.bf16.msra.mxu0 0
      %1042 = vmatprep.subr.bf16.mxu0 0
      %1043 = vmatpush1.bf16.msra.mxu0 0
      %1044 = vmatprep.mubr.bf16.mxu0 0
      %1045 = vmatmul.mubr.bf16.gmra.mrb[0].mxu0 %v1007
      %v1046 = vpop.f32.mrb[0].mxu0
      %v1047 = vadd.f32 0.0, %v1046
      %v1048 = vpop.f32.mrb[0].mxu0
      %v1049 = vpop.f32.mrb[0].mxu0
      %v1050 = vpop.f32.mrb[0].mxu0
      %1051 = vdwg.mxu0
      %1053 = vrot.lane.b32.xlu0 %v660, 120
      %v1054 = vpop.permute.xlu0 %1053
      %v1056 = vsel %vm661, %v1002, 0
      %v1059 = vsel %vm783, %v1054, 0
      %1061 = vmatprep.subr.bf16.mxu0 0
      %1062 = vmatpush1.bf16.msra.mxu0 %v1059
      %1063 = vmatprep.subr.bf16.mxu0 0
      %1064 = vmatpush1.bf16.msra.mxu0 0
      %1065 = vmatprep.subr.bf16.mxu0 0
      %1066 = vmatpush1.bf16.msra.mxu0 0
      %1067 = vmatprep.subr.bf16.mxu0 0
      %1068 = vmatpush1.bf16.msra.mxu0 0
      %1069 = vmatprep.subr.bf16.mxu0 0
      %1070 = vmatpush1.bf16.msra.mxu0 0
      %1071 = vmatprep.subr.bf16.mxu0 0
      %1072 = vmatpush1.bf16.msra.mxu0 0
      %1073 = vmatprep.subr.bf16.mxu0 0
      %1074 = vmatpush1.bf16.msra.mxu0 0
      %1075 = vmatprep.subr.bf16.mxu0 0
      %1076 = vmatpush1.bf16.msra.mxu0 0
      %1077 = vmatprep.subr.bf16.mxu0 0
      %1078 = vmatpush1.bf16.msra.mxu0 0
      %1079 = vmatprep.subr.bf16.mxu0 0
      %1080 = vmatpush1.bf16.msra.mxu0 0
      %1081 = vmatprep.subr.bf16.mxu0 0
      %1082 = vmatpush1.bf16.msra.mxu0 0
      %1083 = vmatprep.subr.bf16.mxu0 0
      %1084 = vmatpush1.bf16.msra.mxu0 0
      %1085 = vmatprep.subr.bf16.mxu0 0
      %1086 = vmatpush1.bf16.msra.mxu0 0
      %1087 = vmatprep.subr.bf16.mxu0 0
      %1088 = vmatpush1.bf16.msra.mxu0 0
      %1089 = vmatprep.subr.bf16.mxu0 0
      %1090 = vmatpush1.bf16.msra.mxu0 0
      %1091 = vmatprep.subr.bf16.mxu0 0
      %1092 = vmatpush1.bf16.msra.mxu0 0
      %1093 = vmatprep.mubr.bf16.mxu0 0
      %1094 = vmatmul.mubr.bf16.gmra.mrb[0].mxu0 %v1056
      %v1095 = vpop.f32.mrb[0].mxu0
      %v1096 = vadd.f32 0.0, %v1095
      %v1097 = vpop.f32.mrb[0].mxu0
      %v1098 = vpop.f32.mrb[0].mxu0
      %v1099 = vpop.f32.mrb[0].mxu0
      %1100 = vdwg.mxu0
      %1101 = vrot.lane.b32.xlu0 %v655, 112
      %v1102 = vpop.permute.xlu0 %1101
      %1103 = vrot.lane.b32.xlu0 %v657, 112
      %v1104 = vpop.permute.xlu0 %1103
      %v1106 = vsel %vm661, %v1102, 0
      %v1109 = vsel %vm661, %v1104, 0
      %1111 = vmatprep.subr.bf16.mxu0 0
      %1112 = vmatpush1.bf16.xpose.msra.mxu0 %v1109
      %1113 = vmatprep.subr.bf16.mxu0 0
      %1114 = vmatpush1.bf16.xpose.msra.mxu0 0
      %1115 = vmatprep.subr.bf16.mxu0 0
      %1116 = vmatpush1.bf16.xpose.msra.mxu0 0
      %1117 = vmatprep.subr.bf16.mxu0 0
      %1118 = vmatpush1.bf16.xpose.msra.mxu0 0
      %1119 = vmatprep.subr.bf16.mxu0 0
      %1120 = vmatpush1.bf16.xpose.msra.mxu0 0
      %1121 = vmatprep.subr.bf16.mxu0 0
      %1122 = vmatpush1.bf16.xpose.msra.mxu0 0
      %1123 = vmatprep.subr.bf16.mxu0 0
      %1124 = vmatpush1.bf16.xpose.msra.mxu0 0
      %1125 = vmatprep.subr.bf16.mxu0 0
      %1126 = vmatpush1.bf16.xpose.msra.mxu0 0
      %1127 = vmatprep.subr.bf16.mxu0 0
      %1128 = vmatpush1.bf16.xpose.msra.mxu0 0
      %1129 = vmatprep.subr.bf16.mxu0 0
      %1130 = vmatpush1.bf16.xpose.msra.mxu0 0
      %1131 = vmatprep.subr.bf16.mxu0 0
      %1132 = vmatpush1.bf16.xpose.msra.mxu0 0
      %1133 = vmatprep.subr.bf16.mxu0 0
      %1134 = vmatpush1.bf16.xpose.msra.mxu0 0
      %1135 = vmatprep.subr.bf16.mxu0 0
      %1136 = vmatpush1.bf16.xpose.msra.mxu0 0
      %1137 = vmatprep.subr.bf16.mxu0 0
      %1138 = vmatpush1.bf16.xpose.msra.mxu0 0
      %1139 = vmatprep.subr.bf16.mxu0 0
      %1140 = vmatpush1.bf16.xpose.msra.mxu0 0
      %1141 = vmatprep.subr.bf16.mxu0 0
      %1142 = vmatpush1.bf16.xpose.msra.mxu0 0
      %1143 = vmatprep.mubr.bf16.mxu0 0
      %1144 = vmatmul.mubr.bf16.gmra.mrb[0].mxu0 %v1106
      %v1145 = vpop.f32.mrb[0].mxu0
      %v1146 = vadd.f32 0.0, %v1145
      %v1147 = vpop.f32.mrb[0].mxu0
      %v1148 = vpop.f32.mrb[0].mxu0
      %v1149 = vpop.f32.mrb[0].mxu0
      %1150 = vdwg.mxu0
      %1151 = vrot.lane.b32.xlu0 %v656, 112
      %v1152 = vpop.permute.xlu0 %1151
      %1153 = vrot.lane.b32.xlu0 %v658, 112
      %v1154 = vpop.permute.xlu0 %1153
      %v1156 = vsel %vm661, %v1152, 0
      %v1159 = vsel %vm661, %v1154, 0
      %1161 = vmatprep.subr.bf16.mxu0 0
      %1162 = vmatpush1.bf16.xpose.msra.mxu0 %v1159
      %1163 = vmatprep.subr.bf16.mxu0 0
      %1164 = vmatpush1.bf16.xpose.msra.mxu0 0
      %1165 = vmatprep.subr.bf16.mxu0 0
      %1166 = vmatpush1.bf16.xpose.msra.mxu0 0
      %1167 = vmatprep.subr.bf16.mxu0 0
      %1168 = vmatpush1.bf16.xpose.msra.mxu0 0
      %1169 = vmatprep.subr.bf16.mxu0 0
      %1170 = vmatpush1.bf16.xpose.msra.mxu0 0
      %1171 = vmatprep.subr.bf16.mxu0 0
      %1172 = vmatpush1.bf16.xpose.msra.mxu0 0
      %1173 = vmatprep.subr.bf16.mxu0 0
      %1174 = vmatpush1.bf16.xpose.msra.mxu0 0
      %1175 = vmatprep.subr.bf16.mxu0 0
      %1176 = vmatpush1.bf16.xpose.msra.mxu0 0
      %1177 = vmatprep.subr.bf16.mxu0 0
      %1178 = vmatpush1.bf16.xpose.msra.mxu0 0
      %1179 = vmatprep.subr.bf16.mxu0 0
      %1180 = vmatpush1.bf16.xpose.msra.mxu0 0
      %1181 = vmatprep.subr.bf16.mxu0 0
      %1182 = vmatpush1.bf16.xpose.msra.mxu0 0
      %1183 = vmatprep.subr.bf16.mxu0 0
      %1184 = vmatpush1.bf16.xpose.msra.mxu0 0
      %1185 = vmatprep.subr.bf16.mxu0 0
      %1186 = vmatpush1.bf16.xpose.msra.mxu0 0
      %1187 = vmatprep.subr.bf16.mxu0 0
      %1188 = vmatpush1.bf16.xpose.msra.mxu0 0
      %1189 = vmatprep.subr.bf16.mxu0 0
      %1190 = vmatpush1.bf16.xpose.msra.mxu0 0
      %1191 = vmatprep.subr.bf16.mxu0 0
      %1192 = vmatpush1.bf16.xpose.msra.mxu0 0
      %1193 = vmatprep.mubr.bf16.mxu0 0
      %1194 = vmatmul.mubr.bf16.gmra.mrb[0].mxu0 %v1156
      %v1195 = vpop.f32.mrb[0].mxu0
      %v1196 = vadd.f32 0.0, %v1195
      %v1197 = vpop.f32.mrb[0].mxu0
      %v1198 = vpop.f32.mrb[0].mxu0
      %v1199 = vpop.f32.mrb[0].mxu0
      %1200 = vdwg.mxu0
      %v1201 = vmul.f32 %v1146, 0.35355338
      %v1202 = vmul.f32 %v1196, 0.35355338
      %v1203 = vsel %vm661, %v1201, -inf
      %1204 = vmax.xlane.f32.xlu0 %v1203
      %v1205 = vpop.xlane.xlu0 %1204
      %v1206 = vsel %vm661, %v1202, -inf
      %1207 = vmax.xlane.f32.xlu0 %v1206
      %v1208 = vpop.xlane.xlu0 %1207
      %v1209 = vsub.f32 %v1201, %v1205
      %v1210 = vsub.f32 %v1202, %v1208
      %v1211 = vmul.f32 %v1209, 1.442695
      %v1212 = vpow.pop %v1211
      %v1213 = vmul.f32 %v1210, 1.442695
      %v1214 = vpow.pop %v1213
      %v1215 = vsel %vm661, %v1212, 0.0
      %1216 = vadd.xlane.f32.xlu0 %v1215
      %v1217 = vpop.xlane.xlu0 %1216
      %v1218 = vsel %vm661, %v1214, 0.0
      %1219 = vadd.xlane.f32.xlu0 %v1218
      %v1220 = vpop.xlane.xlu0 %1219
      %v1221 = vrcp.pop %v1217
      %v1222 = vrcp.pop %v1220
      %v1223 = vmul.f32 %v1212, %v1221
      %v1224 = vmul.f32 %v1214, %v1222
      %v1225 = vpack.c.bf16 %v1223, %v1223
      %v1226 = vpack.c.bf16 %v1224, %v1224
      %1227 = vrot.lane.b32.xlu0 %v659, 112
      %v1228 = vpop.permute.xlu0 %1227
      %v1230 = vsel %vm661, %v1225, 0
      %v1233 = vsel %vm783, %v1228, 0
      %1235 = vmatprep.subr.bf16.mxu0 0
      %1236 = vmatpush1.bf16.msra.mxu0 %v1233
      %1237 = vmatprep.subr.bf16.mxu0 0
      %1238 = vmatpush1.bf16.msra.mxu0 0
      %1239 = vmatprep.subr.bf16.mxu0 0
      %1240 = vmatpush1.bf16.msra.mxu0 0
      %1241 = vmatprep.subr.bf16.mxu0 0
      %1242 = vmatpush1.bf16.msra.mxu0 0
      %1243 = vmatprep.subr.bf16.mxu0 0
      %1244 = vmatpush1.bf16.msra.mxu0 0
      %1245 = vmatprep.subr.bf16.mxu0 0
      %1246 = vmatpush1.bf16.msra.mxu0 0
      %1247 = vmatprep.subr.bf16.mxu0 0
      %1248 = vmatpush1.bf16.msra.mxu0 0
      %1249 = vmatprep.subr.bf16.mxu0 0
      %1250 = vmatpush1.bf16.msra.mxu0 0
      %1251 = vmatprep.subr.bf16.mxu0 0
      %1252 = vmatpush1.bf16.msra.mxu0 0
      %1253 = vmatprep.subr.bf16.mxu0 0
      %1254 = vmatpush1.bf16.msra.mxu0 0
      %1255 = vmatprep.subr.bf16.mxu0 0
      %1256 = vmatpush1.bf16.msra.mxu0 0
      %1257 = vmatprep.subr.bf16.mxu0 0
      %1258 = vmatpush1.bf16.msra.mxu0 0
      %1259 = vmatprep.subr.bf16.mxu0 0
      %1260 = vmatpush1.bf16.msra.mxu0 0
      %1261 = vmatprep.subr.bf16.mxu0 0
      %1262 = vmatpush1.bf16.msra.mxu0 0
      %1263 = vmatprep.subr.bf16.mxu0 0
      %1264 = vmatpush1.bf16.msra.mxu0 0
      %1265 = vmatprep.subr.bf16.mxu0 0
      %1266 = vmatpush1.bf16.msra.mxu0 0
      %1267 = vmatprep.mubr.bf16.mxu0 0
      %1268 = vmatmul.mubr.bf16.gmra.mrb[0].mxu0 %v1230
      %v1269 = vpop.f32.mrb[0].mxu0
      %v1270 = vadd.f32 0.0, %v1269
      %v1271 = vpop.f32.mrb[0].mxu0
      %v1272 = vpop.f32.mrb[0].mxu0
      %v1273 = vpop.f32.mrb[0].mxu0
      %1274 = vdwg.mxu0
      %1275 = vrot.lane.b32.xlu0 %v660, 112
      %v1276 = vpop.permute.xlu0 %1275
      %v1278 = vsel %vm661, %v1226, 0
      %v1281 = vsel %vm783, %v1276, 0
      %1283 = vmatprep.subr.bf16.mxu0 0
      %1284 = vmatpush1.bf16.msra.mxu0 %v1281
      %1285 = vmatprep.subr.bf16.mxu0 0
      %1286 = vmatpush1.bf16.msra.mxu0 0
      %1287 = vmatprep.subr.bf16.mxu0 0
      %1288 = vmatpush1.bf16.msra.mxu0 0
      %1289 = vmatprep.subr.bf16.mxu0 0
      %1290 = vmatpush1.bf16.msra.mxu0 0
      %1291 = vmatprep.subr.bf16.mxu0 0
      %1292 = vmatpush1.bf16.msra.mxu0 0
      %1293 = vmatprep.subr.bf16.mxu0 0
      %1294 = vmatpush1.bf16.msra.mxu0 0
      %1295 = vmatprep.subr.bf16.mxu0 0
      %1296 = vmatpush1.bf16.msra.mxu0 0
      %1297 = vmatprep.subr.bf16.mxu0 0
      %1298 = vmatpush1.bf16.msra.mxu0 0
      %1299 = vmatprep.subr.bf16.mxu0 0
      %1300 = vmatpush1.bf16.msra.mxu0 0
      %1301 = vmatprep.subr.bf16.mxu0 0
      %1302 = vmatpush1.bf16.msra.mxu0 0
      %1303 = vmatprep.subr.bf16.mxu0 0
      %1304 = vmatpush1.bf16.msra.mxu0 0
      %1305 = vmatprep.subr.bf16.mxu0 0
      %1306 = vmatpush1.bf16.msra.mxu0 0
      %1307 = vmatprep.subr.bf16.mxu0 0
      %1308 = vmatpush1.bf16.msra.mxu0 0
      %1309 = vmatprep.subr.bf16.mxu0 0
      %1310 = vmatpush1.bf16.msra.mxu0 0
      %1311 = vmatprep.subr.bf16.mxu0 0
      %1312 = vmatpush1.bf16.msra.mxu0 0
      %1313 = vmatprep.subr.bf16.mxu0 0
      %1314 = vmatpush1.bf16.msra.mxu0 0
      %1315 = vmatprep.mubr.bf16.mxu0 0
      %1316 = vmatmul.mubr.bf16.gmra.mrb[0].mxu0 %v1278
      %v1317 = vpop.f32.mrb[0].mxu0
      %v1318 = vadd.f32 0.0, %v1317
      %v1319 = vpop.f32.mrb[0].mxu0
      %v1320 = vpop.f32.mrb[0].mxu0
      %v1321 = vpop.f32.mrb[0].mxu0
      %1322 = vdwg.mxu0
      %1323 = vrot.lane.b32.xlu0 %v655, 104
      %v1324 = vpop.permute.xlu0 %1323
      %1325 = vrot.lane.b32.xlu0 %v657, 104
      %v1326 = vpop.permute.xlu0 %1325
      %v1328 = vsel %vm661, %v1324, 0
      %v1331 = vsel %vm661, %v1326, 0
      %1333 = vmatprep.subr.bf16.mxu0 0
      %1334 = vmatpush1.bf16.xpose.msra.mxu0 %v1331
      %1335 = vmatprep.subr.bf16.mxu0 0
      %1336 = vmatpush1.bf16.xpose.msra.mxu0 0
      %1337 = vmatprep.subr.bf16.mxu0 0
      %1338 = vmatpush1.bf16.xpose.msra.mxu0 0
      %1339 = vmatprep.subr.bf16.mxu0 0
      %1340 = vmatpush1.bf16.xpose.msra.mxu0 0
      %1341 = vmatprep.subr.bf16.mxu0 0
      %1342 = vmatpush1.bf16.xpose.msra.mxu0 0
      %1343 = vmatprep.subr.bf16.mxu0 0
      %1344 = vmatpush1.bf16.xpose.msra.mxu0 0
      %1345 = vmatprep.subr.bf16.mxu0 0
      %1346 = vmatpush1.bf16.xpose.msra.mxu0 0
      %1347 = vmatprep.subr.bf16.mxu0 0
      %1348 = vmatpush1.bf16.xpose.msra.mxu0 0
      %1349 = vmatprep.subr.bf16.mxu0 0
      %1350 = vmatpush1.bf16.xpose.msra.mxu0 0
      %1351 = vmatprep.subr.bf16.mxu0 0
      %1352 = vmatpush1.bf16.xpose.msra.mxu0 0
      %1353 = vmatprep.subr.bf16.mxu0 0
      %1354 = vmatpush1.bf16.xpose.msra.mxu0 0
      %1355 = vmatprep.subr.bf16.mxu0 0
      %1356 = vmatpush1.bf16.xpose.msra.mxu0 0
      %1357 = vmatprep.subr.bf16.mxu0 0
      %1358 = vmatpush1.bf16.xpose.msra.mxu0 0
      %1359 = vmatprep.subr.bf16.mxu0 0
      %1360 = vmatpush1.bf16.xpose.msra.mxu0 0
      %1361 = vmatprep.subr.bf16.mxu0 0
      %1362 = vmatpush1.bf16.xpose.msra.mxu0 0
      %1363 = vmatprep.subr.bf16.mxu0 0
      %1364 = vmatpush1.bf16.xpose.msra.mxu0 0
      %1365 = vmatprep.mubr.bf16.mxu0 0
      %1366 = vmatmul.mubr.bf16.gmra.mrb[0].mxu0 %v1328
      %v1367 = vpop.f32.mrb[0].mxu0
      %v1368 = vadd.f32 0.0, %v1367
      %v1369 = vpop.f32.mrb[0].mxu0
      %v1370 = vpop.f32.mrb[0].mxu0
      %v1371 = vpop.f32.mrb[0].mxu0
      %1372 = vdwg.mxu0
      %1373 = vrot.lane.b32.xlu0 %v656, 104
      %v1374 = vpop.permute.xlu0 %1373
      %1375 = vrot.lane.b32.xlu0 %v658, 104
      %v1376 = vpop.permute.xlu0 %1375
      %v1378 = vsel %vm661, %v1374, 0
      %v1381 = vsel %vm661, %v1376, 0
      %1383 = vmatprep.subr.bf16.mxu0 0
      %1384 = vmatpush1.bf16.xpose.msra.mxu0 %v1381
      %1385 = vmatprep.subr.bf16.mxu0 0
      %1386 = vmatpush1.bf16.xpose.msra.mxu0 0
      %1387 = vmatprep.subr.bf16.mxu0 0
      %1388 = vmatpush1.bf16.xpose.msra.mxu0 0
      %1389 = vmatprep.subr.bf16.mxu0 0
      %1390 = vmatpush1.bf16.xpose.msra.mxu0 0
      %1391 = vmatprep.subr.bf16.mxu0 0
      %1392 = vmatpush1.bf16.xpose.msra.mxu0 0
      %1393 = vmatprep.subr.bf16.mxu0 0
      %1394 = vmatpush1.bf16.xpose.msra.mxu0 0
      %1395 = vmatprep.subr.bf16.mxu0 0
      %1396 = vmatpush1.bf16.xpose.msra.mxu0 0
      %1397 = vmatprep.subr.bf16.mxu0 0
      %1398 = vmatpush1.bf16.xpose.msra.mxu0 0
      %1399 = vmatprep.subr.bf16.mxu0 0
      %1400 = vmatpush1.bf16.xpose.msra.mxu0 0
      %1401 = vmatprep.subr.bf16.mxu0 0
      %1402 = vmatpush1.bf16.xpose.msra.mxu0 0
      %1403 = vmatprep.subr.bf16.mxu0 0
      %1404 = vmatpush1.bf16.xpose.msra.mxu0 0
      %1405 = vmatprep.subr.bf16.mxu0 0
      %1406 = vmatpush1.bf16.xpose.msra.mxu0 0
      %1407 = vmatprep.subr.bf16.mxu0 0
      %1408 = vmatpush1.bf16.xpose.msra.mxu0 0
      %1409 = vmatprep.subr.bf16.mxu0 0
      %1410 = vmatpush1.bf16.xpose.msra.mxu0 0
      %1411 = vmatprep.subr.bf16.mxu0 0
      %1412 = vmatpush1.bf16.xpose.msra.mxu0 0
      %1413 = vmatprep.subr.bf16.mxu0 0
      %1414 = vmatpush1.bf16.xpose.msra.mxu0 0
      %1415 = vmatprep.mubr.bf16.mxu0 0
      %1416 = vmatmul.mubr.bf16.gmra.mrb[0].mxu0 %v1378
      %v1417 = vpop.f32.mrb[0].mxu0
      %v1418 = vadd.f32 0.0, %v1417
      %v1419 = vpop.f32.mrb[0].mxu0
      %v1420 = vpop.f32.mrb[0].mxu0
      %v1421 = vpop.f32.mrb[0].mxu0
      %1422 = vdwg.mxu0
      %v1423 = vmul.f32 %v1368, 0.35355338
      %v1424 = vmul.f32 %v1418, 0.35355338
      %v1425 = vsel %vm661, %v1423, -inf
      %1426 = vmax.xlane.f32.xlu0 %v1425
      %v1427 = vpop.xlane.xlu0 %1426
      %v1428 = vsel %vm661, %v1424, -inf
      %1429 = vmax.xlane.f32.xlu0 %v1428
      %v1430 = vpop.xlane.xlu0 %1429
      %v1431 = vsub.f32 %v1423, %v1427
      %v1432 = vsub.f32 %v1424, %v1430
      %v1433 = vmul.f32 %v1431, 1.442695
      %v1434 = vpow.pop %v1433
      %v1435 = vmul.f32 %v1432, 1.442695
      %v1436 = vpow.pop %v1435
      %v1437 = vsel %vm661, %v1434, 0.0
      %1438 = vadd.xlane.f32.xlu0 %v1437
      %v1439 = vpop.xlane.xlu0 %1438
      %v1440 = vsel %vm661, %v1436, 0.0
      %1441 = vadd.xlane.f32.xlu0 %v1440
      %v1442 = vpop.xlane.xlu0 %1441
      %v1443 = vrcp.pop %v1439
      %v1444 = vrcp.pop %v1442
      %v1445 = vmul.f32 %v1434, %v1443
      %v1446 = vmul.f32 %v1436, %v1444
      %v1447 = vpack.c.bf16 %v1445, %v1445
      %v1448 = vpack.c.bf16 %v1446, %v1446
      %1449 = vrot.lane.b32.xlu0 %v659, 104
      %v1450 = vpop.permute.xlu0 %1449
      %v1452 = vsel %vm661, %v1447, 0
      %v1455 = vsel %vm783, %v1450, 0
      %1457 = vmatprep.subr.bf16.mxu0 0
      %1458 = vmatpush1.bf16.msra.mxu0 %v1455
      %1459 = vmatprep.subr.bf16.mxu0 0
      %1460 = vmatpush1.bf16.msra.mxu0 0
      %1461 = vmatprep.subr.bf16.mxu0 0
      %1462 = vmatpush1.bf16.msra.mxu0 0
      %1463 = vmatprep.subr.bf16.mxu0 0
      %1464 = vmatpush1.bf16.msra.mxu0 0
      %1465 = vmatprep.subr.bf16.mxu0 0
      %1466 = vmatpush1.bf16.msra.mxu0 0
      %1467 = vmatprep.subr.bf16.mxu0 0
      %1468 = vmatpush1.bf16.msra.mxu0 0
      %1469 = vmatprep.subr.bf16.mxu0 0
      %1470 = vmatpush1.bf16.msra.mxu0 0
      %1471 = vmatprep.subr.bf16.mxu0 0
      %1472 = vmatpush1.bf16.msra.mxu0 0
      %1473 = vmatprep.subr.bf16.mxu0 0
      %1474 = vmatpush1.bf16.msra.mxu0 0
      %1475 = vmatprep.subr.bf16.mxu0 0
      %1476 = vmatpush1.bf16.msra.mxu0 0
      %1477 = vmatprep.subr.bf16.mxu0 0
      %1478 = vmatpush1.bf16.msra.mxu0 0
      %1479 = vmatprep.subr.bf16.mxu0 0
      %1480 = vmatpush1.bf16.msra.mxu0 0
      %1481 = vmatprep.subr.bf16.mxu0 0
      %1482 = vmatpush1.bf16.msra.mxu0 0
      %1483 = vmatprep.subr.bf16.mxu0 0
      %1484 = vmatpush1.bf16.msra.mxu0 0
      %1485 = vmatprep.subr.bf16.mxu0 0
      %1486 = vmatpush1.bf16.msra.mxu0 0
      %1487 = vmatprep.subr.bf16.mxu0 0
      %1488 = vmatpush1.bf16.msra.mxu0 0
      %1489 = vmatprep.mubr.bf16.mxu0 0
      %1490 = vmatmul.mubr.bf16.gmra.mrb[0].mxu0 %v1452
      %v1491 = vpop.f32.mrb[0].mxu0
      %v1492 = vadd.f32 0.0, %v1491
      %v1493 = vpop.f32.mrb[0].mxu0
      %v1494 = vpop.f32.mrb[0].mxu0
      %v1495 = vpop.f32.mrb[0].mxu0
      %1496 = vdwg.mxu0
      %1497 = vrot.lane.b32.xlu0 %v660, 104
      %v1498 = vpop.permute.xlu0 %1497
      %v1500 = vsel %vm661, %v1448, 0
      %v1503 = vsel %vm783, %v1498, 0
      %1505 = vmatprep.subr.bf16.mxu0 0
      %1506 = vmatpush1.bf16.msra.mxu0 %v1503
      %1507 = vmatprep.subr.bf16.mxu0 0
      %1508 = vmatpush1.bf16.msra.mxu0 0
      %1509 = vmatprep.subr.bf16.mxu0 0
      %1510 = vmatpush1.bf16.msra.mxu0 0
      %1511 = vmatprep.subr.bf16.mxu0 0
      %1512 = vmatpush1.bf16.msra.mxu0 0
      %1513 = vmatprep.subr.bf16.mxu0 0
      %1514 = vmatpush1.bf16.msra.mxu0 0
      %1515 = vmatprep.subr.bf16.mxu0 0
      %1516 = vmatpush1.bf16.msra.mxu0 0
      %1517 = vmatprep.subr.bf16.mxu0 0
      %1518 = vmatpush1.bf16.msra.mxu0 0
      %1519 = vmatprep.subr.bf16.mxu0 0
      %1520 = vmatpush1.bf16.msra.mxu0 0
      %1521 = vmatprep.subr.bf16.mxu0 0
      %1522 = vmatpush1.bf16.msra.mxu0 0
      %1523 = vmatprep.subr.bf16.mxu0 0
      %1524 = vmatpush1.bf16.msra.mxu0 0
      %1525 = vmatprep.subr.bf16.mxu0 0
      %1526 = vmatpush1.bf16.msra.mxu0 0
      %1527 = vmatprep.subr.bf16.mxu0 0
      %1528 = vmatpush1.bf16.msra.mxu0 0
      %1529 = vmatprep.subr.bf16.mxu0 0
      %1530 = vmatpush1.bf16.msra.mxu0 0
      %1531 = vmatprep.subr.bf16.mxu0 0
      %1532 = vmatpush1.bf16.msra.mxu0 0
      %1533 = vmatprep.subr.bf16.mxu0 0
      %1534 = vmatpush1.bf16.msra.mxu0 0
      %1535 = vmatprep.subr.bf16.mxu0 0
      %1536 = vmatpush1.bf16.msra.mxu0 0
      %1537 = vmatprep.mubr.bf16.mxu0 0
      %1538 = vmatmul.mubr.bf16.gmra.mrb[0].mxu0 %v1500
      %v1539 = vpop.f32.mrb[0].mxu0
      %v1540 = vadd.f32 0.0, %v1539
      %v1541 = vpop.f32.mrb[0].mxu0
      %v1542 = vpop.f32.mrb[0].mxu0
      %v1543 = vpop.f32.mrb[0].mxu0
      %1544 = vdwg.mxu0
      %1547 = vrot.lane.b32.xlu0 %v1047, 8
      %v1548 = vpop.permute.xlu0 %1547
      %1549 = vrot.lane.b32.xlu0 %v1096, 8
      %v1550 = vpop.permute.xlu0 %1549
      %1555 = vrot.lane.b32.xlu0 %v1270, 16
      %v1556 = vpop.permute.xlu0 %1555
      %1557 = vrot.lane.b32.xlu0 %v1318, 16
      %v1558 = vpop.permute.xlu0 %1557
      %1563 = vrot.lane.b32.xlu0 %v1492, 24
      %v1564 = vpop.permute.xlu0 %1563
      %1565 = vrot.lane.b32.xlu0 %v1540, 24
      %v1566 = vpop.permute.xlu0 %1565
      %v1569 = vsel %vm661, %v822, %v1548
      %v1570 = vsel %vm661, %v868, %v1550
      %vm1571 = vcmask 130048
      %v1572 = vsel %vm1571, %v1569, %v1556
      %v1573 = vsel %vm1571, %v1570, %v1558
      %vm1574 = vcmask 195584
      %v1575 = vsel %vm1574, %v1572, %v1564
      %v1576 = vsel %vm1574, %v1573, %v1566
      %v1577 = vpack.c.bf16 %v1576, %v1575
      %v1579 = vlaneseq
      %v1580 = vshrl.u32 %v1579, 7
      %v1581 = vsub.s32 0, %v1580
      %v1582 = vrot.slane %v472, %v1581
      %v1588 = vunpack.c.l.b16 %v465
      %v1589 = vunpack.c.l.b16 %v466
      %v1590 = vunpack.c.l.b16 %v467
      %v1591 = vunpack.c.l.b16 %v468
      %v1592 = vpack.c.b16 %v1589, %v1588
      %v1593 = vpack.c.b16 %v1591, %v1590
      %v1597 = vsel %vm492, %v1577, 0
      %1599 = vmatprep.subr.bf16.mxu0 0
      %1600 = vmatpush1.bf16.msra.mxu0 %v1592
      %1601 = vmatprep.subr.bf16.mxu0 0
      %1602 = vmatpush1.bf16.msra.mxu0 %v1593
      %1603 = vmatprep.subr.bf16.mxu0 0
      %1604 = vmatpush1.bf16.msra.mxu0 0
      %1605 = vmatprep.subr.bf16.mxu0 0
      %1606 = vmatpush1.bf16.msra.mxu0 0
      %1607 = vmatprep.subr.bf16.mxu0 0
      %1608 = vmatpush1.bf16.msra.mxu0 0
      %1609 = vmatprep.subr.bf16.mxu0 0
      %1610 = vmatpush1.bf16.msra.mxu0 0
      %1611 = vmatprep.subr.bf16.mxu0 0
      %1612 = vmatpush1.bf16.msra.mxu0 0
      %1613 = vmatprep.subr.bf16.mxu0 0
      %1614 = vmatpush1.bf16.msra.mxu0 0
      %1615 = vmatprep.subr.bf16.mxu0 0
      %1616 = vmatpush1.bf16.msra.mxu0 0
      %1617 = vmatprep.subr.bf16.mxu0 0
      %1618 = vmatpush1.bf16.msra.mxu0 0
      %1619 = vmatprep.subr.bf16.mxu0 0
      %1620 = vmatpush1.bf16.msra.mxu0 0
      %1621 = vmatprep.subr.bf16.mxu0 0
      %1622 = vmatpush1.bf16.msra.mxu0 0
      %1623 = vmatprep.subr.bf16.mxu0 0
      %1624 = vmatpush1.bf16.msra.mxu0 0
      %1625 = vmatprep.subr.bf16.mxu0 0
      %1626 = vmatpush1.bf16.msra.mxu0 0
      %1627 = vmatprep.subr.bf16.mxu0 0
      %1628 = vmatpush1.bf16.msra.mxu0 0
      %1629 = vmatprep.subr.bf16.mxu0 0
      %1630 = vmatpush1.bf16.msra.mxu0 0
      %1631 = vmatprep.mubr.bf16.mxu0 0
      %1632 = vmatmul.mubr.bf16.gmra.mrb[0].mxu0 %v1597
      %v1633 = vpop.f32.mrb[0].mxu0
      %v1634 = vadd.f32 %v1582, %v1633
      %v1635 = vpop.f32.mrb[0].mxu0
      %v1636 = vpop.f32.mrb[0].mxu0
      %v1637 = vadd.f32 %v1582, %v1636
      %v1638 = vpop.f32.mrb[0].mxu0
      %1639 = vdwg.mxu0
      %v1640 = vadd.f32 %v1634, %v447
      %v1641 = vadd.f32 %v1637, %v448
      %v1642 = vsel %vm492, %v1640, 0.0
      %1643 = vadd.xlane.f32.xlu0 %v1642
      %v1644 = vpop.xlane.xlu0 %1643
      %v1645 = vsel %vm492, %v1641, 0.0
      %1646 = vadd.xlane.f32.xlu0 %v1645
      %v1647 = vpop.xlane.xlu0 %1646
      %v1648 = vrcp.pop 32.0
      %v1649 = vmul.f32 %v1644, %v1648
      %v1650 = vmul.f32 %v1647, %v1648
      %v1651 = vsub.f32 %v1640, %v1649
      %v1652 = vsub.f32 %v1641, %v1650
      %v1653 = vmul.f32 %v1651, %v1651
      %v1654 = vmul.f32 %v1652, %v1652
      %v1655 = vsel %vm492, %v1653, 0.0
      %1656 = vadd.xlane.f32.xlu0 %v1655
      %v1657 = vpop.xlane.xlu0 %1656
      %v1658 = vsel %vm492, %v1654, 0.0
      %1659 = vadd.xlane.f32.xlu0 %v1658
      %v1660 = vpop.xlane.xlu0 %1659
      %v1661 = vmul.f32 %v1657, %v1648
      %v1662 = vmul.f32 %v1660, %v1648
      %v1663 = vadd.f32 %v1661, 1e-05
      %v1664 = vadd.f32 %v1662, 1e-05
      %v1665 = vrsqrt.pop %v1663
      %v1666 = vrsqrt.pop %v1664
      %v1667 = vmul.f32 %v1651, %v1665
      %v1668 = vmul.f32 %v1652, %v1666
      %v1670 = vlaneseq
      %v1671 = vshrl.u32 %v1670, 7
      %v1672 = vsub.s32 0, %v1671
      %v1673 = vrot.slane %v449, %v1672
      %v1675 = vmul.f32 %v1667, %v1673
      %v1676 = vmul.f32 %v1668, %v1673
      %v1678 = vlaneseq
      %v1679 = vshrl.u32 %v1678, 7
      %v1680 = vsub.s32 0, %v1679
      %v1681 = vrot.slane %v451, %v1680
      %v1683 = vadd.f32 %v1675, %v1681
      %v1684 = vadd.f32 %v1676, %v1681
      %v1685 = vld [vmem:[%s425] sm:$0xf]
      %v1686 = vld [vmem:[%s425 + $0x4] sm:$0xf]
      %v1687 = vld [vmem:[%s425 + $0x8] sm:$0xf]
      %v1688 = vld [vmem:[%s425 + $0xc] sm:$0xf]
      %v1689 = vld [vmem:[%s428] sm:$0x1]
      %v1690 = vpack.c.bf16 %v1684, %v1683
      %v1692 = vlaneseq
      %v1693 = vshrl.u32 %v1692, 7
      %v1694 = vsub.s32 0, %v1693
      %v1695 = vrot.slane %v1689, %v1694
      %v1701 = vunpack.c.l.b16 %v1685
      %v1702 = vunpack.c.l.b16 %v1686
      %v1703 = vunpack.c.l.b16 %v1687
      %v1704 = vunpack.c.l.b16 %v1688
      %v1705 = vpack.c.b16 %v1702, %v1701
      %v1706 = vpack.c.b16 %v1704, %v1703
      %v1710 = vsel %vm492, %v1690, 0
      %1712 = vmatprep.subr.bf16.mxu0 0
      %1713 = vmatpush1.bf16.msra.mxu0 %v1705
      %1714 = vmatprep.subr.bf16.mxu0 0
      %1715 = vmatpush1.bf16.msra.mxu0 %v1706
      %1716 = vmatprep.subr.bf16.mxu0 0
      %1717 = vmatpush1.bf16.msra.mxu0 0
      %1718 = vmatprep.subr.bf16.mxu0 0
      %1719 = vmatpush1.bf16.msra.mxu0 0
      %1720 = vmatprep.subr.bf16.mxu0 0
      %1721 = vmatpush1.bf16.msra.mxu0 0
      %1722 = vmatprep.subr.bf16.mxu0 0
      %1723 = vmatpush1.bf16.msra.mxu0 0
      %1724 = vmatprep.subr.bf16.mxu0 0
      %1725 = vmatpush1.bf16.msra.mxu0 0
      %1726 = vmatprep.subr.bf16.mxu0 0
      %1727 = vmatpush1.bf16.msra.mxu0 0
      %1728 = vmatprep.subr.bf16.mxu0 0
      %1729 = vmatpush1.bf16.msra.mxu0 0
      %1730 = vmatprep.subr.bf16.mxu0 0
      %1731 = vmatpush1.bf16.msra.mxu0 0
      %1732 = vmatprep.subr.bf16.mxu0 0
      %1733 = vmatpush1.bf16.msra.mxu0 0
      %1734 = vmatprep.subr.bf16.mxu0 0
      %1735 = vmatpush1.bf16.msra.mxu0 0
      %1736 = vmatprep.subr.bf16.mxu0 0
      %1737 = vmatpush1.bf16.msra.mxu0 0
      %1738 = vmatprep.subr.bf16.mxu0 0
      %1739 = vmatpush1.bf16.msra.mxu0 0
      %1740 = vmatprep.subr.bf16.mxu0 0
      %1741 = vmatpush1.bf16.msra.mxu0 0
      %1742 = vmatprep.subr.bf16.mxu0 0
      %1743 = vmatpush1.bf16.msra.mxu0 0
      %1744 = vmatprep.mubr.bf16.mxu0 0
      %1745 = vmatmul.mubr.bf16.gmra.mrb[0].mxu0 %v1710
      %v1746 = vpop.f32.mrb[0].mxu0
      %v1747 = vadd.f32 %v1695, %v1746
      %v1748 = vpop.f32.mrb[0].mxu0
      %v1749 = vpop.f32.mrb[0].mxu0
      %v1750 = vadd.f32 %v1695, %v1749
      %v1751 = vpop.f32.mrb[0].mxu0
      %1752 = vdwg.mxu0
      %v1753 = vmax.f32 %v1747, 0.0
      %v1754 = vmax.f32 %v1750, 0.0
      %v1755 = vld [vmem:[%s433] sm:$0xf]
      %v1756 = vld [vmem:[%s433 + $0x4] sm:$0xf]
      %v1757 = vld [vmem:[%s433 + $0x8] sm:$0xf]
      %v1758 = vld [vmem:[%s433 + $0xc] sm:$0xf]
      %v1759 = vld [vmem:[%s433 + $0x10] sm:$0xf]
      %v1760 = vld [vmem:[%s433 + $0x14] sm:$0xf]
      %v1761 = vld [vmem:[%s433 + $0x18] sm:$0xf]
      %v1762 = vld [vmem:[%s433 + $0x1c] sm:$0xf]
      %v1763 = vld [vmem:[%s436] sm:$0x1]
      %v1764 = vpack.c.bf16 %v1754, %v1753
      %v1766 = vlaneseq
      %v1767 = vshrl.u32 %v1766, 7
      %v1768 = vsub.s32 0, %v1767
      %v1769 = vrot.slane %v1763, %v1768
      %v1779 = vunpack.c.l.b16 %v1755
      %v1780 = vunpack.c.l.b16 %v1756
      %v1781 = vunpack.c.l.b16 %v1757
      %v1782 = vunpack.c.l.b16 %v1758
      %v1783 = vunpack.c.l.b16 %v1759
      %v1784 = vunpack.c.l.b16 %v1760
      %v1785 = vunpack.c.l.b16 %v1761
      %v1786 = vunpack.c.l.b16 %v1762
      %v1787 = vpack.c.b16 %v1780, %v1779
      %v1788 = vpack.c.b16 %v1782, %v1781
      %v1789 = vpack.c.b16 %v1784, %v1783
      %v1790 = vpack.c.b16 %v1786, %v1785
      %vm1795 = vcmask 523264
      %v1797 = vsel %vm1795, %v1764, 0
      %1799 = vmatprep.subr.bf16.mxu0 0
      %1800 = vmatpush1.bf16.msra.mxu0 %v1787
      %1801 = vmatprep.subr.bf16.mxu0 0
      %1802 = vmatpush1.bf16.msra.mxu0 %v1788
      %1803 = vmatprep.subr.bf16.mxu0 0
      %1804 = vmatpush1.bf16.msra.mxu0 %v1789
      %1805 = vmatprep.subr.bf16.mxu0 0
      %1806 = vmatpush1.bf16.msra.mxu0 %v1790
      %1807 = vmatprep.subr.bf16.mxu0 0
      %1808 = vmatpush1.bf16.msra.mxu0 0
      %1809 = vmatprep.subr.bf16.mxu0 0
      %1810 = vmatpush1.bf16.msra.mxu0 0
      %1811 = vmatprep.subr.bf16.mxu0 0
      %1812 = vmatpush1.bf16.msra.mxu0 0
      %1813 = vmatprep.subr.bf16.mxu0 0
      %1814 = vmatpush1.bf16.msra.mxu0 0
      %1815 = vmatprep.subr.bf16.mxu0 0
      %1816 = vmatpush1.bf16.msra.mxu0 0
      %1817 = vmatprep.subr.bf16.mxu0 0
      %1818 = vmatpush1.bf16.msra.mxu0 0
      %1819 = vmatprep.subr.bf16.mxu0 0
      %1820 = vmatpush1.bf16.msra.mxu0 0
      %1821 = vmatprep.subr.bf16.mxu0 0
      %1822 = vmatpush1.bf16.msra.mxu0 0
      %1823 = vmatprep.subr.bf16.mxu0 0
      %1824 = vmatpush1.bf16.msra.mxu0 0
      %1825 = vmatprep.subr.bf16.mxu0 0
      %1826 = vmatpush1.bf16.msra.mxu0 0
      %1827 = vmatprep.subr.bf16.mxu0 0
      %1828 = vmatpush1.bf16.msra.mxu0 0
      %1829 = vmatprep.subr.bf16.mxu0 0
      %1830 = vmatpush1.bf16.msra.mxu0 0
      %1831 = vmatprep.mubr.bf16.mxu0 0
      %1832 = vmatmul.mubr.bf16.gmra.mrb[0].mxu0 %v1797
      %v1833 = vpop.f32.mrb[0].mxu0
      %v1834 = vadd.f32 %v1769, %v1833
      %v1835 = vpop.f32.mrb[0].mxu0
      %v1836 = vpop.f32.mrb[0].mxu0
      %v1837 = vadd.f32 %v1769, %v1836
      %v1838 = vpop.f32.mrb[0].mxu0
      %1839 = vdwg.mxu0
      %v1840 = vadd.f32 %v1834, %v1683
      %v1841 = vadd.f32 %v1837, %v1684
      %v1842 = vsel %vm492, %v1840, 0.0
      %1843 = vadd.xlane.f32.xlu0 %v1842
      %v1844 = vpop.xlane.xlu0 %1843
      %v1845 = vsel %vm492, %v1841, 0.0
      %1846 = vadd.xlane.f32.xlu0 %v1845
      %v1847 = vpop.xlane.xlu0 %1846
      %v1848 = vmul.f32 %v1844, %v1648
      %v1849 = vmul.f32 %v1847, %v1648
      %v1850 = vsub.f32 %v1840, %v1848
      %v1851 = vsub.f32 %v1841, %v1849
      %v1852 = vmul.f32 %v1850, %v1850
      %v1853 = vmul.f32 %v1851, %v1851
      %v1854 = vsel %vm492, %v1852, 0.0
      %1855 = vadd.xlane.f32.xlu0 %v1854
      %v1856 = vpop.xlane.xlu0 %1855
      %v1857 = vsel %vm492, %v1853, 0.0
      %1858 = vadd.xlane.f32.xlu0 %v1857
      %v1859 = vpop.xlane.xlu0 %1858
      %v1860 = vmul.f32 %v1856, %v1648
      %v1861 = vmul.f32 %v1859, %v1648
      %v1862 = vadd.f32 %v1860, 1e-05
      %v1863 = vadd.f32 %v1861, 1e-05
      %v1864 = vrsqrt.pop %v1862
      %v1865 = vrsqrt.pop %v1863
      %v1866 = vmul.f32 %v1850, %v1864
      %v1867 = vmul.f32 %v1851, %v1865
      %v1869 = vlaneseq
      %v1870 = vshrl.u32 %v1869, 7
      %v1871 = vsub.s32 0, %v1870
      %v1872 = vrot.slane %v450, %v1871
      %v1874 = vmul.f32 %v1866, %v1872
      %v1875 = vmul.f32 %v1867, %v1872
      %v1877 = vlaneseq
      %v1878 = vshrl.u32 %v1877, 7
      %v1879 = vsub.s32 0, %v1878
      %v1880 = vrot.slane %v452, %v1879
      %v1882 = vadd.f32 %v1874, %v1880
      %v1883 = vadd.f32 %v1875, %v1880
      %1884 = vst.msk [vmem:[#allocation2] sm:$0xff] %vm492, %v1882
      %1885 = vst.msk [vmem:[#allocation2 + $0x8] sm:$0xff] %vm492, %v1883
      %p1886 = scmp.eq.s32.totalorder %s20, 1
      // Predicated region
      $region61: #{transformer_forward.3} parent=55 // pred_check
        %p1887 = pneg %p1886
      $region62: #{transformer_forward.3} parent=55 // pred_check_branch
        %1889 = sbr.rel (%p1887) target = $region64
      $region63: #{transformer_forward.3} parent=55 // pred_region
        %1890 = vst.msk [vmem:[%s9] sm:$0xff] %vm492, %v1882
        %1891 = vst.msk [vmem:[%s9 + $0x8] sm:$0xff] %vm492, %v1883
      $region64: #{transformer_forward.3} parent=55 // pred_fallthru
        _
      // Predicated region
      $region65: #{transformer_forward.3} parent=55 // pred_check
        %p1892 = pneg %p262
      $region66: #{transformer_forward.3} parent=55 // pred_check_branch
        %1894 = sbr.rel (%p1892) target = $region68
      $region67: #{transformer_forward.3} parent=55 // pred_region
        _
      $region68: #{transformer_forward.3} parent=55 // pred_fallthru
        _
      // Predicated region
      $region69: #{transformer_forward.3} parent=55 // pred_check
        %p1895 = pneg %p262
      $region70: #{transformer_forward.3} parent=55 // pred_check_branch
        %1897 = sbr.rel (%p1895) target = $region72
      $region71: #{transformer_forward.3} parent=55 // pred_region
        _
      $region72: #{transformer_forward.3} parent=55 // pred_fallthru
        _
    $region56: #{transformer_forward.3} parent=5 // pred_fallthru
      _
    %p1898 = scmp.le.s32.totalorder 2, %s15
    // Predicated region
    $region73: #{transformer_forward.3} parent=5 // pred_check
      %p1899 = pneg %p1898
    $region74: #{transformer_forward.3} parent=5 // pred_check_branch
      %1901 = sbr.rel (%p1899) target = $region76
    $region75: #{transformer_forward.3} parent=5 // pred_region
      %s1902 = ssub.s32 %s15, 2
    $region76: #{transformer_forward.3} parent=5 // pred_fallthru
      _
  $region6: #{transformer_forward.3} parent=0 // loop_footer
    %s19 = sadd.s32 1, %s15
  $region7: #{transformer_forward.3} parent=0 // loop_footer_branch
    %14 = sbr.rel target = $region3
  $region8: #{transformer_forward.3} parent=0 // loop_exit
    _

// kernel: transformer_forward.4
$region0: #{transformer_forward.4}
  #allocation0 [shape = 'u32[]', space=smem, size = 0x4, offset = 0x4, fixed_abs, tag = 'smem constant byte address 0x4 - core index']
  #allocation1 [shape = 'u32[144,128]{1,0:T(1,128)}', space=vmem, size = 0x12000, scoped, tag = 'internal scratch']
  #allocation2 [shape = 'f32[16,32]{1,0:T(8,128)}', space=vmem, size = 0x2000, scoped, tag = 'scratch operand']
  %s0 = inlined_call_operand.vmem [shape: f32[2,8,32], index: 0, kind: input, shape index: {}]
  %s1 = inlined_call_operand.vmem [shape: f32[2,8,32], index: 1, kind: input, shape index: {}]
  %s2 = inlined_call_operand.vmem [shape: bf16[2,4,32,32], index: 2, kind: input, shape index: {}]
  %s3 = inlined_call_operand.vmem [shape: f32[2,4,1,32], index: 3, kind: input, shape index: {}]
  %s4 = inlined_call_operand.vmem [shape: bf16[2,4,32,32], index: 4, kind: input, shape index: {}]
  %s5 = inlined_call_operand.vmem [shape: f32[2,4,1,32], index: 5, kind: input, shape index: {}]
  %s6 = inlined_call_operand.vmem [shape: f32[2,3,1,32], index: 6, kind: input, shape index: {}]
  %s7 = inlined_call_operand.vmem [shape: f32[2,3,1,32], index: 7, kind: input, shape index: {}]
  %s8 = inlined_call_operand.vmem [shape: bf16[2,32,64], index: 8, kind: input, shape index: {}]
  %s9 = inlined_call_operand.vmem [shape: f32[2,1,64], index: 9, kind: input, shape index: {}]
  %s10 = inlined_call_operand.vmem [shape: bf16[2,64,32], index: 10, kind: input, shape index: {}]
  %s11 = inlined_call_operand.vmem [shape: f32[2,1,32], index: 11, kind: input, shape index: {}]
  %s12 = inlined_call_operand.vmem [shape: f32[2,8,32], index: 12, kind: output, shape index: {}]
  %s13 = sld [smem:[#allocation0]]
  $region89: #{transformer_forward.4} parent=0
    _
  %s15 = ssub.s32 1, %s13
  %s16 = scalar_select 0, %s15, %s13
  loop: start=0, step=1, limit=4
  $region2: #{transformer_forward.4} parent=0 // loop_pre_header
    _
  $region3: #{transformer_forward.4} parent=0 // loop_header
    %s18 = sphi 0, %s22
    %p19 = scmp.ge.s32.totalorder %s18, 4
    %s26 = sphi 0, %s26
    %s28 = sphi 0, %s26
    %s29 = sphi 0, %s28
    %s43 = sphi 0, %s29
    %s47 = sphi 0, %s47
    %s49 = sphi 0, %s47
    %s50 = sphi 0, %s49
    %s64 = sphi 0, %s50
    %s70 = sphi 0, %s72
    %s73 = sphi 0, %s70
    %s74 = sphi 0, %s73
    %s90 = sphi 0, %s74
    %s96 = sphi 0, %s98
    %s99 = sphi 0, %s96
    %s100 = sphi 0, %s99
    %s116 = sphi 0, %s100
    %s122 = sphi 0, %s124
    %s125 = sphi 0, %s122
    %s126 = sphi 0, %s125
    %s142 = sphi 0, %s126
    %s148 = sphi 0, %s150
    %s151 = sphi 0, %s148
    %s152 = sphi 0, %s151
    %s168 = sphi 0, %s152
    %s174 = sphi 0, %s176
    %s177 = sphi 0, %s174
    %s178 = sphi 0, %s177
    %s194 = sphi 0, %s178
    %s200 = sphi 0, %s202
    %s203 = sphi 0, %s200
    %s204 = sphi 0, %s203
    %s220 = sphi 0, %s204
    %s226 = sphi 0, %s228
    %s229 = sphi 0, %s226
    %s230 = sphi 0, %s229
    %s246 = sphi 0, %s230
    %s252 = sphi 0, %s254
    %s255 = sphi 0, %s252
    %s256 = sphi 0, %s255
    %s272 = sphi 0, %s256
    %s278 = sphi 0, %s280
    %s281 = sphi 0, %s278
    %s282 = sphi 0, %s281
    %s298 = sphi 0, %s282
    %s304 = sphi 0, %s306
    %s307 = sphi 0, %s304
    %s308 = sphi 0, %s307
    %s324 = sphi 0, %s308
    %s328 = sphi 0, %s328
    %s330 = sphi 0, %s328
    %s331 = sphi 0, %s330
    %s345 = sphi 0, %s331
  $region4: #{transformer_forward.4} parent=0 // loop_header_branch
    %21 = sbr.rel (%p19) target = $region8
  $region5: #{transformer_forward.4} parent=0 // loop_body
    %s23 = ssub.s32 %s18, 1
    %s24 = ssub.s32 %s18, 2
    %s25 = sadd.s32 %s18, 1
    %s27 = sadd.s32 %s26, 1
    %p30 = scmp.eq.s32.totalorder %s18, 1
    %p31 = scmp.ne.s32.totalorder %s26, %s28
    %p32 = scmp.eq.s32.totalorder %s18, 0
    %p33 = por %p31, %p32
    %p34 = scmp.ne.s32.totalorder %s26, %s28
    %p35 = scmp.eq.s32.totalorder %s23, 1
    %p36 = por %p34, %p35
    %p37 = scmp.ne.s32.totalorder %s28, %s29
    %p38 = scmp.eq.s32.totalorder %s23, 0
    %p39 = por %p37, %p38
    %p40 = scmp.ne.s32.totalorder %s28, %s29
    %p41 = scmp.eq.s32.totalorder %s24, 1
    %p42 = por %p40, %p41
    %p44 = scmp.ne.s32.totalorder %s29, %s43
    %p45 = scmp.eq.s32.totalorder %s24, 0
    %p46 = por %p44, %p45
    %s48 = sadd.s32 %s47, 1
    %p51 = scmp.eq.s32.totalorder %s18, 1
    %p52 = scmp.ne.s32.totalorder %s47, %s49
    %p53 = scmp.eq.s32.totalorder %s18, 0
    %p54 = por %p52, %p53
    %p55 = scmp.ne.s32.totalorder %s47, %s49
    %p56 = scmp.eq.s32.totalorder %s23, 1
    %p57 = por %p55, %p56
    %p58 = scmp.ne.s32.totalorder %s49, %s50
    %p59 = scmp.eq.s32.totalorder %s23, 0
    %p60 = por %p58, %p59
    %p61 = scmp.ne.s32.totalorder %s49, %s50
    %p62 = scmp.eq.s32.totalorder %s24, 1
    %p63 = por %p61, %p62
    %p65 = scmp.ne.s32.totalorder %s50, %s64
    %p66 = scmp.eq.s32.totalorder %s24, 0
    %p67 = por %p65, %p66
    %s68 = ssub.s32 %s18, %s25
    %p69 = scmp.eq.s32.totalorder %s68, 0
    %s71 = sadd.s32 %s70, 1
    %s72 = scalar_select %p69, %s70, %s71
    %p75 = pneg %p69
    %p76 = scmp.eq.s32.totalorder %s18, 1
    %p77 = por %p75, %p76
    %p78 = scmp.ne.s32.totalorder %s70, %s73
    %p79 = scmp.eq.s32.totalorder %s18, 0
    %p80 = por %p78, %p79
    %p81 = scmp.ne.s32.totalorder %s70, %s73
    %p82 = scmp.eq.s32.totalorder %s23, 1
    %p83 = por %p81, %p82
    %p84 = scmp.ne.s32.totalorder %s73, %s74
    %p85 = scmp.eq.s32.totalorder %s23, 0
    %p86 = por %p84, %p85
    %p87 = scmp.ne.s32.totalorder %s73, %s74
    %p88 = scmp.eq.s32.totalorder %s24, 1
    %p89 = por %p87, %p88
    %p91 = scmp.ne.s32.totalorder %s74, %s90
    %p92 = scmp.eq.s32.totalorder %s24, 0
    %p93 = por %p91, %p92
    %s94 = ssub.s32 %s18, %s25
    %p95 = scmp.eq.s32.totalorder %s94, 0
    %s97 = sadd.s32 %s96, 1
    %s98 = scalar_select %p95, %s96, %s97
    %p101 = pneg %p95
    %p102 = scmp.eq.s32.totalorder %s18, 1
    %p103 = por %p101, %p102
    %p104 = scmp.ne.s32.totalorder %s96, %s99
    %p105 = scmp.eq.s32.totalorder %s18, 0
    %p106 = por %p104, %p105
    %p107 = scmp.ne.s32.totalorder %s96, %s99
    %p108 = scmp.eq.s32.totalorder %s23, 1
    %p109 = por %p107, %p108
    %p110 = scmp.ne.s32.totalorder %s99, %s100
    %p111 = scmp.eq.s32.totalorder %s23, 0
    %p112 = por %p110, %p111
    %p113 = scmp.ne.s32.totalorder %s99, %s100
    %p114 = scmp.eq.s32.totalorder %s24, 1
    %p115 = por %p113, %p114
    %p117 = scmp.ne.s32.totalorder %s100, %s116
    %p118 = scmp.eq.s32.totalorder %s24, 0
    %p119 = por %p117, %p118
    %s120 = ssub.s32 %s18, %s25
    %p121 = scmp.eq.s32.totalorder %s120, 0
    %s123 = sadd.s32 %s122, 1
    %s124 = scalar_select %p121, %s122, %s123
    %p127 = pneg %p121
    %p128 = scmp.eq.s32.totalorder %s18, 1
    %p129 = por %p127, %p128
    %p130 = scmp.ne.s32.totalorder %s122, %s125
    %p131 = scmp.eq.s32.totalorder %s18, 0
    %p132 = por %p130, %p131
    %p133 = scmp.ne.s32.totalorder %s122, %s125
    %p134 = scmp.eq.s32.totalorder %s23, 1
    %p135 = por %p133, %p134
    %p136 = scmp.ne.s32.totalorder %s125, %s126
    %p137 = scmp.eq.s32.totalorder %s23, 0
    %p138 = por %p136, %p137
    %p139 = scmp.ne.s32.totalorder %s125, %s126
    %p140 = scmp.eq.s32.totalorder %s24, 1
    %p141 = por %p139, %p140
    %p143 = scmp.ne.s32.totalorder %s126, %s142
    %p144 = scmp.eq.s32.totalorder %s24, 0
    %p145 = por %p143, %p144
    %s146 = ssub.s32 %s18, %s25
    %p147 = scmp.eq.s32.totalorder %s146, 0
    %s149 = sadd.s32 %s148, 1
    %s150 = scalar_select %p147, %s148, %s149
    %p153 = pneg %p147
    %p154 = scmp.eq.s32.totalorder %s18, 1
    %p155 = por %p153, %p154
    %p156 = scmp.ne.s32.totalorder %s148, %s151
    %p157 = scmp.eq.s32.totalorder %s18, 0
    %p158 = por %p156, %p157
    %p159 = scmp.ne.s32.totalorder %s148, %s151
    %p160 = scmp.eq.s32.totalorder %s23, 1
    %p161 = por %p159, %p160
    %p162 = scmp.ne.s32.totalorder %s151, %s152
    %p163 = scmp.eq.s32.totalorder %s23, 0
    %p164 = por %p162, %p163
    %p165 = scmp.ne.s32.totalorder %s151, %s152
    %p166 = scmp.eq.s32.totalorder %s24, 1
    %p167 = por %p165, %p166
    %p169 = scmp.ne.s32.totalorder %s152, %s168
    %p170 = scmp.eq.s32.totalorder %s24, 0
    %p171 = por %p169, %p170
    %s172 = ssub.s32 %s18, %s25
    %p173 = scmp.eq.s32.totalorder %s172, 0
    %s175 = sadd.s32 %s174, 1
    %s176 = scalar_select %p173, %s174, %s175
    %p179 = pneg %p173
    %p180 = scmp.eq.s32.totalorder %s18, 1
    %p181 = por %p179, %p180
    %p182 = scmp.ne.s32.totalorder %s174, %s177
    %p183 = scmp.eq.s32.totalorder %s18, 0
    %p184 = por %p182, %p183
    %p185 = scmp.ne.s32.totalorder %s174, %s177
    %p186 = scmp.eq.s32.totalorder %s23, 1
    %p187 = por %p185, %p186
    %p188 = scmp.ne.s32.totalorder %s177, %s178
    %p189 = scmp.eq.s32.totalorder %s23, 0
    %p190 = por %p188, %p189
    %p191 = scmp.ne.s32.totalorder %s177, %s178
    %p192 = scmp.eq.s32.totalorder %s24, 1
    %p193 = por %p191, %p192
    %p195 = scmp.ne.s32.totalorder %s178, %s194
    %p196 = scmp.eq.s32.totalorder %s24, 0
    %p197 = por %p195, %p196
    %s198 = ssub.s32 %s18, %s25
    %p199 = scmp.eq.s32.totalorder %s198, 0
    %s201 = sadd.s32 %s200, 1
    %s202 = scalar_select %p199, %s200, %s201
    %p205 = pneg %p199
    %p206 = scmp.eq.s32.totalorder %s18, 1
    %p207 = por %p205, %p206
    %p208 = scmp.ne.s32.totalorder %s200, %s203
    %p209 = scmp.eq.s32.totalorder %s18, 0
    %p210 = por %p208, %p209
    %p211 = scmp.ne.s32.totalorder %s200, %s203
    %p212 = scmp.eq.s32.totalorder %s23, 1
    %p213 = por %p211, %p212
    %p214 = scmp.ne.s32.totalorder %s203, %s204
    %p215 = scmp.eq.s32.totalorder %s23, 0
    %p216 = por %p214, %p215
    %p217 = scmp.ne.s32.totalorder %s203, %s204
    %p218 = scmp.eq.s32.totalorder %s24, 1
    %p219 = por %p217, %p218
    %p221 = scmp.ne.s32.totalorder %s204, %s220
    %p222 = scmp.eq.s32.totalorder %s24, 0
    %p223 = por %p221, %p222
    %s224 = ssub.s32 %s18, %s25
    %p225 = scmp.eq.s32.totalorder %s224, 0
    %s227 = sadd.s32 %s226, 1
    %s228 = scalar_select %p225, %s226, %s227
    %p231 = pneg %p225
    %p232 = scmp.eq.s32.totalorder %s18, 1
    %p233 = por %p231, %p232
    %p234 = scmp.ne.s32.totalorder %s226, %s229
    %p235 = scmp.eq.s32.totalorder %s18, 0
    %p236 = por %p234, %p235
    %p237 = scmp.ne.s32.totalorder %s226, %s229
    %p238 = scmp.eq.s32.totalorder %s23, 1
    %p239 = por %p237, %p238
    %p240 = scmp.ne.s32.totalorder %s229, %s230
    %p241 = scmp.eq.s32.totalorder %s23, 0
    %p242 = por %p240, %p241
    %p243 = scmp.ne.s32.totalorder %s229, %s230
    %p244 = scmp.eq.s32.totalorder %s24, 1
    %p245 = por %p243, %p244
    %p247 = scmp.ne.s32.totalorder %s230, %s246
    %p248 = scmp.eq.s32.totalorder %s24, 0
    %p249 = por %p247, %p248
    %s250 = ssub.s32 %s18, %s25
    %p251 = scmp.eq.s32.totalorder %s250, 0
    %s253 = sadd.s32 %s252, 1
    %s254 = scalar_select %p251, %s252, %s253
    %p257 = pneg %p251
    %p258 = scmp.eq.s32.totalorder %s18, 1
    %p259 = por %p257, %p258
    %p260 = scmp.ne.s32.totalorder %s252, %s255
    %p261 = scmp.eq.s32.totalorder %s18, 0
    %p262 = por %p260, %p261
    %p263 = scmp.ne.s32.totalorder %s252, %s255
    %p264 = scmp.eq.s32.totalorder %s23, 1
    %p265 = por %p263, %p264
    %p266 = scmp.ne.s32.totalorder %s255, %s256
    %p267 = scmp.eq.s32.totalorder %s23, 0
    %p268 = por %p266, %p267
    %p269 = scmp.ne.s32.totalorder %s255, %s256
    %p270 = scmp.eq.s32.totalorder %s24, 1
    %p271 = por %p269, %p270
    %p273 = scmp.ne.s32.totalorder %s256, %s272
    %p274 = scmp.eq.s32.totalorder %s24, 0
    %p275 = por %p273, %p274
    %s276 = ssub.s32 %s18, %s25
    %p277 = scmp.eq.s32.totalorder %s276, 0
    %s279 = sadd.s32 %s278, 1
    %s280 = scalar_select %p277, %s278, %s279
    %p283 = pneg %p277
    %p284 = scmp.eq.s32.totalorder %s18, 1
    %p285 = por %p283, %p284
    %p286 = scmp.ne.s32.totalorder %s278, %s281
    %p287 = scmp.eq.s32.totalorder %s18, 0
    %p288 = por %p286, %p287
    %p289 = scmp.ne.s32.totalorder %s278, %s281
    %p290 = scmp.eq.s32.totalorder %s23, 1
    %p291 = por %p289, %p290
    %p292 = scmp.ne.s32.totalorder %s281, %s282
    %p293 = scmp.eq.s32.totalorder %s23, 0
    %p294 = por %p292, %p293
    %p295 = scmp.ne.s32.totalorder %s281, %s282
    %p296 = scmp.eq.s32.totalorder %s24, 1
    %p297 = por %p295, %p296
    %p299 = scmp.ne.s32.totalorder %s282, %s298
    %p300 = scmp.eq.s32.totalorder %s24, 0
    %p301 = por %p299, %p300
    %s302 = ssub.s32 %s18, %s25
    %p303 = scmp.eq.s32.totalorder %s302, 0
    %s305 = sadd.s32 %s304, 1
    %s306 = scalar_select %p303, %s304, %s305
    %p309 = pneg %p303
    %p310 = scmp.eq.s32.totalorder %s18, 1
    %p311 = por %p309, %p310
    %p312 = scmp.ne.s32.totalorder %s304, %s307
    %p313 = scmp.eq.s32.totalorder %s18, 0
    %p314 = por %p312, %p313
    %p315 = scmp.ne.s32.totalorder %s304, %s307
    %p316 = scmp.eq.s32.totalorder %s23, 1
    %p317 = por %p315, %p316
    %p318 = scmp.ne.s32.totalorder %s307, %s308
    %p319 = scmp.eq.s32.totalorder %s23, 0
    %p320 = por %p318, %p319
    %p321 = scmp.ne.s32.totalorder %s307, %s308
    %p322 = scmp.eq.s32.totalorder %s24, 1
    %p323 = por %p321, %p322
    %p325 = scmp.ne.s32.totalorder %s308, %s324
    %p326 = scmp.eq.s32.totalorder %s24, 0
    %p327 = por %p325, %p326
    %s329 = sadd.s32 %s328, 1
    %p332 = scmp.eq.s32.totalorder %s18, 1
    %p333 = scmp.ne.s32.totalorder %s328, %s330
    %p334 = scmp.eq.s32.totalorder %s18, 0
    %p335 = por %p333, %p334
    %p336 = scmp.ne.s32.totalorder %s328, %s330
    %p337 = scmp.eq.s32.totalorder %s23, 1
    %p338 = por %p336, %p337
    %p339 = scmp.ne.s32.totalorder %s330, %s331
    %p340 = scmp.eq.s32.totalorder %s23, 0
    %p341 = por %p339, %p340
    %p342 = scmp.ne.s32.totalorder %s330, %s331
    %p343 = scmp.eq.s32.totalorder %s24, 1
    %p344 = por %p342, %p343
    %p346 = scmp.ne.s32.totalorder %s331, %s345
    %p347 = scmp.eq.s32.totalorder %s24, 0
    %p348 = por %p346, %p347
    %p349 = scmp.le.s32.totalorder 1, %s18
    %p350 = scmp.lt.s32.totalorder %s18, 3
    %p351 = pnand %p349, %p350
    %p352 = pneg %p351
    // Predicated region
    $region9: #{transformer_forward.4} parent=5 // pred_check
      _
    $region10: #{transformer_forward.4} parent=5 // pred_check_branch
      %354 = sbr.rel (%p351) target = $region12
    $region11: #{transformer_forward.4} parent=5 // pred_region
      %s355 = ssub.s32 %s18, 1
      // Predicated region
      $region13: #{transformer_forward.4} parent=11 // pred_check
        %p356 = pneg %p39
      $region14: #{transformer_forward.4} parent=11 // pred_check_branch
        %358 = sbr.rel (%p356) target = $region16
      $region15: #{transformer_forward.4} parent=11 // pred_region
        _
      $region16: #{transformer_forward.4} parent=11 // pred_fallthru
        _
      // Predicated region
      $region17: #{transformer_forward.4} parent=11 // pred_check
        %p359 = pneg %p60
      $region18: #{transformer_forward.4} parent=11 // pred_check_branch
        %361 = sbr.rel (%p359) target = $region20
      $region19: #{transformer_forward.4} parent=11 // pred_region
        _
      $region20: #{transformer_forward.4} parent=11 // pred_fallthru
        _
    $region12: #{transformer_forward.4} parent=5 // pred_fallthru
      _
    %p362 = scmp.lt.s32.totalorder %s18, 2
    // Predicated region
    $region21: #{transformer_forward.4} parent=5 // pred_check
      %p363 = pneg %p362
    $region22: #{transformer_forward.4} parent=5 // pred_check_branch
      %365 = sbr.rel (%p363) target = $region24
    $region23: #{transformer_forward.4} parent=5 // pred_region
      // Predicated region
      $region25: #{transformer_forward.4} parent=23 // pred_check
        %p366 = pneg %p80
      $region26: #{transformer_forward.4} parent=23 // pred_check_branch
        %368 = sbr.rel (%p366) target = $region28
      $region27: #{transformer_forward.4} parent=23 // pred_region
        %p369 = scmp.lt.s32.totalorder %s18, 1
        %s370 = scalar_select %p369, %s18, 1
        %s371 = smul.addr %s370, 16
        %s372 = smul.addr %s371, 4
        %s373 = scalar_lea.vmem %s2, %s372
      $region28: #{transformer_forward.4} parent=23 // pred_fallthru
        _
      // Predicated region
      $region29: #{transformer_forward.4} parent=23 // pred_check
        %p374 = pneg %p106
      $region30: #{transformer_forward.4} parent=23 // pred_check_branch
        %376 = sbr.rel (%p374) target = $region32
      $region31: #{transformer_forward.4} parent=23 // pred_region
        %p377 = scmp.lt.s32.totalorder %s18, 1
        %s378 = scalar_select %p377, %s18, 1
        %s379 = smul.addr %s378, 4
        %s380 = scalar_lea.vmem %s3, %s379
      $region32: #{transformer_forward.4} parent=23 // pred_fallthru
        _
      // Predicated region
      $region33: #{transformer_forward.4} parent=23 // pred_check
        %p381 = pneg %p132
      $region34: #{transformer_forward.4} parent=23 // pred_check_branch
        %383 = sbr.rel (%p381) target = $region36
      $region35: #{transformer_forward.4} parent=23 // pred_region
        %p384 = scmp.lt.s32.totalorder %s18, 1
        %s385 = scalar_select %p384, %s18, 1
        %s386 = smul.addr %s385, 16
        %s387 = smul.addr %s386, 4
        %s388 = scalar_lea.vmem %s4, %s387
      $region36: #{transformer_forward.4} parent=23 // pred_fallthru
        _
      // Predicated region
      $region37: #{transformer_forward.4} parent=23 // pred_check
        %p389 = pneg %p158
      $region38: #{transformer_forward.4} parent=23 // pred_check_branch
        %391 = sbr.rel (%p389) target = $region40
      $region39: #{transformer_forward.4} parent=23 // pred_region
        %p392 = scmp.lt.s32.totalorder %s18, 1
        %s393 = scalar_select %p392, %s18, 1
        %s394 = smul.addr %s393, 4
        %s395 = scalar_lea.vmem %s5, %s394
      $region40: #{transformer_forward.4} parent=23 // pred_fallthru
        _
      // Predicated region
      $region41: #{transformer_forward.4} parent=23 // pred_check
        %p396 = pneg %p184
      $region42: #{transformer_forward.4} parent=23 // pred_check_branch
        %398 = sbr.rel (%p396) target = $region44
      $region43: #{transformer_forward.4} parent=23 // pred_region
        %p399 = scmp.lt.s32.totalorder %s18, 1
        %s400 = scalar_select %p399, %s18, 1
        %s401 = smul.addr %s400, 3
        %s402 = scalar_lea.vmem %s6, %s401
      $region44: #{transformer_forward.4} parent=23 // pred_fallthru
        _
      // Predicated region
      $region45: #{transformer_forward.4} parent=23 // pred_check
        %p403 = pneg %p210
      $region46: #{transformer_forward.4} parent=23 // pred_check_branch
        %405 = sbr.rel (%p403) target = $region48
      $region47: #{transformer_forward.4} parent=23 // pred_region
        %p406 = scmp.lt.s32.totalorder %s18, 1
        %s407 = scalar_select %p406, %s18, 1
        %s408 = smul.addr %s407, 3
        %s409 = scalar_lea.vmem %s7, %s408
      $region48: #{transformer_forward.4} parent=23 // pred_fallthru
        _
      // Predicated region
      $region49: #{transformer_forward.4} parent=23 // pred_check
        %p410 = pneg %p236
      $region50: #{transformer_forward.4} parent=23 // pred_check_branch
        %412 = sbr.rel (%p410) target = $region52
      $region51: #{transformer_forward.4} parent=23 // pred_region
        %p413 = scmp.lt.s32.totalorder %s18, 1
        %s414 = scalar_select %p413, %s18, 1
        %s415 = smul.addr %s414, 4
        %s416 = smul.addr %s415, 4
        %s417 = scalar_lea.vmem %s8, %s416
      $region52: #{transformer_forward.4} parent=23 // pred_fallthru
        _
      // Predicated region
      $region53: #{transformer_forward.4} parent=23 // pred_check
        %p418 = pneg %p262
      $region54: #{transformer_forward.4} parent=23 // pred_check_branch
        %420 = sbr.rel (%p418) target = $region56
      $region55: #{transformer_forward.4} parent=23 // pred_region
        %p421 = scmp.lt.s32.totalorder %s18, 1
        %s422 = scalar_select %p421, %s18, 1
        %s423 = scalar_lea.vmem %s9, %s422
      $region56: #{transformer_forward.4} parent=23 // pred_fallthru
        _
      // Predicated region
      $region57: #{transformer_forward.4} parent=23 // pred_check
        %p424 = pneg %p288
      $region58: #{transformer_forward.4} parent=23 // pred_check_branch
        %426 = sbr.rel (%p424) target = $region60
      $region59: #{transformer_forward.4} parent=23 // pred_region
        %p427 = scmp.lt.s32.totalorder %s18, 1
        %s428 = scalar_select %p427, %s18, 1
        %s429 = smul.addr %s428, 8
        %s430 = smul.addr %s429, 4
        %s431 = scalar_lea.vmem %s10, %s430
      $region60: #{transformer_forward.4} parent=23 // pred_fallthru
        _
      // Predicated region
      $region61: #{transformer_forward.4} parent=23 // pred_check
        %p432 = pneg %p314
      $region62: #{transformer_forward.4} parent=23 // pred_check_branch
        %434 = sbr.rel (%p432) target = $region64
      $region63: #{transformer_forward.4} parent=23 // pred_region
        %p435 = scmp.lt.s32.totalorder %s18, 1
        %s436 = scalar_select %p435, %s18, 1
        %s437 = scalar_lea.vmem %s11, %s436
      $region64: #{transformer_forward.4} parent=23 // pred_fallthru
        _
    $region24: #{transformer_forward.4} parent=5 // pred_fallthru
      _
    %p438 = scmp.le.s32.totalorder 1, %s18
    %p439 = scmp.lt.s32.totalorder %s18, 3
    %p440 = pnand %p438, %p439
    %p441 = pneg %p440
    // Predicated region
    $region65: #{transformer_forward.4} parent=5 // pred_check
      _
    $region66: #{transformer_forward.4} parent=5 // pred_check_branch
      %443 = sbr.rel (%p440) target = $region68
    $region67: #{transformer_forward.4} parent=5 // pred_region
      %s444 = ssub.s32 %s18, 1
      %p445 = pneg %p39
      %p446 = pneg %p36
      %p447 = pneg %p60
      %p448 = pneg %p57
      %p449 = scmp.lt.s32.totalorder %s23, 1
      %s450 = scalar_select %p449, %s23, 1
      %s451 = smul.addr %s450, 16
      %s452 = smul.addr %s451, 4
      %s453 = scalar_lea.vmem %s2, %s452
      %p454 = pneg %p86
      %p455 = pneg %p83
      %p456 = scmp.lt.s32.totalorder %s23, 1
      %s457 = scalar_select %p456, %s23, 1
      %s458 = smul.addr %s457, 4
      %s459 = scalar_lea.vmem %s3, %s458
      %p460 = pneg %p112
      %p461 = pneg %p109
      %p462 = scmp.lt.s32.totalorder %s23, 1
      %s463 = scalar_select %p462, %s23, 1
      %s464 = smul.addr %s463, 16
      %s465 = smul.addr %s464, 4
      %s466 = scalar_lea.vmem %s4, %s465
      %p467 = pneg %p138
      %p468 = pneg %p135
      %p469 = scmp.lt.s32.totalorder %s23, 1
      %s470 = scalar_select %p469, %s23, 1
      %s471 = smul.addr %s470, 4
      %s472 = scalar_lea.vmem %s5, %s471
      %p473 = pneg %p164
      %p474 = pneg %p161
      %p475 = scmp.lt.s32.totalorder %s23, 1
      %s476 = scalar_select %p475, %s23, 1
      %s477 = smul.addr %s476, 3
      %s478 = scalar_lea.vmem %s6, %s477
      %p479 = pneg %p190
      %p480 = pneg %p187
      %p481 = scmp.lt.s32.totalorder %s23, 1
      %s482 = scalar_select %p481, %s23, 1
      %s483 = smul.addr %s482, 3
      %s484 = scalar_lea.vmem %s7, %s483
      %p485 = pneg %p216
      %p486 = pneg %p213
      %p487 = scmp.lt.s32.totalorder %s23, 1
      %s488 = scalar_select %p487, %s23, 1
      %s489 = smul.addr %s488, 4
      %s490 = smul.addr %s489, 4
      %s491 = scalar_lea.vmem %s8, %s490
      %p492 = pneg %p242
      %p493 = pneg %p239
      %p494 = scmp.lt.s32.totalorder %s23, 1
      %s495 = scalar_select %p494, %s23, 1
      %s496 = scalar_lea.vmem %s9, %s495
      %p497 = pneg %p268
      %p498 = pneg %p265
      %p499 = scmp.lt.s32.totalorder %s23, 1
      %s500 = scalar_select %p499, %s23, 1
      %s501 = smul.addr %s500, 8
      %s502 = smul.addr %s501, 4
      %s503 = scalar_lea.vmem %s10, %s502
      %p504 = pneg %p294
      %p505 = pneg %p291
      %p506 = scmp.lt.s32.totalorder %s23, 1
      %s507 = scalar_select %p506, %s23, 1
      %s508 = scalar_lea.vmem %s11, %s507
      %p509 = pneg %p320
      %p510 = pneg %p317
      %p511 = pneg %p341
      %p512 = pneg %p338
      %p513 = scmp.lt.s32.totalorder %s23, 1
      %s514 = scalar_select %p513, %s23, 1
      %s515 = smul.addr %s514, 16
      %s516 = smul.addr %s515, 4
      %s517 = scalar_lea.vmem %s2, %s516
      %p518 = scmp.lt.s32.totalorder %s23, 1
      %s519 = scalar_select %p518, %s23, 1
      %s520 = smul.addr %s519, 4
      %s521 = scalar_lea.vmem %s3, %s520
      %p522 = scmp.lt.s32.totalorder %s23, 1
      %s523 = scalar_select %p522, %s23, 1
      %s524 = smul.addr %s523, 16
      %s525 = smul.addr %s524, 4
      %s526 = scalar_lea.vmem %s4, %s525
      %p527 = scmp.lt.s32.totalorder %s23, 1
      %s528 = scalar_select %p527, %s23, 1
      %s529 = smul.addr %s528, 4
      %s530 = scalar_lea.vmem %s5, %s529
      %p531 = scmp.lt.s32.totalorder %s23, 1
      %s532 = scalar_select %p531, %s23, 1
      %s533 = smul.addr %s532, 3
      %s534 = scalar_lea.vmem %s6, %s533
      %p535 = scmp.lt.s32.totalorder %s23, 1
      %s536 = scalar_select %p535, %s23, 1
      %s537 = smul.addr %s536, 3
      %s538 = scalar_lea.vmem %s7, %s537
      %p539 = scmp.lt.s32.totalorder %s23, 1
      %s540 = scalar_select %p539, %s23, 1
      %s541 = smul.addr %s540, 4
      %s542 = smul.addr %s541, 4
      %s543 = scalar_lea.vmem %s8, %s542
      %p544 = scmp.lt.s32.totalorder %s23, 1
      %s545 = scalar_select %p544, %s23, 1
      %s546 = scalar_lea.vmem %s9, %s545
      %p547 = scmp.lt.s32.totalorder %s23, 1
      %s548 = scalar_select %p547, %s23, 1
      %s549 = smul.addr %s548, 8
      %s550 = smul.addr %s549, 4
      %s551 = scalar_lea.vmem %s10, %s550
      %p552 = scmp.lt.s32.totalorder %s23, 1
      %s553 = scalar_select %p552, %s23, 1
      %s554 = scalar_lea.vmem %s11, %s553
      %p556 = scmp.eq.s32.totalorder %s23, 0
      // Predicated region
      $region69: #{transformer_forward.4} parent=67 // pred_check
        %p557 = pneg %p556
      $region70: #{transformer_forward.4} parent=67 // pred_check_branch
        %559 = sbr.rel (%p557) target = $region72
      $region71: #{transformer_forward.4} parent=67 // pred_region
        %v560 = vld [vmem:[%s0] sm:$0xff]
        %v561 = vld [vmem:[%s0 + $0x8] sm:$0xff]
        %vm562 = vcmask 261120
        %563 = vst.msk [vmem:[#allocation2] sm:$0xff] %vm562, %v560
        %564 = vst.msk [vmem:[#allocation2 + $0x8] sm:$0xff] %vm562, %v561
      $region72: #{transformer_forward.4} parent=67 // pred_fallthru
        _
      %v565 = vld [vmem:[#allocation2] sm:$0xff]
      %v566 = vld [vmem:[#allocation2 + $0x8] sm:$0xff]
      %v567 = vld [vmem:[%s1] sm:$0xff]
      %v568 = vld [vmem:[%s1 + $0x8] sm:$0xff]
      %v569 = vld [vmem:[%s534] sm:$0x1]
      %v570 = vld [vmem:[%s534 + $0x1] sm:$0x1]
      %v571 = vld [vmem:[%s534 + $0x2] sm:$0x1]
      %v572 = vld [vmem:[%s538] sm:$0x1]
      %v573 = vld [vmem:[%s538 + $0x1] sm:$0x1]
      %v574 = vld [vmem:[%s538 + $0x2] sm:$0x1]
      %v575 = vld [vmem:[%s517] sm:$0xf]
      %v576 = vld [vmem:[%s517 + $0x4] sm:$0xf]
      %v577 = vld [vmem:[%s517 + $0x8] sm:$0xf]
      %v578 = vld [vmem:[%s517 + $0xc] sm:$0xf]
      %v579 = vld [vmem:[%s517 + $0x10] sm:$0xf]
      %v580 = vld [vmem:[%s517 + $0x14] sm:$0xf]
      %v581 = vld [vmem:[%s517 + $0x18] sm:$0xf]
      %v582 = vld [vmem:[%s517 + $0x1c] sm:$0xf]
      %v583 = vld [vmem:[%s517 + $0x20] sm:$0xf]
      %v584 = vld [vmem:[%s517 + $0x24] sm:$0xf]
      %v585 = vld [vmem:[%s517 + $0x28] sm:$0xf]
      %v586 = vld [vmem:[%s517 + $0x2c] sm:$0xf]
      %v587 = vld [vmem:[%s517 + $0x30] sm:$0xf]
      %v588 = vld [vmem:[%s517 + $0x34] sm:$0xf]
      %v589 = vld [vmem:[%s517 + $0x38] sm:$0xf]
      %v590 = vld [vmem:[%s517 + $0x3c] sm:$0xf]
      %v591 = vld [vmem:[%s521] sm:$0x1]
      %v592 = vld [vmem:[%s521 + $0x1] sm:$0x1]
      %v593 = vld [vmem:[%s521 + $0x2] sm:$0x1]
      %v594 = vld [vmem:[%s521 + $0x3] sm:$0x1]
      %v595 = vpack.c.bf16 %v566, %v565
      %v597 = vlaneseq
      %v598 = vshrl.u32 %v597, 7
      %v599 = vsub.s32 0, %v598
      %v600 = vrot.slane %v591, %v599
      %v606 = vunpack.c.l.b16 %v575
      %v607 = vunpack.c.l.b16 %v576
      %v608 = vunpack.c.l.b16 %v577
      %v609 = vunpack.c.l.b16 %v578
      %v610 = vpack.c.b16 %v607, %v606
      %v611 = vpack.c.b16 %v609, %v608
      %vm614 = vcmask 261120
      %v616 = vsel %vm614, %v595, 0
      %618 = vmatprep.subr.bf16.mxu0 0
      %619 = vmatpush1.bf16.msra.mxu0 %v610
      %620 = vmatprep.subr.bf16.mxu0 0
      %621 = vmatpush1.bf16.msra.mxu0 %v611
      %622 = vmatprep.subr.bf16.mxu0 0
      %623 = vmatpush1.bf16.msra.mxu0 0
      %624 = vmatprep.subr.bf16.mxu0 0
      %625 = vmatpush1.bf16.msra.mxu0 0
      %626 = vmatprep.subr.bf16.mxu0 0
      %627 = vmatpush1.bf16.msra.mxu0 0
      %628 = vmatprep.subr.bf16.mxu0 0
      %629 = vmatpush1.bf16.msra.mxu0 0
      %630 = vmatprep.subr.bf16.mxu0 0
      %631 = vmatpush1.bf16.msra.mxu0 0
      %632 = vmatprep.subr.bf16.mxu0 0
      %633 = vmatpush1.bf16.msra.mxu0 0
      %634 = vmatprep.subr.bf16.mxu0 0
      %635 = vmatpush1.bf16.msra.mxu0 0
      %636 = vmatprep.subr.bf16.mxu0 0
      %637 = vmatpush1.bf16.msra.mxu0 0
      %638 = vmatprep.subr.bf16.mxu0 0
      %639 = vmatpush1.bf16.msra.mxu0 0
      %640 = vmatprep.subr.bf16.mxu0 0
      %641 = vmatpush1.bf16.msra.mxu0 0
      %642 = vmatprep.subr.bf16.mxu0 0
      %643 = vmatpush1.bf16.msra.mxu0 0
      %644 = vmatprep.subr.bf16.mxu0 0
      %645 = vmatpush1.bf16.msra.mxu0 0
      %646 = vmatprep.subr.bf16.mxu0 0
      %647 = vmatpush1.bf16.msra.mxu0 0
      %648 = vmatprep.subr.bf16.mxu0 0
      %649 = vmatpush1.bf16.msra.mxu0 0
      %650 = vmatprep.mubr.bf16.mxu0 0
      %651 = vmatmul.mubr.bf16.gmra.mrb[0].mxu0 %v616
      %v652 = vpop.f32.mrb[0].mxu0
      %v653 = vadd.f32 %v600, %v652
      %v654 = vpop.f32.mrb[0].mxu0
      %v655 = vpop.f32.mrb[0].mxu0
      %v656 = vadd.f32 %v600, %v655
      %v657 = vpop.f32.mrb[0].mxu0
      %658 = vdwg.mxu0
      %v660 = vlaneseq
      %v661 = vshrl.u32 %v660, 7
      %v662 = vsub.s32 0, %v661
      %v663 = vrot.slane %v592, %v662
      %v669 = vunpack.c.l.b16 %v579
      %v670 = vunpack.c.l.b16 %v580
      %v671 = vunpack.c.l.b16 %v581
      %v672 = vunpack.c.l.b16 %v582
      %v673 = vpack.c.b16 %v670, %v669
      %v674 = vpack.c.b16 %v672, %v671
      %677 = vmatprep.subr.bf16.mxu0 0
      %678 = vmatpush1.bf16.msra.mxu0 %v673
      %679 = vmatprep.subr.bf16.mxu0 0
      %680 = vmatpush1.bf16.msra.mxu0 %v674
      %681 = vmatprep.subr.bf16.mxu0 0
      %682 = vmatpush1.bf16.msra.mxu0 0
      %683 = vmatprep.subr.bf16.mxu0 0
      %684 = vmatpush1.bf16.msra.mxu0 0
      %685 = vmatprep.subr.bf16.mxu0 0
      %686 = vmatpush1.bf16.msra.mxu0 0
      %687 = vmatprep.subr.bf16.mxu0 0
      %688 = vmatpush1.bf16.msra.mxu0 0
      %689 = vmatprep.subr.bf16.mxu0 0
      %690 = vmatpush1.bf16.msra.mxu0 0
      %691 = vmatprep.subr.bf16.mxu0 0
      %692 = vmatpush1.bf16.msra.mxu0 0
      %693 = vmatprep.subr.bf16.mxu0 0
      %694 = vmatpush1.bf16.msra.mxu0 0
      %695 = vmatprep.subr.bf16.mxu0 0
      %696 = vmatpush1.bf16.msra.mxu0 0
      %697 = vmatprep.subr.bf16.mxu0 0
      %698 = vmatpush1.bf16.msra.mxu0 0
      %699 = vmatprep.subr.bf16.mxu0 0
      %700 = vmatpush1.bf16.msra.mxu0 0
      %701 = vmatprep.subr.bf16.mxu0 0
      %702 = vmatpush1.bf16.msra.mxu0 0
      %703 = vmatprep.subr.bf16.mxu0 0
      %704 = vmatpush1.bf16.msra.mxu0 0
      %705 = vmatprep.subr.bf16.mxu0 0
      %706 = vmatpush1.bf16.msra.mxu0 0
      %707 = vmatprep.subr.bf16.mxu0 0
      %708 = vmatpush1.bf16.msra.mxu0 0
      %709 = vmatprep.mubr.bf16.mxu0 0
      %710 = vmatmul.mubr.bf16.gmra.mrb[0].mxu0 %v616
      %v711 = vpop.f32.mrb[0].mxu0
      %v712 = vadd.f32 %v663, %v711
      %v713 = vpop.f32.mrb[0].mxu0
      %v714 = vpop.f32.mrb[0].mxu0
      %v715 = vadd.f32 %v663, %v714
      %v716 = vpop.f32.mrb[0].mxu0
      %717 = vdwg.mxu0
      %v719 = vlaneseq
      %v720 = vshrl.u32 %v719, 7
      %v721 = vsub.s32 0, %v720
      %v722 = vrot.slane %v593, %v721
      %v728 = vunpack.c.l.b16 %v583
      %v729 = vunpack.c.l.b16 %v584
      %v730 = vunpack.c.l.b16 %v585
      %v731 = vunpack.c.l.b16 %v586
      %v732 = vpack.c.b16 %v729, %v728
      %v733 = vpack.c.b16 %v731, %v730
      %736 = vmatprep.subr.bf16.mxu0 0
      %737 = vmatpush1.bf16.msra.mxu0 %v732
      %738 = vmatprep.subr.bf16.mxu0 0
      %739 = vmatpush1.bf16.msra.mxu0 %v733
      %740 = vmatprep.subr.bf16.mxu0 0
      %741 = vmatpush1.bf16.msra.mxu0 0
      %742 = vmatprep.subr.bf16.mxu0 0
      %743 = vmatpush1.bf16.msra.mxu0 0
      %744 = vmatprep.subr.bf16.mxu0 0
      %745 = vmatpush1.bf16.msra.mxu0 0
      %746 = vmatprep.subr.bf16.mxu0 0
      %747 = vmatpush1.bf16.msra.mxu0 0
      %748 = vmatprep.subr.bf16.mxu0 0
      %749 = vmatpush1.bf16.msra.mxu0 0
      %750 = vmatprep.subr.bf16.mxu0 0
      %751 = vmatpush1.bf16.msra.mxu0 0
      %752 = vmatprep.subr.bf16.mxu0 0
      %753 = vmatpush1.bf16.msra.mxu0 0
      %754 = vmatprep.subr.bf16.mxu0 0
      %755 = vmatpush1.bf16.msra.mxu0 0
      %756 = vmatprep.subr.bf16.mxu0 0
      %757 = vmatpush1.bf16.msra.mxu0 0
      %758 = vmatprep.subr.bf16.mxu0 0
      %759 = vmatpush1.bf16.msra.mxu0 0
      %760 = vmatprep.subr.bf16.mxu0 0
      %761 = vmatpush1.bf16.msra.mxu0 0
      %762 = vmatprep.subr.bf16.mxu0 0
      %763 = vmatpush1.bf16.msra.mxu0 0
      %764 = vmatprep.subr.bf16.mxu0 0
      %765 = vmatpush1.bf16.msra.mxu0 0
      %766 = vmatprep.subr.bf16.mxu0 0
      %767 = vmatpush1.bf16.msra.mxu0 0
      %768 = vmatprep.mubr.bf16.mxu0 0
      %769 = vmatmul.mubr.bf16.gmra.mrb[0].mxu0 %v616
      %v770 = vpop.f32.mrb[0].mxu0
      %v771 = vadd.f32 %v722, %v770
      %v772 = vpop.f32.mrb[0].mxu0
      %v773 = vpop.f32.mrb[0].mxu0
      %v774 = vadd.f32 %v722, %v773
      %v775 = vpop.f32.mrb[0].mxu0
      %776 = vdwg.mxu0
      %v777 = vlaneseq
      %v778 = vshrl.u32 %v777, 7
      %v779 = vlaneseq
      %v780 = vand.u32 %v779, 127
      %vm781 = vcmp.ge.s32.totalorder %v778, %v780
      %v782 = vpack.c.bf16 %v653, %v653
      %v783 = vpack.c.bf16 %v656, %v656
      %v784 = vpack.c.bf16 %v712, %v712
      %v785 = vpack.c.bf16 %v715, %v715
      %v786 = vpack.c.bf16 %v771, %v771
      %v787 = vpack.c.bf16 %v774, %v774
      %vm788 = vcmask 64512
      %v790 = vsel %vm788, %v782, 0
      %v793 = vsel %vm788, %v784, 0
      %795 = vmatprep.subr.bf16.mxu0 0
      %796 = vmatpush1.bf16.xpose.msra.mxu0 %v793
      %797 = vmatprep.subr.bf16.mxu0 0
      %798 = vmatpush1.bf16.xpose.msra.mxu0 0
      %799 = vmatprep.subr.bf16.mxu0 0
      %800 = vmatpush1.bf16.xpose.msra.mxu0 0
      %801 = vmatprep.subr.bf16.mxu0 0
      %802 = vmatpush1.bf16.xpose.msra.mxu0 0
      %803 = vmatprep.subr.bf16.mxu0 0
      %804 = vmatpush1.bf16.xpose.msra.mxu0 0
      %805 = vmatprep.subr.bf16.mxu0 0
      %806 = vmatpush1.bf16.xpose.msra.mxu0 0
      %807 = vmatprep.subr.bf16.mxu0 0
      %808 = vmatpush1.bf16.xpose.msra.mxu0 0
      %809 = vmatprep.subr.bf16.mxu0 0
      %810 = vmatpush1.bf16.xpose.msra.mxu0 0
      %811 = vmatprep.subr.bf16.mxu0 0
      %812 = vmatpush1.bf16.xpose.msra.mxu0 0
      %813 = vmatprep.subr.bf16.mxu0 0
      %814 = vmatpush1.bf16.xpose.msra.mxu0 0
      %815 = vmatprep.subr.bf16.mxu0 0
      %816 = vmatpush1.bf16.xpose.msra.mxu0 0
      %817 = vmatprep.subr.bf16.mxu0 0
      %818 = vmatpush1.bf16.xpose.msra.mxu0 0
      %819 = vmatprep.subr.bf16.mxu0 0
      %820 = vmatpush1.bf16.xpose.msra.mxu0 0
      %821 = vmatprep.subr.bf16.mxu0 0
      %822 = vmatpush1.bf16.xpose.msra.mxu0 0
      %823 = vmatprep.subr.bf16.mxu0 0
      %824 = vmatpush1.bf16.xpose.msra.mxu0 0
      %825 = vmatprep.subr.bf16.mxu0 0
      %826 = vmatpush1.bf16.xpose.msra.mxu0 0
      %827 = vmatprep.mubr.bf16.mxu0 0
      %828 = vmatmul.mubr.bf16.gmra.mrb[0].mxu0 %v790
      %v829 = vpop.f32.mrb[0].mxu0
      %v830 = vadd.f32 0.0, %v829
      %v831 = vpop.f32.mrb[0].mxu0
      %v832 = vpop.f32.mrb[0].mxu0
      %v833 = vpop.f32.mrb[0].mxu0
      %834 = vdwg.mxu0
      %v836 = vsel %vm788, %v783, 0
      %v839 = vsel %vm788, %v785, 0
      %841 = vmatprep.subr.bf16.mxu0 0
      %842 = vmatpush1.bf16.xpose.msra.mxu0 %v839
      %843 = vmatprep.subr.bf16.mxu0 0
      %844 = vmatpush1.bf16.xpose.msra.mxu0 0
      %845 = vmatprep.subr.bf16.mxu0 0
      %846 = vmatpush1.bf16.xpose.msra.mxu0 0
      %847 = vmatprep.subr.bf16.mxu0 0
      %848 = vmatpush1.bf16.xpose.msra.mxu0 0
      %849 = vmatprep.subr.bf16.mxu0 0
      %850 = vmatpush1.bf16.xpose.msra.mxu0 0
      %851 = vmatprep.subr.bf16.mxu0 0
      %852 = vmatpush1.bf16.xpose.msra.mxu0 0
      %853 = vmatprep.subr.bf16.mxu0 0
      %854 = vmatpush1.bf16.xpose.msra.mxu0 0
      %855 = vmatprep.subr.bf16.mxu0 0
      %856 = vmatpush1.bf16.xpose.msra.mxu0 0
      %857 = vmatprep.subr.bf16.mxu0 0
      %858 = vmatpush1.bf16.xpose.msra.mxu0 0
      %859 = vmatprep.subr.bf16.mxu0 0
      %860 = vmatpush1.bf16.xpose.msra.mxu0 0
      %861 = vmatprep.subr.bf16.mxu0 0
      %862 = vmatpush1.bf16.xpose.msra.mxu0 0
      %863 = vmatprep.subr.bf16.mxu0 0
      %864 = vmatpush1.bf16.xpose.msra.mxu0 0
      %865 = vmatprep.subr.bf16.mxu0 0
      %866 = vmatpush1.bf16.xpose.msra.mxu0 0
      %867 = vmatprep.subr.bf16.mxu0 0
      %868 = vmatpush1.bf16.xpose.msra.mxu0 0
      %869 = vmatprep.subr.bf16.mxu0 0
      %870 = vmatpush1.bf16.xpose.msra.mxu0 0
      %871 = vmatprep.subr.bf16.mxu0 0
      %872 = vmatpush1.bf16.xpose.msra.mxu0 0
      %873 = vmatprep.mubr.bf16.mxu0 0
      %874 = vmatmul.mubr.bf16.gmra.mrb[0].mxu0 %v836
      %v875 = vpop.f32.mrb[0].mxu0
      %v876 = vadd.f32 0.0, %v875
      %v877 = vpop.f32.mrb[0].mxu0
      %v878 = vpop.f32.mrb[0].mxu0
      %v879 = vpop.f32.mrb[0].mxu0
      %880 = vdwg.mxu0
      %v881 = vmul.f32 %v830, 0.35355338
      %v882 = vmul.f32 %v876, 0.35355338
      %v883 = vsel %vm781, 1, 0
      %vm884 = vcmp.eq.s32.totalorder %v883, 1
      %v885 = vsel %vm884, %v881, -1e+09
      %v886 = vsel %vm884, %v882, -1e+09
      %v887 = vsel %vm788, %v885, -inf
      %888 = vmax.xlane.f32.xlu0 %v887
      %v889 = vpop.xlane.xlu0 %888
      %v890 = vsel %vm788, %v886, -inf
      %891 = vmax.xlane.f32.xlu0 %v890
      %v892 = vpop.xlane.xlu0 %891
      %v893 = vsub.f32 %v885, %v889
      %v894 = vsub.f32 %v886, %v892
      %v895 = vmul.f32 %v893, 1.442695
      %v896 = vpow.pop %v895
      %v897 = vmul.f32 %v894, 1.442695
      %v898 = vpow.pop %v897
      %v899 = vsel %vm788, %v896, 0.0
      %900 = vadd.xlane.f32.xlu0 %v899
      %v901 = vpop.xlane.xlu0 %900
      %v902 = vsel %vm788, %v898, 0.0
      %903 = vadd.xlane.f32.xlu0 %v902
      %v904 = vpop.xlane.xlu0 %903
      %v905 = vrcp.pop %v901
      %v906 = vrcp.pop %v904
      %v907 = vmul.f32 %v896, %v905
      %v908 = vmul.f32 %v898, %v906
      %v909 = vpack.c.bf16 %v907, %v907
      %v910 = vpack.c.bf16 %v908, %v908
      %v912 = vsel %vm788, %v909, 0
      %vm914 = vcmask 1043456
      %v916 = vsel %vm914, %v786, 0
      %918 = vmatprep.subr.bf16.mxu0 0
      %919 = vmatpush1.bf16.msra.mxu0 %v916
      %920 = vmatprep.subr.bf16.mxu0 0
      %921 = vmatpush1.bf16.msra.mxu0 0
      %922 = vmatprep.subr.bf16.mxu0 0
      %923 = vmatpush1.bf16.msra.mxu0 0
      %924 = vmatprep.subr.bf16.mxu0 0
      %925 = vmatpush1.bf16.msra.mxu0 0
      %926 = vmatprep.subr.bf16.mxu0 0
      %927 = vmatpush1.bf16.msra.mxu0 0
      %928 = vmatprep.subr.bf16.mxu0 0
      %929 = vmatpush1.bf16.msra.mxu0 0
      %930 = vmatprep.subr.bf16.mxu0 0
      %931 = vmatpush1.bf16.msra.mxu0 0
      %932 = vmatprep.subr.bf16.mxu0 0
      %933 = vmatpush1.bf16.msra.mxu0 0
      %934 = vmatprep.subr.bf16.mxu0 0
      %935 = vmatpush1.bf16.msra.mxu0 0
      %936 = vmatprep.subr.bf16.mxu0 0
      %937 = vmatpush1.bf16.msra.mxu0 0
      %938 = vmatprep.subr.bf16.mxu0 0
      %939 = vmatpush1.bf16.msra.mxu0 0
      %940 = vmatprep.subr.bf16.mxu0 0
      %941 = vmatpush1.bf16.msra.mxu0 0
      %942 = vmatprep.subr.bf16.mxu0 0
      %943 = vmatpush1.bf16.msra.mxu0 0
      %944 = vmatprep.subr.bf16.mxu0 0
      %945 = vmatpush1.bf16.msra.mxu0 0
      %946 = vmatprep.subr.bf16.mxu0 0
      %947 = vmatpush1.bf16.msra.mxu0 0
      %948 = vmatprep.subr.bf16.mxu0 0
      %949 = vmatpush1.bf16.msra.mxu0 0
      %950 = vmatprep.mubr.bf16.mxu0 0
      %951 = vmatmul.mubr.bf16.gmra.mrb[0].mxu0 %v912
      %v952 = vpop.f32.mrb[0].mxu0
      %v953 = vadd.f32 0.0, %v952
      %v954 = vpop.f32.mrb[0].mxu0
      %v955 = vpop.f32.mrb[0].mxu0
      %v956 = vpop.f32.mrb[0].mxu0
      %957 = vdwg.mxu0
      %v959 = vsel %vm788, %v910, 0
      %v962 = vsel %vm914, %v787, 0
      %964 = vmatprep.subr.bf16.mxu0 0
      %965 = vmatpush1.bf16.msra.mxu0 %v962
      %966 = vmatprep.subr.bf16.mxu0 0
      %967 = vmatpush1.bf16.msra.mxu0 0
      %968 = vmatprep.subr.bf16.mxu0 0
      %969 = vmatpush1.bf16.msra.mxu0 0
      %970 = vmatprep.subr.bf16.mxu0 0
      %971 = vmatpush1.bf16.msra.mxu0 0
      %972 = vmatprep.subr.bf16.mxu0 0
      %973 = vmatpush1.bf16.msra.mxu0 0
      %974 = vmatprep.subr.bf16.mxu0 0
      %975 = vmatpush1.bf16.msra.mxu0 0
      %976 = vmatprep.subr.bf16.mxu0 0
      %977 = vmatpush1.bf16.msra.mxu0 0
      %978 = vmatprep.subr.bf16.mxu0 0
      %979 = vmatpush1.bf16.msra.mxu0 0
      %980 = vmatprep.subr.bf16.mxu0 0
      %981 = vmatpush1.bf16.msra.mxu0 0
      %982 = vmatprep.subr.bf16.mxu0 0
      %983 = vmatpush1.bf16.msra.mxu0 0
      %984 = vmatprep.subr.bf16.mxu0 0
      %985 = vmatpush1.bf16.msra.mxu0 0
      %986 = vmatprep.subr.bf16.mxu0 0
      %987 = vmatpush1.bf16.msra.mxu0 0
      %988 = vmatprep.subr.bf16.mxu0 0
      %989 = vmatpush1.bf16.msra.mxu0 0
      %990 = vmatprep.subr.bf16.mxu0 0
      %991 = vmatpush1.bf16.msra.mxu0 0
      %992 = vmatprep.subr.bf16.mxu0 0
      %993 = vmatpush1.bf16.msra.mxu0 0
      %994 = vmatprep.subr.bf16.mxu0 0
      %995 = vmatpush1.bf16.msra.mxu0 0
      %996 = vmatprep.mubr.bf16.mxu0 0
      %997 = vmatmul.mubr.bf16.gmra.mrb[0].mxu0 %v959
      %v998 = vpop.f32.mrb[0].mxu0
      %v999 = vadd.f32 0.0, %v998
      %v1000 = vpop.f32.mrb[0].mxu0
      %v1001 = vpop.f32.mrb[0].mxu0
      %v1002 = vpop.f32.mrb[0].mxu0
      %1003 = vdwg.mxu0
      %1005 = vrot.lane.b32.xlu0 %v782, 120
      %v1006 = vpop.permute.xlu0 %1005
      %1008 = vrot.lane.b32.xlu0 %v784, 120
      %v1009 = vpop.permute.xlu0 %1008
      %v1011 = vsel %vm788, %v1006, 0
      %v1014 = vsel %vm788, %v1009, 0
      %1016 = vmatprep.subr.bf16.mxu0 0
      %1017 = vmatpush1.bf16.xpose.msra.mxu0 %v1014
      %1018 = vmatprep.subr.bf16.mxu0 0
      %1019 = vmatpush1.bf16.xpose.msra.mxu0 0
      %1020 = vmatprep.subr.bf16.mxu0 0
      %1021 = vmatpush1.bf16.xpose.msra.mxu0 0
      %1022 = vmatprep.subr.bf16.mxu0 0
      %1023 = vmatpush1.bf16.xpose.msra.mxu0 0
      %1024 = vmatprep.subr.bf16.mxu0 0
      %1025 = vmatpush1.bf16.xpose.msra.mxu0 0
      %1026 = vmatprep.subr.bf16.mxu0 0
      %1027 = vmatpush1.bf16.xpose.msra.mxu0 0
      %1028 = vmatprep.subr.bf16.mxu0 0
      %1029 = vmatpush1.bf16.xpose.msra.mxu0 0
      %1030 = vmatprep.subr.bf16.mxu0 0
      %1031 = vmatpush1.bf16.xpose.msra.mxu0 0
      %1032 = vmatprep.subr.bf16.mxu0 0
      %1033 = vmatpush1.bf16.xpose.msra.mxu0 0
      %1034 = vmatprep.subr.bf16.mxu0 0
      %1035 = vmatpush1.bf16.xpose.msra.mxu0 0
      %1036 = vmatprep.subr.bf16.mxu0 0
      %1037 = vmatpush1.bf16.xpose.msra.mxu0 0
      %1038 = vmatprep.subr.bf16.mxu0 0
      %1039 = vmatpush1.bf16.xpose.msra.mxu0 0
      %1040 = vmatprep.subr.bf16.mxu0 0
      %1041 = vmatpush1.bf16.xpose.msra.mxu0 0
      %1042 = vmatprep.subr.bf16.mxu0 0
      %1043 = vmatpush1.bf16.xpose.msra.mxu0 0
      %1044 = vmatprep.subr.bf16.mxu0 0
      %1045 = vmatpush1.bf16.xpose.msra.mxu0 0
      %1046 = vmatprep.subr.bf16.mxu0 0
      %1047 = vmatpush1.bf16.xpose.msra.mxu0 0
      %1048 = vmatprep.mubr.bf16.mxu0 0
      %1049 = vmatmul.mubr.bf16.gmra.mrb[0].mxu0 %v1011
      %v1050 = vpop.f32.mrb[0].mxu0
      %v1051 = vadd.f32 0.0, %v1050
      %v1052 = vpop.f32.mrb[0].mxu0
      %v1053 = vpop.f32.mrb[0].mxu0
      %v1054 = vpop.f32.mrb[0].mxu0
      %1055 = vdwg.mxu0
      %1057 = vrot.lane.b32.xlu0 %v783, 120
      %v1058 = vpop.permute.xlu0 %1057
      %1060 = vrot.lane.b32.xlu0 %v785, 120
      %v1061 = vpop.permute.xlu0 %1060
      %v1063 = vsel %vm788, %v1058, 0
      %v1066 = vsel %vm788, %v1061, 0
      %1068 = vmatprep.subr.bf16.mxu0 0
      %1069 = vmatpush1.bf16.xpose.msra.mxu0 %v1066
      %1070 = vmatprep.subr.bf16.mxu0 0
      %1071 = vmatpush1.bf16.xpose.msra.mxu0 0
      %1072 = vmatprep.subr.bf16.mxu0 0
      %1073 = vmatpush1.bf16.xpose.msra.mxu0 0
      %1074 = vmatprep.subr.bf16.mxu0 0
      %1075 = vmatpush1.bf16.xpose.msra.mxu0 0
      %1076 = vmatprep.subr.bf16.mxu0 0
      %1077 = vmatpush1.bf16.xpose.msra.mxu0 0
      %1078 = vmatprep.subr.bf16.mxu0 0
      %1079 = vmatpush1.bf16.xpose.msra.mxu0 0
      %1080 = vmatprep.subr.bf16.mxu0 0
      %1081 = vmatpush1.bf16.xpose.msra.mxu0 0
      %1082 = vmatprep.subr.bf16.mxu0 0
      %1083 = vmatpush1.bf16.xpose.msra.mxu0 0
      %1084 = vmatprep.subr.bf16.mxu0 0
      %1085 = vmatpush1.bf16.xpose.msra.mxu0 0
      %1086 = vmatprep.subr.bf16.mxu0 0
      %1087 = vmatpush1.bf16.xpose.msra.mxu0 0
      %1088 = vmatprep.subr.bf16.mxu0 0
      %1089 = vmatpush1.bf16.xpose.msra.mxu0 0
      %1090 = vmatprep.subr.bf16.mxu0 0
      %1091 = vmatpush1.bf16.xpose.msra.mxu0 0
      %1092 = vmatprep.subr.bf16.mxu0 0
      %1093 = vmatpush1.bf16.xpose.msra.mxu0 0
      %1094 = vmatprep.subr.bf16.mxu0 0
      %1095 = vmatpush1.bf16.xpose.msra.mxu0 0
      %1096 = vmatprep.subr.bf16.mxu0 0
      %1097 = vmatpush1.bf16.xpose.msra.mxu0 0
      %1098 = vmatprep.subr.bf16.mxu0 0
      %1099 = vmatpush1.bf16.xpose.msra.mxu0 0
      %1100 = vmatprep.mubr.bf16.mxu0 0
      %1101 = vmatmul.mubr.bf16.gmra.mrb[0].mxu0 %v1063
      %v1102 = vpop.f32.mrb[0].mxu0
      %v1103 = vadd.f32 0.0, %v1102
      %v1104 = vpop.f32.mrb[0].mxu0
      %v1105 = vpop.f32.mrb[0].mxu0
      %v1106 = vpop.f32.mrb[0].mxu0
      %1107 = vdwg.mxu0
      %v1108 = vmul.f32 %v1051, 0.35355338
      %v1109 = vmul.f32 %v1103, 0.35355338
      %v1110 = vsel %vm884, %v1108, -1e+09
      %v1111 = vsel %vm884, %v1109, -1e+09
      %v1112 = vsel %vm788, %v1110, -inf
      %1113 = vmax.xlane.f32.xlu0 %v1112
      %v1114 = vpop.xlane.xlu0 %1113
      %v1115 = vsel %vm788, %v1111, -inf
      %1116 = vmax.xlane.f32.xlu0 %v1115
      %v1117 = vpop.xlane.xlu0 %1116
      %v1118 = vsub.f32 %v1110, %v1114
      %v1119 = vsub.f32 %v1111, %v1117
      %v1120 = vmul.f32 %v1118, 1.442695
      %v1121 = vpow.pop %v1120
      %v1122 = vmul.f32 %v1119, 1.442695
      %v1123 = vpow.pop %v1122
      %v1124 = vsel %vm788, %v1121, 0.0
      %1125 = vadd.xlane.f32.xlu0 %v1124
      %v1126 = vpop.xlane.xlu0 %1125
      %v1127 = vsel %vm788, %v1123, 0.0
      %1128 = vadd.xlane.f32.xlu0 %v1127
      %v1129 = vpop.xlane.xlu0 %1128
      %v1130 = vrcp.pop %v1126
      %v1131 = vrcp.pop %v1129
      %v1132 = vmul.f32 %v1121, %v1130
      %v1133 = vmul.f32 %v1123, %v1131
      %v1134 = vpack.c.bf16 %v1132, %v1132
      %v1135 = vpack.c.bf16 %v1133, %v1133
      %1137 = vrot.lane.b32.xlu0 %v786, 120
      %v1138 = vpop.permute.xlu0 %1137
      %v1140 = vsel %vm788, %v1134, 0
      %v1143 = vsel %vm914, %v1138, 0
      %1145 = vmatprep.subr.bf16.mxu0 0
      %1146 = vmatpush1.bf16.msra.mxu0 %v1143
      %1147 = vmatprep.subr.bf16.mxu0 0
      %1148 = vmatpush1.bf16.msra.mxu0 0
      %1149 = vmatprep.subr.bf16.mxu0 0
      %1150 = vmatpush1.bf16.msra.mxu0 0
      %1151 = vmatprep.subr.bf16.mxu0 0
      %1152 = vmatpush1.bf16.msra.mxu0 0
      %1153 = vmatprep.subr.bf16.mxu0 0
      %1154 = vmatpush1.bf16.msra.mxu0 0
      %1155 = vmatprep.subr.bf16.mxu0 0
      %1156 = vmatpush1.bf16.msra.mxu0 0
      %1157 = vmatprep.subr.bf16.mxu0 0
      %1158 = vmatpush1.bf16.msra.mxu0 0
      %1159 = vmatprep.subr.bf16.mxu0 0
      %1160 = vmatpush1.bf16.msra.mxu0 0
      %1161 = vmatprep.subr.bf16.mxu0 0
      %1162 = vmatpush1.bf16.msra.mxu0 0
      %1163 = vmatprep.subr.bf16.mxu0 0
      %1164 = vmatpush1.bf16.msra.mxu0 0
      %1165 = vmatprep.subr.bf16.mxu0 0
      %1166 = vmatpush1.bf16.msra.mxu0 0
      %1167 = vmatprep.subr.bf16.mxu0 0
      %1168 = vmatpush1.bf16.msra.mxu0 0
      %1169 = vmatprep.subr.bf16.mxu0 0
      %1170 = vmatpush1.bf16.msra.mxu0 0
      %1171 = vmatprep.subr.bf16.mxu0 0
      %1172 = vmatpush1.bf16.msra.mxu0 0
      %1173 = vmatprep.subr.bf16.mxu0 0
      %1174 = vmatpush1.bf16.msra.mxu0 0
      %1175 = vmatprep.subr.bf16.mxu0 0
      %1176 = vmatpush1.bf16.msra.mxu0 0
      %1177 = vmatprep.mubr.bf16.mxu0 0
      %1178 = vmatmul.mubr.bf16.gmra.mrb[0].mxu0 %v1140
      %v1179 = vpop.f32.mrb[0].mxu0
      %v1180 = vadd.f32 0.0, %v1179
      %v1181 = vpop.f32.mrb[0].mxu0
      %v1182 = vpop.f32.mrb[0].mxu0
      %v1183 = vpop.f32.mrb[0].mxu0
      %1184 = vdwg.mxu0
      %1186 = vrot.lane.b32.xlu0 %v787, 120
      %v1187 = vpop.permute.xlu0 %1186
      %v1189 = vsel %vm788, %v1135, 0
      %v1192 = vsel %vm914, %v1187, 0
      %1194 = vmatprep.subr.bf16.mxu0 0
      %1195 = vmatpush1.bf16.msra.mxu0 %v1192
      %1196 = vmatprep.subr.bf16.mxu0 0
      %1197 = vmatpush1.bf16.msra.mxu0 0
      %1198 = vmatprep.subr.bf16.mxu0 0
      %1199 = vmatpush1.bf16.msra.mxu0 0
      %1200 = vmatprep.subr.bf16.mxu0 0
      %1201 = vmatpush1.bf16.msra.mxu0 0
      %1202 = vmatprep.subr.bf16.mxu0 0
      %1203 = vmatpush1.bf16.msra.mxu0 0
      %1204 = vmatprep.subr.bf16.mxu0 0
      %1205 = vmatpush1.bf16.msra.mxu0 0
      %1206 = vmatprep.subr.bf16.mxu0 0
      %1207 = vmatpush1.bf16.msra.mxu0 0
      %1208 = vmatprep.subr.bf16.mxu0 0
      %1209 = vmatpush1.bf16.msra.mxu0 0
      %1210 = vmatprep.subr.bf16.mxu0 0
      %1211 = vmatpush1.bf16.msra.mxu0 0
      %1212 = vmatprep.subr.bf16.mxu0 0
      %1213 = vmatpush1.bf16.msra.mxu0 0
      %1214 = vmatprep.subr.bf16.mxu0 0
      %1215 = vmatpush1.bf16.msra.mxu0 0
      %1216 = vmatprep.subr.bf16.mxu0 0
      %1217 = vmatpush1.bf16.msra.mxu0 0
      %1218 = vmatprep.subr.bf16.mxu0 0
      %1219 = vmatpush1.bf16.msra.mxu0 0
      %1220 = vmatprep.subr.bf16.mxu0 0
      %1221 = vmatpush1.bf16.msra.mxu0 0
      %1222 = vmatprep.subr.bf16.mxu0 0
      %1223 = vmatpush1.bf16.msra.mxu0 0
      %1224 = vmatprep.subr.bf16.mxu0 0
      %1225 = vmatpush1.bf16.msra.mxu0 0
      %1226 = vmatprep.mubr.bf16.mxu0 0
      %1227 = vmatmul.mubr.bf16.gmra.mrb[0].mxu0 %v1189
      %v1228 = vpop.f32.mrb[0].mxu0
      %v1229 = vadd.f32 0.0, %v1228
      %v1230 = vpop.f32.mrb[0].mxu0
      %v1231 = vpop.f32.mrb[0].mxu0
      %v1232 = vpop.f32.mrb[0].mxu0
      %1233 = vdwg.mxu0
      %1234 = vrot.lane.b32.xlu0 %v782, 112
      %v1235 = vpop.permute.xlu0 %1234
      %1236 = vrot.lane.b32.xlu0 %v784, 112
      %v1237 = vpop.permute.xlu0 %1236
      %v1239 = vsel %vm788, %v1235, 0
      %v1242 = vsel %vm788, %v1237, 0
      %1244 = vmatprep.subr.bf16.mxu0 0
      %1245 = vmatpush1.bf16.xpose.msra.mxu0 %v1242
      %1246 = vmatprep.subr.bf16.mxu0 0
      %1247 = vmatpush1.bf16.xpose.msra.mxu0 0
      %1248 = vmatprep.subr.bf16.mxu0 0
      %1249 = vmatpush1.bf16.xpose.msra.mxu0 0
      %1250 = vmatprep.subr.bf16.mxu0 0
      %1251 = vmatpush1.bf16.xpose.msra.mxu0 0
      %1252 = vmatprep.subr.bf16.mxu0 0
      %1253 = vmatpush1.bf16.xpose.msra.mxu0 0
      %1254 = vmatprep.subr.bf16.mxu0 0
      %1255 = vmatpush1.bf16.xpose.msra.mxu0 0
      %1256 = vmatprep.subr.bf16.mxu0 0
      %1257 = vmatpush1.bf16.xpose.msra.mxu0 0
      %1258 = vmatprep.subr.bf16.mxu0 0
      %1259 = vmatpush1.bf16.xpose.msra.mxu0 0
      %1260 = vmatprep.subr.bf16.mxu0 0
      %1261 = vmatpush1.bf16.xpose.msra.mxu0 0
      %1262 = vmatprep.subr.bf16.mxu0 0
      %1263 = vmatpush1.bf16.xpose.msra.mxu0 0
      %1264 = vmatprep.subr.bf16.mxu0 0
      %1265 = vmatpush1.bf16.xpose.msra.mxu0 0
      %1266 = vmatprep.subr.bf16.mxu0 0
      %1267 = vmatpush1.bf16.xpose.msra.mxu0 0
      %1268 = vmatprep.subr.bf16.mxu0 0
      %1269 = vmatpush1.bf16.xpose.msra.mxu0 0
      %1270 = vmatprep.subr.bf16.mxu0 0
      %1271 = vmatpush1.bf16.xpose.msra.mxu0 0
      %1272 = vmatprep.subr.bf16.mxu0 0
      %1273 = vmatpush1.bf16.xpose.msra.mxu0 0
      %1274 = vmatprep.subr.bf16.mxu0 0
      %1275 = vmatpush1.bf16.xpose.msra.mxu0 0
      %1276 = vmatprep.mubr.bf16.mxu0 0
      %1277 = vmatmul.mubr.bf16.gmra.mrb[0].mxu0 %v1239
      %v1278 = vpop.f32.mrb[0].mxu0
      %v1279 = vadd.f32 0.0, %v1278
      %v1280 = vpop.f32.mrb[0].mxu0
      %v1281 = vpop.f32.mrb[0].mxu0
      %v1282 = vpop.f32.mrb[0].mxu0
      %1283 = vdwg.mxu0
      %1284 = vrot.lane.b32.xlu0 %v783, 112
      %v1285 = vpop.permute.xlu0 %1284
      %1286 = vrot.lane.b32.xlu0 %v785, 112
      %v1287 = vpop.permute.xlu0 %1286
      %v1289 = vsel %vm788, %v1285, 0
      %v1292 = vsel %vm788, %v1287, 0
      %1294 = vmatprep.subr.bf16.mxu0 0
      %1295 = vmatpush1.bf16.xpose.msra.mxu0 %v1292
      %1296 = vmatprep.subr.bf16.mxu0 0
      %1297 = vmatpush1.bf16.xpose.msra.mxu0 0
      %1298 = vmatprep.subr.bf16.mxu0 0
      %1299 = vmatpush1.bf16.xpose.msra.mxu0 0
      %1300 = vmatprep.subr.bf16.mxu0 0
      %1301 = vmatpush1.bf16.xpose.msra.mxu0 0
      %1302 = vmatprep.subr.bf16.mxu0 0
      %1303 = vmatpush1.bf16.xpose.msra.mxu0 0
      %1304 = vmatprep.subr.bf16.mxu0 0
      %1305 = vmatpush1.bf16.xpose.msra.mxu0 0
      %1306 = vmatprep.subr.bf16.mxu0 0
      %1307 = vmatpush1.bf16.xpose.msra.mxu0 0
      %1308 = vmatprep.subr.bf16.mxu0 0
      %1309 = vmatpush1.bf16.xpose.msra.mxu0 0
      %1310 = vmatprep.subr.bf16.mxu0 0
      %1311 = vmatpush1.bf16.xpose.msra.mxu0 0
      %1312 = vmatprep.subr.bf16.mxu0 0
      %1313 = vmatpush1.bf16.xpose.msra.mxu0 0
      %1314 = vmatprep.subr.bf16.mxu0 0
      %1315 = vmatpush1.bf16.xpose.msra.mxu0 0
      %1316 = vmatprep.subr.bf16.mxu0 0
      %1317 = vmatpush1.bf16.xpose.msra.mxu0 0
      %1318 = vmatprep.subr.bf16.mxu0 0
      %1319 = vmatpush1.bf16.xpose.msra.mxu0 0
      %1320 = vmatprep.subr.bf16.mxu0 0
      %1321 = vmatpush1.bf16.xpose.msra.mxu0 0
      %1322 = vmatprep.subr.bf16.mxu0 0
      %1323 = vmatpush1.bf16.xpose.msra.mxu0 0
      %1324 = vmatprep.subr.bf16.mxu0 0
      %1325 = vmatpush1.bf16.xpose.msra.mxu0 0
      %1326 = vmatprep.mubr.bf16.mxu0 0
      %1327 = vmatmul.mubr.bf16.gmra.mrb[0].mxu0 %v1289
      %v1328 = vpop.f32.mrb[0].mxu0
      %v1329 = vadd.f32 0.0, %v1328
      %v1330 = vpop.f32.mrb[0].mxu0
      %v1331 = vpop.f32.mrb[0].mxu0
      %v1332 = vpop.f32.mrb[0].mxu0
      %1333 = vdwg.mxu0
      %v1334 = vmul.f32 %v1279, 0.35355338
      %v1335 = vmul.f32 %v1329, 0.35355338
      %v1336 = vsel %vm884, %v1334, -1e+09
      %v1337 = vsel %vm884, %v1335, -1e+09
      %v1338 = vsel %vm788, %v1336, -inf
      %1339 = vmax.xlane.f32.xlu0 %v1338
      %v1340 = vpop.xlane.xlu0 %1339
      %v1341 = vsel %vm788, %v1337, -inf
      %1342 = vmax.xlane.f32.xlu0 %v1341
      %v1343 = vpop.xlane.xlu0 %1342
      %v1344 = vsub.f32 %v1336, %v1340
      %v1345 = vsub.f32 %v1337, %v1343
      %v1346 = vmul.f32 %v1344, 1.442695
      %v1347 = vpow.pop %v1346
      %v1348 = vmul.f32 %v1345, 1.442695
      %v1349 = vpow.pop %v1348
      %v1350 = vsel %vm788, %v1347, 0.0
      %1351 = vadd.xlane.f32.xlu0 %v1350
      %v1352 = vpop.xlane.xlu0 %1351
      %v1353 = vsel %vm788, %v1349, 0.0
      %1354 = vadd.xlane.f32.xlu0 %v1353
      %v1355 = vpop.xlane.xlu0 %1354
      %v1356 = vrcp.pop %v1352
      %v1357 = vrcp.pop %v1355
      %v1358 = vmul.f32 %v1347, %v1356
      %v1359 = vmul.f32 %v1349, %v1357
      %v1360 = vpack.c.bf16 %v1358, %v1358
      %v1361 = vpack.c.bf16 %v1359, %v1359
      %1362 = vrot.lane.b32.xlu0 %v786, 112
      %v1363 = vpop.permute.xlu0 %1362
      %v1365 = vsel %vm788, %v1360, 0
      %v1368 = vsel %vm914, %v1363, 0
      %1370 = vmatprep.subr.bf16.mxu0 0
      %1371 = vmatpush1.bf16.msra.mxu0 %v1368
      %1372 = vmatprep.subr.bf16.mxu0 0
      %1373 = vmatpush1.bf16.msra.mxu0 0
      %1374 = vmatprep.subr.bf16.mxu0 0
      %1375 = vmatpush1.bf16.msra.mxu0 0
      %1376 = vmatprep.subr.bf16.mxu0 0
      %1377 = vmatpush1.bf16.msra.mxu0 0
      %1378 = vmatprep.subr.bf16.mxu0 0
      %1379 = vmatpush1.bf16.msra.mxu0 0
      %1380 = vmatprep.subr.bf16.mxu0 0
      %1381 = vmatpush1.bf16.msra.mxu0 0
      %1382 = vmatprep.subr.bf16.mxu0 0
      %1383 = vmatpush1.bf16.msra.mxu0 0
      %1384 = vmatprep.subr.bf16.mxu0 0
      %1385 = vmatpush1.bf16.msra.mxu0 0
      %1386 = vmatprep.subr.bf16.mxu0 0
      %1387 = vmatpush1.bf16.msra.mxu0 0
      %1388 = vmatprep.subr.bf16.mxu0 0
      %1389 = vmatpush1.bf16.msra.mxu0 0
      %1390 = vmatprep.subr.bf16.mxu0 0
      %1391 = vmatpush1.bf16.msra.mxu0 0
      %1392 = vmatprep.subr.bf16.mxu0 0
      %1393 = vmatpush1.bf16.msra.mxu0 0
      %1394 = vmatprep.subr.bf16.mxu0 0
      %1395 = vmatpush1.bf16.msra.mxu0 0
      %1396 = vmatprep.subr.bf16.mxu0 0
      %1397 = vmatpush1.bf16.msra.mxu0 0
      %1398 = vmatprep.subr.bf16.mxu0 0
      %1399 = vmatpush1.bf16.msra.mxu0 0
      %1400 = vmatprep.subr.bf16.mxu0 0
      %1401 = vmatpush1.bf16.msra.mxu0 0
      %1402 = vmatprep.mubr.bf16.mxu0 0
      %1403 = vmatmul.mubr.bf16.gmra.mrb[0].mxu0 %v1365
      %v1404 = vpop.f32.mrb[0].mxu0
      %v1405 = vadd.f32 0.0, %v1404
      %v1406 = vpop.f32.mrb[0].mxu0
      %v1407 = vpop.f32.mrb[0].mxu0
      %v1408 = vpop.f32.mrb[0].mxu0
      %1409 = vdwg.mxu0
      %1410 = vrot.lane.b32.xlu0 %v787, 112
      %v1411 = vpop.permute.xlu0 %1410
      %v1413 = vsel %vm788, %v1361, 0
      %v1416 = vsel %vm914, %v1411, 0
      %1418 = vmatprep.subr.bf16.mxu0 0
      %1419 = vmatpush1.bf16.msra.mxu0 %v1416
      %1420 = vmatprep.subr.bf16.mxu0 0
      %1421 = vmatpush1.bf16.msra.mxu0 0
      %1422 = vmatprep.subr.bf16.mxu0 0
      %1423 = vmatpush1.bf16.msra.mxu0 0
      %1424 = vmatprep.subr.bf16.mxu0 0
      %1425 = vmatpush1.bf16.msra.mxu0 0
      %1426 = vmatprep.subr.bf16.mxu0 0
      %1427 = vmatpush1.bf16.msra.mxu0 0
      %1428 = vmatprep.subr.bf16.mxu0 0
      %1429 = vmatpush1.bf16.msra.mxu0 0
      %1430 = vmatprep.subr.bf16.mxu0 0
      %1431 = vmatpush1.bf16.msra.mxu0 0
      %1432 = vmatprep.subr.bf16.mxu0 0
      %1433 = vmatpush1.bf16.msra.mxu0 0
      %1434 = vmatprep.subr.bf16.mxu0 0
      %1435 = vmatpush1.bf16.msra.mxu0 0
      %1436 = vmatprep.subr.bf16.mxu0 0
      %1437 = vmatpush1.bf16.msra.mxu0 0
      %1438 = vmatprep.subr.bf16.mxu0 0
      %1439 = vmatpush1.bf16.msra.mxu0 0
      %1440 = vmatprep.subr.bf16.mxu0 0
      %1441 = vmatpush1.bf16.msra.mxu0 0
      %1442 = vmatprep.subr.bf16.mxu0 0
      %1443 = vmatpush1.bf16.msra.mxu0 0
      %1444 = vmatprep.subr.bf16.mxu0 0
      %1445 = vmatpush1.bf16.msra.mxu0 0
      %1446 = vmatprep.subr.bf16.mxu0 0
      %1447 = vmatpush1.bf16.msra.mxu0 0
      %1448 = vmatprep.subr.bf16.mxu0 0
      %1449 = vmatpush1.bf16.msra.mxu0 0
      %1450 = vmatprep.mubr.bf16.mxu0 0
      %1451 = vmatmul.mubr.bf16.gmra.mrb[0].mxu0 %v1413
      %v1452 = vpop.f32.mrb[0].mxu0
      %v1453 = vadd.f32 0.0, %v1452
      %v1454 = vpop.f32.mrb[0].mxu0
      %v1455 = vpop.f32.mrb[0].mxu0
      %v1456 = vpop.f32.mrb[0].mxu0
      %1457 = vdwg.mxu0
      %1458 = vrot.lane.b32.xlu0 %v782, 104
      %v1459 = vpop.permute.xlu0 %1458
      %1460 = vrot.lane.b32.xlu0 %v784, 104
      %v1461 = vpop.permute.xlu0 %1460
      %v1463 = vsel %vm788, %v1459, 0
      %v1466 = vsel %vm788, %v1461, 0
      %1468 = vmatprep.subr.bf16.mxu0 0
      %1469 = vmatpush1.bf16.xpose.msra.mxu0 %v1466
      %1470 = vmatprep.subr.bf16.mxu0 0
      %1471 = vmatpush1.bf16.xpose.msra.mxu0 0
      %1472 = vmatprep.subr.bf16.mxu0 0
      %1473 = vmatpush1.bf16.xpose.msra.mxu0 0
      %1474 = vmatprep.subr.bf16.mxu0 0
      %1475 = vmatpush1.bf16.xpose.msra.mxu0 0
      %1476 = vmatprep.subr.bf16.mxu0 0
      %1477 = vmatpush1.bf16.xpose.msra.mxu0 0
      %1478 = vmatprep.subr.bf16.mxu0 0
      %1479 = vmatpush1.bf16.xpose.msra.mxu0 0
      %1480 = vmatprep.subr.bf16.mxu0 0
      %1481 = vmatpush1.bf16.xpose.msra.mxu0 0
      %1482 = vmatprep.subr.bf16.mxu0 0
      %1483 = vmatpush1.bf16.xpose.msra.mxu0 0
      %1484 = vmatprep.subr.bf16.mxu0 0
      %1485 = vmatpush1.bf16.xpose.msra.mxu0 0
      %1486 = vmatprep.subr.bf16.mxu0 0
      %1487 = vmatpush1.bf16.xpose.msra.mxu0 0
      %1488 = vmatprep.subr.bf16.mxu0 0
      %1489 = vmatpush1.bf16.xpose.msra.mxu0 0
      %1490 = vmatprep.subr.bf16.mxu0 0
      %1491 = vmatpush1.bf16.xpose.msra.mxu0 0
      %1492 = vmatprep.subr.bf16.mxu0 0
      %1493 = vmatpush1.bf16.xpose.msra.mxu0 0
      %1494 = vmatprep.subr.bf16.mxu0 0
      %1495 = vmatpush1.bf16.xpose.msra.mxu0 0
      %1496 = vmatprep.subr.bf16.mxu0 0
      %1497 = vmatpush1.bf16.xpose.msra.mxu0 0
      %1498 = vmatprep.subr.bf16.mxu0 0
      %1499 = vmatpush1.bf16.xpose.msra.mxu0 0
      %1500 = vmatprep.mubr.bf16.mxu0 0
      %1501 = vmatmul.mubr.bf16.gmra.mrb[0].mxu0 %v1463
      %v1502 = vpop.f32.mrb[0].mxu0
      %v1503 = vadd.f32 0.0, %v1502
      %v1504 = vpop.f32.mrb[0].mxu0
      %v1505 = vpop.f32.mrb[0].mxu0
      %v1506 = vpop.f32.mrb[0].mxu0
      %1507 = vdwg.mxu0
      %1508 = vrot.lane.b32.xlu0 %v783, 104
      %v1509 = vpop.permute.xlu0 %1508
      %1510 = vrot.lane.b32.xlu0 %v785, 104
      %v1511 = vpop.permute.xlu0 %1510
      %v1513 = vsel %vm788, %v1509, 0
      %v1516 = vsel %vm788, %v1511, 0
      %1518 = vmatprep.subr.bf16.mxu0 0
      %1519 = vmatpush1.bf16.xpose.msra.mxu0 %v1516
      %1520 = vmatprep.subr.bf16.mxu0 0
      %1521 = vmatpush1.bf16.xpose.msra.mxu0 0
      %1522 = vmatprep.subr.bf16.mxu0 0
      %1523 = vmatpush1.bf16.xpose.msra.mxu0 0
      %1524 = vmatprep.subr.bf16.mxu0 0
      %1525 = vmatpush1.bf16.xpose.msra.mxu0 0
      %1526 = vmatprep.subr.bf16.mxu0 0
      %1527 = vmatpush1.bf16.xpose.msra.mxu0 0
      %1528 = vmatprep.subr.bf16.mxu0 0
      %1529 = vmatpush1.bf16.xpose.msra.mxu0 0
      %1530 = vmatprep.subr.bf16.mxu0 0
      %1531 = vmatpush1.bf16.xpose.msra.mxu0 0
      %1532 = vmatprep.subr.bf16.mxu0 0
      %1533 = vmatpush1.bf16.xpose.msra.mxu0 0
      %1534 = vmatprep.subr.bf16.mxu0 0
      %1535 = vmatpush1.bf16.xpose.msra.mxu0 0
      %1536 = vmatprep.subr.bf16.mxu0 0
      %1537 = vmatpush1.bf16.xpose.msra.mxu0 0
      %1538 = vmatprep.subr.bf16.mxu0 0
      %1539 = vmatpush1.bf16.xpose.msra.mxu0 0
      %1540 = vmatprep.subr.bf16.mxu0 0
      %1541 = vmatpush1.bf16.xpose.msra.mxu0 0
      %1542 = vmatprep.subr.bf16.mxu0 0
      %1543 = vmatpush1.bf16.xpose.msra.mxu0 0
      %1544 = vmatprep.subr.bf16.mxu0 0
      %1545 = vmatpush1.bf16.xpose.msra.mxu0 0
      %1546 = vmatprep.subr.bf16.mxu0 0
      %1547 = vmatpush1.bf16.xpose.msra.mxu0 0
      %1548 = vmatprep.subr.bf16.mxu0 0
      %1549 = vmatpush1.bf16.xpose.msra.mxu0 0
      %1550 = vmatprep.mubr.bf16.mxu0 0
      %1551 = vmatmul.mubr.bf16.gmra.mrb[0].mxu0 %v1513
      %v1552 = vpop.f32.mrb[0].mxu0
      %v1553 = vadd.f32 0.0, %v1552
      %v1554 = vpop.f32.mrb[0].mxu0
      %v1555 = vpop.f32.mrb[0].mxu0
      %v1556 = vpop.f32.mrb[0].mxu0
      %1557 = vdwg.mxu0
      %v1558 = vmul.f32 %v1503, 0.35355338
      %v1559 = vmul.f32 %v1553, 0.35355338
      %v1560 = vsel %vm884, %v1558, -1e+09
      %v1561 = vsel %vm884, %v1559, -1e+09
      %v1562 = vsel %vm788, %v1560, -inf
      %1563 = vmax.xlane.f32.xlu0 %v1562
      %v1564 = vpop.xlane.xlu0 %1563
      %v1565 = vsel %vm788, %v1561, -inf
      %1566 = vmax.xlane.f32.xlu0 %v1565
      %v1567 = vpop.xlane.xlu0 %1566
      %v1568 = vsub.f32 %v1560, %v1564
      %v1569 = vsub.f32 %v1561, %v1567
      %v1570 = vmul.f32 %v1568, 1.442695
      %v1571 = vpow.pop %v1570
      %v1572 = vmul.f32 %v1569, 1.442695
      %v1573 = vpow.pop %v1572
      %v1574 = vsel %vm788, %v1571, 0.0
      %1575 = vadd.xlane.f32.xlu0 %v1574
      %v1576 = vpop.xlane.xlu0 %1575
      %v1577 = vsel %vm788, %v1573, 0.0
      %1578 = vadd.xlane.f32.xlu0 %v1577
      %v1579 = vpop.xlane.xlu0 %1578
      %v1580 = vrcp.pop %v1576
      %v1581 = vrcp.pop %v1579
      %v1582 = vmul.f32 %v1571, %v1580
      %v1583 = vmul.f32 %v1573, %v1581
      %v1584 = vpack.c.bf16 %v1582, %v1582
      %v1585 = vpack.c.bf16 %v1583, %v1583
      %1586 = vrot.lane.b32.xlu0 %v786, 104
      %v1587 = vpop.permute.xlu0 %1586
      %v1589 = vsel %vm788, %v1584, 0
      %v1592 = vsel %vm914, %v1587, 0
      %1594 = vmatprep.subr.bf16.mxu0 0
      %1595 = vmatpush1.bf16.msra.mxu0 %v1592
      %1596 = vmatprep.subr.bf16.mxu0 0
      %1597 = vmatpush1.bf16.msra.mxu0 0
      %1598 = vmatprep.subr.bf16.mxu0 0
      %1599 = vmatpush1.bf16.msra.mxu0 0
      %1600 = vmatprep.subr.bf16.mxu0 0
      %1601 = vmatpush1.bf16.msra.mxu0 0
      %1602 = vmatprep.subr.bf16.mxu0 0
      %1603 = vmatpush1.bf16.msra.mxu0 0
      %1604 = vmatprep.subr.bf16.mxu0 0
      %1605 = vmatpush1.bf16.msra.mxu0 0
      %1606 = vmatprep.subr.bf16.mxu0 0
      %1607 = vmatpush1.bf16.msra.mxu0 0
      %1608 = vmatprep.subr.bf16.mxu0 0
      %1609 = vmatpush1.bf16.msra.mxu0 0
      %1610 = vmatprep.subr.bf16.mxu0 0
      %1611 = vmatpush1.bf16.msra.mxu0 0
      %1612 = vmatprep.subr.bf16.mxu0 0
      %1613 = vmatpush1.bf16.msra.mxu0 0
      %1614 = vmatprep.subr.bf16.mxu0 0
      %1615 = vmatpush1.bf16.msra.mxu0 0
      %1616 = vmatprep.subr.bf16.mxu0 0
      %1617 = vmatpush1.bf16.msra.mxu0 0
      %1618 = vmatprep.subr.bf16.mxu0 0
      %1619 = vmatpush1.bf16.msra.mxu0 0
      %1620 = vmatprep.subr.bf16.mxu0 0
      %1621 = vmatpush1.bf16.msra.mxu0 0
      %1622 = vmatprep.subr.bf16.mxu0 0
      %1623 = vmatpush1.bf16.msra.mxu0 0
      %1624 = vmatprep.subr.bf16.mxu0 0
      %1625 = vmatpush1.bf16.msra.mxu0 0
      %1626 = vmatprep.mubr.bf16.mxu0 0
      %1627 = vmatmul.mubr.bf16.gmra.mrb[0].mxu0 %v1589
      %v1628 = vpop.f32.mrb[0].mxu0
      %v1629 = vadd.f32 0.0, %v1628
      %v1630 = vpop.f32.mrb[0].mxu0
      %v1631 = vpop.f32.mrb[0].mxu0
      %v1632 = vpop.f32.mrb[0].mxu0
      %1633 = vdwg.mxu0
      %1634 = vrot.lane.b32.xlu0 %v787, 104
      %v1635 = vpop.permute.xlu0 %1634
      %v1637 = vsel %vm788, %v1585, 0
      %v1640 = vsel %vm914, %v1635, 0
      %1642 = vmatprep.subr.bf16.mxu0 0
      %1643 = vmatpush1.bf16.msra.mxu0 %v1640
      %1644 = vmatprep.subr.bf16.mxu0 0
      %1645 = vmatpush1.bf16.msra.mxu0 0
      %1646 = vmatprep.subr.bf16.mxu0 0
      %1647 = vmatpush1.bf16.msra.mxu0 0
      %1648 = vmatprep.subr.bf16.mxu0 0
      %1649 = vmatpush1.bf16.msra.mxu0 0
      %1650 = vmatprep.subr.bf16.mxu0 0
      %1651 = vmatpush1.bf16.msra.mxu0 0
      %1652 = vmatprep.subr.bf16.mxu0 0
      %1653 = vmatpush1.bf16.msra.mxu0 0
      %1654 = vmatprep.subr.bf16.mxu0 0
      %1655 = vmatpush1.bf16.msra.mxu0 0
      %1656 = vmatprep.subr.bf16.mxu0 0
      %1657 = vmatpush1.bf16.msra.mxu0 0
      %1658 = vmatprep.subr.bf16.mxu0 0
      %1659 = vmatpush1.bf16.msra.mxu0 0
      %1660 = vmatprep.subr.bf16.mxu0 0
      %1661 = vmatpush1.bf16.msra.mxu0 0
      %1662 = vmatprep.subr.bf16.mxu0 0
      %1663 = vmatpush1.bf16.msra.mxu0 0
      %1664 = vmatprep.subr.bf16.mxu0 0
      %1665 = vmatpush1.bf16.msra.mxu0 0
      %1666 = vmatprep.subr.bf16.mxu0 0
      %1667 = vmatpush1.bf16.msra.mxu0 0
      %1668 = vmatprep.subr.bf16.mxu0 0
      %1669 = vmatpush1.bf16.msra.mxu0 0
      %1670 = vmatprep.subr.bf16.mxu0 0
      %1671 = vmatpush1.bf16.msra.mxu0 0
      %1672 = vmatprep.subr.bf16.mxu0 0
      %1673 = vmatpush1.bf16.msra.mxu0 0
      %1674 = vmatprep.mubr.bf16.mxu0 0
      %1675 = vmatmul.mubr.bf16.gmra.mrb[0].mxu0 %v1637
      %v1676 = vpop.f32.mrb[0].mxu0
      %v1677 = vadd.f32 0.0, %v1676
      %v1678 = vpop.f32.mrb[0].mxu0
      %v1679 = vpop.f32.mrb[0].mxu0
      %v1680 = vpop.f32.mrb[0].mxu0
      %1681 = vdwg.mxu0
      %1684 = vrot.lane.b32.xlu0 %v1180, 8
      %v1685 = vpop.permute.xlu0 %1684
      %1686 = vrot.lane.b32.xlu0 %v1229, 8
      %v1687 = vpop.permute.xlu0 %1686
      %1692 = vrot.lane.b32.xlu0 %v1405, 16
      %v1693 = vpop.permute.xlu0 %1692
      %1694 = vrot.lane.b32.xlu0 %v1453, 16
      %v1695 = vpop.permute.xlu0 %1694
      %1700 = vrot.lane.b32.xlu0 %v1629, 24
      %v1701 = vpop.permute.xlu0 %1700
      %1702 = vrot.lane.b32.xlu0 %v1677, 24
      %v1703 = vpop.permute.xlu0 %1702
      %v1706 = vsel %vm788, %v953, %v1685
      %v1707 = vsel %vm788, %v999, %v1687
      %vm1708 = vcmask 130048
      %v1709 = vsel %vm1708, %v1706, %v1693
      %v1710 = vsel %vm1708, %v1707, %v1695
      %vm1711 = vcmask 195584
      %v1712 = vsel %vm1711, %v1709, %v1701
      %v1713 = vsel %vm1711, %v1710, %v1703
      %v1714 = vpack.c.bf16 %v1713, %v1712
      %v1716 = vlaneseq
      %v1717 = vshrl.u32 %v1716, 7
      %v1718 = vsub.s32 0, %v1717
      %v1719 = vrot.slane %v594, %v1718
      %v1725 = vunpack.c.l.b16 %v587
      %v1726 = vunpack.c.l.b16 %v588
      %v1727 = vunpack.c.l.b16 %v589
      %v1728 = vunpack.c.l.b16 %v590
      %v1729 = vpack.c.b16 %v1726, %v1725
      %v1730 = vpack.c.b16 %v1728, %v1727
      %v1734 = vsel %vm614, %v1714, 0
      %1736 = vmatprep.subr.bf16.mxu0 0
      %1737 = vmatpush1.bf16.msra.mxu0 %v1729
      %1738 = vmatprep.subr.bf16.mxu0 0
      %1739 = vmatpush1.bf16.msra.mxu0 %v1730
      %1740 = vmatprep.subr.bf16.mxu0 0
      %1741 = vmatpush1.bf16.msra.mxu0 0
      %1742 = vmatprep.subr.bf16.mxu0 0
      %1743 = vmatpush1.bf16.msra.mxu0 0
      %1744 = vmatprep.subr.bf16.mxu0 0
      %1745 = vmatpush1.bf16.msra.mxu0 0
      %1746 = vmatprep.subr.bf16.mxu0 0
      %1747 = vmatpush1.bf16.msra.mxu0 0
      %1748 = vmatprep.subr.bf16.mxu0 0
      %1749 = vmatpush1.bf16.msra.mxu0 0
      %1750 = vmatprep.subr.bf16.mxu0 0
      %1751 = vmatpush1.bf16.msra.mxu0 0
      %1752 = vmatprep.subr.bf16.mxu0 0
      %1753 = vmatpush1.bf16.msra.mxu0 0
      %1754 = vmatprep.subr.bf16.mxu0 0
      %1755 = vmatpush1.bf16.msra.mxu0 0
      %1756 = vmatprep.subr.bf16.mxu0 0
      %1757 = vmatpush1.bf16.msra.mxu0 0
      %1758 = vmatprep.subr.bf16.mxu0 0
      %1759 = vmatpush1.bf16.msra.mxu0 0
      %1760 = vmatprep.subr.bf16.mxu0 0
      %1761 = vmatpush1.bf16.msra.mxu0 0
      %1762 = vmatprep.subr.bf16.mxu0 0
      %1763 = vmatpush1.bf16.msra.mxu0 0
      %1764 = vmatprep.subr.bf16.mxu0 0
      %1765 = vmatpush1.bf16.msra.mxu0 0
      %1766 = vmatprep.subr.bf16.mxu0 0
      %1767 = vmatpush1.bf16.msra.mxu0 0
      %1768 = vmatprep.mubr.bf16.mxu0 0
      %1769 = vmatmul.mubr.bf16.gmra.mrb[0].mxu0 %v1734
      %v1770 = vpop.f32.mrb[0].mxu0
      %v1771 = vadd.f32 %v1719, %v1770
      %v1772 = vpop.f32.mrb[0].mxu0
      %v1773 = vpop.f32.mrb[0].mxu0
      %v1774 = vadd.f32 %v1719, %v1773
      %v1775 = vpop.f32.mrb[0].mxu0
      %1776 = vdwg.mxu0
      %v1777 = vadd.f32 %v1771, %v565
      %v1778 = vadd.f32 %v1774, %v566
      %v1779 = vsel %vm614, %v1777, 0.0
      %1780 = vadd.xlane.f32.xlu0 %v1779
      %v1781 = vpop.xlane.xlu0 %1780
      %v1782 = vsel %vm614, %v1778, 0.0
      %1783 = vadd.xlane.f32.xlu0 %v1782
      %v1784 = vpop.xlane.xlu0 %1783
      %v1785 = vrcp.pop 32.0
      %v1786 = vmul.f32 %v1781, %v1785
      %v1787 = vmul.f32 %v1784, %v1785
      %v1788 = vsub.f32 %v1777, %v1786
      %v1789 = vsub.f32 %v1778, %v1787
      %v1790 = vmul.f32 %v1788, %v1788
      %v1791 = vmul.f32 %v1789, %v1789
      %v1792 = vsel %vm614, %v1790, 0.0
      %1793 = vadd.xlane.f32.xlu0 %v1792
      %v1794 = vpop.xlane.xlu0 %1793
      %v1795 = vsel %vm614, %v1791, 0.0
      %1796 = vadd.xlane.f32.xlu0 %v1795
      %v1797 = vpop.xlane.xlu0 %1796
      %v1798 = vmul.f32 %v1794, %v1785
      %v1799 = vmul.f32 %v1797, %v1785
      %v1800 = vadd.f32 %v1798, 1e-05
      %v1801 = vadd.f32 %v1799, 1e-05
      %v1802 = vrsqrt.pop %v1800
      %v1803 = vrsqrt.pop %v1801
      %v1804 = vmul.f32 %v1788, %v1802
      %v1805 = vmul.f32 %v1789, %v1803
      %v1807 = vlaneseq
      %v1808 = vshrl.u32 %v1807, 7
      %v1809 = vsub.s32 0, %v1808
      %v1810 = vrot.slane %v569, %v1809
      %v1812 = vmul.f32 %v1804, %v1810
      %v1813 = vmul.f32 %v1805, %v1810
      %v1815 = vlaneseq
      %v1816 = vshrl.u32 %v1815, 7
      %v1817 = vsub.s32 0, %v1816
      %v1818 = vrot.slane %v572, %v1817
      %v1820 = vadd.f32 %v1812, %v1818
      %v1821 = vadd.f32 %v1813, %v1818
      %v1822 = vld [vmem:[%s526] sm:$0xf]
      %v1823 = vld [vmem:[%s526 + $0x4] sm:$0xf]
      %v1824 = vld [vmem:[%s526 + $0x8] sm:$0xf]
      %v1825 = vld [vmem:[%s526 + $0xc] sm:$0xf]
      %v1826 = vld [vmem:[%s526 + $0x10] sm:$0xf]
      %v1827 = vld [vmem:[%s526 + $0x14] sm:$0xf]
      %v1828 = vld [vmem:[%s526 + $0x18] sm:$0xf]
      %v1829 = vld [vmem:[%s526 + $0x1c] sm:$0xf]
      %v1830 = vld [vmem:[%s526 + $0x20] sm:$0xf]
      %v1831 = vld [vmem:[%s526 + $0x24] sm:$0xf]
      %v1832 = vld [vmem:[%s526 + $0x28] sm:$0xf]
      %v1833 = vld [vmem:[%s526 + $0x2c] sm:$0xf]
      %v1834 = vld [vmem:[%s526 + $0x30] sm:$0xf]
      %v1835 = vld [vmem:[%s526 + $0x34] sm:$0xf]
      %v1836 = vld [vmem:[%s526 + $0x38] sm:$0xf]
      %v1837 = vld [vmem:[%s526 + $0x3c] sm:$0xf]
      %v1838 = vld [vmem:[%s530] sm:$0x1]
      %v1839 = vld [vmem:[%s530 + $0x1] sm:$0x1]
      %v1840 = vld [vmem:[%s530 + $0x2] sm:$0x1]
      %v1841 = vld [vmem:[%s530 + $0x3] sm:$0x1]
      %v1842 = vpack.c.bf16 %v1821, %v1820
      %v1843 = vpack.c.bf16 %v568, %v567
      %v1845 = vlaneseq
      %v1846 = vshrl.u32 %v1845, 7
      %v1847 = vsub.s32 0, %v1846
      %v1848 = vrot.slane %v1838, %v1847
      %v1854 = vunpack.c.l.b16 %v1822
      %v1855 = vunpack.c.l.b16 %v1823
      %v1856 = vunpack.c.l.b16 %v1824
      %v1857 = vunpack.c.l.b16 %v1825
      %v1858 = vpack.c.b16 %v1855, %v1854
      %v1859 = vpack.c.b16 %v1857, %v1856
      %v1863 = vsel %vm614, %v1842, 0
      %1865 = vmatprep.subr.bf16.mxu0 0
      %1866 = vmatpush1.bf16.msra.mxu0 %v1858
      %1867 = vmatprep.subr.bf16.mxu0 0
      %1868 = vmatpush1.bf16.msra.mxu0 %v1859
      %1869 = vmatprep.subr.bf16.mxu0 0
      %1870 = vmatpush1.bf16.msra.mxu0 0
      %1871 = vmatprep.subr.bf16.mxu0 0
      %1872 = vmatpush1.bf16.msra.mxu0 0
      %1873 = vmatprep.subr.bf16.mxu0 0
      %1874 = vmatpush1.bf16.msra.mxu0 0
      %1875 = vmatprep.subr.bf16.mxu0 0
      %1876 = vmatpush1.bf16.msra.mxu0 0
      %1877 = vmatprep.subr.bf16.mxu0 0
      %1878 = vmatpush1.bf16.msra.mxu0 0
      %1879 = vmatprep.subr.bf16.mxu0 0
      %1880 = vmatpush1.bf16.msra.mxu0 0
      %1881 = vmatprep.subr.bf16.mxu0 0
      %1882 = vmatpush1.bf16.msra.mxu0 0
      %1883 = vmatprep.subr.bf16.mxu0 0
      %1884 = vmatpush1.bf16.msra.mxu0 0
      %1885 = vmatprep.subr.bf16.mxu0 0
      %1886 = vmatpush1.bf16.msra.mxu0 0
      %1887 = vmatprep.subr.bf16.mxu0 0
      %1888 = vmatpush1.bf16.msra.mxu0 0
      %1889 = vmatprep.subr.bf16.mxu0 0
      %1890 = vmatpush1.bf16.msra.mxu0 0
      %1891 = vmatprep.subr.bf16.mxu0 0
      %1892 = vmatpush1.bf16.msra.mxu0 0
      %1893 = vmatprep.subr.bf16.mxu0 0
      %1894 = vmatpush1.bf16.msra.mxu0 0
      %1895 = vmatprep.subr.bf16.mxu0 0
      %1896 = vmatpush1.bf16.msra.mxu0 0
      %1897 = vmatprep.mubr.bf16.mxu0 0
      %1898 = vmatmul.mubr.bf16.gmra.mrb[0].mxu0 %v1863
      %v1899 = vpop.f32.mrb[0].mxu0
      %v1900 = vadd.f32 %v1848, %v1899
      %v1901 = vpop.f32.mrb[0].mxu0
      %v1902 = vpop.f32.mrb[0].mxu0
      %v1903 = vadd.f32 %v1848, %v1902
      %v1904 = vpop.f32.mrb[0].mxu0
      %1905 = vdwg.mxu0
      %v1907 = vlaneseq
      %v1908 = vshrl.u32 %v1907, 7
      %v1909 = vsub.s32 0, %v1908
      %v1910 = vrot.slane %v1839, %v1909
      %v1916 = vunpack.c.l.b16 %v1826
      %v1917 = vunpack.c.l.b16 %v1827
      %v1918 = vunpack.c.l.b16 %v1828
      %v1919 = vunpack.c.l.b16 %v1829
      %v1920 = vpack.c.b16 %v1917, %v1916
      %v1921 = vpack.c.b16 %v1919, %v1918
      %v1925 = vsel %vm614, %v1843, 0
      %1927 = vmatprep.subr.bf16.mxu0 0
      %1928 = vmatpush1.bf16.msra.mxu0 %v1920
      %1929 = vmatprep.subr.bf16.mxu0 0
      %1930 = vmatpush1.bf16.msra.mxu0 %v1921
      %1931 = vmatprep.subr.bf16.mxu0 0
      %1932 = vmatpush1.bf16.msra.mxu0 0
      %1933 = vmatprep.subr.bf16.mxu0 0
      %1934 = vmatpush1.bf16.msra.mxu0 0
      %1935 = vmatprep.subr.bf16.mxu0 0
      %1936 = vmatpush1.bf16.msra.mxu0 0
      %1937 = vmatprep.subr.bf16.mxu0 0
      %1938 = vmatpush1.bf16.msra.mxu0 0
      %1939 = vmatprep.subr.bf16.mxu0 0
      %1940 = vmatpush1.bf16.msra.mxu0 0
      %1941 = vmatprep.subr.bf16.mxu0 0
      %1942 = vmatpush1.bf16.msra.mxu0 0
      %1943 = vmatprep.subr.bf16.mxu0 0
      %1944 = vmatpush1.bf16.msra.mxu0 0
      %1945 = vmatprep.subr.bf16.mxu0 0
      %1946 = vmatpush1.bf16.msra.mxu0 0
      %1947 = vmatprep.subr.bf16.mxu0 0
      %1948 = vmatpush1.bf16.msra.mxu0 0
      %1949 = vmatprep.subr.bf16.mxu0 0
      %1950 = vmatpush1.bf16.msra.mxu0 0
      %1951 = vmatprep.subr.bf16.mxu0 0
      %1952 = vmatpush1.bf16.msra.mxu0 0
      %1953 = vmatprep.subr.bf16.mxu0 0
      %1954 = vmatpush1.bf16.msra.mxu0 0
      %1955 = vmatprep.subr.bf16.mxu0 0
      %1956 = vmatpush1.bf16.msra.mxu0 0
      %1957 = vmatprep.subr.bf16.mxu0 0
      %1958 = vmatpush1.bf16.msra.mxu0 0
      %1959 = vmatprep.mubr.bf16.mxu0 0
      %1960 = vmatmul.mubr.bf16.gmra.mrb[0].mxu0 %v1925
      %v1961 = vpop.f32.mrb[0].mxu0
      %v1962 = vadd.f32 %v1910, %v1961
      %v1963 = vpop.f32.mrb[0].mxu0
      %v1964 = vpop.f32.mrb[0].mxu0
      %v1965 = vadd.f32 %v1910, %v1964
      %v1966 = vpop.f32.mrb[0].mxu0
      %1967 = vdwg.mxu0
      %v1969 = vlaneseq
      %v1970 = vshrl.u32 %v1969, 7
      %v1971 = vsub.s32 0, %v1970
      %v1972 = vrot.slane %v1840, %v1971
      %v1978 = vunpack.c.l.b16 %v1830
      %v1979 = vunpack.c.l.b16 %v1831
      %v1980 = vunpack.c.l.b16 %v1832
      %v1981 = vunpack.c.l.b16 %v1833
      %v1982 = vpack.c.b16 %v1979, %v1978
      %v1983 = vpack.c.b16 %v1981, %v1980
      %1986 = vmatprep.subr.bf16.mxu0 0
      %1987 = vmatpush1.bf16.msra.mxu0 %v1982
      %1988 = vmatprep.subr.bf16.mxu0 0
      %1989 = vmatpush1.bf16.msra.mxu0 %v1983
      %1990 = vmatprep.subr.bf16.mxu0 0
      %1991 = vmatpush1.bf16.msra.mxu0 0
      %1992 = vmatprep.subr.bf16.mxu0 0
      %1993 = vmatpush1.bf16.msra.mxu0 0
      %1994 = vmatprep.subr.bf16.mxu0 0
      %1995 = vmatpush1.bf16.msra.mxu0 0
      %1996 = vmatprep.subr.bf16.mxu0 0
      %1997 = vmatpush1.bf16.msra.mxu0 0
      %1998 = vmatprep.subr.bf16.mxu0 0
      %1999 = vmatpush1.bf16.msra.mxu0 0
      %2000 = vmatprep.subr.bf16.mxu0 0
      %2001 = vmatpush1.bf16.msra.mxu0 0
      %2002 = vmatprep.subr.bf16.mxu0 0
      %2003 = vmatpush1.bf16.msra.mxu0 0
      %2004 = vmatprep.subr.bf16.mxu0 0
      %2005 = vmatpush1.bf16.msra.mxu0 0
      %2006 = vmatprep.subr.bf16.mxu0 0
      %2007 = vmatpush1.bf16.msra.mxu0 0
      %2008 = vmatprep.subr.bf16.mxu0 0
      %2009 = vmatpush1.bf16.msra.mxu0 0
      %2010 = vmatprep.subr.bf16.mxu0 0
      %2011 = vmatpush1.bf16.msra.mxu0 0
      %2012 = vmatprep.subr.bf16.mxu0 0
      %2013 = vmatpush1.bf16.msra.mxu0 0
      %2014 = vmatprep.subr.bf16.mxu0 0
      %2015 = vmatpush1.bf16.msra.mxu0 0
      %2016 = vmatprep.subr.bf16.mxu0 0
      %2017 = vmatpush1.bf16.msra.mxu0 0
      %2018 = vmatprep.mubr.bf16.mxu0 0
      %2019 = vmatmul.mubr.bf16.gmra.mrb[0].mxu0 %v1925
      %v2020 = vpop.f32.mrb[0].mxu0
      %v2021 = vadd.f32 %v1972, %v2020
      %v2022 = vpop.f32.mrb[0].mxu0
      %v2023 = vpop.f32.mrb[0].mxu0
      %v2024 = vadd.f32 %v1972, %v2023
      %v2025 = vpop.f32.mrb[0].mxu0
      %2026 = vdwg.mxu0
      %v2027 = vpack.c.bf16 %v1900, %v1900
      %v2028 = vpack.c.bf16 %v1903, %v1903
      %v2029 = vpack.c.bf16 %v1962, %v1962
      %v2030 = vpack.c.bf16 %v1965, %v1965
      %v2031 = vpack.c.bf16 %v2021, %v2021
      %v2032 = vpack.c.bf16 %v2024, %v2024
      %v2034 = vsel %vm788, %v2027, 0
      %v2037 = vsel %vm788, %v2029, 0
      %2039 = vmatprep.subr.bf16.mxu0 0
      %2040 = vmatpush1.bf16.xpose.msra.mxu0 %v2037
      %2041 = vmatprep.subr.bf16.mxu0 0
      %2042 = vmatpush1.bf16.xpose.msra.mxu0 0
      %2043 = vmatprep.subr.bf16.mxu0 0
      %2044 = vmatpush1.bf16.xpose.msra.mxu0 0
      %2045 = vmatprep.subr.bf16.mxu0 0
      %2046 = vmatpush1.bf16.xpose.msra.mxu0 0
      %2047 = vmatprep.subr.bf16.mxu0 0
      %2048 = vmatpush1.bf16.xpose.msra.mxu0 0
      %2049 = vmatprep.subr.bf16.mxu0 0
      %2050 = vmatpush1.bf16.xpose.msra.mxu0 0
      %2051 = vmatprep.subr.bf16.mxu0 0
      %2052 = vmatpush1.bf16.xpose.msra.mxu0 0
      %2053 = vmatprep.subr.bf16.mxu0 0
      %2054 = vmatpush1.bf16.xpose.msra.mxu0 0
      %2055 = vmatprep.subr.bf16.mxu0 0
      %2056 = vmatpush1.bf16.xpose.msra.mxu0 0
      %2057 = vmatprep.subr.bf16.mxu0 0
      %2058 = vmatpush1.bf16.xpose.msra.mxu0 0
      %2059 = vmatprep.subr.bf16.mxu0 0
      %2060 = vmatpush1.bf16.xpose.msra.mxu0 0
      %2061 = vmatprep.subr.bf16.mxu0 0
      %2062 = vmatpush1.bf16.xpose.msra.mxu0 0
      %2063 = vmatprep.subr.bf16.mxu0 0
      %2064 = vmatpush1.bf16.xpose.msra.mxu0 0
      %2065 = vmatprep.subr.bf16.mxu0 0
      %2066 = vmatpush1.bf16.xpose.msra.mxu0 0
      %2067 = vmatprep.subr.bf16.mxu0 0
      %2068 = vmatpush1.bf16.xpose.msra.mxu0 0
      %2069 = vmatprep.subr.bf16.mxu0 0
      %2070 = vmatpush1.bf16.xpose.msra.mxu0 0
      %2071 = vmatprep.mubr.bf16.mxu0 0
      %2072 = vmatmul.mubr.bf16.gmra.mrb[0].mxu0 %v2034
      %v2073 = vpop.f32.mrb[0].mxu0
      %v2074 = vadd.f32 0.0, %v2073
      %v2075 = vpop.f32.mrb[0].mxu0
      %v2076 = vpop.f32.mrb[0].mxu0
      %v2077 = vpop.f32.mrb[0].mxu0
      %2078 = vdwg.mxu0
      %v2080 = vsel %vm788, %v2028, 0
      %v2083 = vsel %vm788, %v2030, 0
      %2085 = vmatprep.subr.bf16.mxu0 0
      %2086 = vmatpush1.bf16.xpose.msra.mxu0 %v2083
      %2087 = vmatprep.subr.bf16.mxu0 0
      %2088 = vmatpush1.bf16.xpose.msra.mxu0 0
      %2089 = vmatprep.subr.bf16.mxu0 0
      %2090 = vmatpush1.bf16.xpose.msra.mxu0 0
      %2091 = vmatprep.subr.bf16.mxu0 0
      %2092 = vmatpush1.bf16.xpose.msra.mxu0 0
      %2093 = vmatprep.subr.bf16.mxu0 0
      %2094 = vmatpush1.bf16.xpose.msra.mxu0 0
      %2095 = vmatprep.subr.bf16.mxu0 0
      %2096 = vmatpush1.bf16.xpose.msra.mxu0 0
      %2097 = vmatprep.subr.bf16.mxu0 0
      %2098 = vmatpush1.bf16.xpose.msra.mxu0 0
      %2099 = vmatprep.subr.bf16.mxu0 0
      %2100 = vmatpush1.bf16.xpose.msra.mxu0 0
      %2101 = vmatprep.subr.bf16.mxu0 0
      %2102 = vmatpush1.bf16.xpose.msra.mxu0 0
      %2103 = vmatprep.subr.bf16.mxu0 0
      %2104 = vmatpush1.bf16.xpose.msra.mxu0 0
      %2105 = vmatprep.subr.bf16.mxu0 0
      %2106 = vmatpush1.bf16.xpose.msra.mxu0 0
      %2107 = vmatprep.subr.bf16.mxu0 0
      %2108 = vmatpush1.bf16.xpose.msra.mxu0 0
      %2109 = vmatprep.subr.bf16.mxu0 0
      %2110 = vmatpush1.bf16.xpose.msra.mxu0 0
      %2111 = vmatprep.subr.bf16.mxu0 0
      %2112 = vmatpush1.bf16.xpose.msra.mxu0 0
      %2113 = vmatprep.subr.bf16.mxu0 0
      %2114 = vmatpush1.bf16.xpose.msra.mxu0 0
      %2115 = vmatprep.subr.bf16.mxu0 0
      %2116 = vmatpush1.bf16.xpose.msra.mxu0 0
      %2117 = vmatprep.mubr.bf16.mxu0 0
      %2118 = vmatmul.mubr.bf16.gmra.mrb[0].mxu0 %v2080
      %v2119 = vpop.f32.mrb[0].mxu0
      %v2120 = vadd.f32 0.0, %v2119
      %v2121 = vpop.f32.mrb[0].mxu0
      %v2122 = vpop.f32.mrb[0].mxu0
      %v2123 = vpop.f32.mrb[0].mxu0
      %2124 = vdwg.mxu0
      %v2125 = vmul.f32 %v2074, 0.35355338
      %v2126 = vmul.f32 %v2120, 0.35355338
      %v2127 = vsel %vm788, %v2125, -inf
      %2128 = vmax.xlane.f32.xlu0 %v2127
      %v2129 = vpop.xlane.xlu0 %2128
      %v2130 = vsel %vm788, %v2126, -inf
      %2131 = vmax.xlane.f32.xlu0 %v2130
      %v2132 = vpop.xlane.xlu0 %2131
      %v2133 = vsub.f32 %v2125, %v2129
      %v2134 = vsub.f32 %v2126, %v2132
      %v2135 = vmul.f32 %v2133, 1.442695
      %v2136 = vpow.pop %v2135
      %v2137 = vmul.f32 %v2134, 1.442695
      %v2138 = vpow.pop %v2137
      %v2139 = vsel %vm788, %v2136, 0.0
      %2140 = vadd.xlane.f32.xlu0 %v2139
      %v2141 = vpop.xlane.xlu0 %2140
      %v2142 = vsel %vm788, %v2138, 0.0
      %2143 = vadd.xlane.f32.xlu0 %v2142
      %v2144 = vpop.xlane.xlu0 %2143
      %v2145 = vrcp.pop %v2141
      %v2146 = vrcp.pop %v2144
      %v2147 = vmul.f32 %v2136, %v2145
      %v2148 = vmul.f32 %v2138, %v2146
      %v2149 = vpack.c.bf16 %v2147, %v2147
      %v2150 = vpack.c.bf16 %v2148, %v2148
      %v2152 = vsel %vm788, %v2149, 0
      %v2155 = vsel %vm914, %v2031, 0
      %2157 = vmatprep.subr.bf16.mxu0 0
      %2158 = vmatpush1.bf16.msra.mxu0 %v2155
      %2159 = vmatprep.subr.bf16.mxu0 0
      %2160 = vmatpush1.bf16.msra.mxu0 0
      %2161 = vmatprep.subr.bf16.mxu0 0
      %2162 = vmatpush1.bf16.msra.mxu0 0
      %2163 = vmatprep.subr.bf16.mxu0 0
      %2164 = vmatpush1.bf16.msra.mxu0 0
      %2165 = vmatprep.subr.bf16.mxu0 0
      %2166 = vmatpush1.bf16.msra.mxu0 0
      %2167 = vmatprep.subr.bf16.mxu0 0
      %2168 = vmatpush1.bf16.msra.mxu0 0
      %2169 = vmatprep.subr.bf16.mxu0 0
      %2170 = vmatpush1.bf16.msra.mxu0 0
      %2171 = vmatprep.subr.bf16.mxu0 0
      %2172 = vmatpush1.bf16.msra.mxu0 0
      %2173 = vmatprep.subr.bf16.mxu0 0
      %2174 = vmatpush1.bf16.msra.mxu0 0
      %2175 = vmatprep.subr.bf16.mxu0 0
      %2176 = vmatpush1.bf16.msra.mxu0 0
      %2177 = vmatprep.subr.bf16.mxu0 0
      %2178 = vmatpush1.bf16.msra.mxu0 0
      %2179 = vmatprep.subr.bf16.mxu0 0
      %2180 = vmatpush1.bf16.msra.mxu0 0
      %2181 = vmatprep.subr.bf16.mxu0 0
      %2182 = vmatpush1.bf16.msra.mxu0 0
      %2183 = vmatprep.subr.bf16.mxu0 0
      %2184 = vmatpush1.bf16.msra.mxu0 0
      %2185 = vmatprep.subr.bf16.mxu0 0
      %2186 = vmatpush1.bf16.msra.mxu0 0
      %2187 = vmatprep.subr.bf16.mxu0 0
      %2188 = vmatpush1.bf16.msra.mxu0 0
      %2189 = vmatprep.mubr.bf16.mxu0 0
      %2190 = vmatmul.mubr.bf16.gmra.mrb[0].mxu0 %v2152
      %v2191 = vpop.f32.mrb[0].mxu0
      %v2192 = vadd.f32 0.0, %v2191
      %v2193 = vpop.f32.mrb[0].mxu0
      %v2194 = vpop.f32.mrb[0].mxu0
      %v2195 = vpop.f32.mrb[0].mxu0
      %2196 = vdwg.mxu0
      %v2198 = vsel %vm788, %v2150, 0
      %v2201 = vsel %vm914, %v2032, 0
      %2203 = vmatprep.subr.bf16.mxu0 0
      %2204 = vmatpush1.bf16.msra.mxu0 %v2201
      %2205 = vmatprep.subr.bf16.mxu0 0
      %2206 = vmatpush1.bf16.msra.mxu0 0
      %2207 = vmatprep.subr.bf16.mxu0 0
      %2208 = vmatpush1.bf16.msra.mxu0 0
      %2209 = vmatprep.subr.bf16.mxu0 0
      %2210 = vmatpush1.bf16.msra.mxu0 0
      %2211 = vmatprep.subr.bf16.mxu0 0
      %2212 = vmatpush1.bf16.msra.mxu0 0
      %2213 = vmatprep.subr.bf16.mxu0 0
      %2214 = vmatpush1.bf16.msra.mxu0 0
      %2215 = vmatprep.subr.bf16.mxu0 0
      %2216 = vmatpush1.bf16.msra.mxu0 0
      %2217 = vmatprep.subr.bf16.mxu0 0
      %2218 = vmatpush1.bf16.msra.mxu0 0
      %2219 = vmatprep.subr.bf16.mxu0 0
      %2220 = vmatpush1.bf16.msra.mxu0 0
      %2221 = vmatprep.subr.bf16.mxu0 0
      %2222 = vmatpush1.bf16.msra.mxu0 0
      %2223 = vmatprep.subr.bf16.mxu0 0
      %2224 = vmatpush1.bf16.msra.mxu0 0
      %2225 = vmatprep.subr.bf16.mxu0 0
      %2226 = vmatpush1.bf16.msra.mxu0 0
      %2227 = vmatprep.subr.bf16.mxu0 0
      %2228 = vmatpush1.bf16.msra.mxu0 0
      %2229 = vmatprep.subr.bf16.mxu0 0
      %2230 = vmatpush1.bf16.msra.mxu0 0
      %2231 = vmatprep.subr.bf16.mxu0 0
      %2232 = vmatpush1.bf16.msra.mxu0 0
      %2233 = vmatprep.subr.bf16.mxu0 0
      %2234 = vmatpush1.bf16.msra.mxu0 0
      %2235 = vmatprep.mubr.bf16.mxu0 0
      %2236 = vmatmul.mubr.bf16.gmra.mrb[0].mxu0 %v2198
      %v2237 = vpop.f32.mrb[0].mxu0
      %v2238 = vadd.f32 0.0, %v2237
      %v2239 = vpop.f32.mrb[0].mxu0
      %v2240 = vpop.f32.mrb[0].mxu0
      %v2241 = vpop.f32.mrb[0].mxu0
      %2242 = vdwg.mxu0
      %2244 = vrot.lane.b32.xlu0 %v2027, 120
      %v2245 = vpop.permute.xlu0 %2244
      %2247 = vrot.lane.b32.xlu0 %v2029, 120
      %v2248 = vpop.permute.xlu0 %2247
      %v2250 = vsel %vm788, %v2245, 0
      %v2253 = vsel %vm788, %v2248, 0
      %2255 = vmatprep.subr.bf16.mxu0 0
      %2256 = vmatpush1.bf16.xpose.msra.mxu0 %v2253
      %2257 = vmatprep.subr.bf16.mxu0 0
      %2258 = vmatpush1.bf16.xpose.msra.mxu0 0
      %2259 = vmatprep.subr.bf16.mxu0 0
      %2260 = vmatpush1.bf16.xpose.msra.mxu0 0
      %2261 = vmatprep.subr.bf16.mxu0 0
      %2262 = vmatpush1.bf16.xpose.msra.mxu0 0
      %2263 = vmatprep.subr.bf16.mxu0 0
      %2264 = vmatpush1.bf16.xpose.msra.mxu0 0
      %2265 = vmatprep.subr.bf16.mxu0 0
      %2266 = vmatpush1.bf16.xpose.msra.mxu0 0
      %2267 = vmatprep.subr.bf16.mxu0 0
      %2268 = vmatpush1.bf16.xpose.msra.mxu0 0
      %2269 = vmatprep.subr.bf16.mxu0 0
      %2270 = vmatpush1.bf16.xpose.msra.mxu0 0
      %2271 = vmatprep.subr.bf16.mxu0 0
      %2272 = vmatpush1.bf16.xpose.msra.mxu0 0
      %2273 = vmatprep.subr.bf16.mxu0 0
      %2274 = vmatpush1.bf16.xpose.msra.mxu0 0
      %2275 = vmatprep.subr.bf16.mxu0 0
      %2276 = vmatpush1.bf16.xpose.msra.mxu0 0
      %2277 = vmatprep.subr.bf16.mxu0 0
      %2278 = vmatpush1.bf16.xpose.msra.mxu0 0
      %2279 = vmatprep.subr.bf16.mxu0 0
      %2280 = vmatpush1.bf16.xpose.msra.mxu0 0
      %2281 = vmatprep.subr.bf16.mxu0 0
      %2282 = vmatpush1.bf16.xpose.msra.mxu0 0
      %2283 = vmatprep.subr.bf16.mxu0 0
      %2284 = vmatpush1.bf16.xpose.msra.mxu0 0
      %2285 = vmatprep.subr.bf16.mxu0 0
      %2286 = vmatpush1.bf16.xpose.msra.mxu0 0
      %2287 = vmatprep.mubr.bf16.mxu0 0
      %2288 = vmatmul.mubr.bf16.gmra.mrb[0].mxu0 %v2250
      %v2289 = vpop.f32.mrb[0].mxu0
      %v2290 = vadd.f32 0.0, %v2289
      %v2291 = vpop.f32.mrb[0].mxu0
      %v2292 = vpop.f32.mrb[0].mxu0
      %v2293 = vpop.f32.mrb[0].mxu0
      %2294 = vdwg.mxu0
      %2296 = vrot.lane.b32.xlu0 %v2028, 120
      %v2297 = vpop.permute.xlu0 %2296
      %2299 = vrot.lane.b32.xlu0 %v2030, 120
      %v2300 = vpop.permute.xlu0 %2299
      %v2302 = vsel %vm788, %v2297, 0
      %v2305 = vsel %vm788, %v2300, 0
      %2307 = vmatprep.subr.bf16.mxu0 0
      %2308 = vmatpush1.bf16.xpose.msra.mxu0 %v2305
      %2309 = vmatprep.subr.bf16.mxu0 0
      %2310 = vmatpush1.bf16.xpose.msra.mxu0 0
      %2311 = vmatprep.subr.bf16.mxu0 0
      %2312 = vmatpush1.bf16.xpose.msra.mxu0 0
      %2313 = vmatprep.subr.bf16.mxu0 0
      %2314 = vmatpush1.bf16.xpose.msra.mxu0 0
      %2315 = vmatprep.subr.bf16.mxu0 0
      %2316 = vmatpush1.bf16.xpose.msra.mxu0 0
      %2317 = vmatprep.subr.bf16.mxu0 0
      %2318 = vmatpush1.bf16.xpose.msra.mxu0 0
      %2319 = vmatprep.subr.bf16.mxu0 0
      %2320 = vmatpush1.bf16.xpose.msra.mxu0 0
      %2321 = vmatprep.subr.bf16.mxu0 0
      %2322 = vmatpush1.bf16.xpose.msra.mxu0 0
      %2323 = vmatprep.subr.bf16.mxu0 0
      %2324 = vmatpush1.bf16.xpose.msra.mxu0 0
      %2325 = vmatprep.subr.bf16.mxu0 0
      %2326 = vmatpush1.bf16.xpose.msra.mxu0 0
      %2327 = vmatprep.subr.bf16.mxu0 0
      %2328 = vmatpush1.bf16.xpose.msra.mxu0 0
      %2329 = vmatprep.subr.bf16.mxu0 0
      %2330 = vmatpush1.bf16.xpose.msra.mxu0 0
      %2331 = vmatprep.subr.bf16.mxu0 0
      %2332 = vmatpush1.bf16.xpose.msra.mxu0 0
      %2333 = vmatprep.subr.bf16.mxu0 0
      %2334 = vmatpush1.bf16.xpose.msra.mxu0 0
      %2335 = vmatprep.subr.bf16.mxu0 0
      %2336 = vmatpush1.bf16.xpose.msra.mxu0 0
      %2337 = vmatprep.subr.bf16.mxu0 0
      %2338 = vmatpush1.bf16.xpose.msra.mxu0 0
      %2339 = vmatprep.mubr.bf16.mxu0 0
      %2340 = vmatmul.mubr.bf16.gmra.mrb[0].mxu0 %v2302
      %v2341 = vpop.f32.mrb[0].mxu0
      %v2342 = vadd.f32 0.0, %v2341
      %v2343 = vpop.f32.mrb[0].mxu0
      %v2344 = vpop.f32.mrb[0].mxu0
      %v2345 = vpop.f32.mrb[0].mxu0
      %2346 = vdwg.mxu0
      %v2347 = vmul.f32 %v2290, 0.35355338
      %v2348 = vmul.f32 %v2342, 0.35355338
      %v2349 = vsel %vm788, %v2347, -inf
      %2350 = vmax.xlane.f32.xlu0 %v2349
      %v2351 = vpop.xlane.xlu0 %2350
      %v2352 = vsel %vm788, %v2348, -inf
      %2353 = vmax.xlane.f32.xlu0 %v2352
      %v2354 = vpop.xlane.xlu0 %2353
      %v2355 = vsub.f32 %v2347, %v2351
      %v2356 = vsub.f32 %v2348, %v2354
      %v2357 = vmul.f32 %v2355, 1.442695
      %v2358 = vpow.pop %v2357
      %v2359 = vmul.f32 %v2356, 1.442695
      %v2360 = vpow.pop %v2359
      %v2361 = vsel %vm788, %v2358, 0.0
      %2362 = vadd.xlane.f32.xlu0 %v2361
      %v2363 = vpop.xlane.xlu0 %2362
      %v2364 = vsel %vm788, %v2360, 0.0
      %2365 = vadd.xlane.f32.xlu0 %v2364
      %v2366 = vpop.xlane.xlu0 %2365
      %v2367 = vrcp.pop %v2363
      %v2368 = vrcp.pop %v2366
      %v2369 = vmul.f32 %v2358, %v2367
      %v2370 = vmul.f32 %v2360, %v2368
      %v2371 = vpack.c.bf16 %v2369, %v2369
      %v2372 = vpack.c.bf16 %v2370, %v2370
      %2374 = vrot.lane.b32.xlu0 %v2031, 120
      %v2375 = vpop.permute.xlu0 %2374
      %v2377 = vsel %vm788, %v2371, 0
      %v2380 = vsel %vm914, %v2375, 0
      %2382 = vmatprep.subr.bf16.mxu0 0
      %2383 = vmatpush1.bf16.msra.mxu0 %v2380
      %2384 = vmatprep.subr.bf16.mxu0 0
      %2385 = vmatpush1.bf16.msra.mxu0 0
      %2386 = vmatprep.subr.bf16.mxu0 0
      %2387 = vmatpush1.bf16.msra.mxu0 0
      %2388 = vmatprep.subr.bf16.mxu0 0
      %2389 = vmatpush1.bf16.msra.mxu0 0
      %2390 = vmatprep.subr.bf16.mxu0 0
      %2391 = vmatpush1.bf16.msra.mxu0 0
      %2392 = vmatprep.subr.bf16.mxu0 0
      %2393 = vmatpush1.bf16.msra.mxu0 0
      %2394 = vmatprep.subr.bf16.mxu0 0
      %2395 = vmatpush1.bf16.msra.mxu0 0
      %2396 = vmatprep.subr.bf16.mxu0 0
      %2397 = vmatpush1.bf16.msra.mxu0 0
      %2398 = vmatprep.subr.bf16.mxu0 0
      %2399 = vmatpush1.bf16.msra.mxu0 0
      %2400 = vmatprep.subr.bf16.mxu0 0
      %2401 = vmatpush1.bf16.msra.mxu0 0
      %2402 = vmatprep.subr.bf16.mxu0 0
      %2403 = vmatpush1.bf16.msra.mxu0 0
      %2404 = vmatprep.subr.bf16.mxu0 0
      %2405 = vmatpush1.bf16.msra.mxu0 0
      %2406 = vmatprep.subr.bf16.mxu0 0
      %2407 = vmatpush1.bf16.msra.mxu0 0
      %2408 = vmatprep.subr.bf16.mxu0 0
      %2409 = vmatpush1.bf16.msra.mxu0 0
      %2410 = vmatprep.subr.bf16.mxu0 0
      %2411 = vmatpush1.bf16.msra.mxu0 0
      %2412 = vmatprep.subr.bf16.mxu0 0
      %2413 = vmatpush1.bf16.msra.mxu0 0
      %2414 = vmatprep.mubr.bf16.mxu0 0
      %2415 = vmatmul.mubr.bf16.gmra.mrb[0].mxu0 %v2377
      %v2416 = vpop.f32.mrb[0].mxu0
      %v2417 = vadd.f32 0.0, %v2416
      %v2418 = vpop.f32.mrb[0].mxu0
      %v2419 = vpop.f32.mrb[0].mxu0
      %v2420 = vpop.f32.mrb[0].mxu0
      %2421 = vdwg.mxu0
      %2423 = vrot.lane.b32.xlu0 %v2032, 120
      %v2424 = vpop.permute.xlu0 %2423
      %v2426 = vsel %vm788, %v2372, 0
      %v2429 = vsel %vm914, %v2424, 0
      %2431 = vmatprep.subr.bf16.mxu0 0
      %2432 = vmatpush1.bf16.msra.mxu0 %v2429
      %2433 = vmatprep.subr.bf16.mxu0 0
      %2434 = vmatpush1.bf16.msra.mxu0 0
      %2435 = vmatprep.subr.bf16.mxu0 0
      %2436 = vmatpush1.bf16.msra.mxu0 0
      %2437 = vmatprep.subr.bf16.mxu0 0
      %2438 = vmatpush1.bf16.msra.mxu0 0
      %2439 = vmatprep.subr.bf16.mxu0 0
      %2440 = vmatpush1.bf16.msra.mxu0 0
      %2441 = vmatprep.subr.bf16.mxu0 0
      %2442 = vmatpush1.bf16.msra.mxu0 0
      %2443 = vmatprep.subr.bf16.mxu0 0
      %2444 = vmatpush1.bf16.msra.mxu0 0
      %2445 = vmatprep.subr.bf16.mxu0 0
      %2446 = vmatpush1.bf16.msra.mxu0 0
      %2447 = vmatprep.subr.bf16.mxu0 0
      %2448 = vmatpush1.bf16.msra.mxu0 0
      %2449 = vmatprep.subr.bf16.mxu0 0
      %2450 = vmatpush1.bf16.msra.mxu0 0
      %2451 = vmatprep.subr.bf16.mxu0 0
      %2452 = vmatpush1.bf16.msra.mxu0 0
      %2453 = vmatprep.subr.bf16.mxu0 0
      %2454 = vmatpush1.bf16.msra.mxu0 0
      %2455 = vmatprep.subr.bf16.mxu0 0
      %2456 = vmatpush1.bf16.msra.mxu0 0
      %2457 = vmatprep.subr.bf16.mxu0 0
      %2458 = vmatpush1.bf16.msra.mxu0 0
      %2459 = vmatprep.subr.bf16.mxu0 0
      %2460 = vmatpush1.bf16.msra.mxu0 0
      %2461 = vmatprep.subr.bf16.mxu0 0
      %2462 = vmatpush1.bf16.msra.mxu0 0
      %2463 = vmatprep.mubr.bf16.mxu0 0
      %2464 = vmatmul.mubr.bf16.gmra.mrb[0].mxu0 %v2426
      %v2465 = vpop.f32.mrb[0].mxu0
      %v2466 = vadd.f32 0.0, %v2465
      %v2467 = vpop.f32.mrb[0].mxu0
      %v2468 = vpop.f32.mrb[0].mxu0
      %v2469 = vpop.f32.mrb[0].mxu0
      %2470 = vdwg.mxu0
      %2471 = vrot.lane.b32.xlu0 %v2027, 112
      %v2472 = vpop.permute.xlu0 %2471
      %2473 = vrot.lane.b32.xlu0 %v2029, 112
      %v2474 = vpop.permute.xlu0 %2473
      %v2476 = vsel %vm788, %v2472, 0
      %v2479 = vsel %vm788, %v2474, 0
      %2481 = vmatprep.subr.bf16.mxu0 0
      %2482 = vmatpush1.bf16.xpose.msra.mxu0 %v2479
      %2483 = vmatprep.subr.bf16.mxu0 0
      %2484 = vmatpush1.bf16.xpose.msra.mxu0 0
      %2485 = vmatprep.subr.bf16.mxu0 0
      %2486 = vmatpush1.bf16.xpose.msra.mxu0 0
      %2487 = vmatprep.subr.bf16.mxu0 0
      %2488 = vmatpush1.bf16.xpose.msra.mxu0 0
      %2489 = vmatprep.subr.bf16.mxu0 0
      %2490 = vmatpush1.bf16.xpose.msra.mxu0 0
      %2491 = vmatprep.subr.bf16.mxu0 0
      %2492 = vmatpush1.bf16.xpose.msra.mxu0 0
      %2493 = vmatprep.subr.bf16.mxu0 0
      %2494 = vmatpush1.bf16.xpose.msra.mxu0 0
      %2495 = vmatprep.subr.bf16.mxu0 0
      %2496 = vmatpush1.bf16.xpose.msra.mxu0 0
      %2497 = vmatprep.subr.bf16.mxu0 0
      %2498 = vmatpush1.bf16.xpose.msra.mxu0 0
      %2499 = vmatprep.subr.bf16.mxu0 0
      %2500 = vmatpush1.bf16.xpose.msra.mxu0 0
      %2501 = vmatprep.subr.bf16.mxu0 0
      %2502 = vmatpush1.bf16.xpose.msra.mxu0 0
      %2503 = vmatprep.subr.bf16.mxu0 0
      %2504 = vmatpush1.bf16.xpose.msra.mxu0 0
      %2505 = vmatprep.subr.bf16.mxu0 0
      %2506 = vmatpush1.bf16.xpose.msra.mxu0 0
      %2507 = vmatprep.subr.bf16.mxu0 0
      %2508 = vmatpush1.bf16.xpose.msra.mxu0 0
      %2509 = vmatprep.subr.bf16.mxu0 0
      %2510 = vmatpush1.bf16.xpose.msra.mxu0 0
      %2511 = vmatprep.subr.bf16.mxu0 0
      %2512 = vmatpush1.bf16.xpose.msra.mxu0 0
      %2513 = vmatprep.mubr.bf16.mxu0 0
      %2514 = vmatmul.mubr.bf16.gmra.mrb[0].mxu0 %v2476
      %v2515 = vpop.f32.mrb[0].mxu0
      %v2516 = vadd.f32 0.0, %v2515
      %v2517 = vpop.f32.mrb[0].mxu0
      %v2518 = vpop.f32.mrb[0].mxu0
      %v2519 = vpop.f32.mrb[0].mxu0
      %2520 = vdwg.mxu0
      %2521 = vrot.lane.b32.xlu0 %v2028, 112
      %v2522 = vpop.permute.xlu0 %2521
      %2523 = vrot.lane.b32.xlu0 %v2030, 112
      %v2524 = vpop.permute.xlu0 %2523
      %v2526 = vsel %vm788, %v2522, 0
      %v2529 = vsel %vm788, %v2524, 0
      %2531 = vmatprep.subr.bf16.mxu0 0
      %2532 = vmatpush1.bf16.xpose.msra.mxu0 %v2529
      %2533 = vmatprep.subr.bf16.mxu0 0
      %2534 = vmatpush1.bf16.xpose.msra.mxu0 0
      %2535 = vmatprep.subr.bf16.mxu0 0
      %2536 = vmatpush1.bf16.xpose.msra.mxu0 0
      %2537 = vmatprep.subr.bf16.mxu0 0
      %2538 = vmatpush1.bf16.xpose.msra.mxu0 0
      %2539 = vmatprep.subr.bf16.mxu0 0
      %2540 = vmatpush1.bf16.xpose.msra.mxu0 0
      %2541 = vmatprep.subr.bf16.mxu0 0
      %2542 = vmatpush1.bf16.xpose.msra.mxu0 0
      %2543 = vmatprep.subr.bf16.mxu0 0
      %2544 = vmatpush1.bf16.xpose.msra.mxu0 0
      %2545 = vmatprep.subr.bf16.mxu0 0
      %2546 = vmatpush1.bf16.xpose.msra.mxu0 0
      %2547 = vmatprep.subr.bf16.mxu0 0
      %2548 = vmatpush1.bf16.xpose.msra.mxu0 0
      %2549 = vmatprep.subr.bf16.mxu0 0
      %2550 = vmatpush1.bf16.xpose.msra.mxu0 0
      %2551 = vmatprep.subr.bf16.mxu0 0
      %2552 = vmatpush1.bf16.xpose.msra.mxu0 0
      %2553 = vmatprep.subr.bf16.mxu0 0
      %2554 = vmatpush1.bf16.xpose.msra.mxu0 0
      %2555 = vmatprep.subr.bf16.mxu0 0
      %2556 = vmatpush1.bf16.xpose.msra.mxu0 0
      %2557 = vmatprep.subr.bf16.mxu0 0
      %2558 = vmatpush1.bf16.xpose.msra.mxu0 0
      %2559 = vmatprep.subr.bf16.mxu0 0
      %2560 = vmatpush1.bf16.xpose.msra.mxu0 0
      %2561 = vmatprep.subr.bf16.mxu0 0
      %2562 = vmatpush1.bf16.xpose.msra.mxu0 0
      %2563 = vmatprep.mubr.bf16.mxu0 0
      %2564 = vmatmul.mubr.bf16.gmra.mrb[0].mxu0 %v2526
      %v2565 = vpop.f32.mrb[0].mxu0
      %v2566 = vadd.f32 0.0, %v2565
      %v2567 = vpop.f32.mrb[0].mxu0
      %v2568 = vpop.f32.mrb[0].mxu0
      %v2569 = vpop.f32.mrb[0].mxu0
      %2570 = vdwg.mxu0
      %v2571 = vmul.f32 %v2516, 0.35355338
      %v2572 = vmul.f32 %v2566, 0.35355338
      %v2573 = vsel %vm788, %v2571, -inf
      %2574 = vmax.xlane.f32.xlu0 %v2573
      %v2575 = vpop.xlane.xlu0 %2574
      %v2576 = vsel %vm788, %v2572, -inf
      %2577 = vmax.xlane.f32.xlu0 %v2576
      %v2578 = vpop.xlane.xlu0 %2577
      %v2579 = vsub.f32 %v2571, %v2575
      %v2580 = vsub.f32 %v2572, %v2578
      %v2581 = vmul.f32 %v2579, 1.442695
      %v2582 = vpow.pop %v2581
      %v2583 = vmul.f32 %v2580, 1.442695
      %v2584 = vpow.pop %v2583
      %v2585 = vsel %vm788, %v2582, 0.0
      %2586 = vadd.xlane.f32.xlu0 %v2585
      %v2587 = vpop.xlane.xlu0 %2586
      %v2588 = vsel %vm788, %v2584, 0.0
      %2589 = vadd.xlane.f32.xlu0 %v2588
      %v2590 = vpop.xlane.xlu0 %2589
      %v2591 = vrcp.pop %v2587
      %v2592 = vrcp.pop %v2590
      %v2593 = vmul.f32 %v2582, %v2591
      %v2594 = vmul.f32 %v2584, %v2592
      %v2595 = vpack.c.bf16 %v2593, %v2593
      %v2596 = vpack.c.bf16 %v2594, %v2594
      %2597 = vrot.lane.b32.xlu0 %v2031, 112
      %v2598 = vpop.permute.xlu0 %2597
      %v2600 = vsel %vm788, %v2595, 0
      %v2603 = vsel %vm914, %v2598, 0
      %2605 = vmatprep.subr.bf16.mxu0 0
      %2606 = vmatpush1.bf16.msra.mxu0 %v2603
      %2607 = vmatprep.subr.bf16.mxu0 0
      %2608 = vmatpush1.bf16.msra.mxu0 0
      %2609 = vmatprep.subr.bf16.mxu0 0
      %2610 = vmatpush1.bf16.msra.mxu0 0
      %2611 = vmatprep.subr.bf16.mxu0 0
      %2612 = vmatpush1.bf16.msra.mxu0 0
      %2613 = vmatprep.subr.bf16.mxu0 0
      %2614 = vmatpush1.bf16.msra.mxu0 0
      %2615 = vmatprep.subr.bf16.mxu0 0
      %2616 = vmatpush1.bf16.msra.mxu0 0
      %2617 = vmatprep.subr.bf16.mxu0 0
      %2618 = vmatpush1.bf16.msra.mxu0 0
      %2619 = vmatprep.subr.bf16.mxu0 0
      %2620 = vmatpush1.bf16.msra.mxu0 0
      %2621 = vmatprep.subr.bf16.mxu0 0
      %2622 = vmatpush1.bf16.msra.mxu0 0
      %2623 = vmatprep.subr.bf16.mxu0 0
      %2624 = vmatpush1.bf16.msra.mxu0 0
      %2625 = vmatprep.subr.bf16.mxu0 0
      %2626 = vmatpush1.bf16.msra.mxu0 0
      %2627 = vmatprep.subr.bf16.mxu0 0
      %2628 = vmatpush1.bf16.msra.mxu0 0
      %2629 = vmatprep.subr.bf16.mxu0 0
      %2630 = vmatpush1.bf16.msra.mxu0 0
      %2631 = vmatprep.subr.bf16.mxu0 0
      %2632 = vmatpush1.bf16.msra.mxu0 0
      %2633 = vmatprep.subr.bf16.mxu0 0
      %2634 = vmatpush1.bf16.msra.mxu0 0
      %2635 = vmatprep.subr.bf16.mxu0 0
      %2636 = vmatpush1.bf16.msra.mxu0 0
      %2637 = vmatprep.mubr.bf16.mxu0 0
      %2638 = vmatmul.mubr.bf16.gmra.mrb[0].mxu0 %v2600
      %v2639 = vpop.f32.mrb[0].mxu0
      %v2640 = vadd.f32 0.0, %v2639
      %v2641 = vpop.f32.mrb[0].mxu0
      %v2642 = vpop.f32.mrb[0].mxu0
      %v2643 = vpop.f32.mrb[0].mxu0
      %2644 = vdwg.mxu0
      %2645 = vrot.lane.b32.xlu0 %v2032, 112
      %v2646 = vpop.permute.xlu0 %2645
      %v2648 = vsel %vm788, %v2596, 0
      %v2651 = vsel %vm914, %v2646, 0
      %2653 = vmatprep.subr.bf16.mxu0 0
      %2654 = vmatpush1.bf16.msra.mxu0 %v2651
      %2655 = vmatprep.subr.bf16.mxu0 0
      %2656 = vmatpush1.bf16.msra.mxu0 0
      %2657 = vmatprep.subr.bf16.mxu0 0
      %2658 = vmatpush1.bf16.msra.mxu0 0
      %2659 = vmatprep.subr.bf16.mxu0 0
      %2660 = vmatpush1.bf16.msra.mxu0 0
      %2661 = vmatprep.subr.bf16.mxu0 0
      %2662 = vmatpush1.bf16.msra.mxu0 0
      %2663 = vmatprep.subr.bf16.mxu0 0
      %2664 = vmatpush1.bf16.msra.mxu0 0
      %2665 = vmatprep.subr.bf16.mxu0 0
      %2666 = vmatpush1.bf16.msra.mxu0 0
      %2667 = vmatprep.subr.bf16.mxu0 0
      %2668 = vmatpush1.bf16.msra.mxu0 0
      %2669 = vmatprep.subr.bf16.mxu0 0
      %2670 = vmatpush1.bf16.msra.mxu0 0
      %2671 = vmatprep.subr.bf16.mxu0 0
      %2672 = vmatpush1.bf16.msra.mxu0 0
      %2673 = vmatprep.subr.bf16.mxu0 0
      %2674 = vmatpush1.bf16.msra.mxu0 0
      %2675 = vmatprep.subr.bf16.mxu0 0
      %2676 = vmatpush1.bf16.msra.mxu0 0
      %2677 = vmatprep.subr.bf16.mxu0 0
      %2678 = vmatpush1.bf16.msra.mxu0 0
      %2679 = vmatprep.subr.bf16.mxu0 0
      %2680 = vmatpush1.bf16.msra.mxu0 0
      %2681 = vmatprep.subr.bf16.mxu0 0
      %2682 = vmatpush1.bf16.msra.mxu0 0
      %2683 = vmatprep.subr.bf16.mxu0 0
      %2684 = vmatpush1.bf16.msra.mxu0 0
      %2685 = vmatprep.mubr.bf16.mxu0 0
      %2686 = vmatmul.mubr.bf16.gmra.mrb[0].mxu0 %v2648
      %v2687 = vpop.f32.mrb[0].mxu0
      %v2688 = vadd.f32 0.0, %v2687
      %v2689 = vpop.f32.mrb[0].mxu0
      %v2690 = vpop.f32.mrb[0].mxu0
      %v2691 = vpop.f32.mrb[0].mxu0
      %2692 = vdwg.mxu0
      %2693 = vrot.lane.b32.xlu0 %v2027, 104
      %v2694 = vpop.permute.xlu0 %2693
      %2695 = vrot.lane.b32.xlu0 %v2029, 104
      %v2696 = vpop.permute.xlu0 %2695
      %v2698 = vsel %vm788, %v2694, 0
      %v2701 = vsel %vm788, %v2696, 0
      %2703 = vmatprep.subr.bf16.mxu0 0
      %2704 = vmatpush1.bf16.xpose.msra.mxu0 %v2701
      %2705 = vmatprep.subr.bf16.mxu0 0
      %2706 = vmatpush1.bf16.xpose.msra.mxu0 0
      %2707 = vmatprep.subr.bf16.mxu0 0
      %2708 = vmatpush1.bf16.xpose.msra.mxu0 0
      %2709 = vmatprep.subr.bf16.mxu0 0
      %2710 = vmatpush1.bf16.xpose.msra.mxu0 0
      %2711 = vmatprep.subr.bf16.mxu0 0
      %2712 = vmatpush1.bf16.xpose.msra.mxu0 0
      %2713 = vmatprep.subr.bf16.mxu0 0
      %2714 = vmatpush1.bf16.xpose.msra.mxu0 0
      %2715 = vmatprep.subr.bf16.mxu0 0
      %2716 = vmatpush1.bf16.xpose.msra.mxu0 0
      %2717 = vmatprep.subr.bf16.mxu0 0
      %2718 = vmatpush1.bf16.xpose.msra.mxu0 0
      %2719 = vmatprep.subr.bf16.mxu0 0
      %2720 = vmatpush1.bf16.xpose.msra.mxu0 0
      %2721 = vmatprep.subr.bf16.mxu0 0
      %2722 = vmatpush1.bf16.xpose.msra.mxu0 0
      %2723 = vmatprep.subr.bf16.mxu0 0
      %2724 = vmatpush1.bf16.xpose.msra.mxu0 0
      %2725 = vmatprep.subr.bf16.mxu0 0
      %2726 = vmatpush1.bf16.xpose.msra.mxu0 0
      %2727 = vmatprep.subr.bf16.mxu0 0
      %2728 = vmatpush1.bf16.xpose.msra.mxu0 0
      %2729 = vmatprep.subr.bf16.mxu0 0
      %2730 = vmatpush1.bf16.xpose.msra.mxu0 0
      %2731 = vmatprep.subr.bf16.mxu0 0
      %2732 = vmatpush1.bf16.xpose.msra.mxu0 0
      %2733 = vmatprep.subr.bf16.mxu0 0
      %2734 = vmatpush1.bf16.xpose.msra.mxu0 0
      %2735 = vmatprep.mubr.bf16.mxu0 0
      %2736 = vmatmul.mubr.bf16.gmra.mrb[0].mxu0 %v2698
      %v2737 = vpop.f32.mrb[0].mxu0
      %v2738 = vadd.f32 0.0, %v2737
      %v2739 = vpop.f32.mrb[0].mxu0
      %v2740 = vpop.f32.mrb[0].mxu0
      %v2741 = vpop.f32.mrb[0].mxu0
      %2742 = vdwg.mxu0
      %2743 = vrot.lane.b32.xlu0 %v2028, 104
      %v2744 = vpop.permute.xlu0 %2743
      %2745 = vrot.lane.b32.xlu0 %v2030, 104
      %v2746 = vpop.permute.xlu0 %2745
      %v2748 = vsel %vm788, %v2744, 0
      %v2751 = vsel %vm788, %v2746, 0
      %2753 = vmatprep.subr.bf16.mxu0 0
      %2754 = vmatpush1.bf16.xpose.msra.mxu0 %v2751
      %2755 = vmatprep.subr.bf16.mxu0 0
      %2756 = vmatpush1.bf16.xpose.msra.mxu0 0
      %2757 = vmatprep.subr.bf16.mxu0 0
      %2758 = vmatpush1.bf16.xpose.msra.mxu0 0
      %2759 = vmatprep.subr.bf16.mxu0 0
      %2760 = vmatpush1.bf16.xpose.msra.mxu0 0
      %2761 = vmatprep.subr.bf16.mxu0 0
      %2762 = vmatpush1.bf16.xpose.msra.mxu0 0
      %2763 = vmatprep.subr.bf16.mxu0 0
      %2764 = vmatpush1.bf16.xpose.msra.mxu0 0
      %2765 = vmatprep.subr.bf16.mxu0 0
      %2766 = vmatpush1.bf16.xpose.msra.mxu0 0
      %2767 = vmatprep.subr.bf16.mxu0 0
      %2768 = vmatpush1.bf16.xpose.msra.mxu0 0
      %2769 = vmatprep.subr.bf16.mxu0 0
      %2770 = vmatpush1.bf16.xpose.msra.mxu0 0
      %2771 = vmatprep.subr.bf16.mxu0 0
      %2772 = vmatpush1.bf16.xpose.msra.mxu0 0
      %2773 = vmatprep.subr.bf16.mxu0 0
      %2774 = vmatpush1.bf16.xpose.msra.mxu0 0
      %2775 = vmatprep.subr.bf16.mxu0 0
      %2776 = vmatpush1.bf16.xpose.msra.mxu0 0
      %2777 = vmatprep.subr.bf16.mxu0 0
      %2778 = vmatpush1.bf16.xpose.msra.mxu0 0
      %2779 = vmatprep.subr.bf16.mxu0 0
      %2780 = vmatpush1.bf16.xpose.msra.mxu0 0
      %2781 = vmatprep.subr.bf16.mxu0 0
      %2782 = vmatpush1.bf16.xpose.msra.mxu0 0
      %2783 = vmatprep.subr.bf16.mxu0 0
      %2784 = vmatpush1.bf16.xpose.msra.mxu0 0
      %2785 = vmatprep.mubr.bf16.mxu0 0
      %2786 = vmatmul.mubr.bf16.gmra.mrb[0].mxu0 %v2748
      %v2787 = vpop.f32.mrb[0].mxu0
      %v2788 = vadd.f32 0.0, %v2787
      %v2789 = vpop.f32.mrb[0].mxu0
      %v2790 = vpop.f32.mrb[0].mxu0
      %v2791 = vpop.f32.mrb[0].mxu0
      %2792 = vdwg.mxu0
      %v2793 = vmul.f32 %v2738, 0.35355338
      %v2794 = vmul.f32 %v2788, 0.35355338
      %v2795 = vsel %vm788, %v2793, -inf
      %2796 = vmax.xlane.f32.xlu0 %v2795
      %v2797 = vpop.xlane.xlu0 %2796
      %v2798 = vsel %vm788, %v2794, -inf
      %2799 = vmax.xlane.f32.xlu0 %v2798
      %v2800 = vpop.xlane.xlu0 %2799
      %v2801 = vsub.f32 %v2793, %v2797
      %v2802 = vsub.f32 %v2794, %v2800
      %v2803 = vmul.f32 %v2801, 1.442695
      %v2804 = vpow.pop %v2803
      %v2805 = vmul.f32 %v2802, 1.442695
      %v2806 = vpow.pop %v2805
      %v2807 = vsel %vm788, %v2804, 0.0
      %2808 = vadd.xlane.f32.xlu0 %v2807
      %v2809 = vpop.xlane.xlu0 %2808
      %v2810 = vsel %vm788, %v2806, 0.0
      %2811 = vadd.xlane.f32.xlu0 %v2810
      %v2812 = vpop.xlane.xlu0 %2811
      %v2813 = vrcp.pop %v2809
      %v2814 = vrcp.pop %v2812
      %v2815 = vmul.f32 %v2804, %v2813
      %v2816 = vmul.f32 %v2806, %v2814
      %v2817 = vpack.c.bf16 %v2815, %v2815
      %v2818 = vpack.c.bf16 %v2816, %v2816
      %2819 = vrot.lane.b32.xlu0 %v2031, 104
      %v2820 = vpop.permute.xlu0 %2819
      %v2822 = vsel %vm788, %v2817, 0
      %v2825 = vsel %vm914, %v2820, 0
      %2827 = vmatprep.subr.bf16.mxu0 0
      %2828 = vmatpush1.bf16.msra.mxu0 %v2825
      %2829 = vmatprep.subr.bf16.mxu0 0
      %2830 = vmatpush1.bf16.msra.mxu0 0
      %2831 = vmatprep.subr.bf16.mxu0 0
      %2832 = vmatpush1.bf16.msra.mxu0 0
      %2833 = vmatprep.subr.bf16.mxu0 0
      %2834 = vmatpush1.bf16.msra.mxu0 0
      %2835 = vmatprep.subr.bf16.mxu0 0
      %2836 = vmatpush1.bf16.msra.mxu0 0
      %2837 = vmatprep.subr.bf16.mxu0 0
      %2838 = vmatpush1.bf16.msra.mxu0 0
      %2839 = vmatprep.subr.bf16.mxu0 0
      %2840 = vmatpush1.bf16.msra.mxu0 0
      %2841 = vmatprep.subr.bf16.mxu0 0
      %2842 = vmatpush1.bf16.msra.mxu0 0
      %2843 = vmatprep.subr.bf16.mxu0 0
      %2844 = vmatpush1.bf16.msra.mxu0 0
      %2845 = vmatprep.subr.bf16.mxu0 0
      %2846 = vmatpush1.bf16.msra.mxu0 0
      %2847 = vmatprep.subr.bf16.mxu0 0
      %2848 = vmatpush1.bf16.msra.mxu0 0
      %2849 = vmatprep.subr.bf16.mxu0 0
      %2850 = vmatpush1.bf16.msra.mxu0 0
      %2851 = vmatprep.subr.bf16.mxu0 0
      %2852 = vmatpush1.bf16.msra.mxu0 0
      %2853 = vmatprep.subr.bf16.mxu0 0
      %2854 = vmatpush1.bf16.msra.mxu0 0
      %2855 = vmatprep.subr.bf16.mxu0 0
      %2856 = vmatpush1.bf16.msra.mxu0 0
      %2857 = vmatprep.subr.bf16.mxu0 0
      %2858 = vmatpush1.bf16.msra.mxu0 0
      %2859 = vmatprep.mubr.bf16.mxu0 0
      %2860 = vmatmul.mubr.bf16.gmra.mrb[0].mxu0 %v2822
      %v2861 = vpop.f32.mrb[0].mxu0
      %v2862 = vadd.f32 0.0, %v2861
      %v2863 = vpop.f32.mrb[0].mxu0
      %v2864 = vpop.f32.mrb[0].mxu0
      %v2865 = vpop.f32.mrb[0].mxu0
      %2866 = vdwg.mxu0
      %2867 = vrot.lane.b32.xlu0 %v2032, 104
      %v2868 = vpop.permute.xlu0 %2867
      %v2870 = vsel %vm788, %v2818, 0
      %v2873 = vsel %vm914, %v2868, 0
      %2875 = vmatprep.subr.bf16.mxu0 0
      %2876 = vmatpush1.bf16.msra.mxu0 %v2873
      %2877 = vmatprep.subr.bf16.mxu0 0
      %2878 = vmatpush1.bf16.msra.mxu0 0
      %2879 = vmatprep.subr.bf16.mxu0 0
      %2880 = vmatpush1.bf16.msra.mxu0 0
      %2881 = vmatprep.subr.bf16.mxu0 0
      %2882 = vmatpush1.bf16.msra.mxu0 0
      %2883 = vmatprep.subr.bf16.mxu0 0
      %2884 = vmatpush1.bf16.msra.mxu0 0
      %2885 = vmatprep.subr.bf16.mxu0 0
      %2886 = vmatpush1.bf16.msra.mxu0 0
      %2887 = vmatprep.subr.bf16.mxu0 0
      %2888 = vmatpush1.bf16.msra.mxu0 0
      %2889 = vmatprep.subr.bf16.mxu0 0
      %2890 = vmatpush1.bf16.msra.mxu0 0
      %2891 = vmatprep.subr.bf16.mxu0 0
      %2892 = vmatpush1.bf16.msra.mxu0 0
      %2893 = vmatprep.subr.bf16.mxu0 0
      %2894 = vmatpush1.bf16.msra.mxu0 0
      %2895 = vmatprep.subr.bf16.mxu0 0
      %2896 = vmatpush1.bf16.msra.mxu0 0
      %2897 = vmatprep.subr.bf16.mxu0 0
      %2898 = vmatpush1.bf16.msra.mxu0 0
      %2899 = vmatprep.subr.bf16.mxu0 0
      %2900 = vmatpush1.bf16.msra.mxu0 0
      %2901 = vmatprep.subr.bf16.mxu0 0
      %2902 = vmatpush1.bf16.msra.mxu0 0
      %2903 = vmatprep.subr.bf16.mxu0 0
      %2904 = vmatpush1.bf16.msra.mxu0 0
      %2905 = vmatprep.subr.bf16.mxu0 0
      %2906 = vmatpush1.bf16.msra.mxu0 0
      %2907 = vmatprep.mubr.bf16.mxu0 0
      %2908 = vmatmul.mubr.bf16.gmra.mrb[0].mxu0 %v2870
      %v2909 = vpop.f32.mrb[0].mxu0
      %v2910 = vadd.f32 0.0, %v2909
      %v2911 = vpop.f32.mrb[0].mxu0
      %v2912 = vpop.f32.mrb[0].mxu0
      %v2913 = vpop.f32.mrb[0].mxu0
      %2914 = vdwg.mxu0
      %2917 = vrot.lane.b32.xlu0 %v2417, 8
      %v2918 = vpop.permute.xlu0 %2917
      %2919 = vrot.lane.b32.xlu0 %v2466, 8
      %v2920 = vpop.permute.xlu0 %2919
      %2925 = vrot.lane.b32.xlu0 %v2640, 16
      %v2926 = vpop.permute.xlu0 %2925
      %2927 = vrot.lane.b32.xlu0 %v2688, 16
      %v2928 = vpop.permute.xlu0 %2927
      %2933 = vrot.lane.b32.xlu0 %v2862, 24
      %v2934 = vpop.permute.xlu0 %2933
      %2935 = vrot.lane.b32.xlu0 %v2910, 24
      %v2936 = vpop.permute.xlu0 %2935
      %v2939 = vsel %vm788, %v2192, %v2918
      %v2940 = vsel %vm788, %v2238, %v2920
      %v2941 = vsel %vm1708, %v2939, %v2926
      %v2942 = vsel %vm1708, %v2940, %v2928
      %v2943 = vsel %vm1711, %v2941, %v2934
      %v2944 = vsel %vm1711, %v2942, %v2936
      %v2945 = vpack.c.bf16 %v2944, %v2943
      %v2947 = vlaneseq
      %v2948 = vshrl.u32 %v2947, 7
      %v2949 = vsub.s32 0, %v2948
      %v2950 = vrot.slane %v1841, %v2949
      %v2956 = vunpack.c.l.b16 %v1834
      %v2957 = vunpack.c.l.b16 %v1835
      %v2958 = vunpack.c.l.b16 %v1836
      %v2959 = vunpack.c.l.b16 %v1837
      %v2960 = vpack.c.b16 %v2957, %v2956
      %v2961 = vpack.c.b16 %v2959, %v2958
      %v2965 = vsel %vm614, %v2945, 0
      %2967 = vmatprep.subr.bf16.mxu0 0
      %2968 = vmatpush1.bf16.msra.mxu0 %v2960
      %2969 = vmatprep.subr.bf16.mxu0 0
      %2970 = vmatpush1.bf16.msra.mxu0 %v2961
      %2971 = vmatprep.subr.bf16.mxu0 0
      %2972 = vmatpush1.bf16.msra.mxu0 0
      %2973 = vmatprep.subr.bf16.mxu0 0
      %2974 = vmatpush1.bf16.msra.mxu0 0
      %2975 = vmatprep.subr.bf16.mxu0 0
      %2976 = vmatpush1.bf16.msra.mxu0 0
      %2977 = vmatprep.subr.bf16.mxu0 0
      %2978 = vmatpush1.bf16.msra.mxu0 0
      %2979 = vmatprep.subr.bf16.mxu0 0
      %2980 = vmatpush1.bf16.msra.mxu0 0
      %2981 = vmatprep.subr.bf16.mxu0 0
      %2982 = vmatpush1.bf16.msra.mxu0 0
      %2983 = vmatprep.subr.bf16.mxu0 0
      %2984 = vmatpush1.bf16.msra.mxu0 0
      %2985 = vmatprep.subr.bf16.mxu0 0
      %2986 = vmatpush1.bf16.msra.mxu0 0
      %2987 = vmatprep.subr.bf16.mxu0 0
      %2988 = vmatpush1.bf16.msra.mxu0 0
      %2989 = vmatprep.subr.bf16.mxu0 0
      %2990 = vmatpush1.bf16.msra.mxu0 0
      %2991 = vmatprep.subr.bf16.mxu0 0
      %2992 = vmatpush1.bf16.msra.mxu0 0
      %2993 = vmatprep.subr.bf16.mxu0 0
      %2994 = vmatpush1.bf16.msra.mxu0 0
      %2995 = vmatprep.subr.bf16.mxu0 0
      %2996 = vmatpush1.bf16.msra.mxu0 0
      %2997 = vmatprep.subr.bf16.mxu0 0
      %2998 = vmatpush1.bf16.msra.mxu0 0
      %2999 = vmatprep.mubr.bf16.mxu0 0
      %3000 = vmatmul.mubr.bf16.gmra.mrb[0].mxu0 %v2965
      %v3001 = vpop.f32.mrb[0].mxu0
      %v3002 = vadd.f32 %v2950, %v3001
      %v3003 = vpop.f32.mrb[0].mxu0
      %v3004 = vpop.f32.mrb[0].mxu0
      %v3005 = vadd.f32 %v2950, %v3004
      %v3006 = vpop.f32.mrb[0].mxu0
      %3007 = vdwg.mxu0
      %v3008 = vadd.f32 %v3002, %v1820
      %v3009 = vadd.f32 %v3005, %v1821
      %v3010 = vsel %vm614, %v3008, 0.0
      %3011 = vadd.xlane.f32.xlu0 %v3010
      %v3012 = vpop.xlane.xlu0 %3011
      %v3013 = vsel %vm614, %v3009, 0.0
      %3014 = vadd.xlane.f32.xlu0 %v3013
      %v3015 = vpop.xlane.xlu0 %3014
      %v3016 = vmul.f32 %v3012, %v1785
      %v3017 = vmul.f32 %v3015, %v1785
      %v3018 = vsub.f32 %v3008, %v3016
      %v3019 = vsub.f32 %v3009, %v3017
      %v3020 = vmul.f32 %v3018, %v3018
      %v3021 = vmul.f32 %v3019, %v3019
      %v3022 = vsel %vm614, %v3020, 0.0
      %3023 = vadd.xlane.f32.xlu0 %v3022
      %v3024 = vpop.xlane.xlu0 %3023
      %v3025 = vsel %vm614, %v3021, 0.0
      %3026 = vadd.xlane.f32.xlu0 %v3025
      %v3027 = vpop.xlane.xlu0 %3026
      %v3028 = vmul.f32 %v3024, %v1785
      %v3029 = vmul.f32 %v3027, %v1785
      %v3030 = vadd.f32 %v3028, 1e-05
      %v3031 = vadd.f32 %v3029, 1e-05
      %v3032 = vrsqrt.pop %v3030
      %v3033 = vrsqrt.pop %v3031
      %v3034 = vmul.f32 %v3018, %v3032
      %v3035 = vmul.f32 %v3019, %v3033
      %v3037 = vlaneseq
      %v3038 = vshrl.u32 %v3037, 7
      %v3039 = vsub.s32 0, %v3038
      %v3040 = vrot.slane %v570, %v3039
      %v3042 = vmul.f32 %v3034, %v3040
      %v3043 = vmul.f32 %v3035, %v3040
      %v3045 = vlaneseq
      %v3046 = vshrl.u32 %v3045, 7
      %v3047 = vsub.s32 0, %v3046
      %v3048 = vrot.slane %v573, %v3047
      %v3050 = vadd.f32 %v3042, %v3048
      %v3051 = vadd.f32 %v3043, %v3048
      %v3052 = vld [vmem:[%s543] sm:$0xf]
      %v3053 = vld [vmem:[%s543 + $0x4] sm:$0xf]
      %v3054 = vld [vmem:[%s543 + $0x8] sm:$0xf]
      %v3055 = vld [vmem:[%s543 + $0xc] sm:$0xf]
      %v3056 = vld [vmem:[%s546] sm:$0x1]
      %v3057 = vpack.c.bf16 %v3051, %v3050
      %v3059 = vlaneseq
      %v3060 = vshrl.u32 %v3059, 7
      %v3061 = vsub.s32 0, %v3060
      %v3062 = vrot.slane %v3056, %v3061
      %v3068 = vunpack.c.l.b16 %v3052
      %v3069 = vunpack.c.l.b16 %v3053
      %v3070 = vunpack.c.l.b16 %v3054
      %v3071 = vunpack.c.l.b16 %v3055
      %v3072 = vpack.c.b16 %v3069, %v3068
      %v3073 = vpack.c.b16 %v3071, %v3070
      %v3077 = vsel %vm614, %v3057, 0
      %3079 = vmatprep.subr.bf16.mxu0 0
      %3080 = vmatpush1.bf16.msra.mxu0 %v3072
      %3081 = vmatprep.subr.bf16.mxu0 0
      %3082 = vmatpush1.bf16.msra.mxu0 %v3073
      %3083 = vmatprep.subr.bf16.mxu0 0
      %3084 = vmatpush1.bf16.msra.mxu0 0
      %3085 = vmatprep.subr.bf16.mxu0 0
      %3086 = vmatpush1.bf16.msra.mxu0 0
      %3087 = vmatprep.subr.bf16.mxu0 0
      %3088 = vmatpush1.bf16.msra.mxu0 0
      %3089 = vmatprep.subr.bf16.mxu0 0
      %3090 = vmatpush1.bf16.msra.mxu0 0
      %3091 = vmatprep.subr.bf16.mxu0 0
      %3092 = vmatpush1.bf16.msra.mxu0 0
      %3093 = vmatprep.subr.bf16.mxu0 0
      %3094 = vmatpush1.bf16.msra.mxu0 0
      %3095 = vmatprep.subr.bf16.mxu0 0
      %3096 = vmatpush1.bf16.msra.mxu0 0
      %3097 = vmatprep.subr.bf16.mxu0 0
      %3098 = vmatpush1.bf16.msra.mxu0 0
      %3099 = vmatprep.subr.bf16.mxu0 0
      %3100 = vmatpush1.bf16.msra.mxu0 0
      %3101 = vmatprep.subr.bf16.mxu0 0
      %3102 = vmatpush1.bf16.msra.mxu0 0
      %3103 = vmatprep.subr.bf16.mxu0 0
      %3104 = vmatpush1.bf16.msra.mxu0 0
      %3105 = vmatprep.subr.bf16.mxu0 0
      %3106 = vmatpush1.bf16.msra.mxu0 0
      %3107 = vmatprep.subr.bf16.mxu0 0
      %3108 = vmatpush1.bf16.msra.mxu0 0
      %3109 = vmatprep.subr.bf16.mxu0 0
      %3110 = vmatpush1.bf16.msra.mxu0 0
      %3111 = vmatprep.mubr.bf16.mxu0 0
      %3112 = vmatmul.mubr.bf16.gmra.mrb[0].mxu0 %v3077
      %v3113 = vpop.f32.mrb[0].mxu0
      %v3114 = vadd.f32 %v3062, %v3113
      %v3115 = vpop.f32.mrb[0].mxu0
      %v3116 = vpop.f32.mrb[0].mxu0
      %v3117 = vadd.f32 %v3062, %v3116
      %v3118 = vpop.f32.mrb[0].mxu0
      %3119 = vdwg.mxu0
      %v3120 = vmax.f32 %v3114, 0.0
      %v3121 = vmax.f32 %v3117, 0.0
      %v3122 = vld [vmem:[%s551] sm:$0xf]
      %v3123 = vld [vmem:[%s551 + $0x4] sm:$0xf]
      %v3124 = vld [vmem:[%s551 + $0x8] sm:$0xf]
      %v3125 = vld [vmem:[%s551 + $0xc] sm:$0xf]
      %v3126 = vld [vmem:[%s551 + $0x10] sm:$0xf]
      %v3127 = vld [vmem:[%s551 + $0x14] sm:$0xf]
      %v3128 = vld [vmem:[%s551 + $0x18] sm:$0xf]
      %v3129 = vld [vmem:[%s551 + $0x1c] sm:$0xf]
      %v3130 = vld [vmem:[%s554] sm:$0x1]
      %v3131 = vpack.c.bf16 %v3121, %v3120
      %v3133 = vlaneseq
      %v3134 = vshrl.u32 %v3133, 7
      %v3135 = vsub.s32 0, %v3134
      %v3136 = vrot.slane %v3130, %v3135
      %v3146 = vunpack.c.l.b16 %v3122
      %v3147 = vunpack.c.l.b16 %v3123
      %v3148 = vunpack.c.l.b16 %v3124
      %v3149 = vunpack.c.l.b16 %v3125
      %v3150 = vunpack.c.l.b16 %v3126
      %v3151 = vunpack.c.l.b16 %v3127
      %v3152 = vunpack.c.l.b16 %v3128
      %v3153 = vunpack.c.l.b16 %v3129
      %v3154 = vpack.c.b16 %v3147, %v3146
      %v3155 = vpack.c.b16 %v3149, %v3148
      %v3156 = vpack.c.b16 %v3151, %v3150
      %v3157 = vpack.c.b16 %v3153, %v3152
      %vm3162 = vcmask 523264
      %v3164 = vsel %vm3162, %v3131, 0
      %3166 = vmatprep.subr.bf16.mxu0 0
      %3167 = vmatpush1.bf16.msra.mxu0 %v3154
      %3168 = vmatprep.subr.bf16.mxu0 0
      %3169 = vmatpush1.bf16.msra.mxu0 %v3155
      %3170 = vmatprep.subr.bf16.mxu0 0
      %3171 = vmatpush1.bf16.msra.mxu0 %v3156
      %3172 = vmatprep.subr.bf16.mxu0 0
      %3173 = vmatpush1.bf16.msra.mxu0 %v3157
      %3174 = vmatprep.subr.bf16.mxu0 0
      %3175 = vmatpush1.bf16.msra.mxu0 0
      %3176 = vmatprep.subr.bf16.mxu0 0
      %3177 = vmatpush1.bf16.msra.mxu0 0
      %3178 = vmatprep.subr.bf16.mxu0 0
      %3179 = vmatpush1.bf16.msra.mxu0 0
      %3180 = vmatprep.subr.bf16.mxu0 0
      %3181 = vmatpush1.bf16.msra.mxu0 0
      %3182 = vmatprep.subr.bf16.mxu0 0
      %3183 = vmatpush1.bf16.msra.mxu0 0
      %3184 = vmatprep.subr.bf16.mxu0 0
      %3185 = vmatpush1.bf16.msra.mxu0 0
      %3186 = vmatprep.subr.bf16.mxu0 0
      %3187 = vmatpush1.bf16.msra.mxu0 0
      %3188 = vmatprep.subr.bf16.mxu0 0
      %3189 = vmatpush1.bf16.msra.mxu0 0
      %3190 = vmatprep.subr.bf16.mxu0 0
      %3191 = vmatpush1.bf16.msra.mxu0 0
      %3192 = vmatprep.subr.bf16.mxu0 0
      %3193 = vmatpush1.bf16.msra.mxu0 0
      %3194 = vmatprep.subr.bf16.mxu0 0
      %3195 = vmatpush1.bf16.msra.mxu0 0
      %3196 = vmatprep.subr.bf16.mxu0 0
      %3197 = vmatpush1.bf16.msra.mxu0 0
      %3198 = vmatprep.mubr.bf16.mxu0 0
      %3199 = vmatmul.mubr.bf16.gmra.mrb[0].mxu0 %v3164
      %v3200 = vpop.f32.mrb[0].mxu0
      %v3201 = vadd.f32 %v3136, %v3200
      %v3202 = vpop.f32.mrb[0].mxu0
      %v3203 = vpop.f32.mrb[0].mxu0
      %v3204 = vadd.f32 %v3136, %v3203
      %v3205 = vpop.f32.mrb[0].mxu0
      %3206 = vdwg.mxu0
      %v3207 = vadd.f32 %v3201, %v3050
      %v3208 = vadd.f32 %v3204, %v3051
      %v3209 = vsel %vm614, %v3207, 0.0
      %3210 = vadd.xlane.f32.xlu0 %v3209
      %v3211 = vpop.xlane.xlu0 %3210
      %v3212 = vsel %vm614, %v3208, 0.0
      %3213 = vadd.xlane.f32.xlu0 %v3212
      %v3214 = vpop.xlane.xlu0 %3213
      %v3215 = vmul.f32 %v3211, %v1785
      %v3216 = vmul.f32 %v3214, %v1785
      %v3217 = vsub.f32 %v3207, %v3215
      %v3218 = vsub.f32 %v3208, %v3216
      %v3219 = vmul.f32 %v3217, %v3217
      %v3220 = vmul.f32 %v3218, %v3218
      %v3221 = vsel %vm614, %v3219, 0.0
      %3222 = vadd.xlane.f32.xlu0 %v3221
      %v3223 = vpop.xlane.xlu0 %3222
      %v3224 = vsel %vm614, %v3220, 0.0
      %3225 = vadd.xlane.f32.xlu0 %v3224
      %v3226 = vpop.xlane.xlu0 %3225
      %v3227 = vmul.f32 %v3223, %v1785
      %v3228 = vmul.f32 %v3226, %v1785
      %v3229 = vadd.f32 %v3227, 1e-05
      %v3230 = vadd.f32 %v3228, 1e-05
      %v3231 = vrsqrt.pop %v3229
      %v3232 = vrsqrt.pop %v3230
      %v3233 = vmul.f32 %v3217, %v3231
      %v3234 = vmul.f32 %v3218, %v3232
      %v3236 = vlaneseq
      %v3237 = vshrl.u32 %v3236, 7
      %v3238 = vsub.s32 0, %v3237
      %v3239 = vrot.slane %v571, %v3238
      %v3241 = vmul.f32 %v3233, %v3239
      %v3242 = vmul.f32 %v3234, %v3239
      %v3244 = vlaneseq
      %v3245 = vshrl.u32 %v3244, 7
      %v3246 = vsub.s32 0, %v3245
      %v3247 = vrot.slane %v574, %v3246
      %v3249 = vadd.f32 %v3241, %v3247
      %v3250 = vadd.f32 %v3242, %v3247
      %3251 = vst.msk [vmem:[#allocation2] sm:$0xff] %vm614, %v3249
      %3252 = vst.msk [vmem:[#allocation2 + $0x8] sm:$0xff] %vm614, %v3250
      %p3253 = scmp.eq.s32.totalorder %s23, 1
      // Predicated region
      $region73: #{transformer_forward.4} parent=67 // pred_check
        %p3254 = pneg %p3253
      $region74: #{transformer_forward.4} parent=67 // pred_check_branch
        %3256 = sbr.rel (%p3254) target = $region76
      $region75: #{transformer_forward.4} parent=67 // pred_region
        %3257 = vst.msk [vmem:[%s12] sm:$0xff] %vm614, %v3249
        %3258 = vst.msk [vmem:[%s12 + $0x8] sm:$0xff] %vm614, %v3250
      $region76: #{transformer_forward.4} parent=67 // pred_fallthru
        _
      // Predicated region
      $region77: #{transformer_forward.4} parent=67 // pred_check
        %p3259 = pneg %p338
      $region78: #{transformer_forward.4} parent=67 // pred_check_branch
        %3261 = sbr.rel (%p3259) target = $region80
      $region79: #{transformer_forward.4} parent=67 // pred_region
        _
      $region80: #{transformer_forward.4} parent=67 // pred_fallthru
        _
      // Predicated region
      $region81: #{transformer_forward.4} parent=67 // pred_check
        %p3262 = pneg %p338
      $region82: #{transformer_forward.4} parent=67 // pred_check_branch
        %3264 = sbr.rel (%p3262) target = $region84
      $region83: #{transformer_forward.4} parent=67 // pred_region
        _
      $region84: #{transformer_forward.4} parent=67 // pred_fallthru
        _
    $region68: #{transformer_forward.4} parent=5 // pred_fallthru
      _
    %p3265 = scmp.le.s32.totalorder 2, %s18
    // Predicated region
    $region85: #{transformer_forward.4} parent=5 // pred_check
      %p3266 = pneg %p3265
    $region86: #{transformer_forward.4} parent=5 // pred_check_branch
      %3268 = sbr.rel (%p3266) target = $region88
    $region87: #{transformer_forward.4} parent=5 // pred_region
      %s3269 = ssub.s32 %s18, 2
    $region88: #{transformer_forward.4} parent=5 // pred_fallthru
      _
  $region6: #{transformer_forward.4} parent=0 // loop_footer
    %s22 = sadd.s32 1, %s18
  $region7: #{transformer_forward.4} parent=0 // loop_footer_branch
    %17 = sbr.rel target = $region3
  $region8: #{transformer_forward.4} parent=0 // loop_exit
    _

</llo_original>
